<compile_context>
chip_gen: v6e
topology: v6e:2x2x1
jax: 0.10.0
libtpu: 0.0.40
codegen_flags: <defaults>
</compile_context>

<pallas_src>
import functools
import math

import jax
import jax.numpy as jnp
from jax import lax
from jax.experimental import pallas as pl
from jax.experimental.pallas import tpu as pltpu


def _round_up(x, m):
    return ((x + m - 1) // m) * m


def _pick_row_tile(L):
    for tl in (512, 256, 128, 64, 32, 16, 8):
        if L % tl == 0:
            return tl
    return L


def _pick_channel_tile(C):
    for ct in (256, 128):
        if C % ct == 0:
            return ct
    return C


# -----------------------------------------------------------------------------
# Kernel 1: implicit filter MLP (Linear -> Sin -> [Linear -> Sin] x2 -> Linear)
#           times the (hoisted) ExponentialModulation decay.
#   Row-tiled over L: z block (TL, emb_dim), decay block (TL, d_model),
#   weights/freq resident with constant index maps.
# -----------------------------------------------------------------------------
def _filter_mlp_kernel(z_ref, decay_ref, w1_ref, b1_ref, w2_ref, b2_ref,
                       w3_ref, b3_ref, wout_ref, freq_ref, h_ref):
    w_mod = 1.0                                        # HyenaFilter default w_mod=1
    z = z_ref[...]                                     # (TL, emb_dim)
    freq = freq_ref[...]                               # (1, order)

    h = jnp.dot(z, w1_ref[...], preferred_element_type=jnp.float32) + b1_ref[...]
    h = jnp.sin(w_mod * freq * h)                      # Sin activation
    h = jnp.dot(h, w2_ref[...], preferred_element_type=jnp.float32) + b2_ref[...]
    h = jnp.sin(w_mod * freq * h)
    h = jnp.dot(h, w3_ref[...], preferred_element_type=jnp.float32) + b3_ref[...]
    h = jnp.sin(w_mod * freq * h)
    h = jnp.dot(h, wout_ref[...], preferred_element_type=jnp.float32)   # (TL, d_model)

    # ExponentialModulation decay is precomputed outside the kernel.
    h_ref[...] = h * decay_ref[...]


# -----------------------------------------------------------------------------
# Kernel 2: fftconv_ref equivalent (gelu=False, dropout_mask=None), literal
#           broadcasting semantics, in transposed (time, channel) layout:
#   y[t, c] = sum_{s} ktap[s, c] * u_t[t - s, c]        (causal conv)
#   out     = y + u_t * D[t]                            (literal `u * D`)
#   The causal zero padding lives in a VMEM scratch slab: rows [0, K) are
#   zeroed (K is a multiple of 8 -> aligned stores) and the input block is
#   copied to rows [K, K+L), so every tap is a plain sublane-offset slice --
#   no roll, no mask, no XLA-side pad of the big tensor.
# -----------------------------------------------------------------------------
def _causal_conv_kernel(u_ref, k_ref, d_ref, o_ref, upad_ref, *,
                        n_taps, tap_block, seq_len):
    # u_ref:    (L, CT)      input block (one batch, one channel tile)
    # k_ref:    (K, CT)      per-channel taps (zero-padded to K)
    # d_ref:    (L, 1)       literal `u * D` scale (D indexed by time)
    # o_ref:    (L, CT)
    # upad_ref: (L + K, CT)  VMEM scratch: [0,K) zeros, [K,K+L) input block
    K, TB, L = n_taps, tap_block, seq_len
    CT = o_ref.shape[-1]
    n_blocks = K // TB

    u_blk = u_ref[...]                                               # (L, CT)
    # Re-zero the pad rows every step (cheap, 16 vreg stores at CT=128) so the
    # kernel stays correct under megacore grid splitting of the scratch.
    upad_ref[pl.ds(0, K), :] = jnp.zeros((K, CT), upad_ref.dtype)
    upad_ref[pl.ds(K, L), :] = u_blk

    def tap_block_body(j, acc):
        kstart = pl.multiple_of(j * TB, TB)
        kblk = k_ref[pl.ds(kstart, TB), :].astype(jnp.float32)       # (TB, CT)
        base = pl.multiple_of(K - (j + 1) * TB, TB)
        for r in range(TB):                                          # static unroll in-block
            # tap s = j*TB + r reads upad[K - s + t] = u[t - s] (zero for t < s)
            win = upad_ref[pl.ds(base + (TB - r), L), :]             # (L, CT)
            acc = acc + win.astype(jnp.float32) * kblk[r:r + 1, :]
        return acc

    acc = lax.fori_loop(0, n_blocks, tap_block_body,
                        jnp.zeros((L, CT), jnp.float32))
    o_ref[...] = (acc + u_blk.astype(jnp.float32) * d_ref[...]).astype(o_ref.dtype)


# -----------------------------------------------------------------------------
# Parameter initialization (deterministic, mirrors module __init__ shapes).
# -----------------------------------------------------------------------------
def init_hyena_filter_params(key, d_model, emb_dim, order, seq_len, w=1.0):
    assert emb_dim % 2 != 0 and emb_dim >= 3
    keys = jax.random.split(key, 5)

    def linear(k, fan_in, fan_out, with_bias=True):
        kw, kb = jax.random.split(k)
        bound = 1.0 / math.sqrt(fan_in)
        W = jax.random.uniform(kw, (fan_in, fan_out), jnp.float32, -bound, bound)
        b = (jax.random.uniform(kb, (1, fan_out), jnp.float32, -bound, bound)
             if with_bias else None)
        return W, b

    w1, b1 = linear(keys[0], emb_dim, order)
    w2, b2 = linear(keys[1], order, order)
    w3, b3 = linear(keys[2], order, order)
    wout, _ = linear(keys[3], order, d_model, with_bias=False)
    freq = w * jnp.ones((1, order), jnp.float32)                 # Sin.freq, w=1
    bias = jax.random.normal(keys[4], (d_model,), jnp.float32)   # self.bias

    # ExponentialModulation deltas
    target, fast, slow = 0.01, 0.3, 1.5
    max_decay = math.log(target) / fast
    min_decay = math.log(target) / slow
    deltas = jnp.linspace(min_decay, max_decay, d_model, dtype=jnp.float32)[None, :]

    # PositionalEmbedding buffers (plain-JAX glue)
    t = jnp.linspace(0.0, 1.0, seq_len, dtype=jnp.float32)[:, None]          # (L,1)
    bands = (emb_dim - 1) // 2
    t_res = jnp.linspace(0.0, seq_len - 1, seq_len, dtype=jnp.float32)[:, None]
    wfreq = 2.0 * math.pi * t_res / seq_len                                  # (L,1)
    f = jnp.linspace(1e-4, float(bands - 1), bands, dtype=jnp.float32)[None, :]
    z = jnp.concatenate([t, jnp.cos(f * wfreq), -jnp.sin(f * wfreq)], axis=-1)  # (L, emb_dim)

    return dict(w1=w1, b1=b1, w2=w2, b2=b2, w3=w3, b3=b3, wout=wout,
                freq=freq, bias=bias, deltas=deltas, z=z, t=t)


# -----------------------------------------------------------------------------
# Wrappers around pallas_call.
# -----------------------------------------------------------------------------
def compute_filter_pallas(params, L, d_model):
    """HyenaFilter.filter(L): returns h of shape (L, d_model)."""
    z = params["z"][:L]
    t = params["t"][:L]
    emb_dim = z.shape[1]
    order = params["w1"].shape[1]

    # ExponentialModulation decay depends only on params -> hoist out of the kernel.
    decay = jnp.exp(-t * jnp.abs(params["deltas"]))              # (L, d_model)

    TL = _pick_row_tile(L)
    grid = (L // TL,)

    return pl.pallas_call(
        _filter_mlp_kernel,
        out_shape=jax.ShapeDtypeStruct((L, d_model), jnp.float32),
        grid=grid,
        in_specs=[
            pl.BlockSpec((TL, emb_dim), lambda i: (i, 0)),       # z (row-tiled)
            pl.BlockSpec((TL, d_model), lambda i: (i, 0)),       # decay (row-tiled)
            pl.BlockSpec((emb_dim, order), lambda i: (0, 0)),    # w1
            pl.BlockSpec((1, order), lambda i: (0, 0)),          # b1
            pl.BlockSpec((order, order), lambda i: (0, 0)),      # w2
            pl.BlockSpec((1, order), lambda i: (0, 0)),          # b2
            pl.BlockSpec((order, order), lambda i: (0, 0)),      # w3
            pl.BlockSpec((1, order), lambda i: (0, 0)),          # b3
            pl.BlockSpec((order, d_model), lambda i: (0, 0)),    # wout
            pl.BlockSpec((1, order), lambda i: (0, 0)),          # freq
        ],
        out_specs=pl.BlockSpec((TL, d_model), lambda i: (i, 0)),
        compiler_params=pltpu.CompilerParams(dimension_semantics=("parallel",)),
    )(z, decay, params["w1"], params["b1"], params["w2"], params["b2"],
      params["w3"], params["b3"], params["wout"], params["freq"])


def hyena_filter_forward(params, x, L, *, tap_block=8, compute_dtype=jnp.float32):
    """HyenaFilter.forward(x, L) with k_fwd=None, bias=None (module defaults).

    compute_dtype=jnp.bfloat16 enables the bf16 elementwise path (v6e/v7x);
    accumulation is always f32.
    """
    B, C, Lx = x.shape
    assert Lx == L
    d_model = params["bias"].shape[0]
    # Literal fftconv_ref broadcasting requires d_model == L (see layout note).
    assert d_model == L and C == d_model

    h = compute_filter_pallas(params, L, d_model)        # (L, d_model) == filter(L)[0]

    # Literal semantics: kmat[channel, tap] = h[channel, tap] (taps run over d_model).
    n_taps = min(d_model, L)
    K = _round_up(n_taps, tap_block)

    # Channels-on-lanes / time-on-sublanes layout.  The causal padding is done
    # inside the kernel (VMEM scratch) -- no XLA-side pad of the big tensor.
    u_t = jnp.transpose(x, (0, 2, 1))                     # (B, L, C)
    ktap = jnp.transpose(h, (1, 0))[:n_taps]              # (n_taps, C); ktap[s, c] = h[c, s]
    if K > n_taps:
        ktap = jnp.pad(ktap, ((0, K - n_taps), (0, 0)))   # zero taps -> no contribution
    dvec = params["bias"].astype(jnp.float32)[:, None]    # (L, 1): literal `u * D` (D over time)

    if jnp.dtype(compute_dtype) != jnp.dtype(u_t.dtype):
        u_t = u_t.astype(compute_dtype)
        ktap = ktap.astype(compute_dtype)

    CT = _pick_channel_tile(C)
    grid = (B, C // CT)

    y_t = pl.pallas_call(
        functools.partial(_causal_conv_kernel, n_taps=K, tap_block=tap_block, seq_len=L),
        out_shape=jax.ShapeDtypeStruct((B, L, C), x.dtype),
        grid=grid,
        in_specs=[
            pl.BlockSpec((None, L, CT), lambda b, c: (b, 0, c)),    # input slab (unpadded)
            pl.BlockSpec((K, CT), lambda b, c: (0, c)),             # taps for this C-tile
            pl.BlockSpec((L, 1), lambda b, c: (0, 0)),              # D[t] column
        ],
        out_specs=pl.BlockSpec((None, L, CT), lambda b, c: (b, 0, c)),
        scratch_shapes=[pltpu.VMEM((L + K, CT), compute_dtype)],    # causal-padded slab
        compiler_params=pltpu.CompilerParams(
            dimension_semantics=("parallel", "parallel")),
    )(u_t, ktap, dvec)

    # TODO(synk): fold the (B,C,L)<->(B,L,C) layout changes into the kernel via
    # in-kernel block transposes once validated; for large L, hybridize with a
    # DFT-matrix (MXU) or XLA rfft overlap-save path -- the direct conv is
    # O(C*L*n_taps) VPU work and Pallas has no FFT primitive.
    return jnp.transpose(y_t, (0, 2, 1)).astype(x.dtype)


# -----------------------------------------------------------------------------
# Pure-JAX literal reference (mirrors the torch code op-for-op) for self-check.
# -----------------------------------------------------------------------------
def _filter_ref(params, L):
    z, t = params["z"][:L], params["t"][:L]
    freq = params["freq"]
    h = jnp.sin(freq * (z @ params["w1"] + params["b1"]))
    h = jnp.sin(freq * (h @ params["w2"] + params["b2"]))
    h = jnp.sin(freq * (h @ params["w3"] + params["b3"]))
    h = h @ params["wout"]
    return h * jnp.exp(-t * jnp.abs(params["deltas"]))


def _forward_ref(params, x, L):
    k3 = _filter_ref(params, L)[None]                       # (1, L, d_model)
    D = params["bias"]
    fft_size = 2 * L
    k_f = jnp.fft.rfft(k3, n=fft_size, axis=-1) / fft_size
    u_f = jnp.fft.rfft(x, n=fft_size, axis=-1)
    y = jnp.fft.irfft(u_f * k_f, n=fft_size, axis=-1, norm="forward")[..., :L]
    return (y + x * D).astype(x.dtype)


if __name__ == "__main__":
    d_model = 128
    seq_len = 128        # literal reference broadcasting requires d_model == seq_len
    emb_dim = 3
    order = 16
    batch = 2

    key = jax.random.PRNGKey(0)
    pkey, xkey = jax.random.split(key)
    params = init_hyena_filter_params(pkey, d_model, emb_dim, order, seq_len)
    x = jax.random.normal(xkey, (batch, d_model, seq_len), jnp.float32)

    fwd = jax.jit(functools.partial(hyena_filter_forward, L=seq_len))
    y = jax.block_until_ready(fwd(params, x))

    y_ref = _forward_ref(params, x, seq_len)
    assert y.shape == (batch, d_model, seq_len) and y.dtype == x.dtype
    assert jnp.allclose(y, y_ref, rtol=1e-3, atol=1e-3)
    print("KERNEL_OK")
</pallas_src>

<mosaic_0001>
module attributes {stable_mosaic.version = 11 : i64} {
  func.func @_filter_mlp_kernel(%arg0: i32, %arg1: memref<128x3xf32, #tpu.memory_space<vmem>>, %arg2: memref<128x128xf32, #tpu.memory_space<vmem>>, %arg3: memref<3x16xf32, #tpu.memory_space<vmem>>, %arg4: memref<1x16xf32, #tpu.memory_space<vmem>>, %arg5: memref<16x16xf32, #tpu.memory_space<vmem>>, %arg6: memref<1x16xf32, #tpu.memory_space<vmem>>, %arg7: memref<16x16xf32, #tpu.memory_space<vmem>>, %arg8: memref<1x16xf32, #tpu.memory_space<vmem>>, %arg9: memref<16x128xf32, #tpu.memory_space<vmem>>, %arg10: memref<1x16xf32, #tpu.memory_space<vmem>>, %arg11: memref<128x128xf32, #tpu.memory_space<vmem>>) attributes {dimension_semantics = [#tpu.dimension_semantics<parallel>], iteration_bounds = array<i64: 1>, scalar_prefetch = 0 : i64, scratch_operands = 0 : i64, tpu.core_type = #tpu.core_type<tc>, window_params = [{transform_indices = @transform_0, window_bounds = array<i64: 128, 3>}, {transform_indices = @transform_1, window_bounds = array<i64: 128, 128>}, {pipeline_mode = #tpu.pipeline_mode<synchronous>, transform_indices = @transform_2, window_bounds = array<i64: 3, 16>}, {pipeline_mode = #tpu.pipeline_mode<synchronous>, transform_indices = @transform_3, window_bounds = array<i64: 1, 16>}, {pipeline_mode = #tpu.pipeline_mode<synchronous>, transform_indices = @transform_4, window_bounds = array<i64: 16, 16>}, {pipeline_mode = #tpu.pipeline_mode<synchronous>, transform_indices = @transform_5, window_bounds = array<i64: 1, 16>}, {pipeline_mode = #tpu.pipeline_mode<synchronous>, transform_indices = @transform_6, window_bounds = array<i64: 16, 16>}, {pipeline_mode = #tpu.pipeline_mode<synchronous>, transform_indices = @transform_7, window_bounds = array<i64: 1, 16>}, {pipeline_mode = #tpu.pipeline_mode<synchronous>, transform_indices = @transform_8, window_bounds = array<i64: 16, 128>}, {pipeline_mode = #tpu.pipeline_mode<synchronous>, transform_indices = @transform_9, window_bounds = array<i64: 1, 16>}, {transform_indices = @transform_10, window_bounds = array<i64: 128, 128>}]} {
    %c0 = arith.constant 0 : index
    %c0_0 = arith.constant 0 : index
    %0 = vector.load %arg1[%c0, %c0_0] : memref<128x3xf32, #tpu.memory_space<vmem>>, vector<128x3xf32>
    %c0_1 = arith.constant 0 : index
    %c0_2 = arith.constant 0 : index
    %1 = vector.load %arg10[%c0_1, %c0_2] : memref<1x16xf32, #tpu.memory_space<vmem>>, vector<1x16xf32>
    %c0_3 = arith.constant 0 : index
    %c0_4 = arith.constant 0 : index
    %2 = vector.load %arg3[%c0_3, %c0_4] : memref<3x16xf32, #tpu.memory_space<vmem>>, vector<3x16xf32>
    %cst = arith.constant dense<0.000000e+00> : vector<128x16xf32>
    %3 = tpu.matmul %0, %2, %cst {dimension_numbers = #tpu.dot_dimension_numbers<[1], [0], [0], [1], [0, 0, 1, 1], [], []>} : vector<128x3xf32>, vector<3x16xf32>, vector<128x16xf32> -> vector<128x16xf32>
    %c0_5 = arith.constant 0 : index
    %c0_6 = arith.constant 0 : index
    %4 = vector.load %arg4[%c0_5, %c0_6] : memref<1x16xf32, #tpu.memory_space<vmem>>, vector<1x16xf32>
    %5 = vector.broadcast %4 : vector<1x16xf32> to vector<128x16xf32>
    %6 = arith.addf %3, %5 : vector<128x16xf32>
    %cst_7 = arith.constant 1.000000e+00 : f32
    %7 = vector.broadcast %cst_7 : f32 to vector<1x16xf32>
    %8 = arith.mulf %7, %1 : vector<1x16xf32>
    %9 = vector.broadcast %8 : vector<1x16xf32> to vector<128x16xf32>
    %10 = arith.mulf %9, %6 : vector<128x16xf32>
    %11 = math.sin %10 : vector<128x16xf32>
    %c0_8 = arith.constant 0 : index
    %c0_9 = arith.constant 0 : index
    %12 = vector.load %arg5[%c0_8, %c0_9] : memref<16x16xf32, #tpu.memory_space<vmem>>, vector<16x16xf32>
    %cst_10 = arith.constant dense<0.000000e+00> : vector<128x16xf32>
    %13 = tpu.matmul %11, %12, %cst_10 {dimension_numbers = #tpu.dot_dimension_numbers<[1], [0], [0], [1], [0, 0, 1, 1], [], []>} : vector<128x16xf32>, vector<16x16xf32>, vector<128x16xf32> -> vector<128x16xf32>
    %c0_11 = arith.constant 0 : index
    %c0_12 = arith.constant 0 : index
    %14 = vector.load %arg6[%c0_11, %c0_12] : memref<1x16xf32, #tpu.memory_space<vmem>>, vector<1x16xf32>
    %15 = vector.broadcast %14 : vector<1x16xf32> to vector<128x16xf32>
    %16 = arith.addf %13, %15 : vector<128x16xf32>
    %cst_13 = arith.constant 1.000000e+00 : f32
    %17 = vector.broadcast %cst_13 : f32 to vector<1x16xf32>
    %18 = arith.mulf %17, %1 : vector<1x16xf32>
    %19 = vector.broadcast %18 : vector<1x16xf32> to vector<128x16xf32>
    %20 = arith.mulf %19, %16 : vector<128x16xf32>
    %21 = math.sin %20 : vector<128x16xf32>
    %c0_14 = arith.constant 0 : index
    %c0_15 = arith.constant 0 : index
    %22 = vector.load %arg7[%c0_14, %c0_15] : memref<16x16xf32, #tpu.memory_space<vmem>>, vector<16x16xf32>
    %cst_16 = arith.constant dense<0.000000e+00> : vector<128x16xf32>
    %23 = tpu.matmul %21, %22, %cst_16 {dimension_numbers = #tpu.dot_dimension_numbers<[1], [0], [0], [1], [0, 0, 1, 1], [], []>} : vector<128x16xf32>, vector<16x16xf32>, vector<128x16xf32> -> vector<128x16xf32>
    %c0_17 = arith.constant 0 : index
    %c0_18 = arith.constant 0 : index
    %24 = vector.load %arg8[%c0_17, %c0_18] : memref<1x16xf32, #tpu.memory_space<vmem>>, vector<1x16xf32>
    %25 = vector.broadcast %24 : vector<1x16xf32> to vector<128x16xf32>
    %26 = arith.addf %23, %25 : vector<128x16xf32>
    %cst_19 = arith.constant 1.000000e+00 : f32
    %27 = vector.broadcast %cst_19 : f32 to vector<1x16xf32>
    %28 = arith.mulf %27, %1 : vector<1x16xf32>
    %29 = vector.broadcast %28 : vector<1x16xf32> to vector<128x16xf32>
    %30 = arith.mulf %29, %26 : vector<128x16xf32>
    %31 = math.sin %30 : vector<128x16xf32>
    %c0_20 = arith.constant 0 : index
    %c0_21 = arith.constant 0 : index
    %32 = vector.load %arg9[%c0_20, %c0_21] : memref<16x128xf32, #tpu.memory_space<vmem>>, vector<16x128xf32>
    %cst_22 = arith.constant dense<0.000000e+00> : vector<128x128xf32>
    %33 = tpu.matmul %31, %32, %cst_22 {dimension_numbers = #tpu.dot_dimension_numbers<[1], [0], [0], [1], [0, 0, 1, 1], [], []>} : vector<128x16xf32>, vector<16x128xf32>, vector<128x128xf32> -> vector<128x128xf32>
    %c0_23 = arith.constant 0 : index
    %c0_24 = arith.constant 0 : index
    %34 = vector.load %arg2[%c0_23, %c0_24] : memref<128x128xf32, #tpu.memory_space<vmem>>, vector<128x128xf32>
    %35 = arith.mulf %33, %34 : vector<128x128xf32>
    %c0_25 = arith.constant 0 : index
    %c0_26 = arith.constant 0 : index
    %36 = vector.load %arg11[%c0_25, %c0_26] : memref<128x128xf32, #tpu.memory_space<vmem>>, vector<128x128xf32>
    tpu.vector_store %arg11[%c0_25, %c0_26], %35 {strides = array<i32>} : memref<128x128xf32, #tpu.memory_space<vmem>>, vector<128x128xf32>,
    return
  }
  func.func @transform_0(%arg0: i32) -> (i32, i32) {
    %c0_i32 = arith.constant 0 : i32
    %c0_i32_0 = arith.constant 0 : i32
    return %arg0, %c0_i32 : i32, i32
  }
  func.func @transform_1(%arg0: i32) -> (i32, i32) {
    %c0_i32 = arith.constant 0 : i32
    %c0_i32_0 = arith.constant 0 : i32
    return %arg0, %c0_i32 : i32, i32
  }
  func.func @transform_2(%arg0: i32) -> (i32, i32) {
    %c0_i32 = arith.constant 0 : i32
    %c0_i32_0 = arith.constant 0 : i32
    %c0_i32_1 = arith.constant 0 : i32
    return %c0_i32, %c0_i32_0 : i32, i32
  }
  func.func @transform_3(%arg0: i32) -> (i32, i32) {
    %c0_i32 = arith.constant 0 : i32
    %c0_i32_0 = arith.constant 0 : i32
    %c0_i32_1 = arith.constant 0 : i32
    return %c0_i32, %c0_i32_0 : i32, i32
  }
  func.func @transform_4(%arg0: i32) -> (i32, i32) {
    %c0_i32 = arith.constant 0 : i32
    %c0_i32_0 = arith.constant 0 : i32
    %c0_i32_1 = arith.constant 0 : i32
    return %c0_i32, %c0_i32_0 : i32, i32
  }
  func.func @transform_5(%arg0: i32) -> (i32, i32) {
    %c0_i32 = arith.constant 0 : i32
    %c0_i32_0 = arith.constant 0 : i32
    %c0_i32_1 = arith.constant 0 : i32
    return %c0_i32, %c0_i32_0 : i32, i32
  }
  func.func @transform_6(%arg0: i32) -> (i32, i32) {
    %c0_i32 = arith.constant 0 : i32
    %c0_i32_0 = arith.constant 0 : i32
    %c0_i32_1 = arith.constant 0 : i32
    return %c0_i32, %c0_i32_0 : i32, i32
  }
  func.func @transform_7(%arg0: i32) -> (i32, i32) {
    %c0_i32 = arith.constant 0 : i32
    %c0_i32_0 = arith.constant 0 : i32
    %c0_i32_1 = arith.constant 0 : i32
    return %c0_i32, %c0_i32_0 : i32, i32
  }
  func.func @transform_8(%arg0: i32) -> (i32, i32) {
    %c0_i32 = arith.constant 0 : i32
    %c0_i32_0 = arith.constant 0 : i32
    %c0_i32_1 = arith.constant 0 : i32
    return %c0_i32, %c0_i32_0 : i32, i32
  }
  func.func @transform_9(%arg0: i32) -> (i32, i32) {
    %c0_i32 = arith.constant 0 : i32
    %c0_i32_0 = arith.constant 0 : i32
    %c0_i32_1 = arith.constant 0 : i32
    return %c0_i32, %c0_i32_0 : i32, i32
  }
  func.func @transform_10(%arg0: i32) -> (i32, i32) {
    %c0_i32 = arith.constant 0 : i32
    %c0_i32_0 = arith.constant 0 : i32
    return %arg0, %c0_i32 : i32, i32
  }
}

module attributes {stable_mosaic.version = 11 : i64} {
  func.func @_causal_conv_kernel(%arg0: i32, %arg1: i32, %arg2: memref<1x128x128xf32, #tpu.memory_space<vmem>>, %arg3: memref<128x128xf32, #tpu.memory_space<vmem>>, %arg4: memref<128x1xf32, #tpu.memory_space<vmem>>, %arg5: memref<1x128x128xf32, #tpu.memory_space<vmem>>, %arg6: memref<256x128xf32, #tpu.memory_space<vmem>>) attributes {dimension_semantics = [#tpu.dimension_semantics<parallel>, #tpu.dimension_semantics<parallel>], iteration_bounds = array<i64: 2, 1>, scalar_prefetch = 0 : i64, scratch_operands = 1 : i64, tpu.core_type = #tpu.core_type<tc>, window_params = [{transform_indices = @transform_0, window_bounds = array<i64: 1, 128, 128>}, {transform_indices = @transform_1, window_bounds = array<i64: 128, 128>}, {pipeline_mode = #tpu.pipeline_mode<synchronous>, transform_indices = @transform_2, window_bounds = array<i64: 128, 1>}, {transform_indices = @transform_3, window_bounds = array<i64: 1, 128, 128>}]} {
    %c0 = arith.constant 0 : index
    %c0_0 = arith.constant 0 : index
    %c0_1 = arith.constant 0 : index
    %0 = vector.load %arg2[%c0, %c0_0, %c0_1] : memref<1x128x128xf32, #tpu.memory_space<vmem>>, vector<1x128x128xf32>
    %1 = vector.shape_cast %0 : vector<1x128x128xf32> to vector<128x128xf32>
    %cst = arith.constant 0.000000e+00 : f32
    %2 = vector.broadcast %cst : f32 to vector<128x128xf32>
    %c0_2 = arith.constant 0 : index
    %c0_3 = arith.constant 0 : index
    %3 = vector.load %arg6[%c0_2, %c0_3] : memref<256x128xf32, #tpu.memory_space<vmem>>, vector<128x128xf32>
    tpu.vector_store %arg6[%c0_2, %c0_3], %2 {strides = array<i32>} : memref<256x128xf32, #tpu.memory_space<vmem>>, vector<128x128xf32>,
    %c128 = arith.constant 128 : index
    %c0_4 = arith.constant 0 : index
    %4 = vector.load %arg6[%c128, %c0_4] : memref<256x128xf32, #tpu.memory_space<vmem>>, vector<128x128xf32>
    tpu.vector_store %arg6[%c128, %c0_4], %1 {strides = array<i32>} : memref<256x128xf32, #tpu.memory_space<vmem>>, vector<128x128xf32>,
    %cst_5 = arith.constant 0.000000e+00 : f32
    %5 = vector.broadcast %cst_5 : f32 to vector<128x128xf32>
    %c0_i32 = arith.constant 0 : i32
    %c16_i32 = arith.constant 16 : i32
    %6 = arith.addi %c0_i32, %c16_i32 : i32
    %c1_i32 = arith.constant 1 : i32
    %7 = scf.for %arg7 = %c0_i32 to %6 step %c1_i32 iter_args(%arg8 = %5) -> (vector<128x128xf32>)  : i32 {
      %c8_i32 = arith.constant 8 : i32
      %15 = arith.muli %arg7, %c8_i32 : i32
      %16 = tpu.assume_multiple %15, 8 : i32
      %17 = arith.index_cast %16 : i32 to index
      %c0_12 = arith.constant 0 : index
      %18 = vector.load %arg3[%17, %c0_12] : memref<128x128xf32, #tpu.memory_space<vmem>>, vector<8x128xf32>
      %c1_i32_13 = arith.constant 1 : i32
      %19 = arith.addi %arg7, %c1_i32_13 : i32
      %c8_i32_14 = arith.constant 8 : i32
      %20 = arith.muli %19, %c8_i32_14 : i32
      %c128_i32 = arith.constant 128 : i32
      %21 = arith.subi %c128_i32, %20 : i32
      %22 = tpu.assume_multiple %21, 8 : i32
      %c8_i32_15 = arith.constant 8 : i32
      %23 = arith.addi %22, %c8_i32_15 : i32
      %24 = arith.index_cast %23 : i32 to index
      %c0_16 = arith.constant 0 : index
      %25 = vector.load %arg6[%24, %c0_16] : memref<256x128xf32, #tpu.memory_space<vmem>>, vector<128x128xf32>
      %26 = vector.extract_strided_slice %18 {offsets = [0, 0], sizes = [1, 128], strides = [1, 1]} : vector<8x128xf32> to vector<1x128xf32>
      %27 = vector.broadcast %26 : vector<1x128xf32> to vector<128x128xf32>
      %28 = arith.mulf %25, %27 : vector<128x128xf32>
      %29 = arith.addf %arg8, %28 : vector<128x128xf32>
      %c7_i32 = arith.constant 7 : i32
      %30 = arith.addi %22, %c7_i32 : i32
      %31 = arith.index_cast %30 : i32 to index
      %c0_17 = arith.constant 0 : index
      %32 = vector.load %arg6[%31, %c0_17] : memref<256x128xf32, #tpu.memory_space<vmem>>, vector<128x128xf32>
      %33 = vector.extract_strided_slice %18 {offsets = [1, 0], sizes = [1, 128], strides = [1, 1]} : vector<8x128xf32> to vector<1x128xf32>
      %34 = vector.broadcast %33 : vector<1x128xf32> to vector<128x128xf32>
      %35 = arith.mulf %32, %34 : vector<128x128xf32>
      %36 = arith.addf %29, %35 : vector<128x128xf32>
      %c6_i32 = arith.constant 6 : i32
      %37 = arith.addi %22, %c6_i32 : i32
      %38 = arith.index_cast %37 : i32 to index
      %c0_18 = arith.constant 0 : index
      %39 = vector.load %arg6[%38, %c0_18] : memref<256x128xf32, #tpu.memory_space<vmem>>, vector<128x128xf32>
      %40 = vector.extract_strided_slice %18 {offsets = [2, 0], sizes = [1, 128], strides = [1, 1]} : vector<8x128xf32> to vector<1x128xf32>
      %41 = vector.broadcast %40 : vector<1x128xf32> to vector<128x128xf32>
      %42 = arith.mulf %39, %41 : vector<128x128xf32>
      %43 = arith.addf %36, %42 : vector<128x128xf32>
      %c5_i32 = arith.constant 5 : i32
      %44 = arith.addi %22, %c5_i32 : i32
      %45 = arith.index_cast %44 : i32 to index
      %c0_19 = arith.constant 0 : index
      %46 = vector.load %arg6[%45, %c0_19] : memref<256x128xf32, #tpu.memory_space<vmem>>, vector<128x128xf32>
      %47 = vector.extract_strided_slice %18 {offsets = [3, 0], sizes = [1, 128], strides = [1, 1]} : vector<8x128xf32> to vector<1x128xf32>
      %48 = vector.broadcast %47 : vector<1x128xf32> to vector<128x128xf32>
      %49 = arith.mulf %46, %48 : vector<128x128xf32>
      %50 = arith.addf %43, %49 : vector<128x128xf32>
      %c4_i32 = arith.constant 4 : i32
      %51 = arith.addi %22, %c4_i32 : i32
      %52 = arith.index_cast %51 : i32 to index
      %c0_20 = arith.constant 0 : index
      %53 = vector.load %arg6[%52, %c0_20] : memref<256x128xf32, #tpu.memory_space<vmem>>, vector<128x128xf32>
      %54 = vector.extract_strided_slice %18 {offsets = [4, 0], sizes = [1, 128], strides = [1, 1]} : vector<8x128xf32> to vector<1x128xf32>
      %55 = vector.broadcast %54 : vector<1x128xf32> to vector<128x128xf32>
      %56 = arith.mulf %53, %55 : vector<128x128xf32>
      %57 = arith.addf %50, %56 : vector<128x128xf32>
      %c3_i32 = arith.constant 3 : i32
      %58 = arith.addi %22, %c3_i32 : i32
      %59 = arith.index_cast %58 : i32 to index
      %c0_21 = arith.constant 0 : index
      %60 = vector.load %arg6[%59, %c0_21] : memref<256x128xf32, #tpu.memory_space<vmem>>, vector<128x128xf32>
      %61 = vector.extract_strided_slice %18 {offsets = [5, 0], sizes = [1, 128], strides = [1, 1]} : vector<8x128xf32> to vector<1x128xf32>
      %62 = vector.broadcast %61 : vector<1x128xf32> to vector<128x128xf32>
      %63 = arith.mulf %60, %62 : vector<128x128xf32>
      %64 = arith.addf %57, %63 : vector<128x128xf32>
      %c2_i32 = arith.constant 2 : i32
      %65 = arith.addi %22, %c2_i32 : i32
      %66 = arith.index_cast %65 : i32 to index
      %c0_22 = arith.constant 0 : index
      %67 = vector.load %arg6[%66, %c0_22] : memref<256x128xf32, #tpu.memory_space<vmem>>, vector<128x128xf32>
      %68 = vector.extract_strided_slice %18 {offsets = [6, 0], sizes = [1, 128], strides = [1, 1]} : vector<8x128xf32> to vector<1x128xf32>
      %69 = vector.broadcast %68 : vector<1x128xf32> to vector<128x128xf32>
      %70 = arith.mulf %67, %69 : vector<128x128xf32>
      %71 = arith.addf %64, %70 : vector<128x128xf32>
      %c1_i32_23 = arith.constant 1 : i32
      %72 = arith.addi %22, %c1_i32_23 : i32
      %73 = arith.index_cast %72 : i32 to index
      %c0_24 = arith.constant 0 : index
      %74 = vector.load %arg6[%73, %c0_24] : memref<256x128xf32, #tpu.memory_space<vmem>>, vector<128x128xf32>
      %75 = vector.extract_strided_slice %18 {offsets = [7, 0], sizes = [1, 128], strides = [1, 1]} : vector<8x128xf32> to vector<1x128xf32>
      %76 = vector.broadcast %75 : vector<1x128xf32> to vector<128x128xf32>
      %77 = arith.mulf %74, %76 : vector<128x128xf32>
      %78 = arith.addf %71, %77 : vector<128x128xf32>
      scf.yield %78 : vector<128x128xf32>
    }
    %c16_i32_6 = arith.constant 16 : i32
    %c0_7 = arith.constant 0 : index
    %c0_8 = arith.constant 0 : index
    %8 = vector.load %arg4[%c0_7, %c0_8] : memref<128x1xf32, #tpu.memory_space<vmem>>, vector<128x1xf32>
    %9 = vector.broadcast %8 : vector<128x1xf32> to vector<128x128xf32>
    %10 = arith.mulf %1, %9 : vector<128x128xf32>
    %11 = arith.addf %7, %10 : vector<128x128xf32>
    %c0_9 = arith.constant 0 : index
    %c0_10 = arith.constant 0 : index
    %c0_11 = arith.constant 0 : index
    %12 = vector.load %arg5[%c0_9, %c0_10, %c0_11] : memref<1x128x128xf32, #tpu.memory_space<vmem>>, vector<1x128x128xf32>
    %13 = vector.shape_cast %12 : vector<1x128x128xf32> to vector<128x128xf32>
    %14 = vector.shape_cast %11 : vector<128x128xf32> to vector<1x128x128xf32>
    tpu.vector_store %arg5[%c0_9, %c0_10, %c0_11], %14 {strides = array<i32>} : memref<1x128x128xf32, #tpu.memory_space<vmem>>, vector<1x128x128xf32>,
    return
  }
  func.func @transform_0(%arg0: i32, %arg1: i32) -> (i32, i32, i32) {
    %c0_i32 = arith.constant 0 : i32
    %c0_i32_0 = arith.constant 0 : i32
    return %arg0, %c0_i32, %arg1 : i32, i32, i32
  }
  func.func @transform_1(%arg0: i32, %arg1: i32) -> (i32, i32) {
    %c0_i32 = arith.constant 0 : i32
    %c0_i32_0 = arith.constant 0 : i32
    return %c0_i32, %arg1 : i32, i32
  }
  func.func @transform_2(%arg0: i32, %arg1: i32) -> (i32, i32) {
    %c0_i32 = arith.constant 0 : i32
    %c0_i32_0 = arith.constant 0 : i32
    %c0_i32_1 = arith.constant 0 : i32
    return %c0_i32, %c0_i32_0 : i32, i32
  }
  func.func @transform_3(%arg0: i32, %arg1: i32) -> (i32, i32, i32) {
    %c0_i32 = arith.constant 0 : i32
    %c0_i32_0 = arith.constant 0 : i32
    return %arg0, %c0_i32, %arg1 : i32, i32, i32
  }
}

</mosaic_0001>

<llo_original>
// kernel: hyena_filter_forward.3
$region0: #{hyena_filter_forward.3}
  #allocation0 [shape = 'u32[]', space=smem, size = 0x4, offset = 0x4, fixed_abs, tag = 'smem constant byte address 0x4 - core index']
  #allocation1 [shape = 'u32[144,128]{1,0:T(1,128)}', space=vmem, size = 0x12000, scoped, tag = 'internal scratch']
  #allocation2 [shape = 'f32[256,128]{1,0:T(8,128)}', space=vmem, size = 0x20000, scoped, tag = 'scratch operand']
  %s0 = inlined_call_operand.vmem [shape: f32[2,128,128], index: 0, kind: input, shape index: {}]
  %s1 = inlined_call_operand.vmem [shape: f32[128,128], index: 1, kind: input, shape index: {}]
  %s2 = inlined_call_operand.vmem [shape: f32[128,1], index: 2, kind: input, shape index: {}]
  %s3 = inlined_call_operand.vmem [shape: f32[2,128,128], index: 3, kind: output, shape index: {}]
  %s4 = sld [smem:[#allocation0]]
  $region52: #{hyena_filter_forward.3} parent=0
    _
  %s6 = ssub.s32 1, %s4
  %s7 = scalar_select 0, %s6, %s4
  loop: start=0, step=1, limit=4
  $region2: #{hyena_filter_forward.3} parent=0 // loop_pre_header
    _
  $region3: #{hyena_filter_forward.3} parent=0 // loop_header
    %s9 = sphi 0, %s13
    %p10 = scmp.ge.s32.totalorder %s9, 4
    %s16 = sphi 0, %s28
    %s17 = sphi 0, %s24
    %s18 = sphi 0, %s16
    %s19 = sphi 0, %s17
    %s20 = sphi 0, %s18
    %s21 = sphi 0, %s19
    %s33 = sphi 0, %s35
    %s36 = sphi 0, %s33
    %s37 = sphi 0, %s36
    %s53 = sphi 0, %s37
    %s59 = sphi 0, %s61
    %s62 = sphi 0, %s59
    %s63 = sphi 0, %s62
    %s79 = sphi 0, %s63
    %s83 = sphi 0, %s83
    %s85 = sphi 0, %s83
    %s86 = sphi 0, %s85
    %s100 = sphi 0, %s86
    %s108 = sphi 0, %s110
    %s111 = sphi 0, %s108
    %s112 = sphi 0, %s111
    %s128 = sphi 0, %s112
  $region4: #{hyena_filter_forward.3} parent=0 // loop_header_branch
    %12 = sbr.rel (%p10) target = $region8
  $region5: #{hyena_filter_forward.3} parent=0 // loop_body
    %s14 = ssub.s32 %s9, 1
    %s15 = ssub.s32 %s9, 2
    %s22 = sadd.s32 1, %s17
    %p23 = scmp.ge.s32.totalorder %s22, 1
    %s24 = scalar_select %p23, 0, %s22
    %s25 = sadd.s32 1, %s16
    %s26 = scalar_select %p23, %s25, %s16
    %p27 = scmp.ge.s32.totalorder %s26, 2
    %s28 = scalar_select %p27, 0, %s26
    %s29 = ssub.s32 %s16, %s28
    %s30 = ssub.s32 %s17, %s24
    %s31 = sor.u32 %s29, %s30
    %p32 = scmp.eq.s32.totalorder %s31, 0
    %s34 = sadd.s32 %s33, 1
    %s35 = scalar_select %p32, %s33, %s34
    %p38 = pneg %p32
    %p39 = scmp.eq.s32.totalorder %s9, 1
    %p40 = por %p38, %p39
    %p41 = scmp.ne.s32.totalorder %s33, %s36
    %p42 = scmp.eq.s32.totalorder %s9, 0
    %p43 = por %p41, %p42
    %p44 = scmp.ne.s32.totalorder %s33, %s36
    %p45 = scmp.eq.s32.totalorder %s14, 1
    %p46 = por %p44, %p45
    %p47 = scmp.ne.s32.totalorder %s36, %s37
    %p48 = scmp.eq.s32.totalorder %s14, 0
    %p49 = por %p47, %p48
    %p50 = scmp.ne.s32.totalorder %s36, %s37
    %p51 = scmp.eq.s32.totalorder %s15, 1
    %p52 = por %p50, %p51
    %p54 = scmp.ne.s32.totalorder %s37, %s53
    %p55 = scmp.eq.s32.totalorder %s15, 0
    %p56 = por %p54, %p55
    %s57 = ssub.s32 %s17, %s24
    %p58 = scmp.eq.s32.totalorder %s57, 0
    %s60 = sadd.s32 %s59, 1
    %s61 = scalar_select %p58, %s59, %s60
    %p64 = pneg %p58
    %p65 = scmp.eq.s32.totalorder %s9, 1
    %p66 = por %p64, %p65
    %p67 = scmp.ne.s32.totalorder %s59, %s62
    %p68 = scmp.eq.s32.totalorder %s9, 0
    %p69 = por %p67, %p68
    %p70 = scmp.ne.s32.totalorder %s59, %s62
    %p71 = scmp.eq.s32.totalorder %s14, 1
    %p72 = por %p70, %p71
    %p73 = scmp.ne.s32.totalorder %s62, %s63
    %p74 = scmp.eq.s32.totalorder %s14, 0
    %p75 = por %p73, %p74
    %p76 = scmp.ne.s32.totalorder %s62, %s63
    %p77 = scmp.eq.s32.totalorder %s15, 1
    %p78 = por %p76, %p77
    %p80 = scmp.ne.s32.totalorder %s63, %s79
    %p81 = scmp.eq.s32.totalorder %s15, 0
    %p82 = por %p80, %p81
    %s84 = sadd.s32 %s83, 1
    %p87 = scmp.eq.s32.totalorder %s9, 1
    %p88 = scmp.ne.s32.totalorder %s83, %s85
    %p89 = scmp.eq.s32.totalorder %s9, 0
    %p90 = por %p88, %p89
    %p91 = scmp.ne.s32.totalorder %s83, %s85
    %p92 = scmp.eq.s32.totalorder %s14, 1
    %p93 = por %p91, %p92
    %p94 = scmp.ne.s32.totalorder %s85, %s86
    %p95 = scmp.eq.s32.totalorder %s14, 0
    %p96 = por %p94, %p95
    %p97 = scmp.ne.s32.totalorder %s85, %s86
    %p98 = scmp.eq.s32.totalorder %s15, 1
    %p99 = por %p97, %p98
    %p101 = scmp.ne.s32.totalorder %s86, %s100
    %p102 = scmp.eq.s32.totalorder %s15, 0
    %p103 = por %p101, %p102
    %s104 = ssub.s32 %s16, %s28
    %s105 = ssub.s32 %s17, %s24
    %s106 = sor.u32 %s104, %s105
    %p107 = scmp.eq.s32.totalorder %s106, 0
    %s109 = sadd.s32 %s108, 1
    %s110 = scalar_select %p107, %s108, %s109
    %p113 = pneg %p107
    %p114 = scmp.eq.s32.totalorder %s9, 1
    %p115 = por %p113, %p114
    %p116 = scmp.ne.s32.totalorder %s108, %s111
    %p117 = scmp.eq.s32.totalorder %s9, 0
    %p118 = por %p116, %p117
    %p119 = scmp.ne.s32.totalorder %s108, %s111
    %p120 = scmp.eq.s32.totalorder %s14, 1
    %p121 = por %p119, %p120
    %p122 = scmp.ne.s32.totalorder %s111, %s112
    %p123 = scmp.eq.s32.totalorder %s14, 0
    %p124 = por %p122, %p123
    %p125 = scmp.ne.s32.totalorder %s111, %s112
    %p126 = scmp.eq.s32.totalorder %s15, 1
    %p127 = por %p125, %p126
    %p129 = scmp.ne.s32.totalorder %s112, %s128
    %p130 = scmp.eq.s32.totalorder %s15, 0
    %p131 = por %p129, %p130
    %p132 = scmp.le.s32.totalorder 1, %s9
    %p133 = scmp.lt.s32.totalorder %s9, 3
    %p134 = pnand %p132, %p133
    %p135 = pneg %p134
    // Predicated region
    $region9: #{hyena_filter_forward.3} parent=5 // pred_check
      _
    $region10: #{hyena_filter_forward.3} parent=5 // pred_check_branch
      %137 = sbr.rel (%p134) target = $region12
    $region11: #{hyena_filter_forward.3} parent=5 // pred_region
      %s138 = ssub.s32 %s9, 1
      // Predicated region
      $region13: #{hyena_filter_forward.3} parent=11 // pred_check
        %p139 = pneg %p75
      $region14: #{hyena_filter_forward.3} parent=11 // pred_check_branch
        %141 = sbr.rel (%p139) target = $region16
      $region15: #{hyena_filter_forward.3} parent=11 // pred_region
        %p142 = scmp.lt.s32.totalorder %s19, 0
        %s143 = scalar_select %p142, %s19, 0
        %s144 = smul.addr %s143, 8
        %s145 = scalar_lea.vmem %s1, %s144
      $region16: #{hyena_filter_forward.3} parent=11 // pred_fallthru
        _
      // Predicated region
      $region17: #{hyena_filter_forward.3} parent=11 // pred_check
        %p146 = pneg %p96
      $region18: #{hyena_filter_forward.3} parent=11 // pred_check_branch
        %148 = sbr.rel (%p146) target = $region20
      $region19: #{hyena_filter_forward.3} parent=11 // pred_region
        _
      $region20: #{hyena_filter_forward.3} parent=11 // pred_fallthru
        _
    $region12: #{hyena_filter_forward.3} parent=5 // pred_fallthru
      _
    %p149 = scmp.lt.s32.totalorder %s9, 2
    // Predicated region
    $region21: #{hyena_filter_forward.3} parent=5 // pred_check
      %p150 = pneg %p149
    $region22: #{hyena_filter_forward.3} parent=5 // pred_check_branch
      %152 = sbr.rel (%p150) target = $region24
    $region23: #{hyena_filter_forward.3} parent=5 // pred_region
      // Predicated region
      $region25: #{hyena_filter_forward.3} parent=23 // pred_check
        %p153 = pneg %p43
      $region26: #{hyena_filter_forward.3} parent=23 // pred_check_branch
        %155 = sbr.rel (%p153) target = $region28
      $region27: #{hyena_filter_forward.3} parent=23 // pred_region
        %p156 = scmp.lt.s32.totalorder %s16, 1
        %s157 = scalar_select %p156, %s16, 1
        %p158 = scmp.lt.s32.totalorder %s17, 0
        %s159 = scalar_select %p158, %s17, 0
        %s160 = smul.addr %s157, 16
        %s161 = sadd.s32 %s159, %s160
        %s162 = smul.addr %s161, 8
        %s163 = scalar_lea.vmem %s0, %s162
      $region28: #{hyena_filter_forward.3} parent=23 // pred_fallthru
        _
    $region24: #{hyena_filter_forward.3} parent=5 // pred_fallthru
      _
    %p164 = scmp.le.s32.totalorder 1, %s9
    %p165 = scmp.lt.s32.totalorder %s9, 3
    %p166 = pnand %p164, %p165
    %p167 = pneg %p166
    // Predicated region
    $region29: #{hyena_filter_forward.3} parent=5 // pred_check
      _
    $region30: #{hyena_filter_forward.3} parent=5 // pred_check_branch
      %169 = sbr.rel (%p166) target = $region32
    $region31: #{hyena_filter_forward.3} parent=5 // pred_region
      %s170 = ssub.s32 %s9, 1
      %p171 = scmp.lt.s32.totalorder %s18, 1
      %s172 = scalar_select %p171, %s18, 1
      %p173 = scmp.lt.s32.totalorder %s19, 0
      %s174 = scalar_select %p173, %s19, 0
      %s175 = smul.addr %s172, 16
      %s176 = sadd.s32 %s174, %s175
      %s177 = smul.addr %s176, 8
      %s178 = scalar_lea.vmem %s0, %s177
      %p179 = pneg %p49
      %p180 = pneg %p46
      %p181 = scmp.lt.s32.totalorder %s19, 0
      %s182 = scalar_select %p181, %s19, 0
      %s183 = smul.addr %s182, 8
      %s184 = scalar_lea.vmem %s1, %s183
      %p185 = pneg %p75
      %p186 = pneg %p72
      %p187 = pneg %p96
      %p188 = pneg %p93
      %p189 = pneg %p124
      %p190 = pneg %p121
      %p191 = scmp.lt.s32.totalorder %s18, 1
      %s192 = scalar_select %p191, %s18, 1
      %p193 = scmp.lt.s32.totalorder %s19, 0
      %s194 = scalar_select %p193, %s19, 0
      %s195 = smul.addr %s192, 16
      %s196 = sadd.s32 %s194, %s195
      %s197 = smul.addr %s196, 8
      %s198 = scalar_lea.vmem %s3, %s197
      %p199 = scmp.lt.s32.totalorder %s18, 1
      %s200 = scalar_select %p199, %s18, 1
      %p201 = scmp.lt.s32.totalorder %s19, 0
      %s202 = scalar_select %p201, %s19, 0
      %s203 = smul.addr %s200, 16
      %s204 = sadd.s32 %s202, %s203
      %s205 = smul.addr %s204, 8
      %s206 = scalar_lea.vmem %s0, %s205
      %p207 = scmp.lt.s32.totalorder %s19, 0
      %s208 = scalar_select %p207, %s19, 0
      %s209 = smul.addr %s208, 8
      %s210 = scalar_lea.vmem %s1, %s209
      %p211 = scmp.lt.s32.totalorder %s18, 1
      %s212 = scalar_select %p211, %s18, 1
      %p213 = scmp.lt.s32.totalorder %s19, 0
      %s214 = scalar_select %p213, %s19, 0
      %s215 = smul.addr %s212, 16
      %s216 = sadd.s32 %s214, %s215
      %s217 = smul.addr %s216, 8
      %s218 = scalar_lea.vmem %s3, %s217
      %v219 = vld [vmem:[%s206] sm:$0xff]
      %v220 = vld [vmem:[%s206 + $0x8] sm:$0xff]
      %v221 = vld [vmem:[%s206 + $0x10] sm:$0xff]
      %v222 = vld [vmem:[%s206 + $0x18] sm:$0xff]
      %v223 = vld [vmem:[%s206 + $0x20] sm:$0xff]
      %v224 = vld [vmem:[%s206 + $0x28] sm:$0xff]
      %v225 = vld [vmem:[%s206 + $0x30] sm:$0xff]
      %v226 = vld [vmem:[%s206 + $0x38] sm:$0xff]
      %v227 = vld [vmem:[%s206 + $0x40] sm:$0xff]
      %v228 = vld [vmem:[%s206 + $0x48] sm:$0xff]
      %v229 = vld [vmem:[%s206 + $0x50] sm:$0xff]
      %v230 = vld [vmem:[%s206 + $0x58] sm:$0xff]
      %v231 = vld [vmem:[%s206 + $0x60] sm:$0xff]
      %v232 = vld [vmem:[%s206 + $0x68] sm:$0xff]
      %v233 = vld [vmem:[%s206 + $0x70] sm:$0xff]
      %v234 = vld [vmem:[%s206 + $0x78] sm:$0xff]
      %235 = vst [vmem:[#allocation2] sm:$0xff] 0.0
      %236 = vst [vmem:[#allocation2 + $0x8] sm:$0xff] 0.0
      %237 = vst [vmem:[#allocation2 + $0x10] sm:$0xff] 0.0
      %238 = vst [vmem:[#allocation2 + $0x18] sm:$0xff] 0.0
      %239 = vst [vmem:[#allocation2 + $0x20] sm:$0xff] 0.0
      %240 = vst [vmem:[#allocation2 + $0x28] sm:$0xff] 0.0
      %241 = vst [vmem:[#allocation2 + $0x30] sm:$0xff] 0.0
      %242 = vst [vmem:[#allocation2 + $0x38] sm:$0xff] 0.0
      %243 = vst [vmem:[#allocation2 + $0x40] sm:$0xff] 0.0
      %244 = vst [vmem:[#allocation2 + $0x48] sm:$0xff] 0.0
      %245 = vst [vmem:[#allocation2 + $0x50] sm:$0xff] 0.0
      %246 = vst [vmem:[#allocation2 + $0x58] sm:$0xff] 0.0
      %247 = vst [vmem:[#allocation2 + $0x60] sm:$0xff] 0.0
      %248 = vst [vmem:[#allocation2 + $0x68] sm:$0xff] 0.0
      %249 = vst [vmem:[#allocation2 + $0x70] sm:$0xff] 0.0
      %250 = vst [vmem:[#allocation2 + $0x78] sm:$0xff] 0.0
      %251 = vst [vmem:[#allocation2 + $0x80] sm:$0xff] %v219
      %252 = vst [vmem:[#allocation2 + $0x88] sm:$0xff] %v220
      %253 = vst [vmem:[#allocation2 + $0x90] sm:$0xff] %v221
      %254 = vst [vmem:[#allocation2 + $0x98] sm:$0xff] %v222
      %255 = vst [vmem:[#allocation2 + $0xa0] sm:$0xff] %v223
      %256 = vst [vmem:[#allocation2 + $0xa8] sm:$0xff] %v224
      %257 = vst [vmem:[#allocation2 + $0xb0] sm:$0xff] %v225
      %258 = vst [vmem:[#allocation2 + $0xb8] sm:$0xff] %v226
      %259 = vst [vmem:[#allocation2 + $0xc0] sm:$0xff] %v227
      %260 = vst [vmem:[#allocation2 + $0xc8] sm:$0xff] %v228
      %261 = vst [vmem:[#allocation2 + $0xd0] sm:$0xff] %v229
      %262 = vst [vmem:[#allocation2 + $0xd8] sm:$0xff] %v230
      %263 = vst [vmem:[#allocation2 + $0xe0] sm:$0xff] %v231
      %264 = vst [vmem:[#allocation2 + $0xe8] sm:$0xff] %v232
      %265 = vst [vmem:[#allocation2 + $0xf0] sm:$0xff] %v233
      %266 = vst [vmem:[#allocation2 + $0xf8] sm:$0xff] %v234
      loop: start=0, step=1, limit=16
      $region33: #{hyena_filter_forward.3} parent=31 // loop_pre_header
        _
      $region34: #{hyena_filter_forward.3} parent=31 // loop_header
        %s268 = sphi 0, %s272
        %p269 = scmp.ge.s32.totalorder %s268, 16
        %v273 = vphi 0.0, %v711
        %v274 = vphi 0.0, %v712
        %v275 = vphi 0.0, %v713
        %v276 = vphi 0.0, %v714
        %v277 = vphi 0.0, %v715
        %v278 = vphi 0.0, %v716
        %v279 = vphi 0.0, %v717
        %v280 = vphi 0.0, %v718
        %v281 = vphi 0.0, %v719
        %v282 = vphi 0.0, %v720
        %v283 = vphi 0.0, %v721
        %v284 = vphi 0.0, %v722
        %v285 = vphi 0.0, %v723
        %v286 = vphi 0.0, %v724
        %v287 = vphi 0.0, %v725
        %v288 = vphi 0.0, %v726
      $region35: #{hyena_filter_forward.3} parent=31 // loop_header_branch
        %271 = sbr.rel (%p269) target = $region39
      $region36: #{hyena_filter_forward.3} parent=31 // loop_body
        %s289 = smul.u32 %s268, 8
        %s290 = scalar_lea.vmem %s210, %s289
        %v291 = vld [vmem:[%s290] sm:$0xff]
        %s292 = sadd.s32 %s268, 1
        %s293 = smul.u32 %s292, 8
        %s294 = ssub.s32 128, %s293
        %s295 = sadd.s32 %s294, 8
        %s296 = scalar_lea.vmem [#allocation2], %s295
        %v297 = vld [vmem:[%s296] sm:$0xff]
        %v298 = vld [vmem:[%s296 + $0x8] sm:$0xff]
        %v299 = vld [vmem:[%s296 + $0x10] sm:$0xff]
        %v300 = vld [vmem:[%s296 + $0x18] sm:$0xff]
        %v301 = vld [vmem:[%s296 + $0x20] sm:$0xff]
        %v302 = vld [vmem:[%s296 + $0x28] sm:$0xff]
        %v303 = vld [vmem:[%s296 + $0x30] sm:$0xff]
        %v304 = vld [vmem:[%s296 + $0x38] sm:$0xff]
        %v305 = vld [vmem:[%s296 + $0x40] sm:$0xff]
        %v306 = vld [vmem:[%s296 + $0x48] sm:$0xff]
        %v307 = vld [vmem:[%s296 + $0x50] sm:$0xff]
        %v308 = vld [vmem:[%s296 + $0x58] sm:$0xff]
        %v309 = vld [vmem:[%s296 + $0x60] sm:$0xff]
        %v310 = vld [vmem:[%s296 + $0x68] sm:$0xff]
        %v311 = vld [vmem:[%s296 + $0x70] sm:$0xff]
        %v312 = vld [vmem:[%s296 + $0x78] sm:$0xff]
        %v313 = vlaneseq
        %v314 = vshrl.u32 %v313, 7
        %v315 = vsub.s32 0, %v314
        %v316 = vrot.slane %v291, %v315
        %v317 = vmul.f32 %v297, %v316
        %v318 = vmul.f32 %v298, %v316
        %v319 = vmul.f32 %v299, %v316
        %v320 = vmul.f32 %v300, %v316
        %v321 = vmul.f32 %v301, %v316
        %v322 = vmul.f32 %v302, %v316
        %v323 = vmul.f32 %v303, %v316
        %v324 = vmul.f32 %v304, %v316
        %v325 = vmul.f32 %v305, %v316
        %v326 = vmul.f32 %v306, %v316
        %v327 = vmul.f32 %v307, %v316
        %v328 = vmul.f32 %v308, %v316
        %v329 = vmul.f32 %v309, %v316
        %v330 = vmul.f32 %v310, %v316
        %v331 = vmul.f32 %v311, %v316
        %v332 = vmul.f32 %v312, %v316
        %v333 = vadd.f32 %v273, %v317
        %v334 = vadd.f32 %v274, %v318
        %v335 = vadd.f32 %v275, %v319
        %v336 = vadd.f32 %v276, %v320
        %v337 = vadd.f32 %v277, %v321
        %v338 = vadd.f32 %v278, %v322
        %v339 = vadd.f32 %v279, %v323
        %v340 = vadd.f32 %v280, %v324
        %v341 = vadd.f32 %v281, %v325
        %v342 = vadd.f32 %v282, %v326
        %v343 = vadd.f32 %v283, %v327
        %v344 = vadd.f32 %v284, %v328
        %v345 = vadd.f32 %v285, %v329
        %v346 = vadd.f32 %v286, %v330
        %v347 = vadd.f32 %v287, %v331
        %v348 = vadd.f32 %v288, %v332
        %s349 = sadd.s32 %s294, 7
        %s350 = scalar_lea.vmem [#allocation2], %s349
        %v351 = vld [vmem:[%s350] sm:$0xff]
        %v352 = vld [vmem:[%s350 + $0x8] sm:$0xff]
        %v353 = vld [vmem:[%s350 + $0x10] sm:$0xff]
        %v354 = vld [vmem:[%s350 + $0x18] sm:$0xff]
        %v355 = vld [vmem:[%s350 + $0x20] sm:$0xff]
        %v356 = vld [vmem:[%s350 + $0x28] sm:$0xff]
        %v357 = vld [vmem:[%s350 + $0x30] sm:$0xff]
        %v358 = vld [vmem:[%s350 + $0x38] sm:$0xff]
        %v359 = vld [vmem:[%s350 + $0x40] sm:$0xff]
        %v360 = vld [vmem:[%s350 + $0x48] sm:$0xff]
        %v361 = vld [vmem:[%s350 + $0x50] sm:$0xff]
        %v362 = vld [vmem:[%s350 + $0x58] sm:$0xff]
        %v363 = vld [vmem:[%s350 + $0x60] sm:$0xff]
        %v364 = vld [vmem:[%s350 + $0x68] sm:$0xff]
        %v365 = vld [vmem:[%s350 + $0x70] sm:$0xff]
        %v366 = vld [vmem:[%s350 + $0x78] sm:$0xff]
        %v367 = vlaneseq
        %v368 = vshrl.u32 %v367, 7
        %v369 = vsub.s32 1, %v368
        %v370 = vrot.slane %v291, %v369
        %v371 = vmul.f32 %v351, %v370
        %v372 = vmul.f32 %v352, %v370
        %v373 = vmul.f32 %v353, %v370
        %v374 = vmul.f32 %v354, %v370
        %v375 = vmul.f32 %v355, %v370
        %v376 = vmul.f32 %v356, %v370
        %v377 = vmul.f32 %v357, %v370
        %v378 = vmul.f32 %v358, %v370
        %v379 = vmul.f32 %v359, %v370
        %v380 = vmul.f32 %v360, %v370
        %v381 = vmul.f32 %v361, %v370
        %v382 = vmul.f32 %v362, %v370
        %v383 = vmul.f32 %v363, %v370
        %v384 = vmul.f32 %v364, %v370
        %v385 = vmul.f32 %v365, %v370
        %v386 = vmul.f32 %v366, %v370
        %v387 = vadd.f32 %v333, %v371
        %v388 = vadd.f32 %v334, %v372
        %v389 = vadd.f32 %v335, %v373
        %v390 = vadd.f32 %v336, %v374
        %v391 = vadd.f32 %v337, %v375
        %v392 = vadd.f32 %v338, %v376
        %v393 = vadd.f32 %v339, %v377
        %v394 = vadd.f32 %v340, %v378
        %v395 = vadd.f32 %v341, %v379
        %v396 = vadd.f32 %v342, %v380
        %v397 = vadd.f32 %v343, %v381
        %v398 = vadd.f32 %v344, %v382
        %v399 = vadd.f32 %v345, %v383
        %v400 = vadd.f32 %v346, %v384
        %v401 = vadd.f32 %v347, %v385
        %v402 = vadd.f32 %v348, %v386
        %s403 = sadd.s32 %s294, 6
        %s404 = scalar_lea.vmem [#allocation2], %s403
        %v405 = vld [vmem:[%s404] sm:$0xff]
        %v406 = vld [vmem:[%s404 + $0x8] sm:$0xff]
        %v407 = vld [vmem:[%s404 + $0x10] sm:$0xff]
        %v408 = vld [vmem:[%s404 + $0x18] sm:$0xff]
        %v409 = vld [vmem:[%s404 + $0x20] sm:$0xff]
        %v410 = vld [vmem:[%s404 + $0x28] sm:$0xff]
        %v411 = vld [vmem:[%s404 + $0x30] sm:$0xff]
        %v412 = vld [vmem:[%s404 + $0x38] sm:$0xff]
        %v413 = vld [vmem:[%s404 + $0x40] sm:$0xff]
        %v414 = vld [vmem:[%s404 + $0x48] sm:$0xff]
        %v415 = vld [vmem:[%s404 + $0x50] sm:$0xff]
        %v416 = vld [vmem:[%s404 + $0x58] sm:$0xff]
        %v417 = vld [vmem:[%s404 + $0x60] sm:$0xff]
        %v418 = vld [vmem:[%s404 + $0x68] sm:$0xff]
        %v419 = vld [vmem:[%s404 + $0x70] sm:$0xff]
        %v420 = vld [vmem:[%s404 + $0x78] sm:$0xff]
        %v421 = vlaneseq
        %v422 = vshrl.u32 %v421, 7
        %v423 = vsub.s32 2, %v422
        %v424 = vrot.slane %v291, %v423
        %v425 = vmul.f32 %v405, %v424
        %v426 = vmul.f32 %v406, %v424
        %v427 = vmul.f32 %v407, %v424
        %v428 = vmul.f32 %v408, %v424
        %v429 = vmul.f32 %v409, %v424
        %v430 = vmul.f32 %v410, %v424
        %v431 = vmul.f32 %v411, %v424
        %v432 = vmul.f32 %v412, %v424
        %v433 = vmul.f32 %v413, %v424
        %v434 = vmul.f32 %v414, %v424
        %v435 = vmul.f32 %v415, %v424
        %v436 = vmul.f32 %v416, %v424
        %v437 = vmul.f32 %v417, %v424
        %v438 = vmul.f32 %v418, %v424
        %v439 = vmul.f32 %v419, %v424
        %v440 = vmul.f32 %v420, %v424
        %v441 = vadd.f32 %v387, %v425
        %v442 = vadd.f32 %v388, %v426
        %v443 = vadd.f32 %v389, %v427
        %v444 = vadd.f32 %v390, %v428
        %v445 = vadd.f32 %v391, %v429
        %v446 = vadd.f32 %v392, %v430
        %v447 = vadd.f32 %v393, %v431
        %v448 = vadd.f32 %v394, %v432
        %v449 = vadd.f32 %v395, %v433
        %v450 = vadd.f32 %v396, %v434
        %v451 = vadd.f32 %v397, %v435
        %v452 = vadd.f32 %v398, %v436
        %v453 = vadd.f32 %v399, %v437
        %v454 = vadd.f32 %v400, %v438
        %v455 = vadd.f32 %v401, %v439
        %v456 = vadd.f32 %v402, %v440
        %s457 = sadd.s32 %s294, 5
        %s458 = scalar_lea.vmem [#allocation2], %s457
        %v459 = vld [vmem:[%s458] sm:$0xff]
        %v460 = vld [vmem:[%s458 + $0x8] sm:$0xff]
        %v461 = vld [vmem:[%s458 + $0x10] sm:$0xff]
        %v462 = vld [vmem:[%s458 + $0x18] sm:$0xff]
        %v463 = vld [vmem:[%s458 + $0x20] sm:$0xff]
        %v464 = vld [vmem:[%s458 + $0x28] sm:$0xff]
        %v465 = vld [vmem:[%s458 + $0x30] sm:$0xff]
        %v466 = vld [vmem:[%s458 + $0x38] sm:$0xff]
        %v467 = vld [vmem:[%s458 + $0x40] sm:$0xff]
        %v468 = vld [vmem:[%s458 + $0x48] sm:$0xff]
        %v469 = vld [vmem:[%s458 + $0x50] sm:$0xff]
        %v470 = vld [vmem:[%s458 + $0x58] sm:$0xff]
        %v471 = vld [vmem:[%s458 + $0x60] sm:$0xff]
        %v472 = vld [vmem:[%s458 + $0x68] sm:$0xff]
        %v473 = vld [vmem:[%s458 + $0x70] sm:$0xff]
        %v474 = vld [vmem:[%s458 + $0x78] sm:$0xff]
        %v475 = vlaneseq
        %v476 = vshrl.u32 %v475, 7
        %v477 = vsub.s32 3, %v476
        %v478 = vrot.slane %v291, %v477
        %v479 = vmul.f32 %v459, %v478
        %v480 = vmul.f32 %v460, %v478
        %v481 = vmul.f32 %v461, %v478
        %v482 = vmul.f32 %v462, %v478
        %v483 = vmul.f32 %v463, %v478
        %v484 = vmul.f32 %v464, %v478
        %v485 = vmul.f32 %v465, %v478
        %v486 = vmul.f32 %v466, %v478
        %v487 = vmul.f32 %v467, %v478
        %v488 = vmul.f32 %v468, %v478
        %v489 = vmul.f32 %v469, %v478
        %v490 = vmul.f32 %v470, %v478
        %v491 = vmul.f32 %v471, %v478
        %v492 = vmul.f32 %v472, %v478
        %v493 = vmul.f32 %v473, %v478
        %v494 = vmul.f32 %v474, %v478
        %v495 = vadd.f32 %v441, %v479
        %v496 = vadd.f32 %v442, %v480
        %v497 = vadd.f32 %v443, %v481
        %v498 = vadd.f32 %v444, %v482
        %v499 = vadd.f32 %v445, %v483
        %v500 = vadd.f32 %v446, %v484
        %v501 = vadd.f32 %v447, %v485
        %v502 = vadd.f32 %v448, %v486
        %v503 = vadd.f32 %v449, %v487
        %v504 = vadd.f32 %v450, %v488
        %v505 = vadd.f32 %v451, %v489
        %v506 = vadd.f32 %v452, %v490
        %v507 = vadd.f32 %v453, %v491
        %v508 = vadd.f32 %v454, %v492
        %v509 = vadd.f32 %v455, %v493
        %v510 = vadd.f32 %v456, %v494
        %s511 = sadd.s32 %s294, 4
        %s512 = scalar_lea.vmem [#allocation2], %s511
        %v513 = vld [vmem:[%s512] sm:$0xff]
        %v514 = vld [vmem:[%s512 + $0x8] sm:$0xff]
        %v515 = vld [vmem:[%s512 + $0x10] sm:$0xff]
        %v516 = vld [vmem:[%s512 + $0x18] sm:$0xff]
        %v517 = vld [vmem:[%s512 + $0x20] sm:$0xff]
        %v518 = vld [vmem:[%s512 + $0x28] sm:$0xff]
        %v519 = vld [vmem:[%s512 + $0x30] sm:$0xff]
        %v520 = vld [vmem:[%s512 + $0x38] sm:$0xff]
        %v521 = vld [vmem:[%s512 + $0x40] sm:$0xff]
        %v522 = vld [vmem:[%s512 + $0x48] sm:$0xff]
        %v523 = vld [vmem:[%s512 + $0x50] sm:$0xff]
        %v524 = vld [vmem:[%s512 + $0x58] sm:$0xff]
        %v525 = vld [vmem:[%s512 + $0x60] sm:$0xff]
        %v526 = vld [vmem:[%s512 + $0x68] sm:$0xff]
        %v527 = vld [vmem:[%s512 + $0x70] sm:$0xff]
        %v528 = vld [vmem:[%s512 + $0x78] sm:$0xff]
        %v529 = vlaneseq
        %v530 = vshrl.u32 %v529, 7
        %v531 = vsub.s32 4, %v530
        %v532 = vrot.slane %v291, %v531
        %v533 = vmul.f32 %v513, %v532
        %v534 = vmul.f32 %v514, %v532
        %v535 = vmul.f32 %v515, %v532
        %v536 = vmul.f32 %v516, %v532
        %v537 = vmul.f32 %v517, %v532
        %v538 = vmul.f32 %v518, %v532
        %v539 = vmul.f32 %v519, %v532
        %v540 = vmul.f32 %v520, %v532
        %v541 = vmul.f32 %v521, %v532
        %v542 = vmul.f32 %v522, %v532
        %v543 = vmul.f32 %v523, %v532
        %v544 = vmul.f32 %v524, %v532
        %v545 = vmul.f32 %v525, %v532
        %v546 = vmul.f32 %v526, %v532
        %v547 = vmul.f32 %v527, %v532
        %v548 = vmul.f32 %v528, %v532
        %v549 = vadd.f32 %v495, %v533
        %v550 = vadd.f32 %v496, %v534
        %v551 = vadd.f32 %v497, %v535
        %v552 = vadd.f32 %v498, %v536
        %v553 = vadd.f32 %v499, %v537
        %v554 = vadd.f32 %v500, %v538
        %v555 = vadd.f32 %v501, %v539
        %v556 = vadd.f32 %v502, %v540
        %v557 = vadd.f32 %v503, %v541
        %v558 = vadd.f32 %v504, %v542
        %v559 = vadd.f32 %v505, %v543
        %v560 = vadd.f32 %v506, %v544
        %v561 = vadd.f32 %v507, %v545
        %v562 = vadd.f32 %v508, %v546
        %v563 = vadd.f32 %v509, %v547
        %v564 = vadd.f32 %v510, %v548
        %s565 = sadd.s32 %s294, 3
        %s566 = scalar_lea.vmem [#allocation2], %s565
        %v567 = vld [vmem:[%s566] sm:$0xff]
        %v568 = vld [vmem:[%s566 + $0x8] sm:$0xff]
        %v569 = vld [vmem:[%s566 + $0x10] sm:$0xff]
        %v570 = vld [vmem:[%s566 + $0x18] sm:$0xff]
        %v571 = vld [vmem:[%s566 + $0x20] sm:$0xff]
        %v572 = vld [vmem:[%s566 + $0x28] sm:$0xff]
        %v573 = vld [vmem:[%s566 + $0x30] sm:$0xff]
        %v574 = vld [vmem:[%s566 + $0x38] sm:$0xff]
        %v575 = vld [vmem:[%s566 + $0x40] sm:$0xff]
        %v576 = vld [vmem:[%s566 + $0x48] sm:$0xff]
        %v577 = vld [vmem:[%s566 + $0x50] sm:$0xff]
        %v578 = vld [vmem:[%s566 + $0x58] sm:$0xff]
        %v579 = vld [vmem:[%s566 + $0x60] sm:$0xff]
        %v580 = vld [vmem:[%s566 + $0x68] sm:$0xff]
        %v581 = vld [vmem:[%s566 + $0x70] sm:$0xff]
        %v582 = vld [vmem:[%s566 + $0x78] sm:$0xff]
        %v583 = vlaneseq
        %v584 = vshrl.u32 %v583, 7
        %v585 = vsub.s32 5, %v584
        %v586 = vrot.slane %v291, %v585
        %v587 = vmul.f32 %v567, %v586
        %v588 = vmul.f32 %v568, %v586
        %v589 = vmul.f32 %v569, %v586
        %v590 = vmul.f32 %v570, %v586
        %v591 = vmul.f32 %v571, %v586
        %v592 = vmul.f32 %v572, %v586
        %v593 = vmul.f32 %v573, %v586
        %v594 = vmul.f32 %v574, %v586
        %v595 = vmul.f32 %v575, %v586
        %v596 = vmul.f32 %v576, %v586
        %v597 = vmul.f32 %v577, %v586
        %v598 = vmul.f32 %v578, %v586
        %v599 = vmul.f32 %v579, %v586
        %v600 = vmul.f32 %v580, %v586
        %v601 = vmul.f32 %v581, %v586
        %v602 = vmul.f32 %v582, %v586
        %v603 = vadd.f32 %v549, %v587
        %v604 = vadd.f32 %v550, %v588
        %v605 = vadd.f32 %v551, %v589
        %v606 = vadd.f32 %v552, %v590
        %v607 = vadd.f32 %v553, %v591
        %v608 = vadd.f32 %v554, %v592
        %v609 = vadd.f32 %v555, %v593
        %v610 = vadd.f32 %v556, %v594
        %v611 = vadd.f32 %v557, %v595
        %v612 = vadd.f32 %v558, %v596
        %v613 = vadd.f32 %v559, %v597
        %v614 = vadd.f32 %v560, %v598
        %v615 = vadd.f32 %v561, %v599
        %v616 = vadd.f32 %v562, %v600
        %v617 = vadd.f32 %v563, %v601
        %v618 = vadd.f32 %v564, %v602
        %s619 = sadd.s32 %s294, 2
        %s620 = scalar_lea.vmem [#allocation2], %s619
        %v621 = vld [vmem:[%s620] sm:$0xff]
        %v622 = vld [vmem:[%s620 + $0x8] sm:$0xff]
        %v623 = vld [vmem:[%s620 + $0x10] sm:$0xff]
        %v624 = vld [vmem:[%s620 + $0x18] sm:$0xff]
        %v625 = vld [vmem:[%s620 + $0x20] sm:$0xff]
        %v626 = vld [vmem:[%s620 + $0x28] sm:$0xff]
        %v627 = vld [vmem:[%s620 + $0x30] sm:$0xff]
        %v628 = vld [vmem:[%s620 + $0x38] sm:$0xff]
        %v629 = vld [vmem:[%s620 + $0x40] sm:$0xff]
        %v630 = vld [vmem:[%s620 + $0x48] sm:$0xff]
        %v631 = vld [vmem:[%s620 + $0x50] sm:$0xff]
        %v632 = vld [vmem:[%s620 + $0x58] sm:$0xff]
        %v633 = vld [vmem:[%s620 + $0x60] sm:$0xff]
        %v634 = vld [vmem:[%s620 + $0x68] sm:$0xff]
        %v635 = vld [vmem:[%s620 + $0x70] sm:$0xff]
        %v636 = vld [vmem:[%s620 + $0x78] sm:$0xff]
        %v637 = vlaneseq
        %v638 = vshrl.u32 %v637, 7
        %v639 = vsub.s32 6, %v638
        %v640 = vrot.slane %v291, %v639
        %v641 = vmul.f32 %v621, %v640
        %v642 = vmul.f32 %v622, %v640
        %v643 = vmul.f32 %v623, %v640
        %v644 = vmul.f32 %v624, %v640
        %v645 = vmul.f32 %v625, %v640
        %v646 = vmul.f32 %v626, %v640
        %v647 = vmul.f32 %v627, %v640
        %v648 = vmul.f32 %v628, %v640
        %v649 = vmul.f32 %v629, %v640
        %v650 = vmul.f32 %v630, %v640
        %v651 = vmul.f32 %v631, %v640
        %v652 = vmul.f32 %v632, %v640
        %v653 = vmul.f32 %v633, %v640
        %v654 = vmul.f32 %v634, %v640
        %v655 = vmul.f32 %v635, %v640
        %v656 = vmul.f32 %v636, %v640
        %v657 = vadd.f32 %v603, %v641
        %v658 = vadd.f32 %v604, %v642
        %v659 = vadd.f32 %v605, %v643
        %v660 = vadd.f32 %v606, %v644
        %v661 = vadd.f32 %v607, %v645
        %v662 = vadd.f32 %v608, %v646
        %v663 = vadd.f32 %v609, %v647
        %v664 = vadd.f32 %v610, %v648
        %v665 = vadd.f32 %v611, %v649
        %v666 = vadd.f32 %v612, %v650
        %v667 = vadd.f32 %v613, %v651
        %v668 = vadd.f32 %v614, %v652
        %v669 = vadd.f32 %v615, %v653
        %v670 = vadd.f32 %v616, %v654
        %v671 = vadd.f32 %v617, %v655
        %v672 = vadd.f32 %v618, %v656
        %s673 = sadd.s32 %s294, 1
        %s674 = scalar_lea.vmem [#allocation2], %s673
        %v675 = vld [vmem:[%s674] sm:$0xff]
        %v676 = vld [vmem:[%s674 + $0x8] sm:$0xff]
        %v677 = vld [vmem:[%s674 + $0x10] sm:$0xff]
        %v678 = vld [vmem:[%s674 + $0x18] sm:$0xff]
        %v679 = vld [vmem:[%s674 + $0x20] sm:$0xff]
        %v680 = vld [vmem:[%s674 + $0x28] sm:$0xff]
        %v681 = vld [vmem:[%s674 + $0x30] sm:$0xff]
        %v682 = vld [vmem:[%s674 + $0x38] sm:$0xff]
        %v683 = vld [vmem:[%s674 + $0x40] sm:$0xff]
        %v684 = vld [vmem:[%s674 + $0x48] sm:$0xff]
        %v685 = vld [vmem:[%s674 + $0x50] sm:$0xff]
        %v686 = vld [vmem:[%s674 + $0x58] sm:$0xff]
        %v687 = vld [vmem:[%s674 + $0x60] sm:$0xff]
        %v688 = vld [vmem:[%s674 + $0x68] sm:$0xff]
        %v689 = vld [vmem:[%s674 + $0x70] sm:$0xff]
        %v690 = vld [vmem:[%s674 + $0x78] sm:$0xff]
        %v691 = vlaneseq
        %v692 = vshrl.u32 %v691, 7
        %v693 = vsub.s32 7, %v692
        %v694 = vrot.slane %v291, %v693
        %v695 = vmul.f32 %v675, %v694
        %v696 = vmul.f32 %v676, %v694
        %v697 = vmul.f32 %v677, %v694
        %v698 = vmul.f32 %v678, %v694
        %v699 = vmul.f32 %v679, %v694
        %v700 = vmul.f32 %v680, %v694
        %v701 = vmul.f32 %v681, %v694
        %v702 = vmul.f32 %v682, %v694
        %v703 = vmul.f32 %v683, %v694
        %v704 = vmul.f32 %v684, %v694
        %v705 = vmul.f32 %v685, %v694
        %v706 = vmul.f32 %v686, %v694
        %v707 = vmul.f32 %v687, %v694
        %v708 = vmul.f32 %v688, %v694
        %v709 = vmul.f32 %v689, %v694
        %v710 = vmul.f32 %v690, %v694
        %v711 = vadd.f32 %v657, %v695
        %v712 = vadd.f32 %v658, %v696
        %v713 = vadd.f32 %v659, %v697
        %v714 = vadd.f32 %v660, %v698
        %v715 = vadd.f32 %v661, %v699
        %v716 = vadd.f32 %v662, %v700
        %v717 = vadd.f32 %v663, %v701
        %v718 = vadd.f32 %v664, %v702
        %v719 = vadd.f32 %v665, %v703
        %v720 = vadd.f32 %v666, %v704
        %v721 = vadd.f32 %v667, %v705
        %v722 = vadd.f32 %v668, %v706
        %v723 = vadd.f32 %v669, %v707
        %v724 = vadd.f32 %v670, %v708
        %v725 = vadd.f32 %v671, %v709
        %v726 = vadd.f32 %v672, %v710
      $region37: #{hyena_filter_forward.3} parent=31 // loop_footer
        %s272 = sadd.s32 1, %s268
      $region38: #{hyena_filter_forward.3} parent=31 // loop_footer_branch
        %267 = sbr.rel target = $region34
      $region39: #{hyena_filter_forward.3} parent=31 // loop_exit
        _
      %v727 = vld [vmem:[%s2] sm:$0xff]
      %v728 = vld [vmem:[%s2 + $0x8] sm:$0xff]
      %v729 = vld [vmem:[%s2 + $0x10] sm:$0xff]
      %v730 = vld [vmem:[%s2 + $0x18] sm:$0xff]
      %v731 = vld [vmem:[%s2 + $0x20] sm:$0xff]
      %v732 = vld [vmem:[%s2 + $0x28] sm:$0xff]
      %v733 = vld [vmem:[%s2 + $0x30] sm:$0xff]
      %v734 = vld [vmem:[%s2 + $0x38] sm:$0xff]
      %v735 = vld [vmem:[%s2 + $0x40] sm:$0xff]
      %v736 = vld [vmem:[%s2 + $0x48] sm:$0xff]
      %v737 = vld [vmem:[%s2 + $0x50] sm:$0xff]
      %v738 = vld [vmem:[%s2 + $0x58] sm:$0xff]
      %v739 = vld [vmem:[%s2 + $0x60] sm:$0xff]
      %v740 = vld [vmem:[%s2 + $0x68] sm:$0xff]
      %v741 = vld [vmem:[%s2 + $0x70] sm:$0xff]
      %v742 = vld [vmem:[%s2 + $0x78] sm:$0xff]
      %744 = vset.pattern.permute.xlu0 0
      %745 = vperm.xlu0 %744, %v727
      %v746 = vpop.permute.xlu0 %745
      %749 = vset.pattern.permute.xlu0 0
      %750 = vperm.xlu0 %749, %v728
      %v751 = vpop.permute.xlu0 %750
      %754 = vset.pattern.permute.xlu0 0
      %755 = vperm.xlu0 %754, %v729
      %v756 = vpop.permute.xlu0 %755
      %759 = vset.pattern.permute.xlu0 0
      %760 = vperm.xlu0 %759, %v730
      %v761 = vpop.permute.xlu0 %760
      %764 = vset.pattern.permute.xlu0 0
      %765 = vperm.xlu0 %764, %v731
      %v766 = vpop.permute.xlu0 %765
      %769 = vset.pattern.permute.xlu0 0
      %770 = vperm.xlu0 %769, %v732
      %v771 = vpop.permute.xlu0 %770
      %774 = vset.pattern.permute.xlu0 0
      %775 = vperm.xlu0 %774, %v733
      %v776 = vpop.permute.xlu0 %775
      %779 = vset.pattern.permute.xlu0 0
      %780 = vperm.xlu0 %779, %v734
      %v781 = vpop.permute.xlu0 %780
      %784 = vset.pattern.permute.xlu0 0
      %785 = vperm.xlu0 %784, %v735
      %v786 = vpop.permute.xlu0 %785
      %789 = vset.pattern.permute.xlu0 0
      %790 = vperm.xlu0 %789, %v736
      %v791 = vpop.permute.xlu0 %790
      %794 = vset.pattern.permute.xlu0 0
      %795 = vperm.xlu0 %794, %v737
      %v796 = vpop.permute.xlu0 %795
      %799 = vset.pattern.permute.xlu0 0
      %800 = vperm.xlu0 %799, %v738
      %v801 = vpop.permute.xlu0 %800
      %804 = vset.pattern.permute.xlu0 0
      %805 = vperm.xlu0 %804, %v739
      %v806 = vpop.permute.xlu0 %805
      %809 = vset.pattern.permute.xlu0 0
      %810 = vperm.xlu0 %809, %v740
      %v811 = vpop.permute.xlu0 %810
      %814 = vset.pattern.permute.xlu0 0
      %815 = vperm.xlu0 %814, %v741
      %v816 = vpop.permute.xlu0 %815
      %819 = vset.pattern.permute.xlu0 0
      %820 = vperm.xlu0 %819, %v742
      %v821 = vpop.permute.xlu0 %820
      %v823 = vmul.f32 %v219, %v746
      %v824 = vmul.f32 %v220, %v751
      %v825 = vmul.f32 %v221, %v756
      %v826 = vmul.f32 %v222, %v761
      %v827 = vmul.f32 %v223, %v766
      %v828 = vmul.f32 %v224, %v771
      %v829 = vmul.f32 %v225, %v776
      %v830 = vmul.f32 %v226, %v781
      %v831 = vmul.f32 %v227, %v786
      %v832 = vmul.f32 %v228, %v791
      %v833 = vmul.f32 %v229, %v796
      %v834 = vmul.f32 %v230, %v801
      %v835 = vmul.f32 %v231, %v806
      %v836 = vmul.f32 %v232, %v811
      %v837 = vmul.f32 %v233, %v816
      %v838 = vmul.f32 %v234, %v821
      %v839 = vadd.f32 %v273, %v823
      %v840 = vadd.f32 %v274, %v824
      %v841 = vadd.f32 %v275, %v825
      %v842 = vadd.f32 %v276, %v826
      %v843 = vadd.f32 %v277, %v827
      %v844 = vadd.f32 %v278, %v828
      %v845 = vadd.f32 %v279, %v829
      %v846 = vadd.f32 %v280, %v830
      %v847 = vadd.f32 %v281, %v831
      %v848 = vadd.f32 %v282, %v832
      %v849 = vadd.f32 %v283, %v833
      %v850 = vadd.f32 %v284, %v834
      %v851 = vadd.f32 %v285, %v835
      %v852 = vadd.f32 %v286, %v836
      %v853 = vadd.f32 %v287, %v837
      %v854 = vadd.f32 %v288, %v838
      %855 = vst [vmem:[%s218] sm:$0xff] %v839
      %856 = vst [vmem:[%s218 + $0x8] sm:$0xff] %v840
      %857 = vst [vmem:[%s218 + $0x10] sm:$0xff] %v841
      %858 = vst [vmem:[%s218 + $0x18] sm:$0xff] %v842
      %859 = vst [vmem:[%s218 + $0x20] sm:$0xff] %v843
      %860 = vst [vmem:[%s218 + $0x28] sm:$0xff] %v844
      %861 = vst [vmem:[%s218 + $0x30] sm:$0xff] %v845
      %862 = vst [vmem:[%s218 + $0x38] sm:$0xff] %v846
      %863 = vst [vmem:[%s218 + $0x40] sm:$0xff] %v847
      %864 = vst [vmem:[%s218 + $0x48] sm:$0xff] %v848
      %865 = vst [vmem:[%s218 + $0x50] sm:$0xff] %v849
      %866 = vst [vmem:[%s218 + $0x58] sm:$0xff] %v850
      %867 = vst [vmem:[%s218 + $0x60] sm:$0xff] %v851
      %868 = vst [vmem:[%s218 + $0x68] sm:$0xff] %v852
      %869 = vst [vmem:[%s218 + $0x70] sm:$0xff] %v853
      %870 = vst [vmem:[%s218 + $0x78] sm:$0xff] %v854
      %p871 = scmp.lt.s32.totalorder %s18, 1
      %s872 = scalar_select %p871, %s18, 1
      %p873 = scmp.lt.s32.totalorder %s19, 0
      %s874 = scalar_select %p873, %s19, 0
      %s875 = smul.addr %s872, 16
      %s876 = sadd.s32 %s874, %s875
      %s877 = smul.addr %s876, 8
      %s878 = scalar_lea.vmem %s3, %s877
      // Predicated region
      $region40: #{hyena_filter_forward.3} parent=31 // pred_check
        %p879 = pneg %p121
      $region41: #{hyena_filter_forward.3} parent=31 // pred_check_branch
        %881 = sbr.rel (%p879) target = $region43
      $region42: #{hyena_filter_forward.3} parent=31 // pred_region
        _
      $region43: #{hyena_filter_forward.3} parent=31 // pred_fallthru
        _
    $region32: #{hyena_filter_forward.3} parent=5 // pred_fallthru
      _
    %p882 = scmp.le.s32.totalorder 2, %s9
    // Predicated region
    $region44: #{hyena_filter_forward.3} parent=5 // pred_check
      %p883 = pneg %p882
    $region45: #{hyena_filter_forward.3} parent=5 // pred_check_branch
      %885 = sbr.rel (%p883) target = $region47
    $region46: #{hyena_filter_forward.3} parent=5 // pred_region
      %s886 = ssub.s32 %s9, 2
      // Predicated region
      $region48: #{hyena_filter_forward.3} parent=46 // pred_check
        %p887 = pneg %p127
      $region49: #{hyena_filter_forward.3} parent=46 // pred_check_branch
        %889 = sbr.rel (%p887) target = $region51
      $region50: #{hyena_filter_forward.3} parent=46 // pred_region
        %p890 = scmp.lt.s32.totalorder %s20, 1
        %s891 = scalar_select %p890, %s20, 1
        %p892 = scmp.lt.s32.totalorder %s21, 0
        %s893 = scalar_select %p892, %s21, 0
        %s894 = smul.addr %s891, 16
        %s895 = sadd.s32 %s893, %s894
        %s896 = smul.addr %s895, 8
        %s897 = scalar_lea.vmem %s3, %s896
      $region51: #{hyena_filter_forward.3} parent=46 // pred_fallthru
        _
    $region47: #{hyena_filter_forward.3} parent=5 // pred_fallthru
      _
  $region6: #{hyena_filter_forward.3} parent=0 // loop_footer
    %s13 = sadd.s32 1, %s9
  $region7: #{hyena_filter_forward.3} parent=0 // loop_footer_branch
    %8 = sbr.rel target = $region3
  $region8: #{hyena_filter_forward.3} parent=0 // loop_exit
    _

// kernel: hyena_filter_forward.2
$region0: #{hyena_filter_forward.2}
  #allocation0 [shape = 'u32[]', space=smem, size = 0x4, offset = 0x4, fixed_abs, tag = 'smem constant byte address 0x4 - core index']
  #allocation1 [shape = 'u32[144,128]{1,0:T(1,128)}', space=vmem, size = 0x12000, scoped, tag = 'internal scratch']
  %s0 = inlined_call_operand.vmem [shape: f32[128,3], index: 0, kind: input, shape index: {}]
  %s1 = inlined_call_operand.vmem [shape: f32[128,128], index: 1, kind: input, shape index: {}]
  %s2 = inlined_call_operand.vmem [shape: f32[3,16], index: 2, kind: input, shape index: {}]
  %s3 = inlined_call_operand.vmem [shape: f32[1,16], index: 3, kind: input, shape index: {}]
  %s4 = inlined_call_operand.vmem [shape: f32[16,16], index: 4, kind: input, shape index: {}]
  %s5 = inlined_call_operand.vmem [shape: f32[1,16], index: 5, kind: input, shape index: {}]
  %s6 = inlined_call_operand.vmem [shape: f32[16,16], index: 6, kind: input, shape index: {}]
  %s7 = inlined_call_operand.vmem [shape: f32[1,16], index: 7, kind: input, shape index: {}]
  %s8 = inlined_call_operand.vmem [shape: f32[16,128], index: 8, kind: input, shape index: {}]
  %s9 = inlined_call_operand.vmem [shape: f32[1,16], index: 9, kind: input, shape index: {}]
  %s10 = inlined_call_operand.vmem [shape: f32[128,128], index: 10, kind: output, shape index: {}]
  %s11 = sld [smem:[#allocation0]]
  $region50: #{hyena_filter_forward.2} parent=0
    _
  %s13 = ssub.s32 1, %s11
  %s14 = scalar_select 0, %s13, %s11
  // Predicated region
  $region2: #{hyena_filter_forward.2} parent=0 // pred_check
    _
  $region3: #{hyena_filter_forward.2} parent=0 // pred_check_branch
    %16 = sbr.rel (0) target = $region5
  $region4: #{hyena_filter_forward.2} parent=0 // pred_region
    _
  $region5: #{hyena_filter_forward.2} parent=0 // pred_fallthru
    _
  // Predicated region
  $region6: #{hyena_filter_forward.2} parent=0 // pred_check
    _
  $region7: #{hyena_filter_forward.2} parent=0 // pred_check_branch
    %18 = sbr.rel (0) target = $region9
  $region8: #{hyena_filter_forward.2} parent=0 // pred_region
    _
  $region9: #{hyena_filter_forward.2} parent=0 // pred_fallthru
    _
  // Predicated region
  $region10: #{hyena_filter_forward.2} parent=0 // pred_check
    _
  $region11: #{hyena_filter_forward.2} parent=0 // pred_check_branch
    %20 = sbr.rel (0) target = $region13
  $region12: #{hyena_filter_forward.2} parent=0 // pred_region
    _
  $region13: #{hyena_filter_forward.2} parent=0 // pred_fallthru
    _
  // Predicated region
  $region14: #{hyena_filter_forward.2} parent=0 // pred_check
    _
  $region15: #{hyena_filter_forward.2} parent=0 // pred_check_branch
    %22 = sbr.rel (0) target = $region17
  $region16: #{hyena_filter_forward.2} parent=0 // pred_region
    _
  $region17: #{hyena_filter_forward.2} parent=0 // pred_fallthru
    _
  // Predicated region
  $region18: #{hyena_filter_forward.2} parent=0 // pred_check
    _
  $region19: #{hyena_filter_forward.2} parent=0 // pred_check_branch
    %24 = sbr.rel (0) target = $region21
  $region20: #{hyena_filter_forward.2} parent=0 // pred_region
    _
  $region21: #{hyena_filter_forward.2} parent=0 // pred_fallthru
    _
  // Predicated region
  $region22: #{hyena_filter_forward.2} parent=0 // pred_check
    _
  $region23: #{hyena_filter_forward.2} parent=0 // pred_check_branch
    %26 = sbr.rel (0) target = $region25
  $region24: #{hyena_filter_forward.2} parent=0 // pred_region
    _
  $region25: #{hyena_filter_forward.2} parent=0 // pred_fallthru
    _
  // Predicated region
  $region26: #{hyena_filter_forward.2} parent=0 // pred_check
    _
  $region27: #{hyena_filter_forward.2} parent=0 // pred_check_branch
    %28 = sbr.rel (0) target = $region29
  $region28: #{hyena_filter_forward.2} parent=0 // pred_region
    _
  $region29: #{hyena_filter_forward.2} parent=0 // pred_fallthru
    _
  // Predicated region
  $region30: #{hyena_filter_forward.2} parent=0 // pred_check
    _
  $region31: #{hyena_filter_forward.2} parent=0 // pred_check_branch
    %30 = sbr.rel (0) target = $region33
  $region32: #{hyena_filter_forward.2} parent=0 // pred_region
    _
  $region33: #{hyena_filter_forward.2} parent=0 // pred_fallthru
    _
  // Predicated region
  $region34: #{hyena_filter_forward.2} parent=0 // pred_check
    _
  $region35: #{hyena_filter_forward.2} parent=0 // pred_check_branch
    %32 = sbr.rel (0) target = $region37
  $region36: #{hyena_filter_forward.2} parent=0 // pred_region
    _
  $region37: #{hyena_filter_forward.2} parent=0 // pred_fallthru
    _
  // Predicated region
  $region38: #{hyena_filter_forward.2} parent=0 // pred_check
    _
  $region39: #{hyena_filter_forward.2} parent=0 // pred_check_branch
    %34 = sbr.rel (0) target = $region41
  $region40: #{hyena_filter_forward.2} parent=0 // pred_region
    _
  $region41: #{hyena_filter_forward.2} parent=0 // pred_fallthru
    _
  %v35 = vld [vmem:[%s0] sm:$0xff]
  %v36 = vld [vmem:[%s0 + $0x8] sm:$0xff]
  %v37 = vld [vmem:[%s0 + $0x10] sm:$0xff]
  %v38 = vld [vmem:[%s0 + $0x18] sm:$0xff]
  %v39 = vld [vmem:[%s0 + $0x20] sm:$0xff]
  %v40 = vld [vmem:[%s0 + $0x28] sm:$0xff]
  %v41 = vld [vmem:[%s0 + $0x30] sm:$0xff]
  %v42 = vld [vmem:[%s0 + $0x38] sm:$0xff]
  %v43 = vld [vmem:[%s0 + $0x40] sm:$0xff]
  %v44 = vld [vmem:[%s0 + $0x48] sm:$0xff]
  %v45 = vld [vmem:[%s0 + $0x50] sm:$0xff]
  %v46 = vld [vmem:[%s0 + $0x58] sm:$0xff]
  %v47 = vld [vmem:[%s0 + $0x60] sm:$0xff]
  %v48 = vld [vmem:[%s0 + $0x68] sm:$0xff]
  %v49 = vld [vmem:[%s0 + $0x70] sm:$0xff]
  %v50 = vld [vmem:[%s0 + $0x78] sm:$0xff]
  %v51 = vld [vmem:[%s9] sm:$0x1]
  %v52 = vld [vmem:[%s2] sm:$0x7]
  %v53 = vld [vmem:[%s3] sm:$0x1]
  %v55 = vlaneseq
  %v56 = vshrl.u32 %v55, 7
  %v57 = vsub.s32 0, %v56
  %v58 = vrot.slane %v53, %v57
  %vm60 = vcmask 23552
  %v62 = vsel %vm60, %v35, 0
  %v65 = vsel %vm60, %v36, 0
  %v68 = vsel %vm60, %v37, 0
  %v71 = vsel %vm60, %v38, 0
  %v74 = vsel %vm60, %v39, 0
  %v77 = vsel %vm60, %v40, 0
  %v80 = vsel %vm60, %v41, 0
  %v83 = vsel %vm60, %v42, 0
  %v86 = vsel %vm60, %v43, 0
  %v89 = vsel %vm60, %v44, 0
  %v92 = vsel %vm60, %v45, 0
  %v95 = vsel %vm60, %v46, 0
  %v98 = vsel %vm60, %v47, 0
  %v101 = vsel %vm60, %v48, 0
  %v104 = vsel %vm60, %v49, 0
  %v107 = vsel %vm60, %v50, 0
  %vm109 = vcmask 1042432
  %v111 = vsel %vm109, %v52, 0
  %113 = vmatprep.subr.mxu0 0.0
  %114 = vmatpush1.msra.mxu0 0.0
  %115 = vmatprep.subr.mxu0 0.0
  %116 = vmatpush1.msra.mxu0 0.0
  %117 = vmatprep.subr.mxu0 0.0
  %118 = vmatpush1.msra.mxu0 0.0
  %119 = vmatprep.subr.mxu0 0.0
  %120 = vmatpush1.msra.mxu0 0.0
  %121 = vmatprep.subr.mxu0 0.0
  %122 = vmatpush1.msra.mxu0 0.0
  %123 = vmatprep.subr.mxu0 0.0
  %124 = vmatpush1.msra.mxu0 0.0
  %125 = vmatprep.subr.mxu0 0.0
  %126 = vmatpush1.msra.mxu0 0.0
  %127 = vmatprep.subr.mxu0 0.0
  %128 = vmatpush1.msra.mxu0 0.0
  %129 = vmatprep.subr.mxu0 0.0
  %130 = vmatpush1.msra.mxu0 0.0
  %131 = vmatprep.subr.mxu0 0.0
  %132 = vmatpush1.msra.mxu0 0.0
  %133 = vmatprep.subr.mxu0 0.0
  %134 = vmatpush1.msra.mxu0 0.0
  %135 = vmatprep.subr.mxu0 0.0
  %136 = vmatpush1.msra.mxu0 0.0
  %137 = vmatprep.subr.mxu0 0.0
  %138 = vmatpush1.msra.mxu0 0.0
  %139 = vmatprep.subr.mxu0 0.0
  %140 = vmatpush1.msra.mxu0 0.0
  %141 = vmatprep.subr.mxu0 0.0
  %142 = vmatpush1.msra.mxu0 0.0
  %143 = vmatprep.subr.mxu0 0.0
  %144 = vmatpush1.msra.mxu0 %v111
  %145 = vmatprep.subr.mxu0 0.0
  %146 = vmatpush2.msra.mxu0 0.0
  %147 = vmatprep.subr.mxu0 0.0
  %148 = vmatpush2.msra.mxu0 0.0
  %149 = vmatprep.subr.mxu0 0.0
  %150 = vmatpush2.msra.mxu0 0.0
  %151 = vmatprep.subr.mxu0 0.0
  %152 = vmatpush2.msra.mxu0 0.0
  %153 = vmatprep.subr.mxu0 0.0
  %154 = vmatpush2.msra.mxu0 0.0
  %155 = vmatprep.subr.mxu0 0.0
  %156 = vmatpush2.msra.mxu0 0.0
  %157 = vmatprep.subr.mxu0 0.0
  %158 = vmatpush2.msra.mxu0 0.0
  %159 = vmatprep.subr.mxu0 0.0
  %160 = vmatpush2.msra.mxu0 0.0
  %161 = vmatprep.subr.mxu0 0.0
  %162 = vmatpush2.msra.mxu0 0.0
  %163 = vmatprep.subr.mxu0 0.0
  %164 = vmatpush2.msra.mxu0 0.0
  %165 = vmatprep.subr.mxu0 0.0
  %166 = vmatpush2.msra.mxu0 0.0
  %167 = vmatprep.subr.mxu0 0.0
  %168 = vmatpush2.msra.mxu0 0.0
  %169 = vmatprep.subr.mxu0 0.0
  %170 = vmatpush2.msra.mxu0 0.0
  %171 = vmatprep.subr.mxu0 0.0
  %172 = vmatpush2.msra.mxu0 0.0
  %173 = vmatprep.subr.mxu0 0.0
  %174 = vmatpush2.msra.mxu0 0.0
  %175 = vmatprep.subr.mxu0 0.0
  %176 = vmatpush2.msra.mxu0 0.0
  %177 = vmatprep.mubr.f32.mxu0 0.0
  %178 = vmatmul.mubr.f32.gmra.mxu0 %v62
  %v179 = vpop.f32.mrf.mxu0
  %v180 = vadd.f32 %v58, %v179
  %v181 = vpop.f32.mrf.mxu0
  %182 = vmatprep.mubr.f32.mxu0 0.0
  %183 = vmatmul.mubr.f32.gmra.mxu0 %v65
  %v184 = vpop.f32.mrf.mxu0
  %v185 = vadd.f32 %v58, %v184
  %v186 = vpop.f32.mrf.mxu0
  %187 = vmatprep.mubr.f32.mxu0 0.0
  %188 = vmatmul.mubr.f32.gmra.mxu0 %v68
  %v189 = vpop.f32.mrf.mxu0
  %v190 = vadd.f32 %v58, %v189
  %v191 = vpop.f32.mrf.mxu0
  %192 = vmatprep.mubr.f32.mxu0 0.0
  %193 = vmatmul.mubr.f32.gmra.mxu0 %v71
  %v194 = vpop.f32.mrf.mxu0
  %v195 = vadd.f32 %v58, %v194
  %v196 = vpop.f32.mrf.mxu0
  %197 = vmatprep.mubr.f32.mxu0 0.0
  %198 = vmatmul.mubr.f32.gmra.mxu0 %v74
  %v199 = vpop.f32.mrf.mxu0
  %v200 = vadd.f32 %v58, %v199
  %v201 = vpop.f32.mrf.mxu0
  %202 = vmatprep.mubr.f32.mxu0 0.0
  %203 = vmatmul.mubr.f32.gmra.mxu0 %v77
  %v204 = vpop.f32.mrf.mxu0
  %v205 = vadd.f32 %v58, %v204
  %v206 = vpop.f32.mrf.mxu0
  %207 = vmatprep.mubr.f32.mxu0 0.0
  %208 = vmatmul.mubr.f32.gmra.mxu0 %v80
  %v209 = vpop.f32.mrf.mxu0
  %v210 = vadd.f32 %v58, %v209
  %v211 = vpop.f32.mrf.mxu0
  %212 = vmatprep.mubr.f32.mxu0 0.0
  %213 = vmatmul.mubr.f32.gmra.mxu0 %v83
  %v214 = vpop.f32.mrf.mxu0
  %v215 = vadd.f32 %v58, %v214
  %v216 = vpop.f32.mrf.mxu0
  %217 = vmatprep.mubr.f32.mxu0 0.0
  %218 = vmatmul.mubr.f32.gmra.mxu0 %v86
  %v219 = vpop.f32.mrf.mxu0
  %v220 = vadd.f32 %v58, %v219
  %v221 = vpop.f32.mrf.mxu0
  %222 = vmatprep.mubr.f32.mxu0 0.0
  %223 = vmatmul.mubr.f32.gmra.mxu0 %v89
  %v224 = vpop.f32.mrf.mxu0
  %v225 = vadd.f32 %v58, %v224
  %v226 = vpop.f32.mrf.mxu0
  %227 = vmatprep.mubr.f32.mxu0 0.0
  %228 = vmatmul.mubr.f32.gmra.mxu0 %v92
  %v229 = vpop.f32.mrf.mxu0
  %v230 = vadd.f32 %v58, %v229
  %v231 = vpop.f32.mrf.mxu0
  %232 = vmatprep.mubr.f32.mxu0 0.0
  %233 = vmatmul.mubr.f32.gmra.mxu0 %v95
  %v234 = vpop.f32.mrf.mxu0
  %v235 = vadd.f32 %v58, %v234
  %v236 = vpop.f32.mrf.mxu0
  %237 = vmatprep.mubr.f32.mxu0 0.0
  %238 = vmatmul.mubr.f32.gmra.mxu0 %v98
  %v239 = vpop.f32.mrf.mxu0
  %v240 = vadd.f32 %v58, %v239
  %v241 = vpop.f32.mrf.mxu0
  %242 = vmatprep.mubr.f32.mxu0 0.0
  %243 = vmatmul.mubr.f32.gmra.mxu0 %v101
  %v244 = vpop.f32.mrf.mxu0
  %v245 = vadd.f32 %v58, %v244
  %v246 = vpop.f32.mrf.mxu0
  %247 = vmatprep.mubr.f32.mxu0 0.0
  %248 = vmatmul.mubr.f32.gmra.mxu0 %v104
  %v249 = vpop.f32.mrf.mxu0
  %v250 = vadd.f32 %v58, %v249
  %v251 = vpop.f32.mrf.mxu0
  %252 = vmatprep.mubr.f32.mxu0 0.0
  %253 = vmatmul.mubr.f32.gmra.mxu0 %v107
  %v254 = vpop.f32.mrf.mxu0
  %v255 = vadd.f32 %v58, %v254
  %v256 = vpop.f32.mrf.mxu0
  %257 = vdwg.mxu0
  %v259 = vlaneseq
  %v260 = vshrl.u32 %v259, 7
  %v261 = vsub.s32 0, %v260
  %v262 = vrot.slane %v51, %v261
  %v264 = vmul.f32 %v262, %v180
  %v265 = vmul.f32 %v262, %v185
  %v266 = vmul.f32 %v262, %v190
  %v267 = vmul.f32 %v262, %v195
  %v268 = vmul.f32 %v262, %v200
  %v269 = vmul.f32 %v262, %v205
  %v270 = vmul.f32 %v262, %v210
  %v271 = vmul.f32 %v262, %v215
  %v272 = vmul.f32 %v262, %v220
  %v273 = vmul.f32 %v262, %v225
  %v274 = vmul.f32 %v262, %v230
  %v275 = vmul.f32 %v262, %v235
  %v276 = vmul.f32 %v262, %v240
  %v277 = vmul.f32 %v262, %v245
  %v278 = vmul.f32 %v262, %v250
  %v279 = vmul.f32 %v262, %v255
  %v280 = vand.u32 2147483647, %v264
  %vm281 = vcmp.le.f32.partialorder %v280, 0.7853982
  %vm282 = vcmp.lt.s32.totalorder %v264, 0
  %v283 = vand.u32 %v264, 2139095040
  %v284 = vshrl.u32 %v283, 23
  %v285 = vsub.s32 %v284, 127
  %v286 = vand.u32 2147483647, %v264
  %v287 = vand.u32 %v286, 8388607
  %v288 = vor.u32 %v287, 8388608
  %v289 = vsub.s32 0, %v288
  %v290 = vadd.s32 %v285, 1
  %vm291 = vcmp.gt.s32.totalorder %v290, 0
  %v292 = vsel %vm291, %v290, 0
  %v293 = vshrl.u32 %v292, 5
  %v294 = vand.u32 %v292, 31
  %v295 = vsub.s32 32, %v294
  %v296 = vshrl.u32 683565275, %v295
  %v297 = vshll.u32 683565275, %v294
  %v298 = vshrl.u32 2475754826, %v295
  %v299 = vor.u32 %v297, %v298
  %v300 = vshll.u32 2475754826, %v294
  %v301 = vshrl.u32 2131351028, %v295
  %v302 = vor.u32 %v300, %v301
  %v303 = vshll.u32 2131351028, %v294
  %v304 = vshrl.u32 2102212464, %v295
  %v305 = vor.u32 %v303, %v304
  %v306 = vshll.u32 2102212464, %v294
  %v307 = vshrl.u32 920167782, %v295
  %v308 = vor.u32 %v306, %v307
  %v309 = vshll.u32 920167782, %v294
  %v310 = vshrl.u32 1326507024, %v295
  %v311 = vor.u32 %v309, %v310
  %vm312 = vcmp.lt.s32.totalorder %v293, 1
  %vm313 = vcmp.lt.s32.totalorder %v293, 2
  %vm314 = vcmp.lt.s32.totalorder %v293, 3
  %vm315 = vcmp.lt.s32.totalorder %v293, 4
  %v316 = vsel %vm312, %v296, %v299
  %v317 = vsel %vm315, %v305, 2102212464
  %v318 = vsel %vm314, %v302, %v317
  %v319 = vsel %vm313, %v316, %v318
  %v320 = vsel %vm312, %v299, %v302
  %v321 = vsel %vm315, %v308, 920167782
  %v322 = vsel %vm314, %v305, %v321
  %v323 = vsel %vm313, %v320, %v322
  %v324 = vsel %vm312, %v302, %v305
  %v325 = vsel %vm315, %v311, 1326507024
  %v326 = vsel %vm314, %v308, %v325
  %v327 = vsel %vm313, %v324, %v326
  %v328 = vshll.u32 %v288, 8
  %v329 = vmul.u32.u64.compose %v328, %v327
  %v330 = vextract.low.u32 %v329
  %v331 = vextract.high.u32 %v329
  %v332 = vmul.u32.u64.compose %v328, %v323
  %v333 = vextract.low.u32 %v332
  %v334 = vextract.high.u32 %v332
  %v335 = vmul.u32 %v328, %v319
  %v336 = vadd.s32 %v331, %v333
  %vm337 = vc.u32 %v331, %v333
  %v338 = vadd.s32 %v334, 1
  %v339 = vsel %vm337, %v338, %v334
  %v340 = vadd.s32 %v335, %v339
  %v341 = vadd.s32 %v340, 536870912
  %v342 = vshrl.u32 %v341, 30
  %v343 = vshll.u32 %v342, 30
  %v344 = vsub.s32 %v340, %v343
  %vm345 = vcmp.lt.s32.totalorder %v344, 0
  %v346 = vsub.s32 0, %v344
  %v347 = vsel %vm345, %v346, %v344
  %v348 = vclz %v347
  %v349 = vsub.s32 %v348, 2
  %vm350 = vcmp.gt.s32.totalorder 0, %v349
  %v351 = vsel %vm350, 0, %v349
  %v352 = vsub.s32 32, %v351
  %v353 = vshll.u32 %v344, %v351
  %v354 = vshrl.u32 %v336, %v352
  %v355 = vor.u32 %v353, %v354
  %v356 = vsub.s32 4294967266, %v351
  %v357 = vadd.s32 %v356, 127
  %v358 = vshll.u32 %v357, 23
  %v359 = vor.u32 4788187, %v358
  %v360 = vand.u32 2147483647, %v359
  %v362 = vcvt.s32.f32 %v355
  %v363 = vmul.f32 %v362, %v360
  %v364 = vxor.u32 %v363, 2147483648
  %v365 = vsel %vm282, %v364, %v363
  %v366 = vsub.s32 4, %v342
  %v367 = vsel %vm282, %v366, %v342
  %v368 = vsel %vm281, %v264, %v365
  %v369 = vsel %vm281, 0, %v367
  %v370 = vcosq.f32.pop %v368
  %v371 = vsinq.f32.pop %v368
  %vm372 = vweird.f32 %v264
  %v373 = vadd.s32 %v369, 3
  %v374 = vand.u32 %v373, 3
  %vm375 = vcmp.lt.s32.totalorder %v374, 2
  %vm376 = vcmp.eq.s32.totalorder %v374, 0
  %v377 = vxor.u32 %v371, 2147483648
  %v378 = vsel %vm376, %v370, %v377
  %vm379 = vcmp.eq.s32.totalorder %v374, 2
  %v380 = vxor.u32 %v370, 2147483648
  %v381 = vsel %vm379, %v380, %v371
  %v382 = vsel %vm375, %v378, %v381
  %v383 = vsel %vm372, nan, %v382
  %v384 = vand.u32 2147483647, %v265
  %vm385 = vcmp.le.f32.partialorder %v384, 0.7853982
  %vm386 = vcmp.lt.s32.totalorder %v265, 0
  %v387 = vand.u32 %v265, 2139095040
  %v388 = vshrl.u32 %v387, 23
  %v389 = vsub.s32 %v388, 127
  %v390 = vand.u32 2147483647, %v265
  %v391 = vand.u32 %v390, 8388607
  %v392 = vor.u32 %v391, 8388608
  %v393 = vsub.s32 0, %v392
  %v394 = vadd.s32 %v389, 1
  %vm395 = vcmp.gt.s32.totalorder %v394, 0
  %v396 = vsel %vm395, %v394, 0
  %v397 = vshrl.u32 %v396, 5
  %v398 = vand.u32 %v396, 31
  %v399 = vsub.s32 32, %v398
  %v400 = vshrl.u32 683565275, %v399
  %v401 = vshll.u32 683565275, %v398
  %v402 = vshrl.u32 2475754826, %v399
  %v403 = vor.u32 %v401, %v402
  %v404 = vshll.u32 2475754826, %v398
  %v405 = vshrl.u32 2131351028, %v399
  %v406 = vor.u32 %v404, %v405
  %v407 = vshll.u32 2131351028, %v398
  %v408 = vshrl.u32 2102212464, %v399
  %v409 = vor.u32 %v407, %v408
  %v410 = vshll.u32 2102212464, %v398
  %v411 = vshrl.u32 920167782, %v399
  %v412 = vor.u32 %v410, %v411
  %v413 = vshll.u32 920167782, %v398
  %v414 = vshrl.u32 1326507024, %v399
  %v415 = vor.u32 %v413, %v414
  %vm416 = vcmp.lt.s32.totalorder %v397, 1
  %vm417 = vcmp.lt.s32.totalorder %v397, 2
  %vm418 = vcmp.lt.s32.totalorder %v397, 3
  %vm419 = vcmp.lt.s32.totalorder %v397, 4
  %v420 = vsel %vm416, %v400, %v403
  %v421 = vsel %vm419, %v409, 2102212464
  %v422 = vsel %vm418, %v406, %v421
  %v423 = vsel %vm417, %v420, %v422
  %v424 = vsel %vm416, %v403, %v406
  %v425 = vsel %vm419, %v412, 920167782
  %v426 = vsel %vm418, %v409, %v425
  %v427 = vsel %vm417, %v424, %v426
  %v428 = vsel %vm416, %v406, %v409
  %v429 = vsel %vm419, %v415, 1326507024
  %v430 = vsel %vm418, %v412, %v429
  %v431 = vsel %vm417, %v428, %v430
  %v432 = vshll.u32 %v392, 8
  %v433 = vmul.u32.u64.compose %v432, %v431
  %v434 = vextract.low.u32 %v433
  %v435 = vextract.high.u32 %v433
  %v436 = vmul.u32.u64.compose %v432, %v427
  %v437 = vextract.low.u32 %v436
  %v438 = vextract.high.u32 %v436
  %v439 = vmul.u32 %v432, %v423
  %v440 = vadd.s32 %v435, %v437
  %vm441 = vc.u32 %v435, %v437
  %v442 = vadd.s32 %v438, 1
  %v443 = vsel %vm441, %v442, %v438
  %v444 = vadd.s32 %v439, %v443
  %v445 = vadd.s32 %v444, 536870912
  %v446 = vshrl.u32 %v445, 30
  %v447 = vshll.u32 %v446, 30
  %v448 = vsub.s32 %v444, %v447
  %vm449 = vcmp.lt.s32.totalorder %v448, 0
  %v450 = vsub.s32 0, %v448
  %v451 = vsel %vm449, %v450, %v448
  %v452 = vclz %v451
  %v453 = vsub.s32 %v452, 2
  %vm454 = vcmp.gt.s32.totalorder 0, %v453
  %v455 = vsel %vm454, 0, %v453
  %v456 = vsub.s32 32, %v455
  %v457 = vshll.u32 %v448, %v455
  %v458 = vshrl.u32 %v440, %v456
  %v459 = vor.u32 %v457, %v458
  %v460 = vsub.s32 4294967266, %v455
  %v461 = vadd.s32 %v460, 127
  %v462 = vshll.u32 %v461, 23
  %v463 = vor.u32 4788187, %v462
  %v464 = vand.u32 2147483647, %v463
  %v466 = vcvt.s32.f32 %v459
  %v467 = vmul.f32 %v466, %v464
  %v468 = vxor.u32 %v467, 2147483648
  %v469 = vsel %vm386, %v468, %v467
  %v470 = vsub.s32 4, %v446
  %v471 = vsel %vm386, %v470, %v446
  %v472 = vsel %vm385, %v265, %v469
  %v473 = vsel %vm385, 0, %v471
  %v474 = vcosq.f32.pop %v472
  %v475 = vsinq.f32.pop %v472
  %vm476 = vweird.f32 %v265
  %v477 = vadd.s32 %v473, 3
  %v478 = vand.u32 %v477, 3
  %vm479 = vcmp.lt.s32.totalorder %v478, 2
  %vm480 = vcmp.eq.s32.totalorder %v478, 0
  %v481 = vxor.u32 %v475, 2147483648
  %v482 = vsel %vm480, %v474, %v481
  %vm483 = vcmp.eq.s32.totalorder %v478, 2
  %v484 = vxor.u32 %v474, 2147483648
  %v485 = vsel %vm483, %v484, %v475
  %v486 = vsel %vm479, %v482, %v485
  %v487 = vsel %vm476, nan, %v486
  %v488 = vand.u32 2147483647, %v266
  %vm489 = vcmp.le.f32.partialorder %v488, 0.7853982
  %vm490 = vcmp.lt.s32.totalorder %v266, 0
  %v491 = vand.u32 %v266, 2139095040
  %v492 = vshrl.u32 %v491, 23
  %v493 = vsub.s32 %v492, 127
  %v494 = vand.u32 2147483647, %v266
  %v495 = vand.u32 %v494, 8388607
  %v496 = vor.u32 %v495, 8388608
  %v497 = vsub.s32 0, %v496
  %v498 = vadd.s32 %v493, 1
  %vm499 = vcmp.gt.s32.totalorder %v498, 0
  %v500 = vsel %vm499, %v498, 0
  %v501 = vshrl.u32 %v500, 5
  %v502 = vand.u32 %v500, 31
  %v503 = vsub.s32 32, %v502
  %v504 = vshrl.u32 683565275, %v503
  %v505 = vshll.u32 683565275, %v502
  %v506 = vshrl.u32 2475754826, %v503
  %v507 = vor.u32 %v505, %v506
  %v508 = vshll.u32 2475754826, %v502
  %v509 = vshrl.u32 2131351028, %v503
  %v510 = vor.u32 %v508, %v509
  %v511 = vshll.u32 2131351028, %v502
  %v512 = vshrl.u32 2102212464, %v503
  %v513 = vor.u32 %v511, %v512
  %v514 = vshll.u32 2102212464, %v502
  %v515 = vshrl.u32 920167782, %v503
  %v516 = vor.u32 %v514, %v515
  %v517 = vshll.u32 920167782, %v502
  %v518 = vshrl.u32 1326507024, %v503
  %v519 = vor.u32 %v517, %v518
  %vm520 = vcmp.lt.s32.totalorder %v501, 1
  %vm521 = vcmp.lt.s32.totalorder %v501, 2
  %vm522 = vcmp.lt.s32.totalorder %v501, 3
  %vm523 = vcmp.lt.s32.totalorder %v501, 4
  %v524 = vsel %vm520, %v504, %v507
  %v525 = vsel %vm523, %v513, 2102212464
  %v526 = vsel %vm522, %v510, %v525
  %v527 = vsel %vm521, %v524, %v526
  %v528 = vsel %vm520, %v507, %v510
  %v529 = vsel %vm523, %v516, 920167782
  %v530 = vsel %vm522, %v513, %v529
  %v531 = vsel %vm521, %v528, %v530
  %v532 = vsel %vm520, %v510, %v513
  %v533 = vsel %vm523, %v519, 1326507024
  %v534 = vsel %vm522, %v516, %v533
  %v535 = vsel %vm521, %v532, %v534
  %v536 = vshll.u32 %v496, 8
  %v537 = vmul.u32.u64.compose %v536, %v535
  %v538 = vextract.low.u32 %v537
  %v539 = vextract.high.u32 %v537
  %v540 = vmul.u32.u64.compose %v536, %v531
  %v541 = vextract.low.u32 %v540
  %v542 = vextract.high.u32 %v540
  %v543 = vmul.u32 %v536, %v527
  %v544 = vadd.s32 %v539, %v541
  %vm545 = vc.u32 %v539, %v541
  %v546 = vadd.s32 %v542, 1
  %v547 = vsel %vm545, %v546, %v542
  %v548 = vadd.s32 %v543, %v547
  %v549 = vadd.s32 %v548, 536870912
  %v550 = vshrl.u32 %v549, 30
  %v551 = vshll.u32 %v550, 30
  %v552 = vsub.s32 %v548, %v551
  %vm553 = vcmp.lt.s32.totalorder %v552, 0
  %v554 = vsub.s32 0, %v552
  %v555 = vsel %vm553, %v554, %v552
  %v556 = vclz %v555
  %v557 = vsub.s32 %v556, 2
  %vm558 = vcmp.gt.s32.totalorder 0, %v557
  %v559 = vsel %vm558, 0, %v557
  %v560 = vsub.s32 32, %v559
  %v561 = vshll.u32 %v552, %v559
  %v562 = vshrl.u32 %v544, %v560
  %v563 = vor.u32 %v561, %v562
  %v564 = vsub.s32 4294967266, %v559
  %v565 = vadd.s32 %v564, 127
  %v566 = vshll.u32 %v565, 23
  %v567 = vor.u32 4788187, %v566
  %v568 = vand.u32 2147483647, %v567
  %v570 = vcvt.s32.f32 %v563
  %v571 = vmul.f32 %v570, %v568
  %v572 = vxor.u32 %v571, 2147483648
  %v573 = vsel %vm490, %v572, %v571
  %v574 = vsub.s32 4, %v550
  %v575 = vsel %vm490, %v574, %v550
  %v576 = vsel %vm489, %v266, %v573
  %v577 = vsel %vm489, 0, %v575
  %v578 = vcosq.f32.pop %v576
  %v579 = vsinq.f32.pop %v576
  %vm580 = vweird.f32 %v266
  %v581 = vadd.s32 %v577, 3
  %v582 = vand.u32 %v581, 3
  %vm583 = vcmp.lt.s32.totalorder %v582, 2
  %vm584 = vcmp.eq.s32.totalorder %v582, 0
  %v585 = vxor.u32 %v579, 2147483648
  %v586 = vsel %vm584, %v578, %v585
  %vm587 = vcmp.eq.s32.totalorder %v582, 2
  %v588 = vxor.u32 %v578, 2147483648
  %v589 = vsel %vm587, %v588, %v579
  %v590 = vsel %vm583, %v586, %v589
  %v591 = vsel %vm580, nan, %v590
  %v592 = vand.u32 2147483647, %v267
  %vm593 = vcmp.le.f32.partialorder %v592, 0.7853982
  %vm594 = vcmp.lt.s32.totalorder %v267, 0
  %v595 = vand.u32 %v267, 2139095040
  %v596 = vshrl.u32 %v595, 23
  %v597 = vsub.s32 %v596, 127
  %v598 = vand.u32 2147483647, %v267
  %v599 = vand.u32 %v598, 8388607
  %v600 = vor.u32 %v599, 8388608
  %v601 = vsub.s32 0, %v600
  %v602 = vadd.s32 %v597, 1
  %vm603 = vcmp.gt.s32.totalorder %v602, 0
  %v604 = vsel %vm603, %v602, 0
  %v605 = vshrl.u32 %v604, 5
  %v606 = vand.u32 %v604, 31
  %v607 = vsub.s32 32, %v606
  %v608 = vshrl.u32 683565275, %v607
  %v609 = vshll.u32 683565275, %v606
  %v610 = vshrl.u32 2475754826, %v607
  %v611 = vor.u32 %v609, %v610
  %v612 = vshll.u32 2475754826, %v606
  %v613 = vshrl.u32 2131351028, %v607
  %v614 = vor.u32 %v612, %v613
  %v615 = vshll.u32 2131351028, %v606
  %v616 = vshrl.u32 2102212464, %v607
  %v617 = vor.u32 %v615, %v616
  %v618 = vshll.u32 2102212464, %v606
  %v619 = vshrl.u32 920167782, %v607
  %v620 = vor.u32 %v618, %v619
  %v621 = vshll.u32 920167782, %v606
  %v622 = vshrl.u32 1326507024, %v607
  %v623 = vor.u32 %v621, %v622
  %vm624 = vcmp.lt.s32.totalorder %v605, 1
  %vm625 = vcmp.lt.s32.totalorder %v605, 2
  %vm626 = vcmp.lt.s32.totalorder %v605, 3
  %vm627 = vcmp.lt.s32.totalorder %v605, 4
  %v628 = vsel %vm624, %v608, %v611
  %v629 = vsel %vm627, %v617, 2102212464
  %v630 = vsel %vm626, %v614, %v629
  %v631 = vsel %vm625, %v628, %v630
  %v632 = vsel %vm624, %v611, %v614
  %v633 = vsel %vm627, %v620, 920167782
  %v634 = vsel %vm626, %v617, %v633
  %v635 = vsel %vm625, %v632, %v634
  %v636 = vsel %vm624, %v614, %v617
  %v637 = vsel %vm627, %v623, 1326507024
  %v638 = vsel %vm626, %v620, %v637
  %v639 = vsel %vm625, %v636, %v638
  %v640 = vshll.u32 %v600, 8
  %v641 = vmul.u32.u64.compose %v640, %v639
  %v642 = vextract.low.u32 %v641
  %v643 = vextract.high.u32 %v641
  %v644 = vmul.u32.u64.compose %v640, %v635
  %v645 = vextract.low.u32 %v644
  %v646 = vextract.high.u32 %v644
  %v647 = vmul.u32 %v640, %v631
  %v648 = vadd.s32 %v643, %v645
  %vm649 = vc.u32 %v643, %v645
  %v650 = vadd.s32 %v646, 1
  %v651 = vsel %vm649, %v650, %v646
  %v652 = vadd.s32 %v647, %v651
  %v653 = vadd.s32 %v652, 536870912
  %v654 = vshrl.u32 %v653, 30
  %v655 = vshll.u32 %v654, 30
  %v656 = vsub.s32 %v652, %v655
  %vm657 = vcmp.lt.s32.totalorder %v656, 0
  %v658 = vsub.s32 0, %v656
  %v659 = vsel %vm657, %v658, %v656
  %v660 = vclz %v659
  %v661 = vsub.s32 %v660, 2
  %vm662 = vcmp.gt.s32.totalorder 0, %v661
  %v663 = vsel %vm662, 0, %v661
  %v664 = vsub.s32 32, %v663
  %v665 = vshll.u32 %v656, %v663
  %v666 = vshrl.u32 %v648, %v664
  %v667 = vor.u32 %v665, %v666
  %v668 = vsub.s32 4294967266, %v663
  %v669 = vadd.s32 %v668, 127
  %v670 = vshll.u32 %v669, 23
  %v671 = vor.u32 4788187, %v670
  %v672 = vand.u32 2147483647, %v671
  %v674 = vcvt.s32.f32 %v667
  %v675 = vmul.f32 %v674, %v672
  %v676 = vxor.u32 %v675, 2147483648
  %v677 = vsel %vm594, %v676, %v675
  %v678 = vsub.s32 4, %v654
  %v679 = vsel %vm594, %v678, %v654
  %v680 = vsel %vm593, %v267, %v677
  %v681 = vsel %vm593, 0, %v679
  %v682 = vcosq.f32.pop %v680
  %v683 = vsinq.f32.pop %v680
  %vm684 = vweird.f32 %v267
  %v685 = vadd.s32 %v681, 3
  %v686 = vand.u32 %v685, 3
  %vm687 = vcmp.lt.s32.totalorder %v686, 2
  %vm688 = vcmp.eq.s32.totalorder %v686, 0
  %v689 = vxor.u32 %v683, 2147483648
  %v690 = vsel %vm688, %v682, %v689
  %vm691 = vcmp.eq.s32.totalorder %v686, 2
  %v692 = vxor.u32 %v682, 2147483648
  %v693 = vsel %vm691, %v692, %v683
  %v694 = vsel %vm687, %v690, %v693
  %v695 = vsel %vm684, nan, %v694
  %v696 = vand.u32 2147483647, %v268
  %vm697 = vcmp.le.f32.partialorder %v696, 0.7853982
  %vm698 = vcmp.lt.s32.totalorder %v268, 0
  %v699 = vand.u32 %v268, 2139095040
  %v700 = vshrl.u32 %v699, 23
  %v701 = vsub.s32 %v700, 127
  %v702 = vand.u32 2147483647, %v268
  %v703 = vand.u32 %v702, 8388607
  %v704 = vor.u32 %v703, 8388608
  %v705 = vsub.s32 0, %v704
  %v706 = vadd.s32 %v701, 1
  %vm707 = vcmp.gt.s32.totalorder %v706, 0
  %v708 = vsel %vm707, %v706, 0
  %v709 = vshrl.u32 %v708, 5
  %v710 = vand.u32 %v708, 31
  %v711 = vsub.s32 32, %v710
  %v712 = vshrl.u32 683565275, %v711
  %v713 = vshll.u32 683565275, %v710
  %v714 = vshrl.u32 2475754826, %v711
  %v715 = vor.u32 %v713, %v714
  %v716 = vshll.u32 2475754826, %v710
  %v717 = vshrl.u32 2131351028, %v711
  %v718 = vor.u32 %v716, %v717
  %v719 = vshll.u32 2131351028, %v710
  %v720 = vshrl.u32 2102212464, %v711
  %v721 = vor.u32 %v719, %v720
  %v722 = vshll.u32 2102212464, %v710
  %v723 = vshrl.u32 920167782, %v711
  %v724 = vor.u32 %v722, %v723
  %v725 = vshll.u32 920167782, %v710
  %v726 = vshrl.u32 1326507024, %v711
  %v727 = vor.u32 %v725, %v726
  %vm728 = vcmp.lt.s32.totalorder %v709, 1
  %vm729 = vcmp.lt.s32.totalorder %v709, 2
  %vm730 = vcmp.lt.s32.totalorder %v709, 3
  %vm731 = vcmp.lt.s32.totalorder %v709, 4
  %v732 = vsel %vm728, %v712, %v715
  %v733 = vsel %vm731, %v721, 2102212464
  %v734 = vsel %vm730, %v718, %v733
  %v735 = vsel %vm729, %v732, %v734
  %v736 = vsel %vm728, %v715, %v718
  %v737 = vsel %vm731, %v724, 920167782
  %v738 = vsel %vm730, %v721, %v737
  %v739 = vsel %vm729, %v736, %v738
  %v740 = vsel %vm728, %v718, %v721
  %v741 = vsel %vm731, %v727, 1326507024
  %v742 = vsel %vm730, %v724, %v741
  %v743 = vsel %vm729, %v740, %v742
  %v744 = vshll.u32 %v704, 8
  %v745 = vmul.u32.u64.compose %v744, %v743
  %v746 = vextract.low.u32 %v745
  %v747 = vextract.high.u32 %v745
  %v748 = vmul.u32.u64.compose %v744, %v739
  %v749 = vextract.low.u32 %v748
  %v750 = vextract.high.u32 %v748
  %v751 = vmul.u32 %v744, %v735
  %v752 = vadd.s32 %v747, %v749
  %vm753 = vc.u32 %v747, %v749
  %v754 = vadd.s32 %v750, 1
  %v755 = vsel %vm753, %v754, %v750
  %v756 = vadd.s32 %v751, %v755
  %v757 = vadd.s32 %v756, 536870912
  %v758 = vshrl.u32 %v757, 30
  %v759 = vshll.u32 %v758, 30
  %v760 = vsub.s32 %v756, %v759
  %vm761 = vcmp.lt.s32.totalorder %v760, 0
  %v762 = vsub.s32 0, %v760
  %v763 = vsel %vm761, %v762, %v760
  %v764 = vclz %v763
  %v765 = vsub.s32 %v764, 2
  %vm766 = vcmp.gt.s32.totalorder 0, %v765
  %v767 = vsel %vm766, 0, %v765
  %v768 = vsub.s32 32, %v767
  %v769 = vshll.u32 %v760, %v767
  %v770 = vshrl.u32 %v752, %v768
  %v771 = vor.u32 %v769, %v770
  %v772 = vsub.s32 4294967266, %v767
  %v773 = vadd.s32 %v772, 127
  %v774 = vshll.u32 %v773, 23
  %v775 = vor.u32 4788187, %v774
  %v776 = vand.u32 2147483647, %v775
  %v778 = vcvt.s32.f32 %v771
  %v779 = vmul.f32 %v778, %v776
  %v780 = vxor.u32 %v779, 2147483648
  %v781 = vsel %vm698, %v780, %v779
  %v782 = vsub.s32 4, %v758
  %v783 = vsel %vm698, %v782, %v758
  %v784 = vsel %vm697, %v268, %v781
  %v785 = vsel %vm697, 0, %v783
  %v786 = vcosq.f32.pop %v784
  %v787 = vsinq.f32.pop %v784
  %vm788 = vweird.f32 %v268
  %v789 = vadd.s32 %v785, 3
  %v790 = vand.u32 %v789, 3
  %vm791 = vcmp.lt.s32.totalorder %v790, 2
  %vm792 = vcmp.eq.s32.totalorder %v790, 0
  %v793 = vxor.u32 %v787, 2147483648
  %v794 = vsel %vm792, %v786, %v793
  %vm795 = vcmp.eq.s32.totalorder %v790, 2
  %v796 = vxor.u32 %v786, 2147483648
  %v797 = vsel %vm795, %v796, %v787
  %v798 = vsel %vm791, %v794, %v797
  %v799 = vsel %vm788, nan, %v798
  %v800 = vand.u32 2147483647, %v269
  %vm801 = vcmp.le.f32.partialorder %v800, 0.7853982
  %vm802 = vcmp.lt.s32.totalorder %v269, 0
  %v803 = vand.u32 %v269, 2139095040
  %v804 = vshrl.u32 %v803, 23
  %v805 = vsub.s32 %v804, 127
  %v806 = vand.u32 2147483647, %v269
  %v807 = vand.u32 %v806, 8388607
  %v808 = vor.u32 %v807, 8388608
  %v809 = vsub.s32 0, %v808
  %v810 = vadd.s32 %v805, 1
  %vm811 = vcmp.gt.s32.totalorder %v810, 0
  %v812 = vsel %vm811, %v810, 0
  %v813 = vshrl.u32 %v812, 5
  %v814 = vand.u32 %v812, 31
  %v815 = vsub.s32 32, %v814
  %v816 = vshrl.u32 683565275, %v815
  %v817 = vshll.u32 683565275, %v814
  %v818 = vshrl.u32 2475754826, %v815
  %v819 = vor.u32 %v817, %v818
  %v820 = vshll.u32 2475754826, %v814
  %v821 = vshrl.u32 2131351028, %v815
  %v822 = vor.u32 %v820, %v821
  %v823 = vshll.u32 2131351028, %v814
  %v824 = vshrl.u32 2102212464, %v815
  %v825 = vor.u32 %v823, %v824
  %v826 = vshll.u32 2102212464, %v814
  %v827 = vshrl.u32 920167782, %v815
  %v828 = vor.u32 %v826, %v827
  %v829 = vshll.u32 920167782, %v814
  %v830 = vshrl.u32 1326507024, %v815
  %v831 = vor.u32 %v829, %v830
  %vm832 = vcmp.lt.s32.totalorder %v813, 1
  %vm833 = vcmp.lt.s32.totalorder %v813, 2
  %vm834 = vcmp.lt.s32.totalorder %v813, 3
  %vm835 = vcmp.lt.s32.totalorder %v813, 4
  %v836 = vsel %vm832, %v816, %v819
  %v837 = vsel %vm835, %v825, 2102212464
  %v838 = vsel %vm834, %v822, %v837
  %v839 = vsel %vm833, %v836, %v838
  %v840 = vsel %vm832, %v819, %v822
  %v841 = vsel %vm835, %v828, 920167782
  %v842 = vsel %vm834, %v825, %v841
  %v843 = vsel %vm833, %v840, %v842
  %v844 = vsel %vm832, %v822, %v825
  %v845 = vsel %vm835, %v831, 1326507024
  %v846 = vsel %vm834, %v828, %v845
  %v847 = vsel %vm833, %v844, %v846
  %v848 = vshll.u32 %v808, 8
  %v849 = vmul.u32.u64.compose %v848, %v847
  %v850 = vextract.low.u32 %v849
  %v851 = vextract.high.u32 %v849
  %v852 = vmul.u32.u64.compose %v848, %v843
  %v853 = vextract.low.u32 %v852
  %v854 = vextract.high.u32 %v852
  %v855 = vmul.u32 %v848, %v839
  %v856 = vadd.s32 %v851, %v853
  %vm857 = vc.u32 %v851, %v853
  %v858 = vadd.s32 %v854, 1
  %v859 = vsel %vm857, %v858, %v854
  %v860 = vadd.s32 %v855, %v859
  %v861 = vadd.s32 %v860, 536870912
  %v862 = vshrl.u32 %v861, 30
  %v863 = vshll.u32 %v862, 30
  %v864 = vsub.s32 %v860, %v863
  %vm865 = vcmp.lt.s32.totalorder %v864, 0
  %v866 = vsub.s32 0, %v864
  %v867 = vsel %vm865, %v866, %v864
  %v868 = vclz %v867
  %v869 = vsub.s32 %v868, 2
  %vm870 = vcmp.gt.s32.totalorder 0, %v869
  %v871 = vsel %vm870, 0, %v869
  %v872 = vsub.s32 32, %v871
  %v873 = vshll.u32 %v864, %v871
  %v874 = vshrl.u32 %v856, %v872
  %v875 = vor.u32 %v873, %v874
  %v876 = vsub.s32 4294967266, %v871
  %v877 = vadd.s32 %v876, 127
  %v878 = vshll.u32 %v877, 23
  %v879 = vor.u32 4788187, %v878
  %v880 = vand.u32 2147483647, %v879
  %v882 = vcvt.s32.f32 %v875
  %v883 = vmul.f32 %v882, %v880
  %v884 = vxor.u32 %v883, 2147483648
  %v885 = vsel %vm802, %v884, %v883
  %v886 = vsub.s32 4, %v862
  %v887 = vsel %vm802, %v886, %v862
  %v888 = vsel %vm801, %v269, %v885
  %v889 = vsel %vm801, 0, %v887
  %v890 = vcosq.f32.pop %v888
  %v891 = vsinq.f32.pop %v888
  %vm892 = vweird.f32 %v269
  %v893 = vadd.s32 %v889, 3
  %v894 = vand.u32 %v893, 3
  %vm895 = vcmp.lt.s32.totalorder %v894, 2
  %vm896 = vcmp.eq.s32.totalorder %v894, 0
  %v897 = vxor.u32 %v891, 2147483648
  %v898 = vsel %vm896, %v890, %v897
  %vm899 = vcmp.eq.s32.totalorder %v894, 2
  %v900 = vxor.u32 %v890, 2147483648
  %v901 = vsel %vm899, %v900, %v891
  %v902 = vsel %vm895, %v898, %v901
  %v903 = vsel %vm892, nan, %v902
  %v904 = vand.u32 2147483647, %v270
  %vm905 = vcmp.le.f32.partialorder %v904, 0.7853982
  %vm906 = vcmp.lt.s32.totalorder %v270, 0
  %v907 = vand.u32 %v270, 2139095040
  %v908 = vshrl.u32 %v907, 23
  %v909 = vsub.s32 %v908, 127
  %v910 = vand.u32 2147483647, %v270
  %v911 = vand.u32 %v910, 8388607
  %v912 = vor.u32 %v911, 8388608
  %v913 = vsub.s32 0, %v912
  %v914 = vadd.s32 %v909, 1
  %vm915 = vcmp.gt.s32.totalorder %v914, 0
  %v916 = vsel %vm915, %v914, 0
  %v917 = vshrl.u32 %v916, 5
  %v918 = vand.u32 %v916, 31
  %v919 = vsub.s32 32, %v918
  %v920 = vshrl.u32 683565275, %v919
  %v921 = vshll.u32 683565275, %v918
  %v922 = vshrl.u32 2475754826, %v919
  %v923 = vor.u32 %v921, %v922
  %v924 = vshll.u32 2475754826, %v918
  %v925 = vshrl.u32 2131351028, %v919
  %v926 = vor.u32 %v924, %v925
  %v927 = vshll.u32 2131351028, %v918
  %v928 = vshrl.u32 2102212464, %v919
  %v929 = vor.u32 %v927, %v928
  %v930 = vshll.u32 2102212464, %v918
  %v931 = vshrl.u32 920167782, %v919
  %v932 = vor.u32 %v930, %v931
  %v933 = vshll.u32 920167782, %v918
  %v934 = vshrl.u32 1326507024, %v919
  %v935 = vor.u32 %v933, %v934
  %vm936 = vcmp.lt.s32.totalorder %v917, 1
  %vm937 = vcmp.lt.s32.totalorder %v917, 2
  %vm938 = vcmp.lt.s32.totalorder %v917, 3
  %vm939 = vcmp.lt.s32.totalorder %v917, 4
  %v940 = vsel %vm936, %v920, %v923
  %v941 = vsel %vm939, %v929, 2102212464
  %v942 = vsel %vm938, %v926, %v941
  %v943 = vsel %vm937, %v940, %v942
  %v944 = vsel %vm936, %v923, %v926
  %v945 = vsel %vm939, %v932, 920167782
  %v946 = vsel %vm938, %v929, %v945
  %v947 = vsel %vm937, %v944, %v946
  %v948 = vsel %vm936, %v926, %v929
  %v949 = vsel %vm939, %v935, 1326507024
  %v950 = vsel %vm938, %v932, %v949
  %v951 = vsel %vm937, %v948, %v950
  %v952 = vshll.u32 %v912, 8
  %v953 = vmul.u32.u64.compose %v952, %v951
  %v954 = vextract.low.u32 %v953
  %v955 = vextract.high.u32 %v953
  %v956 = vmul.u32.u64.compose %v952, %v947
  %v957 = vextract.low.u32 %v956
  %v958 = vextract.high.u32 %v956
  %v959 = vmul.u32 %v952, %v943
  %v960 = vadd.s32 %v955, %v957
  %vm961 = vc.u32 %v955, %v957
  %v962 = vadd.s32 %v958, 1
  %v963 = vsel %vm961, %v962, %v958
  %v964 = vadd.s32 %v959, %v963
  %v965 = vadd.s32 %v964, 536870912
  %v966 = vshrl.u32 %v965, 30
  %v967 = vshll.u32 %v966, 30
  %v968 = vsub.s32 %v964, %v967
  %vm969 = vcmp.lt.s32.totalorder %v968, 0
  %v970 = vsub.s32 0, %v968
  %v971 = vsel %vm969, %v970, %v968
  %v972 = vclz %v971
  %v973 = vsub.s32 %v972, 2
  %vm974 = vcmp.gt.s32.totalorder 0, %v973
  %v975 = vsel %vm974, 0, %v973
  %v976 = vsub.s32 32, %v975
  %v977 = vshll.u32 %v968, %v975
  %v978 = vshrl.u32 %v960, %v976
  %v979 = vor.u32 %v977, %v978
  %v980 = vsub.s32 4294967266, %v975
  %v981 = vadd.s32 %v980, 127
  %v982 = vshll.u32 %v981, 23
  %v983 = vor.u32 4788187, %v982
  %v984 = vand.u32 2147483647, %v983
  %v986 = vcvt.s32.f32 %v979
  %v987 = vmul.f32 %v986, %v984
  %v988 = vxor.u32 %v987, 2147483648
  %v989 = vsel %vm906, %v988, %v987
  %v990 = vsub.s32 4, %v966
  %v991 = vsel %vm906, %v990, %v966
  %v992 = vsel %vm905, %v270, %v989
  %v993 = vsel %vm905, 0, %v991
  %v994 = vcosq.f32.pop %v992
  %v995 = vsinq.f32.pop %v992
  %vm996 = vweird.f32 %v270
  %v997 = vadd.s32 %v993, 3
  %v998 = vand.u32 %v997, 3
  %vm999 = vcmp.lt.s32.totalorder %v998, 2
  %vm1000 = vcmp.eq.s32.totalorder %v998, 0
  %v1001 = vxor.u32 %v995, 2147483648
  %v1002 = vsel %vm1000, %v994, %v1001
  %vm1003 = vcmp.eq.s32.totalorder %v998, 2
  %v1004 = vxor.u32 %v994, 2147483648
  %v1005 = vsel %vm1003, %v1004, %v995
  %v1006 = vsel %vm999, %v1002, %v1005
  %v1007 = vsel %vm996, nan, %v1006
  %v1008 = vand.u32 2147483647, %v271
  %vm1009 = vcmp.le.f32.partialorder %v1008, 0.7853982
  %vm1010 = vcmp.lt.s32.totalorder %v271, 0
  %v1011 = vand.u32 %v271, 2139095040
  %v1012 = vshrl.u32 %v1011, 23
  %v1013 = vsub.s32 %v1012, 127
  %v1014 = vand.u32 2147483647, %v271
  %v1015 = vand.u32 %v1014, 8388607
  %v1016 = vor.u32 %v1015, 8388608
  %v1017 = vsub.s32 0, %v1016
  %v1018 = vadd.s32 %v1013, 1
  %vm1019 = vcmp.gt.s32.totalorder %v1018, 0
  %v1020 = vsel %vm1019, %v1018, 0
  %v1021 = vshrl.u32 %v1020, 5
  %v1022 = vand.u32 %v1020, 31
  %v1023 = vsub.s32 32, %v1022
  %v1024 = vshrl.u32 683565275, %v1023
  %v1025 = vshll.u32 683565275, %v1022
  %v1026 = vshrl.u32 2475754826, %v1023
  %v1027 = vor.u32 %v1025, %v1026
  %v1028 = vshll.u32 2475754826, %v1022
  %v1029 = vshrl.u32 2131351028, %v1023
  %v1030 = vor.u32 %v1028, %v1029
  %v1031 = vshll.u32 2131351028, %v1022
  %v1032 = vshrl.u32 2102212464, %v1023
  %v1033 = vor.u32 %v1031, %v1032
  %v1034 = vshll.u32 2102212464, %v1022
  %v1035 = vshrl.u32 920167782, %v1023
  %v1036 = vor.u32 %v1034, %v1035
  %v1037 = vshll.u32 920167782, %v1022
  %v1038 = vshrl.u32 1326507024, %v1023
  %v1039 = vor.u32 %v1037, %v1038
  %vm1040 = vcmp.lt.s32.totalorder %v1021, 1
  %vm1041 = vcmp.lt.s32.totalorder %v1021, 2
  %vm1042 = vcmp.lt.s32.totalorder %v1021, 3
  %vm1043 = vcmp.lt.s32.totalorder %v1021, 4
  %v1044 = vsel %vm1040, %v1024, %v1027
  %v1045 = vsel %vm1043, %v1033, 2102212464
  %v1046 = vsel %vm1042, %v1030, %v1045
  %v1047 = vsel %vm1041, %v1044, %v1046
  %v1048 = vsel %vm1040, %v1027, %v1030
  %v1049 = vsel %vm1043, %v1036, 920167782
  %v1050 = vsel %vm1042, %v1033, %v1049
  %v1051 = vsel %vm1041, %v1048, %v1050
  %v1052 = vsel %vm1040, %v1030, %v1033
  %v1053 = vsel %vm1043, %v1039, 1326507024
  %v1054 = vsel %vm1042, %v1036, %v1053
  %v1055 = vsel %vm1041, %v1052, %v1054
  %v1056 = vshll.u32 %v1016, 8
  %v1057 = vmul.u32.u64.compose %v1056, %v1055
  %v1058 = vextract.low.u32 %v1057
  %v1059 = vextract.high.u32 %v1057
  %v1060 = vmul.u32.u64.compose %v1056, %v1051
  %v1061 = vextract.low.u32 %v1060
  %v1062 = vextract.high.u32 %v1060
  %v1063 = vmul.u32 %v1056, %v1047
  %v1064 = vadd.s32 %v1059, %v1061
  %vm1065 = vc.u32 %v1059, %v1061
  %v1066 = vadd.s32 %v1062, 1
  %v1067 = vsel %vm1065, %v1066, %v1062
  %v1068 = vadd.s32 %v1063, %v1067
  %v1069 = vadd.s32 %v1068, 536870912
  %v1070 = vshrl.u32 %v1069, 30
  %v1071 = vshll.u32 %v1070, 30
  %v1072 = vsub.s32 %v1068, %v1071
  %vm1073 = vcmp.lt.s32.totalorder %v1072, 0
  %v1074 = vsub.s32 0, %v1072
  %v1075 = vsel %vm1073, %v1074, %v1072
  %v1076 = vclz %v1075
  %v1077 = vsub.s32 %v1076, 2
  %vm1078 = vcmp.gt.s32.totalorder 0, %v1077
  %v1079 = vsel %vm1078, 0, %v1077
  %v1080 = vsub.s32 32, %v1079
  %v1081 = vshll.u32 %v1072, %v1079
  %v1082 = vshrl.u32 %v1064, %v1080
  %v1083 = vor.u32 %v1081, %v1082
  %v1084 = vsub.s32 4294967266, %v1079
  %v1085 = vadd.s32 %v1084, 127
  %v1086 = vshll.u32 %v1085, 23
  %v1087 = vor.u32 4788187, %v1086
  %v1088 = vand.u32 2147483647, %v1087
  %v1090 = vcvt.s32.f32 %v1083
  %v1091 = vmul.f32 %v1090, %v1088
  %v1092 = vxor.u32 %v1091, 2147483648
  %v1093 = vsel %vm1010, %v1092, %v1091
  %v1094 = vsub.s32 4, %v1070
  %v1095 = vsel %vm1010, %v1094, %v1070
  %v1096 = vsel %vm1009, %v271, %v1093
  %v1097 = vsel %vm1009, 0, %v1095
  %v1098 = vcosq.f32.pop %v1096
  %v1099 = vsinq.f32.pop %v1096
  %vm1100 = vweird.f32 %v271
  %v1101 = vadd.s32 %v1097, 3
  %v1102 = vand.u32 %v1101, 3
  %vm1103 = vcmp.lt.s32.totalorder %v1102, 2
  %vm1104 = vcmp.eq.s32.totalorder %v1102, 0
  %v1105 = vxor.u32 %v1099, 2147483648
  %v1106 = vsel %vm1104, %v1098, %v1105
  %vm1107 = vcmp.eq.s32.totalorder %v1102, 2
  %v1108 = vxor.u32 %v1098, 2147483648
  %v1109 = vsel %vm1107, %v1108, %v1099
  %v1110 = vsel %vm1103, %v1106, %v1109
  %v1111 = vsel %vm1100, nan, %v1110
  %v1112 = vand.u32 2147483647, %v272
  %vm1113 = vcmp.le.f32.partialorder %v1112, 0.7853982
  %vm1114 = vcmp.lt.s32.totalorder %v272, 0
  %v1115 = vand.u32 %v272, 2139095040
  %v1116 = vshrl.u32 %v1115, 23
  %v1117 = vsub.s32 %v1116, 127
  %v1118 = vand.u32 2147483647, %v272
  %v1119 = vand.u32 %v1118, 8388607
  %v1120 = vor.u32 %v1119, 8388608
  %v1121 = vsub.s32 0, %v1120
  %v1122 = vadd.s32 %v1117, 1
  %vm1123 = vcmp.gt.s32.totalorder %v1122, 0
  %v1124 = vsel %vm1123, %v1122, 0
  %v1125 = vshrl.u32 %v1124, 5
  %v1126 = vand.u32 %v1124, 31
  %v1127 = vsub.s32 32, %v1126
  %v1128 = vshrl.u32 683565275, %v1127
  %v1129 = vshll.u32 683565275, %v1126
  %v1130 = vshrl.u32 2475754826, %v1127
  %v1131 = vor.u32 %v1129, %v1130
  %v1132 = vshll.u32 2475754826, %v1126
  %v1133 = vshrl.u32 2131351028, %v1127
  %v1134 = vor.u32 %v1132, %v1133
  %v1135 = vshll.u32 2131351028, %v1126
  %v1136 = vshrl.u32 2102212464, %v1127
  %v1137 = vor.u32 %v1135, %v1136
  %v1138 = vshll.u32 2102212464, %v1126
  %v1139 = vshrl.u32 920167782, %v1127
  %v1140 = vor.u32 %v1138, %v1139
  %v1141 = vshll.u32 920167782, %v1126
  %v1142 = vshrl.u32 1326507024, %v1127
  %v1143 = vor.u32 %v1141, %v1142
  %vm1144 = vcmp.lt.s32.totalorder %v1125, 1
  %vm1145 = vcmp.lt.s32.totalorder %v1125, 2
  %vm1146 = vcmp.lt.s32.totalorder %v1125, 3
  %vm1147 = vcmp.lt.s32.totalorder %v1125, 4
  %v1148 = vsel %vm1144, %v1128, %v1131
  %v1149 = vsel %vm1147, %v1137, 2102212464
  %v1150 = vsel %vm1146, %v1134, %v1149
  %v1151 = vsel %vm1145, %v1148, %v1150
  %v1152 = vsel %vm1144, %v1131, %v1134
  %v1153 = vsel %vm1147, %v1140, 920167782
  %v1154 = vsel %vm1146, %v1137, %v1153
  %v1155 = vsel %vm1145, %v1152, %v1154
  %v1156 = vsel %vm1144, %v1134, %v1137
  %v1157 = vsel %vm1147, %v1143, 1326507024
  %v1158 = vsel %vm1146, %v1140, %v1157
  %v1159 = vsel %vm1145, %v1156, %v1158
  %v1160 = vshll.u32 %v1120, 8
  %v1161 = vmul.u32.u64.compose %v1160, %v1159
  %v1162 = vextract.low.u32 %v1161
  %v1163 = vextract.high.u32 %v1161
  %v1164 = vmul.u32.u64.compose %v1160, %v1155
  %v1165 = vextract.low.u32 %v1164
  %v1166 = vextract.high.u32 %v1164
  %v1167 = vmul.u32 %v1160, %v1151
  %v1168 = vadd.s32 %v1163, %v1165
  %vm1169 = vc.u32 %v1163, %v1165
  %v1170 = vadd.s32 %v1166, 1
  %v1171 = vsel %vm1169, %v1170, %v1166
  %v1172 = vadd.s32 %v1167, %v1171
  %v1173 = vadd.s32 %v1172, 536870912
  %v1174 = vshrl.u32 %v1173, 30
  %v1175 = vshll.u32 %v1174, 30
  %v1176 = vsub.s32 %v1172, %v1175
  %vm1177 = vcmp.lt.s32.totalorder %v1176, 0
  %v1178 = vsub.s32 0, %v1176
  %v1179 = vsel %vm1177, %v1178, %v1176
  %v1180 = vclz %v1179
  %v1181 = vsub.s32 %v1180, 2
  %vm1182 = vcmp.gt.s32.totalorder 0, %v1181
  %v1183 = vsel %vm1182, 0, %v1181
  %v1184 = vsub.s32 32, %v1183
  %v1185 = vshll.u32 %v1176, %v1183
  %v1186 = vshrl.u32 %v1168, %v1184
  %v1187 = vor.u32 %v1185, %v1186
  %v1188 = vsub.s32 4294967266, %v1183
  %v1189 = vadd.s32 %v1188, 127
  %v1190 = vshll.u32 %v1189, 23
  %v1191 = vor.u32 4788187, %v1190
  %v1192 = vand.u32 2147483647, %v1191
  %v1194 = vcvt.s32.f32 %v1187
  %v1195 = vmul.f32 %v1194, %v1192
  %v1196 = vxor.u32 %v1195, 2147483648
  %v1197 = vsel %vm1114, %v1196, %v1195
  %v1198 = vsub.s32 4, %v1174
  %v1199 = vsel %vm1114, %v1198, %v1174
  %v1200 = vsel %vm1113, %v272, %v1197
  %v1201 = vsel %vm1113, 0, %v1199
  %v1202 = vcosq.f32.pop %v1200
  %v1203 = vsinq.f32.pop %v1200
  %vm1204 = vweird.f32 %v272
  %v1205 = vadd.s32 %v1201, 3
  %v1206 = vand.u32 %v1205, 3
  %vm1207 = vcmp.lt.s32.totalorder %v1206, 2
  %vm1208 = vcmp.eq.s32.totalorder %v1206, 0
  %v1209 = vxor.u32 %v1203, 2147483648
  %v1210 = vsel %vm1208, %v1202, %v1209
  %vm1211 = vcmp.eq.s32.totalorder %v1206, 2
  %v1212 = vxor.u32 %v1202, 2147483648
  %v1213 = vsel %vm1211, %v1212, %v1203
  %v1214 = vsel %vm1207, %v1210, %v1213
  %v1215 = vsel %vm1204, nan, %v1214
  %v1216 = vand.u32 2147483647, %v273
  %vm1217 = vcmp.le.f32.partialorder %v1216, 0.7853982
  %vm1218 = vcmp.lt.s32.totalorder %v273, 0
  %v1219 = vand.u32 %v273, 2139095040
  %v1220 = vshrl.u32 %v1219, 23
  %v1221 = vsub.s32 %v1220, 127
  %v1222 = vand.u32 2147483647, %v273
  %v1223 = vand.u32 %v1222, 8388607
  %v1224 = vor.u32 %v1223, 8388608
  %v1225 = vsub.s32 0, %v1224
  %v1226 = vadd.s32 %v1221, 1
  %vm1227 = vcmp.gt.s32.totalorder %v1226, 0
  %v1228 = vsel %vm1227, %v1226, 0
  %v1229 = vshrl.u32 %v1228, 5
  %v1230 = vand.u32 %v1228, 31
  %v1231 = vsub.s32 32, %v1230
  %v1232 = vshrl.u32 683565275, %v1231
  %v1233 = vshll.u32 683565275, %v1230
  %v1234 = vshrl.u32 2475754826, %v1231
  %v1235 = vor.u32 %v1233, %v1234
  %v1236 = vshll.u32 2475754826, %v1230
  %v1237 = vshrl.u32 2131351028, %v1231
  %v1238 = vor.u32 %v1236, %v1237
  %v1239 = vshll.u32 2131351028, %v1230
  %v1240 = vshrl.u32 2102212464, %v1231
  %v1241 = vor.u32 %v1239, %v1240
  %v1242 = vshll.u32 2102212464, %v1230
  %v1243 = vshrl.u32 920167782, %v1231
  %v1244 = vor.u32 %v1242, %v1243
  %v1245 = vshll.u32 920167782, %v1230
  %v1246 = vshrl.u32 1326507024, %v1231
  %v1247 = vor.u32 %v1245, %v1246
  %vm1248 = vcmp.lt.s32.totalorder %v1229, 1
  %vm1249 = vcmp.lt.s32.totalorder %v1229, 2
  %vm1250 = vcmp.lt.s32.totalorder %v1229, 3
  %vm1251 = vcmp.lt.s32.totalorder %v1229, 4
  %v1252 = vsel %vm1248, %v1232, %v1235
  %v1253 = vsel %vm1251, %v1241, 2102212464
  %v1254 = vsel %vm1250, %v1238, %v1253
  %v1255 = vsel %vm1249, %v1252, %v1254
  %v1256 = vsel %vm1248, %v1235, %v1238
  %v1257 = vsel %vm1251, %v1244, 920167782
  %v1258 = vsel %vm1250, %v1241, %v1257
  %v1259 = vsel %vm1249, %v1256, %v1258
  %v1260 = vsel %vm1248, %v1238, %v1241
  %v1261 = vsel %vm1251, %v1247, 1326507024
  %v1262 = vsel %vm1250, %v1244, %v1261
  %v1263 = vsel %vm1249, %v1260, %v1262
  %v1264 = vshll.u32 %v1224, 8
  %v1265 = vmul.u32.u64.compose %v1264, %v1263
  %v1266 = vextract.low.u32 %v1265
  %v1267 = vextract.high.u32 %v1265
  %v1268 = vmul.u32.u64.compose %v1264, %v1259
  %v1269 = vextract.low.u32 %v1268
  %v1270 = vextract.high.u32 %v1268
  %v1271 = vmul.u32 %v1264, %v1255
  %v1272 = vadd.s32 %v1267, %v1269
  %vm1273 = vc.u32 %v1267, %v1269
  %v1274 = vadd.s32 %v1270, 1
  %v1275 = vsel %vm1273, %v1274, %v1270
  %v1276 = vadd.s32 %v1271, %v1275
  %v1277 = vadd.s32 %v1276, 536870912
  %v1278 = vshrl.u32 %v1277, 30
  %v1279 = vshll.u32 %v1278, 30
  %v1280 = vsub.s32 %v1276, %v1279
  %vm1281 = vcmp.lt.s32.totalorder %v1280, 0
  %v1282 = vsub.s32 0, %v1280
  %v1283 = vsel %vm1281, %v1282, %v1280
  %v1284 = vclz %v1283
  %v1285 = vsub.s32 %v1284, 2
  %vm1286 = vcmp.gt.s32.totalorder 0, %v1285
  %v1287 = vsel %vm1286, 0, %v1285
  %v1288 = vsub.s32 32, %v1287
  %v1289 = vshll.u32 %v1280, %v1287
  %v1290 = vshrl.u32 %v1272, %v1288
  %v1291 = vor.u32 %v1289, %v1290
  %v1292 = vsub.s32 4294967266, %v1287
  %v1293 = vadd.s32 %v1292, 127
  %v1294 = vshll.u32 %v1293, 23
  %v1295 = vor.u32 4788187, %v1294
  %v1296 = vand.u32 2147483647, %v1295
  %v1298 = vcvt.s32.f32 %v1291
  %v1299 = vmul.f32 %v1298, %v1296
  %v1300 = vxor.u32 %v1299, 2147483648
  %v1301 = vsel %vm1218, %v1300, %v1299
  %v1302 = vsub.s32 4, %v1278
  %v1303 = vsel %vm1218, %v1302, %v1278
  %v1304 = vsel %vm1217, %v273, %v1301
  %v1305 = vsel %vm1217, 0, %v1303
  %v1306 = vcosq.f32.pop %v1304
  %v1307 = vsinq.f32.pop %v1304
  %vm1308 = vweird.f32 %v273
  %v1309 = vadd.s32 %v1305, 3
  %v1310 = vand.u32 %v1309, 3
  %vm1311 = vcmp.lt.s32.totalorder %v1310, 2
  %vm1312 = vcmp.eq.s32.totalorder %v1310, 0
  %v1313 = vxor.u32 %v1307, 2147483648
  %v1314 = vsel %vm1312, %v1306, %v1313
  %vm1315 = vcmp.eq.s32.totalorder %v1310, 2
  %v1316 = vxor.u32 %v1306, 2147483648
  %v1317 = vsel %vm1315, %v1316, %v1307
  %v1318 = vsel %vm1311, %v1314, %v1317
  %v1319 = vsel %vm1308, nan, %v1318
  %v1320 = vand.u32 2147483647, %v274
  %vm1321 = vcmp.le.f32.partialorder %v1320, 0.7853982
  %vm1322 = vcmp.lt.s32.totalorder %v274, 0
  %v1323 = vand.u32 %v274, 2139095040
  %v1324 = vshrl.u32 %v1323, 23
  %v1325 = vsub.s32 %v1324, 127
  %v1326 = vand.u32 2147483647, %v274
  %v1327 = vand.u32 %v1326, 8388607
  %v1328 = vor.u32 %v1327, 8388608
  %v1329 = vsub.s32 0, %v1328
  %v1330 = vadd.s32 %v1325, 1
  %vm1331 = vcmp.gt.s32.totalorder %v1330, 0
  %v1332 = vsel %vm1331, %v1330, 0
  %v1333 = vshrl.u32 %v1332, 5
  %v1334 = vand.u32 %v1332, 31
  %v1335 = vsub.s32 32, %v1334
  %v1336 = vshrl.u32 683565275, %v1335
  %v1337 = vshll.u32 683565275, %v1334
  %v1338 = vshrl.u32 2475754826, %v1335
  %v1339 = vor.u32 %v1337, %v1338
  %v1340 = vshll.u32 2475754826, %v1334
  %v1341 = vshrl.u32 2131351028, %v1335
  %v1342 = vor.u32 %v1340, %v1341
  %v1343 = vshll.u32 2131351028, %v1334
  %v1344 = vshrl.u32 2102212464, %v1335
  %v1345 = vor.u32 %v1343, %v1344
  %v1346 = vshll.u32 2102212464, %v1334
  %v1347 = vshrl.u32 920167782, %v1335
  %v1348 = vor.u32 %v1346, %v1347
  %v1349 = vshll.u32 920167782, %v1334
  %v1350 = vshrl.u32 1326507024, %v1335
  %v1351 = vor.u32 %v1349, %v1350
  %vm1352 = vcmp.lt.s32.totalorder %v1333, 1
  %vm1353 = vcmp.lt.s32.totalorder %v1333, 2
  %vm1354 = vcmp.lt.s32.totalorder %v1333, 3
  %vm1355 = vcmp.lt.s32.totalorder %v1333, 4
  %v1356 = vsel %vm1352, %v1336, %v1339
  %v1357 = vsel %vm1355, %v1345, 2102212464
  %v1358 = vsel %vm1354, %v1342, %v1357
  %v1359 = vsel %vm1353, %v1356, %v1358
  %v1360 = vsel %vm1352, %v1339, %v1342
  %v1361 = vsel %vm1355, %v1348, 920167782
  %v1362 = vsel %vm1354, %v1345, %v1361
  %v1363 = vsel %vm1353, %v1360, %v1362
  %v1364 = vsel %vm1352, %v1342, %v1345
  %v1365 = vsel %vm1355, %v1351, 1326507024
  %v1366 = vsel %vm1354, %v1348, %v1365
  %v1367 = vsel %vm1353, %v1364, %v1366
  %v1368 = vshll.u32 %v1328, 8
  %v1369 = vmul.u32.u64.compose %v1368, %v1367
  %v1370 = vextract.low.u32 %v1369
  %v1371 = vextract.high.u32 %v1369
  %v1372 = vmul.u32.u64.compose %v1368, %v1363
  %v1373 = vextract.low.u32 %v1372
  %v1374 = vextract.high.u32 %v1372
  %v1375 = vmul.u32 %v1368, %v1359
  %v1376 = vadd.s32 %v1371, %v1373
  %vm1377 = vc.u32 %v1371, %v1373
  %v1378 = vadd.s32 %v1374, 1
  %v1379 = vsel %vm1377, %v1378, %v1374
  %v1380 = vadd.s32 %v1375, %v1379
  %v1381 = vadd.s32 %v1380, 536870912
  %v1382 = vshrl.u32 %v1381, 30
  %v1383 = vshll.u32 %v1382, 30
  %v1384 = vsub.s32 %v1380, %v1383
  %vm1385 = vcmp.lt.s32.totalorder %v1384, 0
  %v1386 = vsub.s32 0, %v1384
  %v1387 = vsel %vm1385, %v1386, %v1384
  %v1388 = vclz %v1387
  %v1389 = vsub.s32 %v1388, 2
  %vm1390 = vcmp.gt.s32.totalorder 0, %v1389
  %v1391 = vsel %vm1390, 0, %v1389
  %v1392 = vsub.s32 32, %v1391
  %v1393 = vshll.u32 %v1384, %v1391
  %v1394 = vshrl.u32 %v1376, %v1392
  %v1395 = vor.u32 %v1393, %v1394
  %v1396 = vsub.s32 4294967266, %v1391
  %v1397 = vadd.s32 %v1396, 127
  %v1398 = vshll.u32 %v1397, 23
  %v1399 = vor.u32 4788187, %v1398
  %v1400 = vand.u32 2147483647, %v1399
  %v1402 = vcvt.s32.f32 %v1395
  %v1403 = vmul.f32 %v1402, %v1400
  %v1404 = vxor.u32 %v1403, 2147483648
  %v1405 = vsel %vm1322, %v1404, %v1403
  %v1406 = vsub.s32 4, %v1382
  %v1407 = vsel %vm1322, %v1406, %v1382
  %v1408 = vsel %vm1321, %v274, %v1405
  %v1409 = vsel %vm1321, 0, %v1407
  %v1410 = vcosq.f32.pop %v1408
  %v1411 = vsinq.f32.pop %v1408
  %vm1412 = vweird.f32 %v274
  %v1413 = vadd.s32 %v1409, 3
  %v1414 = vand.u32 %v1413, 3
  %vm1415 = vcmp.lt.s32.totalorder %v1414, 2
  %vm1416 = vcmp.eq.s32.totalorder %v1414, 0
  %v1417 = vxor.u32 %v1411, 2147483648
  %v1418 = vsel %vm1416, %v1410, %v1417
  %vm1419 = vcmp.eq.s32.totalorder %v1414, 2
  %v1420 = vxor.u32 %v1410, 2147483648
  %v1421 = vsel %vm1419, %v1420, %v1411
  %v1422 = vsel %vm1415, %v1418, %v1421
  %v1423 = vsel %vm1412, nan, %v1422
  %v1424 = vand.u32 2147483647, %v275
  %vm1425 = vcmp.le.f32.partialorder %v1424, 0.7853982
  %vm1426 = vcmp.lt.s32.totalorder %v275, 0
  %v1427 = vand.u32 %v275, 2139095040
  %v1428 = vshrl.u32 %v1427, 23
  %v1429 = vsub.s32 %v1428, 127
  %v1430 = vand.u32 2147483647, %v275
  %v1431 = vand.u32 %v1430, 8388607
  %v1432 = vor.u32 %v1431, 8388608
  %v1433 = vsub.s32 0, %v1432
  %v1434 = vadd.s32 %v1429, 1
  %vm1435 = vcmp.gt.s32.totalorder %v1434, 0
  %v1436 = vsel %vm1435, %v1434, 0
  %v1437 = vshrl.u32 %v1436, 5
  %v1438 = vand.u32 %v1436, 31
  %v1439 = vsub.s32 32, %v1438
  %v1440 = vshrl.u32 683565275, %v1439
  %v1441 = vshll.u32 683565275, %v1438
  %v1442 = vshrl.u32 2475754826, %v1439
  %v1443 = vor.u32 %v1441, %v1442
  %v1444 = vshll.u32 2475754826, %v1438
  %v1445 = vshrl.u32 2131351028, %v1439
  %v1446 = vor.u32 %v1444, %v1445
  %v1447 = vshll.u32 2131351028, %v1438
  %v1448 = vshrl.u32 2102212464, %v1439
  %v1449 = vor.u32 %v1447, %v1448
  %v1450 = vshll.u32 2102212464, %v1438
  %v1451 = vshrl.u32 920167782, %v1439
  %v1452 = vor.u32 %v1450, %v1451
  %v1453 = vshll.u32 920167782, %v1438
  %v1454 = vshrl.u32 1326507024, %v1439
  %v1455 = vor.u32 %v1453, %v1454
  %vm1456 = vcmp.lt.s32.totalorder %v1437, 1
  %vm1457 = vcmp.lt.s32.totalorder %v1437, 2
  %vm1458 = vcmp.lt.s32.totalorder %v1437, 3
  %vm1459 = vcmp.lt.s32.totalorder %v1437, 4
  %v1460 = vsel %vm1456, %v1440, %v1443
  %v1461 = vsel %vm1459, %v1449, 2102212464
  %v1462 = vsel %vm1458, %v1446, %v1461
  %v1463 = vsel %vm1457, %v1460, %v1462
  %v1464 = vsel %vm1456, %v1443, %v1446
  %v1465 = vsel %vm1459, %v1452, 920167782
  %v1466 = vsel %vm1458, %v1449, %v1465
  %v1467 = vsel %vm1457, %v1464, %v1466
  %v1468 = vsel %vm1456, %v1446, %v1449
  %v1469 = vsel %vm1459, %v1455, 1326507024
  %v1470 = vsel %vm1458, %v1452, %v1469
  %v1471 = vsel %vm1457, %v1468, %v1470
  %v1472 = vshll.u32 %v1432, 8
  %v1473 = vmul.u32.u64.compose %v1472, %v1471
  %v1474 = vextract.low.u32 %v1473
  %v1475 = vextract.high.u32 %v1473
  %v1476 = vmul.u32.u64.compose %v1472, %v1467
  %v1477 = vextract.low.u32 %v1476
  %v1478 = vextract.high.u32 %v1476
  %v1479 = vmul.u32 %v1472, %v1463
  %v1480 = vadd.s32 %v1475, %v1477
  %vm1481 = vc.u32 %v1475, %v1477
  %v1482 = vadd.s32 %v1478, 1
  %v1483 = vsel %vm1481, %v1482, %v1478
  %v1484 = vadd.s32 %v1479, %v1483
  %v1485 = vadd.s32 %v1484, 536870912
  %v1486 = vshrl.u32 %v1485, 30
  %v1487 = vshll.u32 %v1486, 30
  %v1488 = vsub.s32 %v1484, %v1487
  %vm1489 = vcmp.lt.s32.totalorder %v1488, 0
  %v1490 = vsub.s32 0, %v1488
  %v1491 = vsel %vm1489, %v1490, %v1488
  %v1492 = vclz %v1491
  %v1493 = vsub.s32 %v1492, 2
  %vm1494 = vcmp.gt.s32.totalorder 0, %v1493
  %v1495 = vsel %vm1494, 0, %v1493
  %v1496 = vsub.s32 32, %v1495
  %v1497 = vshll.u32 %v1488, %v1495
  %v1498 = vshrl.u32 %v1480, %v1496
  %v1499 = vor.u32 %v1497, %v1498
  %v1500 = vsub.s32 4294967266, %v1495
  %v1501 = vadd.s32 %v1500, 127
  %v1502 = vshll.u32 %v1501, 23
  %v1503 = vor.u32 4788187, %v1502
  %v1504 = vand.u32 2147483647, %v1503
  %v1506 = vcvt.s32.f32 %v1499
  %v1507 = vmul.f32 %v1506, %v1504
  %v1508 = vxor.u32 %v1507, 2147483648
  %v1509 = vsel %vm1426, %v1508, %v1507
  %v1510 = vsub.s32 4, %v1486
  %v1511 = vsel %vm1426, %v1510, %v1486
  %v1512 = vsel %vm1425, %v275, %v1509
  %v1513 = vsel %vm1425, 0, %v1511
  %v1514 = vcosq.f32.pop %v1512
  %v1515 = vsinq.f32.pop %v1512
  %vm1516 = vweird.f32 %v275
  %v1517 = vadd.s32 %v1513, 3
  %v1518 = vand.u32 %v1517, 3
  %vm1519 = vcmp.lt.s32.totalorder %v1518, 2
  %vm1520 = vcmp.eq.s32.totalorder %v1518, 0
  %v1521 = vxor.u32 %v1515, 2147483648
  %v1522 = vsel %vm1520, %v1514, %v1521
  %vm1523 = vcmp.eq.s32.totalorder %v1518, 2
  %v1524 = vxor.u32 %v1514, 2147483648
  %v1525 = vsel %vm1523, %v1524, %v1515
  %v1526 = vsel %vm1519, %v1522, %v1525
  %v1527 = vsel %vm1516, nan, %v1526
  %v1528 = vand.u32 2147483647, %v276
  %vm1529 = vcmp.le.f32.partialorder %v1528, 0.7853982
  %vm1530 = vcmp.lt.s32.totalorder %v276, 0
  %v1531 = vand.u32 %v276, 2139095040
  %v1532 = vshrl.u32 %v1531, 23
  %v1533 = vsub.s32 %v1532, 127
  %v1534 = vand.u32 2147483647, %v276
  %v1535 = vand.u32 %v1534, 8388607
  %v1536 = vor.u32 %v1535, 8388608
  %v1537 = vsub.s32 0, %v1536
  %v1538 = vadd.s32 %v1533, 1
  %vm1539 = vcmp.gt.s32.totalorder %v1538, 0
  %v1540 = vsel %vm1539, %v1538, 0
  %v1541 = vshrl.u32 %v1540, 5
  %v1542 = vand.u32 %v1540, 31
  %v1543 = vsub.s32 32, %v1542
  %v1544 = vshrl.u32 683565275, %v1543
  %v1545 = vshll.u32 683565275, %v1542
  %v1546 = vshrl.u32 2475754826, %v1543
  %v1547 = vor.u32 %v1545, %v1546
  %v1548 = vshll.u32 2475754826, %v1542
  %v1549 = vshrl.u32 2131351028, %v1543
  %v1550 = vor.u32 %v1548, %v1549
  %v1551 = vshll.u32 2131351028, %v1542
  %v1552 = vshrl.u32 2102212464, %v1543
  %v1553 = vor.u32 %v1551, %v1552
  %v1554 = vshll.u32 2102212464, %v1542
  %v1555 = vshrl.u32 920167782, %v1543
  %v1556 = vor.u32 %v1554, %v1555
  %v1557 = vshll.u32 920167782, %v1542
  %v1558 = vshrl.u32 1326507024, %v1543
  %v1559 = vor.u32 %v1557, %v1558
  %vm1560 = vcmp.lt.s32.totalorder %v1541, 1
  %vm1561 = vcmp.lt.s32.totalorder %v1541, 2
  %vm1562 = vcmp.lt.s32.totalorder %v1541, 3
  %vm1563 = vcmp.lt.s32.totalorder %v1541, 4
  %v1564 = vsel %vm1560, %v1544, %v1547
  %v1565 = vsel %vm1563, %v1553, 2102212464
  %v1566 = vsel %vm1562, %v1550, %v1565
  %v1567 = vsel %vm1561, %v1564, %v1566
  %v1568 = vsel %vm1560, %v1547, %v1550
  %v1569 = vsel %vm1563, %v1556, 920167782
  %v1570 = vsel %vm1562, %v1553, %v1569
  %v1571 = vsel %vm1561, %v1568, %v1570
  %v1572 = vsel %vm1560, %v1550, %v1553
  %v1573 = vsel %vm1563, %v1559, 1326507024
  %v1574 = vsel %vm1562, %v1556, %v1573
  %v1575 = vsel %vm1561, %v1572, %v1574
  %v1576 = vshll.u32 %v1536, 8
  %v1577 = vmul.u32.u64.compose %v1576, %v1575
  %v1578 = vextract.low.u32 %v1577
  %v1579 = vextract.high.u32 %v1577
  %v1580 = vmul.u32.u64.compose %v1576, %v1571
  %v1581 = vextract.low.u32 %v1580
  %v1582 = vextract.high.u32 %v1580
  %v1583 = vmul.u32 %v1576, %v1567
  %v1584 = vadd.s32 %v1579, %v1581
  %vm1585 = vc.u32 %v1579, %v1581
  %v1586 = vadd.s32 %v1582, 1
  %v1587 = vsel %vm1585, %v1586, %v1582
  %v1588 = vadd.s32 %v1583, %v1587
  %v1589 = vadd.s32 %v1588, 536870912
  %v1590 = vshrl.u32 %v1589, 30
  %v1591 = vshll.u32 %v1590, 30
  %v1592 = vsub.s32 %v1588, %v1591
  %vm1593 = vcmp.lt.s32.totalorder %v1592, 0
  %v1594 = vsub.s32 0, %v1592
  %v1595 = vsel %vm1593, %v1594, %v1592
  %v1596 = vclz %v1595
  %v1597 = vsub.s32 %v1596, 2
  %vm1598 = vcmp.gt.s32.totalorder 0, %v1597
  %v1599 = vsel %vm1598, 0, %v1597
  %v1600 = vsub.s32 32, %v1599
  %v1601 = vshll.u32 %v1592, %v1599
  %v1602 = vshrl.u32 %v1584, %v1600
  %v1603 = vor.u32 %v1601, %v1602
  %v1604 = vsub.s32 4294967266, %v1599
  %v1605 = vadd.s32 %v1604, 127
  %v1606 = vshll.u32 %v1605, 23
  %v1607 = vor.u32 4788187, %v1606
  %v1608 = vand.u32 2147483647, %v1607
  %v1610 = vcvt.s32.f32 %v1603
  %v1611 = vmul.f32 %v1610, %v1608
  %v1612 = vxor.u32 %v1611, 2147483648
  %v1613 = vsel %vm1530, %v1612, %v1611
  %v1614 = vsub.s32 4, %v1590
  %v1615 = vsel %vm1530, %v1614, %v1590
  %v1616 = vsel %vm1529, %v276, %v1613
  %v1617 = vsel %vm1529, 0, %v1615
  %v1618 = vcosq.f32.pop %v1616
  %v1619 = vsinq.f32.pop %v1616
  %vm1620 = vweird.f32 %v276
  %v1621 = vadd.s32 %v1617, 3
  %v1622 = vand.u32 %v1621, 3
  %vm1623 = vcmp.lt.s32.totalorder %v1622, 2
  %vm1624 = vcmp.eq.s32.totalorder %v1622, 0
  %v1625 = vxor.u32 %v1619, 2147483648
  %v1626 = vsel %vm1624, %v1618, %v1625
  %vm1627 = vcmp.eq.s32.totalorder %v1622, 2
  %v1628 = vxor.u32 %v1618, 2147483648
  %v1629 = vsel %vm1627, %v1628, %v1619
  %v1630 = vsel %vm1623, %v1626, %v1629
  %v1631 = vsel %vm1620, nan, %v1630
  %v1632 = vand.u32 2147483647, %v277
  %vm1633 = vcmp.le.f32.partialorder %v1632, 0.7853982
  %vm1634 = vcmp.lt.s32.totalorder %v277, 0
  %v1635 = vand.u32 %v277, 2139095040
  %v1636 = vshrl.u32 %v1635, 23
  %v1637 = vsub.s32 %v1636, 127
  %v1638 = vand.u32 2147483647, %v277
  %v1639 = vand.u32 %v1638, 8388607
  %v1640 = vor.u32 %v1639, 8388608
  %v1641 = vsub.s32 0, %v1640
  %v1642 = vadd.s32 %v1637, 1
  %vm1643 = vcmp.gt.s32.totalorder %v1642, 0
  %v1644 = vsel %vm1643, %v1642, 0
  %v1645 = vshrl.u32 %v1644, 5
  %v1646 = vand.u32 %v1644, 31
  %v1647 = vsub.s32 32, %v1646
  %v1648 = vshrl.u32 683565275, %v1647
  %v1649 = vshll.u32 683565275, %v1646
  %v1650 = vshrl.u32 2475754826, %v1647
  %v1651 = vor.u32 %v1649, %v1650
  %v1652 = vshll.u32 2475754826, %v1646
  %v1653 = vshrl.u32 2131351028, %v1647
  %v1654 = vor.u32 %v1652, %v1653
  %v1655 = vshll.u32 2131351028, %v1646
  %v1656 = vshrl.u32 2102212464, %v1647
  %v1657 = vor.u32 %v1655, %v1656
  %v1658 = vshll.u32 2102212464, %v1646
  %v1659 = vshrl.u32 920167782, %v1647
  %v1660 = vor.u32 %v1658, %v1659
  %v1661 = vshll.u32 920167782, %v1646
  %v1662 = vshrl.u32 1326507024, %v1647
  %v1663 = vor.u32 %v1661, %v1662
  %vm1664 = vcmp.lt.s32.totalorder %v1645, 1
  %vm1665 = vcmp.lt.s32.totalorder %v1645, 2
  %vm1666 = vcmp.lt.s32.totalorder %v1645, 3
  %vm1667 = vcmp.lt.s32.totalorder %v1645, 4
  %v1668 = vsel %vm1664, %v1648, %v1651
  %v1669 = vsel %vm1667, %v1657, 2102212464
  %v1670 = vsel %vm1666, %v1654, %v1669
  %v1671 = vsel %vm1665, %v1668, %v1670
  %v1672 = vsel %vm1664, %v1651, %v1654
  %v1673 = vsel %vm1667, %v1660, 920167782
  %v1674 = vsel %vm1666, %v1657, %v1673
  %v1675 = vsel %vm1665, %v1672, %v1674
  %v1676 = vsel %vm1664, %v1654, %v1657
  %v1677 = vsel %vm1667, %v1663, 1326507024
  %v1678 = vsel %vm1666, %v1660, %v1677
  %v1679 = vsel %vm1665, %v1676, %v1678
  %v1680 = vshll.u32 %v1640, 8
  %v1681 = vmul.u32.u64.compose %v1680, %v1679
  %v1682 = vextract.low.u32 %v1681
  %v1683 = vextract.high.u32 %v1681
  %v1684 = vmul.u32.u64.compose %v1680, %v1675
  %v1685 = vextract.low.u32 %v1684
  %v1686 = vextract.high.u32 %v1684
  %v1687 = vmul.u32 %v1680, %v1671
  %v1688 = vadd.s32 %v1683, %v1685
  %vm1689 = vc.u32 %v1683, %v1685
  %v1690 = vadd.s32 %v1686, 1
  %v1691 = vsel %vm1689, %v1690, %v1686
  %v1692 = vadd.s32 %v1687, %v1691
  %v1693 = vadd.s32 %v1692, 536870912
  %v1694 = vshrl.u32 %v1693, 30
  %v1695 = vshll.u32 %v1694, 30
  %v1696 = vsub.s32 %v1692, %v1695
  %vm1697 = vcmp.lt.s32.totalorder %v1696, 0
  %v1698 = vsub.s32 0, %v1696
  %v1699 = vsel %vm1697, %v1698, %v1696
  %v1700 = vclz %v1699
  %v1701 = vsub.s32 %v1700, 2
  %vm1702 = vcmp.gt.s32.totalorder 0, %v1701
  %v1703 = vsel %vm1702, 0, %v1701
  %v1704 = vsub.s32 32, %v1703
  %v1705 = vshll.u32 %v1696, %v1703
  %v1706 = vshrl.u32 %v1688, %v1704
  %v1707 = vor.u32 %v1705, %v1706
  %v1708 = vsub.s32 4294967266, %v1703
  %v1709 = vadd.s32 %v1708, 127
  %v1710 = vshll.u32 %v1709, 23
  %v1711 = vor.u32 4788187, %v1710
  %v1712 = vand.u32 2147483647, %v1711
  %v1714 = vcvt.s32.f32 %v1707
  %v1715 = vmul.f32 %v1714, %v1712
  %v1716 = vxor.u32 %v1715, 2147483648
  %v1717 = vsel %vm1634, %v1716, %v1715
  %v1718 = vsub.s32 4, %v1694
  %v1719 = vsel %vm1634, %v1718, %v1694
  %v1720 = vsel %vm1633, %v277, %v1717
  %v1721 = vsel %vm1633, 0, %v1719
  %v1722 = vcosq.f32.pop %v1720
  %v1723 = vsinq.f32.pop %v1720
  %vm1724 = vweird.f32 %v277
  %v1725 = vadd.s32 %v1721, 3
  %v1726 = vand.u32 %v1725, 3
  %vm1727 = vcmp.lt.s32.totalorder %v1726, 2
  %vm1728 = vcmp.eq.s32.totalorder %v1726, 0
  %v1729 = vxor.u32 %v1723, 2147483648
  %v1730 = vsel %vm1728, %v1722, %v1729
  %vm1731 = vcmp.eq.s32.totalorder %v1726, 2
  %v1732 = vxor.u32 %v1722, 2147483648
  %v1733 = vsel %vm1731, %v1732, %v1723
  %v1734 = vsel %vm1727, %v1730, %v1733
  %v1735 = vsel %vm1724, nan, %v1734
  %v1736 = vand.u32 2147483647, %v278
  %vm1737 = vcmp.le.f32.partialorder %v1736, 0.7853982
  %vm1738 = vcmp.lt.s32.totalorder %v278, 0
  %v1739 = vand.u32 %v278, 2139095040
  %v1740 = vshrl.u32 %v1739, 23
  %v1741 = vsub.s32 %v1740, 127
  %v1742 = vand.u32 2147483647, %v278
  %v1743 = vand.u32 %v1742, 8388607
  %v1744 = vor.u32 %v1743, 8388608
  %v1745 = vsub.s32 0, %v1744
  %v1746 = vadd.s32 %v1741, 1
  %vm1747 = vcmp.gt.s32.totalorder %v1746, 0
  %v1748 = vsel %vm1747, %v1746, 0
  %v1749 = vshrl.u32 %v1748, 5
  %v1750 = vand.u32 %v1748, 31
  %v1751 = vsub.s32 32, %v1750
  %v1752 = vshrl.u32 683565275, %v1751
  %v1753 = vshll.u32 683565275, %v1750
  %v1754 = vshrl.u32 2475754826, %v1751
  %v1755 = vor.u32 %v1753, %v1754
  %v1756 = vshll.u32 2475754826, %v1750
  %v1757 = vshrl.u32 2131351028, %v1751
  %v1758 = vor.u32 %v1756, %v1757
  %v1759 = vshll.u32 2131351028, %v1750
  %v1760 = vshrl.u32 2102212464, %v1751
  %v1761 = vor.u32 %v1759, %v1760
  %v1762 = vshll.u32 2102212464, %v1750
  %v1763 = vshrl.u32 920167782, %v1751
  %v1764 = vor.u32 %v1762, %v1763
  %v1765 = vshll.u32 920167782, %v1750
  %v1766 = vshrl.u32 1326507024, %v1751
  %v1767 = vor.u32 %v1765, %v1766
  %vm1768 = vcmp.lt.s32.totalorder %v1749, 1
  %vm1769 = vcmp.lt.s32.totalorder %v1749, 2
  %vm1770 = vcmp.lt.s32.totalorder %v1749, 3
  %vm1771 = vcmp.lt.s32.totalorder %v1749, 4
  %v1772 = vsel %vm1768, %v1752, %v1755
  %v1773 = vsel %vm1771, %v1761, 2102212464
  %v1774 = vsel %vm1770, %v1758, %v1773
  %v1775 = vsel %vm1769, %v1772, %v1774
  %v1776 = vsel %vm1768, %v1755, %v1758
  %v1777 = vsel %vm1771, %v1764, 920167782
  %v1778 = vsel %vm1770, %v1761, %v1777
  %v1779 = vsel %vm1769, %v1776, %v1778
  %v1780 = vsel %vm1768, %v1758, %v1761
  %v1781 = vsel %vm1771, %v1767, 1326507024
  %v1782 = vsel %vm1770, %v1764, %v1781
  %v1783 = vsel %vm1769, %v1780, %v1782
  %v1784 = vshll.u32 %v1744, 8
  %v1785 = vmul.u32.u64.compose %v1784, %v1783
  %v1786 = vextract.low.u32 %v1785
  %v1787 = vextract.high.u32 %v1785
  %v1788 = vmul.u32.u64.compose %v1784, %v1779
  %v1789 = vextract.low.u32 %v1788
  %v1790 = vextract.high.u32 %v1788
  %v1791 = vmul.u32 %v1784, %v1775
  %v1792 = vadd.s32 %v1787, %v1789
  %vm1793 = vc.u32 %v1787, %v1789
  %v1794 = vadd.s32 %v1790, 1
  %v1795 = vsel %vm1793, %v1794, %v1790
  %v1796 = vadd.s32 %v1791, %v1795
  %v1797 = vadd.s32 %v1796, 536870912
  %v1798 = vshrl.u32 %v1797, 30
  %v1799 = vshll.u32 %v1798, 30
  %v1800 = vsub.s32 %v1796, %v1799
  %vm1801 = vcmp.lt.s32.totalorder %v1800, 0
  %v1802 = vsub.s32 0, %v1800
  %v1803 = vsel %vm1801, %v1802, %v1800
  %v1804 = vclz %v1803
  %v1805 = vsub.s32 %v1804, 2
  %vm1806 = vcmp.gt.s32.totalorder 0, %v1805
  %v1807 = vsel %vm1806, 0, %v1805
  %v1808 = vsub.s32 32, %v1807
  %v1809 = vshll.u32 %v1800, %v1807
  %v1810 = vshrl.u32 %v1792, %v1808
  %v1811 = vor.u32 %v1809, %v1810
  %v1812 = vsub.s32 4294967266, %v1807
  %v1813 = vadd.s32 %v1812, 127
  %v1814 = vshll.u32 %v1813, 23
  %v1815 = vor.u32 4788187, %v1814
  %v1816 = vand.u32 2147483647, %v1815
  %v1818 = vcvt.s32.f32 %v1811
  %v1819 = vmul.f32 %v1818, %v1816
  %v1820 = vxor.u32 %v1819, 2147483648
  %v1821 = vsel %vm1738, %v1820, %v1819
  %v1822 = vsub.s32 4, %v1798
  %v1823 = vsel %vm1738, %v1822, %v1798
  %v1824 = vsel %vm1737, %v278, %v1821
  %v1825 = vsel %vm1737, 0, %v1823
  %v1826 = vcosq.f32.pop %v1824
  %v1827 = vsinq.f32.pop %v1824
  %vm1828 = vweird.f32 %v278
  %v1829 = vadd.s32 %v1825, 3
  %v1830 = vand.u32 %v1829, 3
  %vm1831 = vcmp.lt.s32.totalorder %v1830, 2
  %vm1832 = vcmp.eq.s32.totalorder %v1830, 0
  %v1833 = vxor.u32 %v1827, 2147483648
  %v1834 = vsel %vm1832, %v1826, %v1833
  %vm1835 = vcmp.eq.s32.totalorder %v1830, 2
  %v1836 = vxor.u32 %v1826, 2147483648
  %v1837 = vsel %vm1835, %v1836, %v1827
  %v1838 = vsel %vm1831, %v1834, %v1837
  %v1839 = vsel %vm1828, nan, %v1838
  %v1840 = vand.u32 2147483647, %v279
  %vm1841 = vcmp.le.f32.partialorder %v1840, 0.7853982
  %vm1842 = vcmp.lt.s32.totalorder %v279, 0
  %v1843 = vand.u32 %v279, 2139095040
  %v1844 = vshrl.u32 %v1843, 23
  %v1845 = vsub.s32 %v1844, 127
  %v1846 = vand.u32 2147483647, %v279
  %v1847 = vand.u32 %v1846, 8388607
  %v1848 = vor.u32 %v1847, 8388608
  %v1849 = vsub.s32 0, %v1848
  %v1850 = vadd.s32 %v1845, 1
  %vm1851 = vcmp.gt.s32.totalorder %v1850, 0
  %v1852 = vsel %vm1851, %v1850, 0
  %v1853 = vshrl.u32 %v1852, 5
  %v1854 = vand.u32 %v1852, 31
  %v1855 = vsub.s32 32, %v1854
  %v1856 = vshrl.u32 683565275, %v1855
  %v1857 = vshll.u32 683565275, %v1854
  %v1858 = vshrl.u32 2475754826, %v1855
  %v1859 = vor.u32 %v1857, %v1858
  %v1860 = vshll.u32 2475754826, %v1854
  %v1861 = vshrl.u32 2131351028, %v1855
  %v1862 = vor.u32 %v1860, %v1861
  %v1863 = vshll.u32 2131351028, %v1854
  %v1864 = vshrl.u32 2102212464, %v1855
  %v1865 = vor.u32 %v1863, %v1864
  %v1866 = vshll.u32 2102212464, %v1854
  %v1867 = vshrl.u32 920167782, %v1855
  %v1868 = vor.u32 %v1866, %v1867
  %v1869 = vshll.u32 920167782, %v1854
  %v1870 = vshrl.u32 1326507024, %v1855
  %v1871 = vor.u32 %v1869, %v1870
  %vm1872 = vcmp.lt.s32.totalorder %v1853, 1
  %vm1873 = vcmp.lt.s32.totalorder %v1853, 2
  %vm1874 = vcmp.lt.s32.totalorder %v1853, 3
  %vm1875 = vcmp.lt.s32.totalorder %v1853, 4
  %v1876 = vsel %vm1872, %v1856, %v1859
  %v1877 = vsel %vm1875, %v1865, 2102212464
  %v1878 = vsel %vm1874, %v1862, %v1877
  %v1879 = vsel %vm1873, %v1876, %v1878
  %v1880 = vsel %vm1872, %v1859, %v1862
  %v1881 = vsel %vm1875, %v1868, 920167782
  %v1882 = vsel %vm1874, %v1865, %v1881
  %v1883 = vsel %vm1873, %v1880, %v1882
  %v1884 = vsel %vm1872, %v1862, %v1865
  %v1885 = vsel %vm1875, %v1871, 1326507024
  %v1886 = vsel %vm1874, %v1868, %v1885
  %v1887 = vsel %vm1873, %v1884, %v1886
  %v1888 = vshll.u32 %v1848, 8
  %v1889 = vmul.u32.u64.compose %v1888, %v1887
  %v1890 = vextract.low.u32 %v1889
  %v1891 = vextract.high.u32 %v1889
  %v1892 = vmul.u32.u64.compose %v1888, %v1883
  %v1893 = vextract.low.u32 %v1892
  %v1894 = vextract.high.u32 %v1892
  %v1895 = vmul.u32 %v1888, %v1879
  %v1896 = vadd.s32 %v1891, %v1893
  %vm1897 = vc.u32 %v1891, %v1893
  %v1898 = vadd.s32 %v1894, 1
  %v1899 = vsel %vm1897, %v1898, %v1894
  %v1900 = vadd.s32 %v1895, %v1899
  %v1901 = vadd.s32 %v1900, 536870912
  %v1902 = vshrl.u32 %v1901, 30
  %v1903 = vshll.u32 %v1902, 30
  %v1904 = vsub.s32 %v1900, %v1903
  %vm1905 = vcmp.lt.s32.totalorder %v1904, 0
  %v1906 = vsub.s32 0, %v1904
  %v1907 = vsel %vm1905, %v1906, %v1904
  %v1908 = vclz %v1907
  %v1909 = vsub.s32 %v1908, 2
  %vm1910 = vcmp.gt.s32.totalorder 0, %v1909
  %v1911 = vsel %vm1910, 0, %v1909
  %v1912 = vsub.s32 32, %v1911
  %v1913 = vshll.u32 %v1904, %v1911
  %v1914 = vshrl.u32 %v1896, %v1912
  %v1915 = vor.u32 %v1913, %v1914
  %v1916 = vsub.s32 4294967266, %v1911
  %v1917 = vadd.s32 %v1916, 127
  %v1918 = vshll.u32 %v1917, 23
  %v1919 = vor.u32 4788187, %v1918
  %v1920 = vand.u32 2147483647, %v1919
  %v1922 = vcvt.s32.f32 %v1915
  %v1923 = vmul.f32 %v1922, %v1920
  %v1924 = vxor.u32 %v1923, 2147483648
  %v1925 = vsel %vm1842, %v1924, %v1923
  %v1926 = vsub.s32 4, %v1902
  %v1927 = vsel %vm1842, %v1926, %v1902
  %v1928 = vsel %vm1841, %v279, %v1925
  %v1929 = vsel %vm1841, 0, %v1927
  %v1930 = vcosq.f32.pop %v1928
  %v1931 = vsinq.f32.pop %v1928
  %vm1932 = vweird.f32 %v279
  %v1933 = vadd.s32 %v1929, 3
  %v1934 = vand.u32 %v1933, 3
  %vm1935 = vcmp.lt.s32.totalorder %v1934, 2
  %vm1936 = vcmp.eq.s32.totalorder %v1934, 0
  %v1937 = vxor.u32 %v1931, 2147483648
  %v1938 = vsel %vm1936, %v1930, %v1937
  %vm1939 = vcmp.eq.s32.totalorder %v1934, 2
  %v1940 = vxor.u32 %v1930, 2147483648
  %v1941 = vsel %vm1939, %v1940, %v1931
  %v1942 = vsel %vm1935, %v1938, %v1941
  %v1943 = vsel %vm1932, nan, %v1942
  %v1944 = vld [vmem:[%s4] sm:$0xff]
  %v1945 = vld [vmem:[%s4 + $0x8] sm:$0xff]
  %v1946 = vld [vmem:[%s5] sm:$0x1]
  %v1948 = vlaneseq
  %v1949 = vshrl.u32 %v1948, 7
  %v1950 = vsub.s32 0, %v1949
  %v1951 = vrot.slane %v1946, %v1950
  %vm1953 = vcmask 130048
  %v1955 = vsel %vm1953, %v383, 0
  %v1958 = vsel %vm1953, %v487, 0
  %v1961 = vsel %vm1953, %v591, 0
  %v1964 = vsel %vm1953, %v695, 0
  %v1967 = vsel %vm1953, %v799, 0
  %v1970 = vsel %vm1953, %v903, 0
  %v1973 = vsel %vm1953, %v1007, 0
  %v1976 = vsel %vm1953, %v1111, 0
  %v1979 = vsel %vm1953, %v1215, 0
  %v1982 = vsel %vm1953, %v1319, 0
  %v1985 = vsel %vm1953, %v1423, 0
  %v1988 = vsel %vm1953, %v1527, 0
  %v1991 = vsel %vm1953, %v1631, 0
  %v1994 = vsel %vm1953, %v1735, 0
  %v1997 = vsel %vm1953, %v1839, 0
  %v2000 = vsel %vm1953, %v1943, 0
  %2002 = vmatprep.subr.mxu0 0.0
  %2003 = vmatpush1.msra.mxu0 0.0
  %2004 = vmatprep.subr.mxu0 0.0
  %2005 = vmatpush1.msra.mxu0 0.0
  %2006 = vmatprep.subr.mxu0 0.0
  %2007 = vmatpush1.msra.mxu0 0.0
  %2008 = vmatprep.subr.mxu0 0.0
  %2009 = vmatpush1.msra.mxu0 0.0
  %2010 = vmatprep.subr.mxu0 0.0
  %2011 = vmatpush1.msra.mxu0 0.0
  %2012 = vmatprep.subr.mxu0 0.0
  %2013 = vmatpush1.msra.mxu0 0.0
  %2014 = vmatprep.subr.mxu0 0.0
  %2015 = vmatpush1.msra.mxu0 0.0
  %2016 = vmatprep.subr.mxu0 0.0
  %2017 = vmatpush1.msra.mxu0 0.0
  %2018 = vmatprep.subr.mxu0 0.0
  %2019 = vmatpush1.msra.mxu0 0.0
  %2020 = vmatprep.subr.mxu0 0.0
  %2021 = vmatpush1.msra.mxu0 0.0
  %2022 = vmatprep.subr.mxu0 0.0
  %2023 = vmatpush1.msra.mxu0 0.0
  %2024 = vmatprep.subr.mxu0 0.0
  %2025 = vmatpush1.msra.mxu0 0.0
  %2026 = vmatprep.subr.mxu0 0.0
  %2027 = vmatpush1.msra.mxu0 0.0
  %2028 = vmatprep.subr.mxu0 0.0
  %2029 = vmatpush1.msra.mxu0 0.0
  %2030 = vmatprep.subr.mxu0 0.0
  %2031 = vmatpush1.msra.mxu0 %v1945
  %2032 = vmatprep.subr.mxu0 0.0
  %2033 = vmatpush1.msra.mxu0 %v1944
  %2034 = vmatprep.subr.mxu0 0.0
  %2035 = vmatpush2.msra.mxu0 0.0
  %2036 = vmatprep.subr.mxu0 0.0
  %2037 = vmatpush2.msra.mxu0 0.0
  %2038 = vmatprep.subr.mxu0 0.0
  %2039 = vmatpush2.msra.mxu0 0.0
  %2040 = vmatprep.subr.mxu0 0.0
  %2041 = vmatpush2.msra.mxu0 0.0
  %2042 = vmatprep.subr.mxu0 0.0
  %2043 = vmatpush2.msra.mxu0 0.0
  %2044 = vmatprep.subr.mxu0 0.0
  %2045 = vmatpush2.msra.mxu0 0.0
  %2046 = vmatprep.subr.mxu0 0.0
  %2047 = vmatpush2.msra.mxu0 0.0
  %2048 = vmatprep.subr.mxu0 0.0
  %2049 = vmatpush2.msra.mxu0 0.0
  %2050 = vmatprep.subr.mxu0 0.0
  %2051 = vmatpush2.msra.mxu0 0.0
  %2052 = vmatprep.subr.mxu0 0.0
  %2053 = vmatpush2.msra.mxu0 0.0
  %2054 = vmatprep.subr.mxu0 0.0
  %2055 = vmatpush2.msra.mxu0 0.0
  %2056 = vmatprep.subr.mxu0 0.0
  %2057 = vmatpush2.msra.mxu0 0.0
  %2058 = vmatprep.subr.mxu0 0.0
  %2059 = vmatpush2.msra.mxu0 0.0
  %2060 = vmatprep.subr.mxu0 0.0
  %2061 = vmatpush2.msra.mxu0 0.0
  %2062 = vmatprep.subr.mxu0 0.0
  %2063 = vmatpush2.msra.mxu0 0.0
  %2064 = vmatprep.subr.mxu0 0.0
  %2065 = vmatpush2.msra.mxu0 0.0
  %2066 = vmatprep.mubr.f32.mxu0 0.0
  %2067 = vmatmul.mubr.f32.gmra.mxu0 %v1955
  %v2068 = vpop.f32.mrf.mxu0
  %v2069 = vadd.f32 %v1951, %v2068
  %v2070 = vpop.f32.mrf.mxu0
  %2071 = vmatprep.mubr.f32.mxu0 0.0
  %2072 = vmatmul.mubr.f32.gmra.mxu0 %v1958
  %v2073 = vpop.f32.mrf.mxu0
  %v2074 = vadd.f32 %v1951, %v2073
  %v2075 = vpop.f32.mrf.mxu0
  %2076 = vmatprep.mubr.f32.mxu0 0.0
  %2077 = vmatmul.mubr.f32.gmra.mxu0 %v1961
  %v2078 = vpop.f32.mrf.mxu0
  %v2079 = vadd.f32 %v1951, %v2078
  %v2080 = vpop.f32.mrf.mxu0
  %2081 = vmatprep.mubr.f32.mxu0 0.0
  %2082 = vmatmul.mubr.f32.gmra.mxu0 %v1964
  %v2083 = vpop.f32.mrf.mxu0
  %v2084 = vadd.f32 %v1951, %v2083
  %v2085 = vpop.f32.mrf.mxu0
  %2086 = vmatprep.mubr.f32.mxu0 0.0
  %2087 = vmatmul.mubr.f32.gmra.mxu0 %v1967
  %v2088 = vpop.f32.mrf.mxu0
  %v2089 = vadd.f32 %v1951, %v2088
  %v2090 = vpop.f32.mrf.mxu0
  %2091 = vmatprep.mubr.f32.mxu0 0.0
  %2092 = vmatmul.mubr.f32.gmra.mxu0 %v1970
  %v2093 = vpop.f32.mrf.mxu0
  %v2094 = vadd.f32 %v1951, %v2093
  %v2095 = vpop.f32.mrf.mxu0
  %2096 = vmatprep.mubr.f32.mxu0 0.0
  %2097 = vmatmul.mubr.f32.gmra.mxu0 %v1973
  %v2098 = vpop.f32.mrf.mxu0
  %v2099 = vadd.f32 %v1951, %v2098
  %v2100 = vpop.f32.mrf.mxu0
  %2101 = vmatprep.mubr.f32.mxu0 0.0
  %2102 = vmatmul.mubr.f32.gmra.mxu0 %v1976
  %v2103 = vpop.f32.mrf.mxu0
  %v2104 = vadd.f32 %v1951, %v2103
  %v2105 = vpop.f32.mrf.mxu0
  %2106 = vmatprep.mubr.f32.mxu0 0.0
  %2107 = vmatmul.mubr.f32.gmra.mxu0 %v1979
  %v2108 = vpop.f32.mrf.mxu0
  %v2109 = vadd.f32 %v1951, %v2108
  %v2110 = vpop.f32.mrf.mxu0
  %2111 = vmatprep.mubr.f32.mxu0 0.0
  %2112 = vmatmul.mubr.f32.gmra.mxu0 %v1982
  %v2113 = vpop.f32.mrf.mxu0
  %v2114 = vadd.f32 %v1951, %v2113
  %v2115 = vpop.f32.mrf.mxu0
  %2116 = vmatprep.mubr.f32.mxu0 0.0
  %2117 = vmatmul.mubr.f32.gmra.mxu0 %v1985
  %v2118 = vpop.f32.mrf.mxu0
  %v2119 = vadd.f32 %v1951, %v2118
  %v2120 = vpop.f32.mrf.mxu0
  %2121 = vmatprep.mubr.f32.mxu0 0.0
  %2122 = vmatmul.mubr.f32.gmra.mxu0 %v1988
  %v2123 = vpop.f32.mrf.mxu0
  %v2124 = vadd.f32 %v1951, %v2123
  %v2125 = vpop.f32.mrf.mxu0
  %2126 = vmatprep.mubr.f32.mxu0 0.0
  %2127 = vmatmul.mubr.f32.gmra.mxu0 %v1991
  %v2128 = vpop.f32.mrf.mxu0
  %v2129 = vadd.f32 %v1951, %v2128
  %v2130 = vpop.f32.mrf.mxu0
  %2131 = vmatprep.mubr.f32.mxu0 0.0
  %2132 = vmatmul.mubr.f32.gmra.mxu0 %v1994
  %v2133 = vpop.f32.mrf.mxu0
  %v2134 = vadd.f32 %v1951, %v2133
  %v2135 = vpop.f32.mrf.mxu0
  %2136 = vmatprep.mubr.f32.mxu0 0.0
  %2137 = vmatmul.mubr.f32.gmra.mxu0 %v1997
  %v2138 = vpop.f32.mrf.mxu0
  %v2139 = vadd.f32 %v1951, %v2138
  %v2140 = vpop.f32.mrf.mxu0
  %2141 = vmatprep.mubr.f32.mxu0 0.0
  %2142 = vmatmul.mubr.f32.gmra.mxu0 %v2000
  %v2143 = vpop.f32.mrf.mxu0
  %v2144 = vadd.f32 %v1951, %v2143
  %v2145 = vpop.f32.mrf.mxu0
  %2146 = vdwg.mxu0
  %v2147 = vmul.f32 %v262, %v2069
  %v2148 = vmul.f32 %v262, %v2074
  %v2149 = vmul.f32 %v262, %v2079
  %v2150 = vmul.f32 %v262, %v2084
  %v2151 = vmul.f32 %v262, %v2089
  %v2152 = vmul.f32 %v262, %v2094
  %v2153 = vmul.f32 %v262, %v2099
  %v2154 = vmul.f32 %v262, %v2104
  %v2155 = vmul.f32 %v262, %v2109
  %v2156 = vmul.f32 %v262, %v2114
  %v2157 = vmul.f32 %v262, %v2119
  %v2158 = vmul.f32 %v262, %v2124
  %v2159 = vmul.f32 %v262, %v2129
  %v2160 = vmul.f32 %v262, %v2134
  %v2161 = vmul.f32 %v262, %v2139
  %v2162 = vmul.f32 %v262, %v2144
  %v2163 = vand.u32 2147483647, %v2147
  %vm2164 = vcmp.le.f32.partialorder %v2163, 0.7853982
  %vm2165 = vcmp.lt.s32.totalorder %v2147, 0
  %v2166 = vand.u32 %v2147, 2139095040
  %v2167 = vshrl.u32 %v2166, 23
  %v2168 = vsub.s32 %v2167, 127
  %v2169 = vand.u32 2147483647, %v2147
  %v2170 = vand.u32 %v2169, 8388607
  %v2171 = vor.u32 %v2170, 8388608
  %v2172 = vsub.s32 0, %v2171
  %v2173 = vadd.s32 %v2168, 1
  %vm2174 = vcmp.gt.s32.totalorder %v2173, 0
  %v2175 = vsel %vm2174, %v2173, 0
  %v2176 = vshrl.u32 %v2175, 5
  %v2177 = vand.u32 %v2175, 31
  %v2178 = vsub.s32 32, %v2177
  %v2179 = vshrl.u32 683565275, %v2178
  %v2180 = vshll.u32 683565275, %v2177
  %v2181 = vshrl.u32 2475754826, %v2178
  %v2182 = vor.u32 %v2180, %v2181
  %v2183 = vshll.u32 2475754826, %v2177
  %v2184 = vshrl.u32 2131351028, %v2178
  %v2185 = vor.u32 %v2183, %v2184
  %v2186 = vshll.u32 2131351028, %v2177
  %v2187 = vshrl.u32 2102212464, %v2178
  %v2188 = vor.u32 %v2186, %v2187
  %v2189 = vshll.u32 2102212464, %v2177
  %v2190 = vshrl.u32 920167782, %v2178
  %v2191 = vor.u32 %v2189, %v2190
  %v2192 = vshll.u32 920167782, %v2177
  %v2193 = vshrl.u32 1326507024, %v2178
  %v2194 = vor.u32 %v2192, %v2193
  %vm2195 = vcmp.lt.s32.totalorder %v2176, 1
  %vm2196 = vcmp.lt.s32.totalorder %v2176, 2
  %vm2197 = vcmp.lt.s32.totalorder %v2176, 3
  %vm2198 = vcmp.lt.s32.totalorder %v2176, 4
  %v2199 = vsel %vm2195, %v2179, %v2182
  %v2200 = vsel %vm2198, %v2188, 2102212464
  %v2201 = vsel %vm2197, %v2185, %v2200
  %v2202 = vsel %vm2196, %v2199, %v2201
  %v2203 = vsel %vm2195, %v2182, %v2185
  %v2204 = vsel %vm2198, %v2191, 920167782
  %v2205 = vsel %vm2197, %v2188, %v2204
  %v2206 = vsel %vm2196, %v2203, %v2205
  %v2207 = vsel %vm2195, %v2185, %v2188
  %v2208 = vsel %vm2198, %v2194, 1326507024
  %v2209 = vsel %vm2197, %v2191, %v2208
  %v2210 = vsel %vm2196, %v2207, %v2209
  %v2211 = vshll.u32 %v2171, 8
  %v2212 = vmul.u32.u64.compose %v2211, %v2210
  %v2213 = vextract.low.u32 %v2212
  %v2214 = vextract.high.u32 %v2212
  %v2215 = vmul.u32.u64.compose %v2211, %v2206
  %v2216 = vextract.low.u32 %v2215
  %v2217 = vextract.high.u32 %v2215
  %v2218 = vmul.u32 %v2211, %v2202
  %v2219 = vadd.s32 %v2214, %v2216
  %vm2220 = vc.u32 %v2214, %v2216
  %v2221 = vadd.s32 %v2217, 1
  %v2222 = vsel %vm2220, %v2221, %v2217
  %v2223 = vadd.s32 %v2218, %v2222
  %v2224 = vadd.s32 %v2223, 536870912
  %v2225 = vshrl.u32 %v2224, 30
  %v2226 = vshll.u32 %v2225, 30
  %v2227 = vsub.s32 %v2223, %v2226
  %vm2228 = vcmp.lt.s32.totalorder %v2227, 0
  %v2229 = vsub.s32 0, %v2227
  %v2230 = vsel %vm2228, %v2229, %v2227
  %v2231 = vclz %v2230
  %v2232 = vsub.s32 %v2231, 2
  %vm2233 = vcmp.gt.s32.totalorder 0, %v2232
  %v2234 = vsel %vm2233, 0, %v2232
  %v2235 = vsub.s32 32, %v2234
  %v2236 = vshll.u32 %v2227, %v2234
  %v2237 = vshrl.u32 %v2219, %v2235
  %v2238 = vor.u32 %v2236, %v2237
  %v2239 = vsub.s32 4294967266, %v2234
  %v2240 = vadd.s32 %v2239, 127
  %v2241 = vshll.u32 %v2240, 23
  %v2242 = vor.u32 4788187, %v2241
  %v2243 = vand.u32 2147483647, %v2242
  %v2245 = vcvt.s32.f32 %v2238
  %v2246 = vmul.f32 %v2245, %v2243
  %v2247 = vxor.u32 %v2246, 2147483648
  %v2248 = vsel %vm2165, %v2247, %v2246
  %v2249 = vsub.s32 4, %v2225
  %v2250 = vsel %vm2165, %v2249, %v2225
  %v2251 = vsel %vm2164, %v2147, %v2248
  %v2252 = vsel %vm2164, 0, %v2250
  %v2253 = vcosq.f32.pop %v2251
  %v2254 = vsinq.f32.pop %v2251
  %vm2255 = vweird.f32 %v2147
  %v2256 = vadd.s32 %v2252, 3
  %v2257 = vand.u32 %v2256, 3
  %vm2258 = vcmp.lt.s32.totalorder %v2257, 2
  %vm2259 = vcmp.eq.s32.totalorder %v2257, 0
  %v2260 = vxor.u32 %v2254, 2147483648
  %v2261 = vsel %vm2259, %v2253, %v2260
  %vm2262 = vcmp.eq.s32.totalorder %v2257, 2
  %v2263 = vxor.u32 %v2253, 2147483648
  %v2264 = vsel %vm2262, %v2263, %v2254
  %v2265 = vsel %vm2258, %v2261, %v2264
  %v2266 = vsel %vm2255, nan, %v2265
  %v2267 = vand.u32 2147483647, %v2148
  %vm2268 = vcmp.le.f32.partialorder %v2267, 0.7853982
  %vm2269 = vcmp.lt.s32.totalorder %v2148, 0
  %v2270 = vand.u32 %v2148, 2139095040
  %v2271 = vshrl.u32 %v2270, 23
  %v2272 = vsub.s32 %v2271, 127
  %v2273 = vand.u32 2147483647, %v2148
  %v2274 = vand.u32 %v2273, 8388607
  %v2275 = vor.u32 %v2274, 8388608
  %v2276 = vsub.s32 0, %v2275
  %v2277 = vadd.s32 %v2272, 1
  %vm2278 = vcmp.gt.s32.totalorder %v2277, 0
  %v2279 = vsel %vm2278, %v2277, 0
  %v2280 = vshrl.u32 %v2279, 5
  %v2281 = vand.u32 %v2279, 31
  %v2282 = vsub.s32 32, %v2281
  %v2283 = vshrl.u32 683565275, %v2282
  %v2284 = vshll.u32 683565275, %v2281
  %v2285 = vshrl.u32 2475754826, %v2282
  %v2286 = vor.u32 %v2284, %v2285
  %v2287 = vshll.u32 2475754826, %v2281
  %v2288 = vshrl.u32 2131351028, %v2282
  %v2289 = vor.u32 %v2287, %v2288
  %v2290 = vshll.u32 2131351028, %v2281
  %v2291 = vshrl.u32 2102212464, %v2282
  %v2292 = vor.u32 %v2290, %v2291
  %v2293 = vshll.u32 2102212464, %v2281
  %v2294 = vshrl.u32 920167782, %v2282
  %v2295 = vor.u32 %v2293, %v2294
  %v2296 = vshll.u32 920167782, %v2281
  %v2297 = vshrl.u32 1326507024, %v2282
  %v2298 = vor.u32 %v2296, %v2297
  %vm2299 = vcmp.lt.s32.totalorder %v2280, 1
  %vm2300 = vcmp.lt.s32.totalorder %v2280, 2
  %vm2301 = vcmp.lt.s32.totalorder %v2280, 3
  %vm2302 = vcmp.lt.s32.totalorder %v2280, 4
  %v2303 = vsel %vm2299, %v2283, %v2286
  %v2304 = vsel %vm2302, %v2292, 2102212464
  %v2305 = vsel %vm2301, %v2289, %v2304
  %v2306 = vsel %vm2300, %v2303, %v2305
  %v2307 = vsel %vm2299, %v2286, %v2289
  %v2308 = vsel %vm2302, %v2295, 920167782
  %v2309 = vsel %vm2301, %v2292, %v2308
  %v2310 = vsel %vm2300, %v2307, %v2309
  %v2311 = vsel %vm2299, %v2289, %v2292
  %v2312 = vsel %vm2302, %v2298, 1326507024
  %v2313 = vsel %vm2301, %v2295, %v2312
  %v2314 = vsel %vm2300, %v2311, %v2313
  %v2315 = vshll.u32 %v2275, 8
  %v2316 = vmul.u32.u64.compose %v2315, %v2314
  %v2317 = vextract.low.u32 %v2316
  %v2318 = vextract.high.u32 %v2316
  %v2319 = vmul.u32.u64.compose %v2315, %v2310
  %v2320 = vextract.low.u32 %v2319
  %v2321 = vextract.high.u32 %v2319
  %v2322 = vmul.u32 %v2315, %v2306
  %v2323 = vadd.s32 %v2318, %v2320
  %vm2324 = vc.u32 %v2318, %v2320
  %v2325 = vadd.s32 %v2321, 1
  %v2326 = vsel %vm2324, %v2325, %v2321
  %v2327 = vadd.s32 %v2322, %v2326
  %v2328 = vadd.s32 %v2327, 536870912
  %v2329 = vshrl.u32 %v2328, 30
  %v2330 = vshll.u32 %v2329, 30
  %v2331 = vsub.s32 %v2327, %v2330
  %vm2332 = vcmp.lt.s32.totalorder %v2331, 0
  %v2333 = vsub.s32 0, %v2331
  %v2334 = vsel %vm2332, %v2333, %v2331
  %v2335 = vclz %v2334
  %v2336 = vsub.s32 %v2335, 2
  %vm2337 = vcmp.gt.s32.totalorder 0, %v2336
  %v2338 = vsel %vm2337, 0, %v2336
  %v2339 = vsub.s32 32, %v2338
  %v2340 = vshll.u32 %v2331, %v2338
  %v2341 = vshrl.u32 %v2323, %v2339
  %v2342 = vor.u32 %v2340, %v2341
  %v2343 = vsub.s32 4294967266, %v2338
  %v2344 = vadd.s32 %v2343, 127
  %v2345 = vshll.u32 %v2344, 23
  %v2346 = vor.u32 4788187, %v2345
  %v2347 = vand.u32 2147483647, %v2346
  %v2349 = vcvt.s32.f32 %v2342
  %v2350 = vmul.f32 %v2349, %v2347
  %v2351 = vxor.u32 %v2350, 2147483648
  %v2352 = vsel %vm2269, %v2351, %v2350
  %v2353 = vsub.s32 4, %v2329
  %v2354 = vsel %vm2269, %v2353, %v2329
  %v2355 = vsel %vm2268, %v2148, %v2352
  %v2356 = vsel %vm2268, 0, %v2354
  %v2357 = vcosq.f32.pop %v2355
  %v2358 = vsinq.f32.pop %v2355
  %vm2359 = vweird.f32 %v2148
  %v2360 = vadd.s32 %v2356, 3
  %v2361 = vand.u32 %v2360, 3
  %vm2362 = vcmp.lt.s32.totalorder %v2361, 2
  %vm2363 = vcmp.eq.s32.totalorder %v2361, 0
  %v2364 = vxor.u32 %v2358, 2147483648
  %v2365 = vsel %vm2363, %v2357, %v2364
  %vm2366 = vcmp.eq.s32.totalorder %v2361, 2
  %v2367 = vxor.u32 %v2357, 2147483648
  %v2368 = vsel %vm2366, %v2367, %v2358
  %v2369 = vsel %vm2362, %v2365, %v2368
  %v2370 = vsel %vm2359, nan, %v2369
  %v2371 = vand.u32 2147483647, %v2149
  %vm2372 = vcmp.le.f32.partialorder %v2371, 0.7853982
  %vm2373 = vcmp.lt.s32.totalorder %v2149, 0
  %v2374 = vand.u32 %v2149, 2139095040
  %v2375 = vshrl.u32 %v2374, 23
  %v2376 = vsub.s32 %v2375, 127
  %v2377 = vand.u32 2147483647, %v2149
  %v2378 = vand.u32 %v2377, 8388607
  %v2379 = vor.u32 %v2378, 8388608
  %v2380 = vsub.s32 0, %v2379
  %v2381 = vadd.s32 %v2376, 1
  %vm2382 = vcmp.gt.s32.totalorder %v2381, 0
  %v2383 = vsel %vm2382, %v2381, 0
  %v2384 = vshrl.u32 %v2383, 5
  %v2385 = vand.u32 %v2383, 31
  %v2386 = vsub.s32 32, %v2385
  %v2387 = vshrl.u32 683565275, %v2386
  %v2388 = vshll.u32 683565275, %v2385
  %v2389 = vshrl.u32 2475754826, %v2386
  %v2390 = vor.u32 %v2388, %v2389
  %v2391 = vshll.u32 2475754826, %v2385
  %v2392 = vshrl.u32 2131351028, %v2386
  %v2393 = vor.u32 %v2391, %v2392
  %v2394 = vshll.u32 2131351028, %v2385
  %v2395 = vshrl.u32 2102212464, %v2386
  %v2396 = vor.u32 %v2394, %v2395
  %v2397 = vshll.u32 2102212464, %v2385
  %v2398 = vshrl.u32 920167782, %v2386
  %v2399 = vor.u32 %v2397, %v2398
  %v2400 = vshll.u32 920167782, %v2385
  %v2401 = vshrl.u32 1326507024, %v2386
  %v2402 = vor.u32 %v2400, %v2401
  %vm2403 = vcmp.lt.s32.totalorder %v2384, 1
  %vm2404 = vcmp.lt.s32.totalorder %v2384, 2
  %vm2405 = vcmp.lt.s32.totalorder %v2384, 3
  %vm2406 = vcmp.lt.s32.totalorder %v2384, 4
  %v2407 = vsel %vm2403, %v2387, %v2390
  %v2408 = vsel %vm2406, %v2396, 2102212464
  %v2409 = vsel %vm2405, %v2393, %v2408
  %v2410 = vsel %vm2404, %v2407, %v2409
  %v2411 = vsel %vm2403, %v2390, %v2393
  %v2412 = vsel %vm2406, %v2399, 920167782
  %v2413 = vsel %vm2405, %v2396, %v2412
  %v2414 = vsel %vm2404, %v2411, %v2413
  %v2415 = vsel %vm2403, %v2393, %v2396
  %v2416 = vsel %vm2406, %v2402, 1326507024
  %v2417 = vsel %vm2405, %v2399, %v2416
  %v2418 = vsel %vm2404, %v2415, %v2417
  %v2419 = vshll.u32 %v2379, 8
  %v2420 = vmul.u32.u64.compose %v2419, %v2418
  %v2421 = vextract.low.u32 %v2420
  %v2422 = vextract.high.u32 %v2420
  %v2423 = vmul.u32.u64.compose %v2419, %v2414
  %v2424 = vextract.low.u32 %v2423
  %v2425 = vextract.high.u32 %v2423
  %v2426 = vmul.u32 %v2419, %v2410
  %v2427 = vadd.s32 %v2422, %v2424
  %vm2428 = vc.u32 %v2422, %v2424
  %v2429 = vadd.s32 %v2425, 1
  %v2430 = vsel %vm2428, %v2429, %v2425
  %v2431 = vadd.s32 %v2426, %v2430
  %v2432 = vadd.s32 %v2431, 536870912
  %v2433 = vshrl.u32 %v2432, 30
  %v2434 = vshll.u32 %v2433, 30
  %v2435 = vsub.s32 %v2431, %v2434
  %vm2436 = vcmp.lt.s32.totalorder %v2435, 0
  %v2437 = vsub.s32 0, %v2435
  %v2438 = vsel %vm2436, %v2437, %v2435
  %v2439 = vclz %v2438
  %v2440 = vsub.s32 %v2439, 2
  %vm2441 = vcmp.gt.s32.totalorder 0, %v2440
  %v2442 = vsel %vm2441, 0, %v2440
  %v2443 = vsub.s32 32, %v2442
  %v2444 = vshll.u32 %v2435, %v2442
  %v2445 = vshrl.u32 %v2427, %v2443
  %v2446 = vor.u32 %v2444, %v2445
  %v2447 = vsub.s32 4294967266, %v2442
  %v2448 = vadd.s32 %v2447, 127
  %v2449 = vshll.u32 %v2448, 23
  %v2450 = vor.u32 4788187, %v2449
  %v2451 = vand.u32 2147483647, %v2450
  %v2453 = vcvt.s32.f32 %v2446
  %v2454 = vmul.f32 %v2453, %v2451
  %v2455 = vxor.u32 %v2454, 2147483648
  %v2456 = vsel %vm2373, %v2455, %v2454
  %v2457 = vsub.s32 4, %v2433
  %v2458 = vsel %vm2373, %v2457, %v2433
  %v2459 = vsel %vm2372, %v2149, %v2456
  %v2460 = vsel %vm2372, 0, %v2458
  %v2461 = vcosq.f32.pop %v2459
  %v2462 = vsinq.f32.pop %v2459
  %vm2463 = vweird.f32 %v2149
  %v2464 = vadd.s32 %v2460, 3
  %v2465 = vand.u32 %v2464, 3
  %vm2466 = vcmp.lt.s32.totalorder %v2465, 2
  %vm2467 = vcmp.eq.s32.totalorder %v2465, 0
  %v2468 = vxor.u32 %v2462, 2147483648
  %v2469 = vsel %vm2467, %v2461, %v2468
  %vm2470 = vcmp.eq.s32.totalorder %v2465, 2
  %v2471 = vxor.u32 %v2461, 2147483648
  %v2472 = vsel %vm2470, %v2471, %v2462
  %v2473 = vsel %vm2466, %v2469, %v2472
  %v2474 = vsel %vm2463, nan, %v2473
  %v2475 = vand.u32 2147483647, %v2150
  %vm2476 = vcmp.le.f32.partialorder %v2475, 0.7853982
  %vm2477 = vcmp.lt.s32.totalorder %v2150, 0
  %v2478 = vand.u32 %v2150, 2139095040
  %v2479 = vshrl.u32 %v2478, 23
  %v2480 = vsub.s32 %v2479, 127
  %v2481 = vand.u32 2147483647, %v2150
  %v2482 = vand.u32 %v2481, 8388607
  %v2483 = vor.u32 %v2482, 8388608
  %v2484 = vsub.s32 0, %v2483
  %v2485 = vadd.s32 %v2480, 1
  %vm2486 = vcmp.gt.s32.totalorder %v2485, 0
  %v2487 = vsel %vm2486, %v2485, 0
  %v2488 = vshrl.u32 %v2487, 5
  %v2489 = vand.u32 %v2487, 31
  %v2490 = vsub.s32 32, %v2489
  %v2491 = vshrl.u32 683565275, %v2490
  %v2492 = vshll.u32 683565275, %v2489
  %v2493 = vshrl.u32 2475754826, %v2490
  %v2494 = vor.u32 %v2492, %v2493
  %v2495 = vshll.u32 2475754826, %v2489
  %v2496 = vshrl.u32 2131351028, %v2490
  %v2497 = vor.u32 %v2495, %v2496
  %v2498 = vshll.u32 2131351028, %v2489
  %v2499 = vshrl.u32 2102212464, %v2490
  %v2500 = vor.u32 %v2498, %v2499
  %v2501 = vshll.u32 2102212464, %v2489
  %v2502 = vshrl.u32 920167782, %v2490
  %v2503 = vor.u32 %v2501, %v2502
  %v2504 = vshll.u32 920167782, %v2489
  %v2505 = vshrl.u32 1326507024, %v2490
  %v2506 = vor.u32 %v2504, %v2505
  %vm2507 = vcmp.lt.s32.totalorder %v2488, 1
  %vm2508 = vcmp.lt.s32.totalorder %v2488, 2
  %vm2509 = vcmp.lt.s32.totalorder %v2488, 3
  %vm2510 = vcmp.lt.s32.totalorder %v2488, 4
  %v2511 = vsel %vm2507, %v2491, %v2494
  %v2512 = vsel %vm2510, %v2500, 2102212464
  %v2513 = vsel %vm2509, %v2497, %v2512
  %v2514 = vsel %vm2508, %v2511, %v2513
  %v2515 = vsel %vm2507, %v2494, %v2497
  %v2516 = vsel %vm2510, %v2503, 920167782
  %v2517 = vsel %vm2509, %v2500, %v2516
  %v2518 = vsel %vm2508, %v2515, %v2517
  %v2519 = vsel %vm2507, %v2497, %v2500
  %v2520 = vsel %vm2510, %v2506, 1326507024
  %v2521 = vsel %vm2509, %v2503, %v2520
  %v2522 = vsel %vm2508, %v2519, %v2521
  %v2523 = vshll.u32 %v2483, 8
  %v2524 = vmul.u32.u64.compose %v2523, %v2522
  %v2525 = vextract.low.u32 %v2524
  %v2526 = vextract.high.u32 %v2524
  %v2527 = vmul.u32.u64.compose %v2523, %v2518
  %v2528 = vextract.low.u32 %v2527
  %v2529 = vextract.high.u32 %v2527
  %v2530 = vmul.u32 %v2523, %v2514
  %v2531 = vadd.s32 %v2526, %v2528
  %vm2532 = vc.u32 %v2526, %v2528
  %v2533 = vadd.s32 %v2529, 1
  %v2534 = vsel %vm2532, %v2533, %v2529
  %v2535 = vadd.s32 %v2530, %v2534
  %v2536 = vadd.s32 %v2535, 536870912
  %v2537 = vshrl.u32 %v2536, 30
  %v2538 = vshll.u32 %v2537, 30
  %v2539 = vsub.s32 %v2535, %v2538
  %vm2540 = vcmp.lt.s32.totalorder %v2539, 0
  %v2541 = vsub.s32 0, %v2539
  %v2542 = vsel %vm2540, %v2541, %v2539
  %v2543 = vclz %v2542
  %v2544 = vsub.s32 %v2543, 2
  %vm2545 = vcmp.gt.s32.totalorder 0, %v2544
  %v2546 = vsel %vm2545, 0, %v2544
  %v2547 = vsub.s32 32, %v2546
  %v2548 = vshll.u32 %v2539, %v2546
  %v2549 = vshrl.u32 %v2531, %v2547
  %v2550 = vor.u32 %v2548, %v2549
  %v2551 = vsub.s32 4294967266, %v2546
  %v2552 = vadd.s32 %v2551, 127
  %v2553 = vshll.u32 %v2552, 23
  %v2554 = vor.u32 4788187, %v2553
  %v2555 = vand.u32 2147483647, %v2554
  %v2557 = vcvt.s32.f32 %v2550
  %v2558 = vmul.f32 %v2557, %v2555
  %v2559 = vxor.u32 %v2558, 2147483648
  %v2560 = vsel %vm2477, %v2559, %v2558
  %v2561 = vsub.s32 4, %v2537
  %v2562 = vsel %vm2477, %v2561, %v2537
  %v2563 = vsel %vm2476, %v2150, %v2560
  %v2564 = vsel %vm2476, 0, %v2562
  %v2565 = vcosq.f32.pop %v2563
  %v2566 = vsinq.f32.pop %v2563
  %vm2567 = vweird.f32 %v2150
  %v2568 = vadd.s32 %v2564, 3
  %v2569 = vand.u32 %v2568, 3
  %vm2570 = vcmp.lt.s32.totalorder %v2569, 2
  %vm2571 = vcmp.eq.s32.totalorder %v2569, 0
  %v2572 = vxor.u32 %v2566, 2147483648
  %v2573 = vsel %vm2571, %v2565, %v2572
  %vm2574 = vcmp.eq.s32.totalorder %v2569, 2
  %v2575 = vxor.u32 %v2565, 2147483648
  %v2576 = vsel %vm2574, %v2575, %v2566
  %v2577 = vsel %vm2570, %v2573, %v2576
  %v2578 = vsel %vm2567, nan, %v2577
  %v2579 = vand.u32 2147483647, %v2151
  %vm2580 = vcmp.le.f32.partialorder %v2579, 0.7853982
  %vm2581 = vcmp.lt.s32.totalorder %v2151, 0
  %v2582 = vand.u32 %v2151, 2139095040
  %v2583 = vshrl.u32 %v2582, 23
  %v2584 = vsub.s32 %v2583, 127
  %v2585 = vand.u32 2147483647, %v2151
  %v2586 = vand.u32 %v2585, 8388607
  %v2587 = vor.u32 %v2586, 8388608
  %v2588 = vsub.s32 0, %v2587
  %v2589 = vadd.s32 %v2584, 1
  %vm2590 = vcmp.gt.s32.totalorder %v2589, 0
  %v2591 = vsel %vm2590, %v2589, 0
  %v2592 = vshrl.u32 %v2591, 5
  %v2593 = vand.u32 %v2591, 31
  %v2594 = vsub.s32 32, %v2593
  %v2595 = vshrl.u32 683565275, %v2594
  %v2596 = vshll.u32 683565275, %v2593
  %v2597 = vshrl.u32 2475754826, %v2594
  %v2598 = vor.u32 %v2596, %v2597
  %v2599 = vshll.u32 2475754826, %v2593
  %v2600 = vshrl.u32 2131351028, %v2594
  %v2601 = vor.u32 %v2599, %v2600
  %v2602 = vshll.u32 2131351028, %v2593
  %v2603 = vshrl.u32 2102212464, %v2594
  %v2604 = vor.u32 %v2602, %v2603
  %v2605 = vshll.u32 2102212464, %v2593
  %v2606 = vshrl.u32 920167782, %v2594
  %v2607 = vor.u32 %v2605, %v2606
  %v2608 = vshll.u32 920167782, %v2593
  %v2609 = vshrl.u32 1326507024, %v2594
  %v2610 = vor.u32 %v2608, %v2609
  %vm2611 = vcmp.lt.s32.totalorder %v2592, 1
  %vm2612 = vcmp.lt.s32.totalorder %v2592, 2
  %vm2613 = vcmp.lt.s32.totalorder %v2592, 3
  %vm2614 = vcmp.lt.s32.totalorder %v2592, 4
  %v2615 = vsel %vm2611, %v2595, %v2598
  %v2616 = vsel %vm2614, %v2604, 2102212464
  %v2617 = vsel %vm2613, %v2601, %v2616
  %v2618 = vsel %vm2612, %v2615, %v2617
  %v2619 = vsel %vm2611, %v2598, %v2601
  %v2620 = vsel %vm2614, %v2607, 920167782
  %v2621 = vsel %vm2613, %v2604, %v2620
  %v2622 = vsel %vm2612, %v2619, %v2621
  %v2623 = vsel %vm2611, %v2601, %v2604
  %v2624 = vsel %vm2614, %v2610, 1326507024
  %v2625 = vsel %vm2613, %v2607, %v2624
  %v2626 = vsel %vm2612, %v2623, %v2625
  %v2627 = vshll.u32 %v2587, 8
  %v2628 = vmul.u32.u64.compose %v2627, %v2626
  %v2629 = vextract.low.u32 %v2628
  %v2630 = vextract.high.u32 %v2628
  %v2631 = vmul.u32.u64.compose %v2627, %v2622
  %v2632 = vextract.low.u32 %v2631
  %v2633 = vextract.high.u32 %v2631
  %v2634 = vmul.u32 %v2627, %v2618
  %v2635 = vadd.s32 %v2630, %v2632
  %vm2636 = vc.u32 %v2630, %v2632
  %v2637 = vadd.s32 %v2633, 1
  %v2638 = vsel %vm2636, %v2637, %v2633
  %v2639 = vadd.s32 %v2634, %v2638
  %v2640 = vadd.s32 %v2639, 536870912
  %v2641 = vshrl.u32 %v2640, 30
  %v2642 = vshll.u32 %v2641, 30
  %v2643 = vsub.s32 %v2639, %v2642
  %vm2644 = vcmp.lt.s32.totalorder %v2643, 0
  %v2645 = vsub.s32 0, %v2643
  %v2646 = vsel %vm2644, %v2645, %v2643
  %v2647 = vclz %v2646
  %v2648 = vsub.s32 %v2647, 2
  %vm2649 = vcmp.gt.s32.totalorder 0, %v2648
  %v2650 = vsel %vm2649, 0, %v2648
  %v2651 = vsub.s32 32, %v2650
  %v2652 = vshll.u32 %v2643, %v2650
  %v2653 = vshrl.u32 %v2635, %v2651
  %v2654 = vor.u32 %v2652, %v2653
  %v2655 = vsub.s32 4294967266, %v2650
  %v2656 = vadd.s32 %v2655, 127
  %v2657 = vshll.u32 %v2656, 23
  %v2658 = vor.u32 4788187, %v2657
  %v2659 = vand.u32 2147483647, %v2658
  %v2661 = vcvt.s32.f32 %v2654
  %v2662 = vmul.f32 %v2661, %v2659
  %v2663 = vxor.u32 %v2662, 2147483648
  %v2664 = vsel %vm2581, %v2663, %v2662
  %v2665 = vsub.s32 4, %v2641
  %v2666 = vsel %vm2581, %v2665, %v2641
  %v2667 = vsel %vm2580, %v2151, %v2664
  %v2668 = vsel %vm2580, 0, %v2666
  %v2669 = vcosq.f32.pop %v2667
  %v2670 = vsinq.f32.pop %v2667
  %vm2671 = vweird.f32 %v2151
  %v2672 = vadd.s32 %v2668, 3
  %v2673 = vand.u32 %v2672, 3
  %vm2674 = vcmp.lt.s32.totalorder %v2673, 2
  %vm2675 = vcmp.eq.s32.totalorder %v2673, 0
  %v2676 = vxor.u32 %v2670, 2147483648
  %v2677 = vsel %vm2675, %v2669, %v2676
  %vm2678 = vcmp.eq.s32.totalorder %v2673, 2
  %v2679 = vxor.u32 %v2669, 2147483648
  %v2680 = vsel %vm2678, %v2679, %v2670
  %v2681 = vsel %vm2674, %v2677, %v2680
  %v2682 = vsel %vm2671, nan, %v2681
  %v2683 = vand.u32 2147483647, %v2152
  %vm2684 = vcmp.le.f32.partialorder %v2683, 0.7853982
  %vm2685 = vcmp.lt.s32.totalorder %v2152, 0
  %v2686 = vand.u32 %v2152, 2139095040
  %v2687 = vshrl.u32 %v2686, 23
  %v2688 = vsub.s32 %v2687, 127
  %v2689 = vand.u32 2147483647, %v2152
  %v2690 = vand.u32 %v2689, 8388607
  %v2691 = vor.u32 %v2690, 8388608
  %v2692 = vsub.s32 0, %v2691
  %v2693 = vadd.s32 %v2688, 1
  %vm2694 = vcmp.gt.s32.totalorder %v2693, 0
  %v2695 = vsel %vm2694, %v2693, 0
  %v2696 = vshrl.u32 %v2695, 5
  %v2697 = vand.u32 %v2695, 31
  %v2698 = vsub.s32 32, %v2697
  %v2699 = vshrl.u32 683565275, %v2698
  %v2700 = vshll.u32 683565275, %v2697
  %v2701 = vshrl.u32 2475754826, %v2698
  %v2702 = vor.u32 %v2700, %v2701
  %v2703 = vshll.u32 2475754826, %v2697
  %v2704 = vshrl.u32 2131351028, %v2698
  %v2705 = vor.u32 %v2703, %v2704
  %v2706 = vshll.u32 2131351028, %v2697
  %v2707 = vshrl.u32 2102212464, %v2698
  %v2708 = vor.u32 %v2706, %v2707
  %v2709 = vshll.u32 2102212464, %v2697
  %v2710 = vshrl.u32 920167782, %v2698
  %v2711 = vor.u32 %v2709, %v2710
  %v2712 = vshll.u32 920167782, %v2697
  %v2713 = vshrl.u32 1326507024, %v2698
  %v2714 = vor.u32 %v2712, %v2713
  %vm2715 = vcmp.lt.s32.totalorder %v2696, 1
  %vm2716 = vcmp.lt.s32.totalorder %v2696, 2
  %vm2717 = vcmp.lt.s32.totalorder %v2696, 3
  %vm2718 = vcmp.lt.s32.totalorder %v2696, 4
  %v2719 = vsel %vm2715, %v2699, %v2702
  %v2720 = vsel %vm2718, %v2708, 2102212464
  %v2721 = vsel %vm2717, %v2705, %v2720
  %v2722 = vsel %vm2716, %v2719, %v2721
  %v2723 = vsel %vm2715, %v2702, %v2705
  %v2724 = vsel %vm2718, %v2711, 920167782
  %v2725 = vsel %vm2717, %v2708, %v2724
  %v2726 = vsel %vm2716, %v2723, %v2725
  %v2727 = vsel %vm2715, %v2705, %v2708
  %v2728 = vsel %vm2718, %v2714, 1326507024
  %v2729 = vsel %vm2717, %v2711, %v2728
  %v2730 = vsel %vm2716, %v2727, %v2729
  %v2731 = vshll.u32 %v2691, 8
  %v2732 = vmul.u32.u64.compose %v2731, %v2730
  %v2733 = vextract.low.u32 %v2732
  %v2734 = vextract.high.u32 %v2732
  %v2735 = vmul.u32.u64.compose %v2731, %v2726
  %v2736 = vextract.low.u32 %v2735
  %v2737 = vextract.high.u32 %v2735
  %v2738 = vmul.u32 %v2731, %v2722
  %v2739 = vadd.s32 %v2734, %v2736
  %vm2740 = vc.u32 %v2734, %v2736
  %v2741 = vadd.s32 %v2737, 1
  %v2742 = vsel %vm2740, %v2741, %v2737
  %v2743 = vadd.s32 %v2738, %v2742
  %v2744 = vadd.s32 %v2743, 536870912
  %v2745 = vshrl.u32 %v2744, 30
  %v2746 = vshll.u32 %v2745, 30
  %v2747 = vsub.s32 %v2743, %v2746
  %vm2748 = vcmp.lt.s32.totalorder %v2747, 0
  %v2749 = vsub.s32 0, %v2747
  %v2750 = vsel %vm2748, %v2749, %v2747
  %v2751 = vclz %v2750
  %v2752 = vsub.s32 %v2751, 2
  %vm2753 = vcmp.gt.s32.totalorder 0, %v2752
  %v2754 = vsel %vm2753, 0, %v2752
  %v2755 = vsub.s32 32, %v2754
  %v2756 = vshll.u32 %v2747, %v2754
  %v2757 = vshrl.u32 %v2739, %v2755
  %v2758 = vor.u32 %v2756, %v2757
  %v2759 = vsub.s32 4294967266, %v2754
  %v2760 = vadd.s32 %v2759, 127
  %v2761 = vshll.u32 %v2760, 23
  %v2762 = vor.u32 4788187, %v2761
  %v2763 = vand.u32 2147483647, %v2762
  %v2765 = vcvt.s32.f32 %v2758
  %v2766 = vmul.f32 %v2765, %v2763
  %v2767 = vxor.u32 %v2766, 2147483648
  %v2768 = vsel %vm2685, %v2767, %v2766
  %v2769 = vsub.s32 4, %v2745
  %v2770 = vsel %vm2685, %v2769, %v2745
  %v2771 = vsel %vm2684, %v2152, %v2768
  %v2772 = vsel %vm2684, 0, %v2770
  %v2773 = vcosq.f32.pop %v2771
  %v2774 = vsinq.f32.pop %v2771
  %vm2775 = vweird.f32 %v2152
  %v2776 = vadd.s32 %v2772, 3
  %v2777 = vand.u32 %v2776, 3
  %vm2778 = vcmp.lt.s32.totalorder %v2777, 2
  %vm2779 = vcmp.eq.s32.totalorder %v2777, 0
  %v2780 = vxor.u32 %v2774, 2147483648
  %v2781 = vsel %vm2779, %v2773, %v2780
  %vm2782 = vcmp.eq.s32.totalorder %v2777, 2
  %v2783 = vxor.u32 %v2773, 2147483648
  %v2784 = vsel %vm2782, %v2783, %v2774
  %v2785 = vsel %vm2778, %v2781, %v2784
  %v2786 = vsel %vm2775, nan, %v2785
  %v2787 = vand.u32 2147483647, %v2153
  %vm2788 = vcmp.le.f32.partialorder %v2787, 0.7853982
  %vm2789 = vcmp.lt.s32.totalorder %v2153, 0
  %v2790 = vand.u32 %v2153, 2139095040
  %v2791 = vshrl.u32 %v2790, 23
  %v2792 = vsub.s32 %v2791, 127
  %v2793 = vand.u32 2147483647, %v2153
  %v2794 = vand.u32 %v2793, 8388607
  %v2795 = vor.u32 %v2794, 8388608
  %v2796 = vsub.s32 0, %v2795
  %v2797 = vadd.s32 %v2792, 1
  %vm2798 = vcmp.gt.s32.totalorder %v2797, 0
  %v2799 = vsel %vm2798, %v2797, 0
  %v2800 = vshrl.u32 %v2799, 5
  %v2801 = vand.u32 %v2799, 31
  %v2802 = vsub.s32 32, %v2801
  %v2803 = vshrl.u32 683565275, %v2802
  %v2804 = vshll.u32 683565275, %v2801
  %v2805 = vshrl.u32 2475754826, %v2802
  %v2806 = vor.u32 %v2804, %v2805
  %v2807 = vshll.u32 2475754826, %v2801
  %v2808 = vshrl.u32 2131351028, %v2802
  %v2809 = vor.u32 %v2807, %v2808
  %v2810 = vshll.u32 2131351028, %v2801
  %v2811 = vshrl.u32 2102212464, %v2802
  %v2812 = vor.u32 %v2810, %v2811
  %v2813 = vshll.u32 2102212464, %v2801
  %v2814 = vshrl.u32 920167782, %v2802
  %v2815 = vor.u32 %v2813, %v2814
  %v2816 = vshll.u32 920167782, %v2801
  %v2817 = vshrl.u32 1326507024, %v2802
  %v2818 = vor.u32 %v2816, %v2817
  %vm2819 = vcmp.lt.s32.totalorder %v2800, 1
  %vm2820 = vcmp.lt.s32.totalorder %v2800, 2
  %vm2821 = vcmp.lt.s32.totalorder %v2800, 3
  %vm2822 = vcmp.lt.s32.totalorder %v2800, 4
  %v2823 = vsel %vm2819, %v2803, %v2806
  %v2824 = vsel %vm2822, %v2812, 2102212464
  %v2825 = vsel %vm2821, %v2809, %v2824
  %v2826 = vsel %vm2820, %v2823, %v2825
  %v2827 = vsel %vm2819, %v2806, %v2809
  %v2828 = vsel %vm2822, %v2815, 920167782
  %v2829 = vsel %vm2821, %v2812, %v2828
  %v2830 = vsel %vm2820, %v2827, %v2829
  %v2831 = vsel %vm2819, %v2809, %v2812
  %v2832 = vsel %vm2822, %v2818, 1326507024
  %v2833 = vsel %vm2821, %v2815, %v2832
  %v2834 = vsel %vm2820, %v2831, %v2833
  %v2835 = vshll.u32 %v2795, 8
  %v2836 = vmul.u32.u64.compose %v2835, %v2834
  %v2837 = vextract.low.u32 %v2836
  %v2838 = vextract.high.u32 %v2836
  %v2839 = vmul.u32.u64.compose %v2835, %v2830
  %v2840 = vextract.low.u32 %v2839
  %v2841 = vextract.high.u32 %v2839
  %v2842 = vmul.u32 %v2835, %v2826
  %v2843 = vadd.s32 %v2838, %v2840
  %vm2844 = vc.u32 %v2838, %v2840
  %v2845 = vadd.s32 %v2841, 1
  %v2846 = vsel %vm2844, %v2845, %v2841
  %v2847 = vadd.s32 %v2842, %v2846
  %v2848 = vadd.s32 %v2847, 536870912
  %v2849 = vshrl.u32 %v2848, 30
  %v2850 = vshll.u32 %v2849, 30
  %v2851 = vsub.s32 %v2847, %v2850
  %vm2852 = vcmp.lt.s32.totalorder %v2851, 0
  %v2853 = vsub.s32 0, %v2851
  %v2854 = vsel %vm2852, %v2853, %v2851
  %v2855 = vclz %v2854
  %v2856 = vsub.s32 %v2855, 2
  %vm2857 = vcmp.gt.s32.totalorder 0, %v2856
  %v2858 = vsel %vm2857, 0, %v2856
  %v2859 = vsub.s32 32, %v2858
  %v2860 = vshll.u32 %v2851, %v2858
  %v2861 = vshrl.u32 %v2843, %v2859
  %v2862 = vor.u32 %v2860, %v2861
  %v2863 = vsub.s32 4294967266, %v2858
  %v2864 = vadd.s32 %v2863, 127
  %v2865 = vshll.u32 %v2864, 23
  %v2866 = vor.u32 4788187, %v2865
  %v2867 = vand.u32 2147483647, %v2866
  %v2869 = vcvt.s32.f32 %v2862
  %v2870 = vmul.f32 %v2869, %v2867
  %v2871 = vxor.u32 %v2870, 2147483648
  %v2872 = vsel %vm2789, %v2871, %v2870
  %v2873 = vsub.s32 4, %v2849
  %v2874 = vsel %vm2789, %v2873, %v2849
  %v2875 = vsel %vm2788, %v2153, %v2872
  %v2876 = vsel %vm2788, 0, %v2874
  %v2877 = vcosq.f32.pop %v2875
  %v2878 = vsinq.f32.pop %v2875
  %vm2879 = vweird.f32 %v2153
  %v2880 = vadd.s32 %v2876, 3
  %v2881 = vand.u32 %v2880, 3
  %vm2882 = vcmp.lt.s32.totalorder %v2881, 2
  %vm2883 = vcmp.eq.s32.totalorder %v2881, 0
  %v2884 = vxor.u32 %v2878, 2147483648
  %v2885 = vsel %vm2883, %v2877, %v2884
  %vm2886 = vcmp.eq.s32.totalorder %v2881, 2
  %v2887 = vxor.u32 %v2877, 2147483648
  %v2888 = vsel %vm2886, %v2887, %v2878
  %v2889 = vsel %vm2882, %v2885, %v2888
  %v2890 = vsel %vm2879, nan, %v2889
  %v2891 = vand.u32 2147483647, %v2154
  %vm2892 = vcmp.le.f32.partialorder %v2891, 0.7853982
  %vm2893 = vcmp.lt.s32.totalorder %v2154, 0
  %v2894 = vand.u32 %v2154, 2139095040
  %v2895 = vshrl.u32 %v2894, 23
  %v2896 = vsub.s32 %v2895, 127
  %v2897 = vand.u32 2147483647, %v2154
  %v2898 = vand.u32 %v2897, 8388607
  %v2899 = vor.u32 %v2898, 8388608
  %v2900 = vsub.s32 0, %v2899
  %v2901 = vadd.s32 %v2896, 1
  %vm2902 = vcmp.gt.s32.totalorder %v2901, 0
  %v2903 = vsel %vm2902, %v2901, 0
  %v2904 = vshrl.u32 %v2903, 5
  %v2905 = vand.u32 %v2903, 31
  %v2906 = vsub.s32 32, %v2905
  %v2907 = vshrl.u32 683565275, %v2906
  %v2908 = vshll.u32 683565275, %v2905
  %v2909 = vshrl.u32 2475754826, %v2906
  %v2910 = vor.u32 %v2908, %v2909
  %v2911 = vshll.u32 2475754826, %v2905
  %v2912 = vshrl.u32 2131351028, %v2906
  %v2913 = vor.u32 %v2911, %v2912
  %v2914 = vshll.u32 2131351028, %v2905
  %v2915 = vshrl.u32 2102212464, %v2906
  %v2916 = vor.u32 %v2914, %v2915
  %v2917 = vshll.u32 2102212464, %v2905
  %v2918 = vshrl.u32 920167782, %v2906
  %v2919 = vor.u32 %v2917, %v2918
  %v2920 = vshll.u32 920167782, %v2905
  %v2921 = vshrl.u32 1326507024, %v2906
  %v2922 = vor.u32 %v2920, %v2921
  %vm2923 = vcmp.lt.s32.totalorder %v2904, 1
  %vm2924 = vcmp.lt.s32.totalorder %v2904, 2
  %vm2925 = vcmp.lt.s32.totalorder %v2904, 3
  %vm2926 = vcmp.lt.s32.totalorder %v2904, 4
  %v2927 = vsel %vm2923, %v2907, %v2910
  %v2928 = vsel %vm2926, %v2916, 2102212464
  %v2929 = vsel %vm2925, %v2913, %v2928
  %v2930 = vsel %vm2924, %v2927, %v2929
  %v2931 = vsel %vm2923, %v2910, %v2913
  %v2932 = vsel %vm2926, %v2919, 920167782
  %v2933 = vsel %vm2925, %v2916, %v2932
  %v2934 = vsel %vm2924, %v2931, %v2933
  %v2935 = vsel %vm2923, %v2913, %v2916
  %v2936 = vsel %vm2926, %v2922, 1326507024
  %v2937 = vsel %vm2925, %v2919, %v2936
  %v2938 = vsel %vm2924, %v2935, %v2937
  %v2939 = vshll.u32 %v2899, 8
  %v2940 = vmul.u32.u64.compose %v2939, %v2938
  %v2941 = vextract.low.u32 %v2940
  %v2942 = vextract.high.u32 %v2940
  %v2943 = vmul.u32.u64.compose %v2939, %v2934
  %v2944 = vextract.low.u32 %v2943
  %v2945 = vextract.high.u32 %v2943
  %v2946 = vmul.u32 %v2939, %v2930
  %v2947 = vadd.s32 %v2942, %v2944
  %vm2948 = vc.u32 %v2942, %v2944
  %v2949 = vadd.s32 %v2945, 1
  %v2950 = vsel %vm2948, %v2949, %v2945
  %v2951 = vadd.s32 %v2946, %v2950
  %v2952 = vadd.s32 %v2951, 536870912
  %v2953 = vshrl.u32 %v2952, 30
  %v2954 = vshll.u32 %v2953, 30
  %v2955 = vsub.s32 %v2951, %v2954
  %vm2956 = vcmp.lt.s32.totalorder %v2955, 0
  %v2957 = vsub.s32 0, %v2955
  %v2958 = vsel %vm2956, %v2957, %v2955
  %v2959 = vclz %v2958
  %v2960 = vsub.s32 %v2959, 2
  %vm2961 = vcmp.gt.s32.totalorder 0, %v2960
  %v2962 = vsel %vm2961, 0, %v2960
  %v2963 = vsub.s32 32, %v2962
  %v2964 = vshll.u32 %v2955, %v2962
  %v2965 = vshrl.u32 %v2947, %v2963
  %v2966 = vor.u32 %v2964, %v2965
  %v2967 = vsub.s32 4294967266, %v2962
  %v2968 = vadd.s32 %v2967, 127
  %v2969 = vshll.u32 %v2968, 23
  %v2970 = vor.u32 4788187, %v2969
  %v2971 = vand.u32 2147483647, %v2970
  %v2973 = vcvt.s32.f32 %v2966
  %v2974 = vmul.f32 %v2973, %v2971
  %v2975 = vxor.u32 %v2974, 2147483648
  %v2976 = vsel %vm2893, %v2975, %v2974
  %v2977 = vsub.s32 4, %v2953
  %v2978 = vsel %vm2893, %v2977, %v2953
  %v2979 = vsel %vm2892, %v2154, %v2976
  %v2980 = vsel %vm2892, 0, %v2978
  %v2981 = vcosq.f32.pop %v2979
  %v2982 = vsinq.f32.pop %v2979
  %vm2983 = vweird.f32 %v2154
  %v2984 = vadd.s32 %v2980, 3
  %v2985 = vand.u32 %v2984, 3
  %vm2986 = vcmp.lt.s32.totalorder %v2985, 2
  %vm2987 = vcmp.eq.s32.totalorder %v2985, 0
  %v2988 = vxor.u32 %v2982, 2147483648
  %v2989 = vsel %vm2987, %v2981, %v2988
  %vm2990 = vcmp.eq.s32.totalorder %v2985, 2
  %v2991 = vxor.u32 %v2981, 2147483648
  %v2992 = vsel %vm2990, %v2991, %v2982
  %v2993 = vsel %vm2986, %v2989, %v2992
  %v2994 = vsel %vm2983, nan, %v2993
  %v2995 = vand.u32 2147483647, %v2155
  %vm2996 = vcmp.le.f32.partialorder %v2995, 0.7853982
  %vm2997 = vcmp.lt.s32.totalorder %v2155, 0
  %v2998 = vand.u32 %v2155, 2139095040
  %v2999 = vshrl.u32 %v2998, 23
  %v3000 = vsub.s32 %v2999, 127
  %v3001 = vand.u32 2147483647, %v2155
  %v3002 = vand.u32 %v3001, 8388607
  %v3003 = vor.u32 %v3002, 8388608
  %v3004 = vsub.s32 0, %v3003
  %v3005 = vadd.s32 %v3000, 1
  %vm3006 = vcmp.gt.s32.totalorder %v3005, 0
  %v3007 = vsel %vm3006, %v3005, 0
  %v3008 = vshrl.u32 %v3007, 5
  %v3009 = vand.u32 %v3007, 31
  %v3010 = vsub.s32 32, %v3009
  %v3011 = vshrl.u32 683565275, %v3010
  %v3012 = vshll.u32 683565275, %v3009
  %v3013 = vshrl.u32 2475754826, %v3010
  %v3014 = vor.u32 %v3012, %v3013
  %v3015 = vshll.u32 2475754826, %v3009
  %v3016 = vshrl.u32 2131351028, %v3010
  %v3017 = vor.u32 %v3015, %v3016
  %v3018 = vshll.u32 2131351028, %v3009
  %v3019 = vshrl.u32 2102212464, %v3010
  %v3020 = vor.u32 %v3018, %v3019
  %v3021 = vshll.u32 2102212464, %v3009
  %v3022 = vshrl.u32 920167782, %v3010
  %v3023 = vor.u32 %v3021, %v3022
  %v3024 = vshll.u32 920167782, %v3009
  %v3025 = vshrl.u32 1326507024, %v3010
  %v3026 = vor.u32 %v3024, %v3025
  %vm3027 = vcmp.lt.s32.totalorder %v3008, 1
  %vm3028 = vcmp.lt.s32.totalorder %v3008, 2
  %vm3029 = vcmp.lt.s32.totalorder %v3008, 3
  %vm3030 = vcmp.lt.s32.totalorder %v3008, 4
  %v3031 = vsel %vm3027, %v3011, %v3014
  %v3032 = vsel %vm3030, %v3020, 2102212464
  %v3033 = vsel %vm3029, %v3017, %v3032
  %v3034 = vsel %vm3028, %v3031, %v3033
  %v3035 = vsel %vm3027, %v3014, %v3017
  %v3036 = vsel %vm3030, %v3023, 920167782
  %v3037 = vsel %vm3029, %v3020, %v3036
  %v3038 = vsel %vm3028, %v3035, %v3037
  %v3039 = vsel %vm3027, %v3017, %v3020
  %v3040 = vsel %vm3030, %v3026, 1326507024
  %v3041 = vsel %vm3029, %v3023, %v3040
  %v3042 = vsel %vm3028, %v3039, %v3041
  %v3043 = vshll.u32 %v3003, 8
  %v3044 = vmul.u32.u64.compose %v3043, %v3042
  %v3045 = vextract.low.u32 %v3044
  %v3046 = vextract.high.u32 %v3044
  %v3047 = vmul.u32.u64.compose %v3043, %v3038
  %v3048 = vextract.low.u32 %v3047
  %v3049 = vextract.high.u32 %v3047
  %v3050 = vmul.u32 %v3043, %v3034
  %v3051 = vadd.s32 %v3046, %v3048
  %vm3052 = vc.u32 %v3046, %v3048
  %v3053 = vadd.s32 %v3049, 1
  %v3054 = vsel %vm3052, %v3053, %v3049
  %v3055 = vadd.s32 %v3050, %v3054
  %v3056 = vadd.s32 %v3055, 536870912
  %v3057 = vshrl.u32 %v3056, 30
  %v3058 = vshll.u32 %v3057, 30
  %v3059 = vsub.s32 %v3055, %v3058
  %vm3060 = vcmp.lt.s32.totalorder %v3059, 0
  %v3061 = vsub.s32 0, %v3059
  %v3062 = vsel %vm3060, %v3061, %v3059
  %v3063 = vclz %v3062
  %v3064 = vsub.s32 %v3063, 2
  %vm3065 = vcmp.gt.s32.totalorder 0, %v3064
  %v3066 = vsel %vm3065, 0, %v3064
  %v3067 = vsub.s32 32, %v3066
  %v3068 = vshll.u32 %v3059, %v3066
  %v3069 = vshrl.u32 %v3051, %v3067
  %v3070 = vor.u32 %v3068, %v3069
  %v3071 = vsub.s32 4294967266, %v3066
  %v3072 = vadd.s32 %v3071, 127
  %v3073 = vshll.u32 %v3072, 23
  %v3074 = vor.u32 4788187, %v3073
  %v3075 = vand.u32 2147483647, %v3074
  %v3077 = vcvt.s32.f32 %v3070
  %v3078 = vmul.f32 %v3077, %v3075
  %v3079 = vxor.u32 %v3078, 2147483648
  %v3080 = vsel %vm2997, %v3079, %v3078
  %v3081 = vsub.s32 4, %v3057
  %v3082 = vsel %vm2997, %v3081, %v3057
  %v3083 = vsel %vm2996, %v2155, %v3080
  %v3084 = vsel %vm2996, 0, %v3082
  %v3085 = vcosq.f32.pop %v3083
  %v3086 = vsinq.f32.pop %v3083
  %vm3087 = vweird.f32 %v2155
  %v3088 = vadd.s32 %v3084, 3
  %v3089 = vand.u32 %v3088, 3
  %vm3090 = vcmp.lt.s32.totalorder %v3089, 2
  %vm3091 = vcmp.eq.s32.totalorder %v3089, 0
  %v3092 = vxor.u32 %v3086, 2147483648
  %v3093 = vsel %vm3091, %v3085, %v3092
  %vm3094 = vcmp.eq.s32.totalorder %v3089, 2
  %v3095 = vxor.u32 %v3085, 2147483648
  %v3096 = vsel %vm3094, %v3095, %v3086
  %v3097 = vsel %vm3090, %v3093, %v3096
  %v3098 = vsel %vm3087, nan, %v3097
  %v3099 = vand.u32 2147483647, %v2156
  %vm3100 = vcmp.le.f32.partialorder %v3099, 0.7853982
  %vm3101 = vcmp.lt.s32.totalorder %v2156, 0
  %v3102 = vand.u32 %v2156, 2139095040
  %v3103 = vshrl.u32 %v3102, 23
  %v3104 = vsub.s32 %v3103, 127
  %v3105 = vand.u32 2147483647, %v2156
  %v3106 = vand.u32 %v3105, 8388607
  %v3107 = vor.u32 %v3106, 8388608
  %v3108 = vsub.s32 0, %v3107
  %v3109 = vadd.s32 %v3104, 1
  %vm3110 = vcmp.gt.s32.totalorder %v3109, 0
  %v3111 = vsel %vm3110, %v3109, 0
  %v3112 = vshrl.u32 %v3111, 5
  %v3113 = vand.u32 %v3111, 31
  %v3114 = vsub.s32 32, %v3113
  %v3115 = vshrl.u32 683565275, %v3114
  %v3116 = vshll.u32 683565275, %v3113
  %v3117 = vshrl.u32 2475754826, %v3114
  %v3118 = vor.u32 %v3116, %v3117
  %v3119 = vshll.u32 2475754826, %v3113
  %v3120 = vshrl.u32 2131351028, %v3114
  %v3121 = vor.u32 %v3119, %v3120
  %v3122 = vshll.u32 2131351028, %v3113
  %v3123 = vshrl.u32 2102212464, %v3114
  %v3124 = vor.u32 %v3122, %v3123
  %v3125 = vshll.u32 2102212464, %v3113
  %v3126 = vshrl.u32 920167782, %v3114
  %v3127 = vor.u32 %v3125, %v3126
  %v3128 = vshll.u32 920167782, %v3113
  %v3129 = vshrl.u32 1326507024, %v3114
  %v3130 = vor.u32 %v3128, %v3129
  %vm3131 = vcmp.lt.s32.totalorder %v3112, 1
  %vm3132 = vcmp.lt.s32.totalorder %v3112, 2
  %vm3133 = vcmp.lt.s32.totalorder %v3112, 3
  %vm3134 = vcmp.lt.s32.totalorder %v3112, 4
  %v3135 = vsel %vm3131, %v3115, %v3118
  %v3136 = vsel %vm3134, %v3124, 2102212464
  %v3137 = vsel %vm3133, %v3121, %v3136
  %v3138 = vsel %vm3132, %v3135, %v3137
  %v3139 = vsel %vm3131, %v3118, %v3121
  %v3140 = vsel %vm3134, %v3127, 920167782
  %v3141 = vsel %vm3133, %v3124, %v3140
  %v3142 = vsel %vm3132, %v3139, %v3141
  %v3143 = vsel %vm3131, %v3121, %v3124
  %v3144 = vsel %vm3134, %v3130, 1326507024
  %v3145 = vsel %vm3133, %v3127, %v3144
  %v3146 = vsel %vm3132, %v3143, %v3145
  %v3147 = vshll.u32 %v3107, 8
  %v3148 = vmul.u32.u64.compose %v3147, %v3146
  %v3149 = vextract.low.u32 %v3148
  %v3150 = vextract.high.u32 %v3148
  %v3151 = vmul.u32.u64.compose %v3147, %v3142
  %v3152 = vextract.low.u32 %v3151
  %v3153 = vextract.high.u32 %v3151
  %v3154 = vmul.u32 %v3147, %v3138
  %v3155 = vadd.s32 %v3150, %v3152
  %vm3156 = vc.u32 %v3150, %v3152
  %v3157 = vadd.s32 %v3153, 1
  %v3158 = vsel %vm3156, %v3157, %v3153
  %v3159 = vadd.s32 %v3154, %v3158
  %v3160 = vadd.s32 %v3159, 536870912
  %v3161 = vshrl.u32 %v3160, 30
  %v3162 = vshll.u32 %v3161, 30
  %v3163 = vsub.s32 %v3159, %v3162
  %vm3164 = vcmp.lt.s32.totalorder %v3163, 0
  %v3165 = vsub.s32 0, %v3163
  %v3166 = vsel %vm3164, %v3165, %v3163
  %v3167 = vclz %v3166
  %v3168 = vsub.s32 %v3167, 2
  %vm3169 = vcmp.gt.s32.totalorder 0, %v3168
  %v3170 = vsel %vm3169, 0, %v3168
  %v3171 = vsub.s32 32, %v3170
  %v3172 = vshll.u32 %v3163, %v3170
  %v3173 = vshrl.u32 %v3155, %v3171
  %v3174 = vor.u32 %v3172, %v3173
  %v3175 = vsub.s32 4294967266, %v3170
  %v3176 = vadd.s32 %v3175, 127
  %v3177 = vshll.u32 %v3176, 23
  %v3178 = vor.u32 4788187, %v3177
  %v3179 = vand.u32 2147483647, %v3178
  %v3181 = vcvt.s32.f32 %v3174
  %v3182 = vmul.f32 %v3181, %v3179
  %v3183 = vxor.u32 %v3182, 2147483648
  %v3184 = vsel %vm3101, %v3183, %v3182
  %v3185 = vsub.s32 4, %v3161
  %v3186 = vsel %vm3101, %v3185, %v3161
  %v3187 = vsel %vm3100, %v2156, %v3184
  %v3188 = vsel %vm3100, 0, %v3186
  %v3189 = vcosq.f32.pop %v3187
  %v3190 = vsinq.f32.pop %v3187
  %vm3191 = vweird.f32 %v2156
  %v3192 = vadd.s32 %v3188, 3
  %v3193 = vand.u32 %v3192, 3
  %vm3194 = vcmp.lt.s32.totalorder %v3193, 2
  %vm3195 = vcmp.eq.s32.totalorder %v3193, 0
  %v3196 = vxor.u32 %v3190, 2147483648
  %v3197 = vsel %vm3195, %v3189, %v3196
  %vm3198 = vcmp.eq.s32.totalorder %v3193, 2
  %v3199 = vxor.u32 %v3189, 2147483648
  %v3200 = vsel %vm3198, %v3199, %v3190
  %v3201 = vsel %vm3194, %v3197, %v3200
  %v3202 = vsel %vm3191, nan, %v3201
  %v3203 = vand.u32 2147483647, %v2157
  %vm3204 = vcmp.le.f32.partialorder %v3203, 0.7853982
  %vm3205 = vcmp.lt.s32.totalorder %v2157, 0
  %v3206 = vand.u32 %v2157, 2139095040
  %v3207 = vshrl.u32 %v3206, 23
  %v3208 = vsub.s32 %v3207, 127
  %v3209 = vand.u32 2147483647, %v2157
  %v3210 = vand.u32 %v3209, 8388607
  %v3211 = vor.u32 %v3210, 8388608
  %v3212 = vsub.s32 0, %v3211
  %v3213 = vadd.s32 %v3208, 1
  %vm3214 = vcmp.gt.s32.totalorder %v3213, 0
  %v3215 = vsel %vm3214, %v3213, 0
  %v3216 = vshrl.u32 %v3215, 5
  %v3217 = vand.u32 %v3215, 31
  %v3218 = vsub.s32 32, %v3217
  %v3219 = vshrl.u32 683565275, %v3218
  %v3220 = vshll.u32 683565275, %v3217
  %v3221 = vshrl.u32 2475754826, %v3218
  %v3222 = vor.u32 %v3220, %v3221
  %v3223 = vshll.u32 2475754826, %v3217
  %v3224 = vshrl.u32 2131351028, %v3218
  %v3225 = vor.u32 %v3223, %v3224
  %v3226 = vshll.u32 2131351028, %v3217
  %v3227 = vshrl.u32 2102212464, %v3218
  %v3228 = vor.u32 %v3226, %v3227
  %v3229 = vshll.u32 2102212464, %v3217
  %v3230 = vshrl.u32 920167782, %v3218
  %v3231 = vor.u32 %v3229, %v3230
  %v3232 = vshll.u32 920167782, %v3217
  %v3233 = vshrl.u32 1326507024, %v3218
  %v3234 = vor.u32 %v3232, %v3233
  %vm3235 = vcmp.lt.s32.totalorder %v3216, 1
  %vm3236 = vcmp.lt.s32.totalorder %v3216, 2
  %vm3237 = vcmp.lt.s32.totalorder %v3216, 3
  %vm3238 = vcmp.lt.s32.totalorder %v3216, 4
  %v3239 = vsel %vm3235, %v3219, %v3222
  %v3240 = vsel %vm3238, %v3228, 2102212464
  %v3241 = vsel %vm3237, %v3225, %v3240
  %v3242 = vsel %vm3236, %v3239, %v3241
  %v3243 = vsel %vm3235, %v3222, %v3225
  %v3244 = vsel %vm3238, %v3231, 920167782
  %v3245 = vsel %vm3237, %v3228, %v3244
  %v3246 = vsel %vm3236, %v3243, %v3245
  %v3247 = vsel %vm3235, %v3225, %v3228
  %v3248 = vsel %vm3238, %v3234, 1326507024
  %v3249 = vsel %vm3237, %v3231, %v3248
  %v3250 = vsel %vm3236, %v3247, %v3249
  %v3251 = vshll.u32 %v3211, 8
  %v3252 = vmul.u32.u64.compose %v3251, %v3250
  %v3253 = vextract.low.u32 %v3252
  %v3254 = vextract.high.u32 %v3252
  %v3255 = vmul.u32.u64.compose %v3251, %v3246
  %v3256 = vextract.low.u32 %v3255
  %v3257 = vextract.high.u32 %v3255
  %v3258 = vmul.u32 %v3251, %v3242
  %v3259 = vadd.s32 %v3254, %v3256
  %vm3260 = vc.u32 %v3254, %v3256
  %v3261 = vadd.s32 %v3257, 1
  %v3262 = vsel %vm3260, %v3261, %v3257
  %v3263 = vadd.s32 %v3258, %v3262
  %v3264 = vadd.s32 %v3263, 536870912
  %v3265 = vshrl.u32 %v3264, 30
  %v3266 = vshll.u32 %v3265, 30
  %v3267 = vsub.s32 %v3263, %v3266
  %vm3268 = vcmp.lt.s32.totalorder %v3267, 0
  %v3269 = vsub.s32 0, %v3267
  %v3270 = vsel %vm3268, %v3269, %v3267
  %v3271 = vclz %v3270
  %v3272 = vsub.s32 %v3271, 2
  %vm3273 = vcmp.gt.s32.totalorder 0, %v3272
  %v3274 = vsel %vm3273, 0, %v3272
  %v3275 = vsub.s32 32, %v3274
  %v3276 = vshll.u32 %v3267, %v3274
  %v3277 = vshrl.u32 %v3259, %v3275
  %v3278 = vor.u32 %v3276, %v3277
  %v3279 = vsub.s32 4294967266, %v3274
  %v3280 = vadd.s32 %v3279, 127
  %v3281 = vshll.u32 %v3280, 23
  %v3282 = vor.u32 4788187, %v3281
  %v3283 = vand.u32 2147483647, %v3282
  %v3285 = vcvt.s32.f32 %v3278
  %v3286 = vmul.f32 %v3285, %v3283
  %v3287 = vxor.u32 %v3286, 2147483648
  %v3288 = vsel %vm3205, %v3287, %v3286
  %v3289 = vsub.s32 4, %v3265
  %v3290 = vsel %vm3205, %v3289, %v3265
  %v3291 = vsel %vm3204, %v2157, %v3288
  %v3292 = vsel %vm3204, 0, %v3290
  %v3293 = vcosq.f32.pop %v3291
  %v3294 = vsinq.f32.pop %v3291
  %vm3295 = vweird.f32 %v2157
  %v3296 = vadd.s32 %v3292, 3
  %v3297 = vand.u32 %v3296, 3
  %vm3298 = vcmp.lt.s32.totalorder %v3297, 2
  %vm3299 = vcmp.eq.s32.totalorder %v3297, 0
  %v3300 = vxor.u32 %v3294, 2147483648
  %v3301 = vsel %vm3299, %v3293, %v3300
  %vm3302 = vcmp.eq.s32.totalorder %v3297, 2
  %v3303 = vxor.u32 %v3293, 2147483648
  %v3304 = vsel %vm3302, %v3303, %v3294
  %v3305 = vsel %vm3298, %v3301, %v3304
  %v3306 = vsel %vm3295, nan, %v3305
  %v3307 = vand.u32 2147483647, %v2158
  %vm3308 = vcmp.le.f32.partialorder %v3307, 0.7853982
  %vm3309 = vcmp.lt.s32.totalorder %v2158, 0
  %v3310 = vand.u32 %v2158, 2139095040
  %v3311 = vshrl.u32 %v3310, 23
  %v3312 = vsub.s32 %v3311, 127
  %v3313 = vand.u32 2147483647, %v2158
  %v3314 = vand.u32 %v3313, 8388607
  %v3315 = vor.u32 %v3314, 8388608
  %v3316 = vsub.s32 0, %v3315
  %v3317 = vadd.s32 %v3312, 1
  %vm3318 = vcmp.gt.s32.totalorder %v3317, 0
  %v3319 = vsel %vm3318, %v3317, 0
  %v3320 = vshrl.u32 %v3319, 5
  %v3321 = vand.u32 %v3319, 31
  %v3322 = vsub.s32 32, %v3321
  %v3323 = vshrl.u32 683565275, %v3322
  %v3324 = vshll.u32 683565275, %v3321
  %v3325 = vshrl.u32 2475754826, %v3322
  %v3326 = vor.u32 %v3324, %v3325
  %v3327 = vshll.u32 2475754826, %v3321
  %v3328 = vshrl.u32 2131351028, %v3322
  %v3329 = vor.u32 %v3327, %v3328
  %v3330 = vshll.u32 2131351028, %v3321
  %v3331 = vshrl.u32 2102212464, %v3322
  %v3332 = vor.u32 %v3330, %v3331
  %v3333 = vshll.u32 2102212464, %v3321
  %v3334 = vshrl.u32 920167782, %v3322
  %v3335 = vor.u32 %v3333, %v3334
  %v3336 = vshll.u32 920167782, %v3321
  %v3337 = vshrl.u32 1326507024, %v3322
  %v3338 = vor.u32 %v3336, %v3337
  %vm3339 = vcmp.lt.s32.totalorder %v3320, 1
  %vm3340 = vcmp.lt.s32.totalorder %v3320, 2
  %vm3341 = vcmp.lt.s32.totalorder %v3320, 3
  %vm3342 = vcmp.lt.s32.totalorder %v3320, 4
  %v3343 = vsel %vm3339, %v3323, %v3326
  %v3344 = vsel %vm3342, %v3332, 2102212464
  %v3345 = vsel %vm3341, %v3329, %v3344
  %v3346 = vsel %vm3340, %v3343, %v3345
  %v3347 = vsel %vm3339, %v3326, %v3329
  %v3348 = vsel %vm3342, %v3335, 920167782
  %v3349 = vsel %vm3341, %v3332, %v3348
  %v3350 = vsel %vm3340, %v3347, %v3349
  %v3351 = vsel %vm3339, %v3329, %v3332
  %v3352 = vsel %vm3342, %v3338, 1326507024
  %v3353 = vsel %vm3341, %v3335, %v3352
  %v3354 = vsel %vm3340, %v3351, %v3353
  %v3355 = vshll.u32 %v3315, 8
  %v3356 = vmul.u32.u64.compose %v3355, %v3354
  %v3357 = vextract.low.u32 %v3356
  %v3358 = vextract.high.u32 %v3356
  %v3359 = vmul.u32.u64.compose %v3355, %v3350
  %v3360 = vextract.low.u32 %v3359
  %v3361 = vextract.high.u32 %v3359
  %v3362 = vmul.u32 %v3355, %v3346
  %v3363 = vadd.s32 %v3358, %v3360
  %vm3364 = vc.u32 %v3358, %v3360
  %v3365 = vadd.s32 %v3361, 1
  %v3366 = vsel %vm3364, %v3365, %v3361
  %v3367 = vadd.s32 %v3362, %v3366
  %v3368 = vadd.s32 %v3367, 536870912
  %v3369 = vshrl.u32 %v3368, 30
  %v3370 = vshll.u32 %v3369, 30
  %v3371 = vsub.s32 %v3367, %v3370
  %vm3372 = vcmp.lt.s32.totalorder %v3371, 0
  %v3373 = vsub.s32 0, %v3371
  %v3374 = vsel %vm3372, %v3373, %v3371
  %v3375 = vclz %v3374
  %v3376 = vsub.s32 %v3375, 2
  %vm3377 = vcmp.gt.s32.totalorder 0, %v3376
  %v3378 = vsel %vm3377, 0, %v3376
  %v3379 = vsub.s32 32, %v3378
  %v3380 = vshll.u32 %v3371, %v3378
  %v3381 = vshrl.u32 %v3363, %v3379
  %v3382 = vor.u32 %v3380, %v3381
  %v3383 = vsub.s32 4294967266, %v3378
  %v3384 = vadd.s32 %v3383, 127
  %v3385 = vshll.u32 %v3384, 23
  %v3386 = vor.u32 4788187, %v3385
  %v3387 = vand.u32 2147483647, %v3386
  %v3389 = vcvt.s32.f32 %v3382
  %v3390 = vmul.f32 %v3389, %v3387
  %v3391 = vxor.u32 %v3390, 2147483648
  %v3392 = vsel %vm3309, %v3391, %v3390
  %v3393 = vsub.s32 4, %v3369
  %v3394 = vsel %vm3309, %v3393, %v3369
  %v3395 = vsel %vm3308, %v2158, %v3392
  %v3396 = vsel %vm3308, 0, %v3394
  %v3397 = vcosq.f32.pop %v3395
  %v3398 = vsinq.f32.pop %v3395
  %vm3399 = vweird.f32 %v2158
  %v3400 = vadd.s32 %v3396, 3
  %v3401 = vand.u32 %v3400, 3
  %vm3402 = vcmp.lt.s32.totalorder %v3401, 2
  %vm3403 = vcmp.eq.s32.totalorder %v3401, 0
  %v3404 = vxor.u32 %v3398, 2147483648
  %v3405 = vsel %vm3403, %v3397, %v3404
  %vm3406 = vcmp.eq.s32.totalorder %v3401, 2
  %v3407 = vxor.u32 %v3397, 2147483648
  %v3408 = vsel %vm3406, %v3407, %v3398
  %v3409 = vsel %vm3402, %v3405, %v3408
  %v3410 = vsel %vm3399, nan, %v3409
  %v3411 = vand.u32 2147483647, %v2159
  %vm3412 = vcmp.le.f32.partialorder %v3411, 0.7853982
  %vm3413 = vcmp.lt.s32.totalorder %v2159, 0
  %v3414 = vand.u32 %v2159, 2139095040
  %v3415 = vshrl.u32 %v3414, 23
  %v3416 = vsub.s32 %v3415, 127
  %v3417 = vand.u32 2147483647, %v2159
  %v3418 = vand.u32 %v3417, 8388607
  %v3419 = vor.u32 %v3418, 8388608
  %v3420 = vsub.s32 0, %v3419
  %v3421 = vadd.s32 %v3416, 1
  %vm3422 = vcmp.gt.s32.totalorder %v3421, 0
  %v3423 = vsel %vm3422, %v3421, 0
  %v3424 = vshrl.u32 %v3423, 5
  %v3425 = vand.u32 %v3423, 31
  %v3426 = vsub.s32 32, %v3425
  %v3427 = vshrl.u32 683565275, %v3426
  %v3428 = vshll.u32 683565275, %v3425
  %v3429 = vshrl.u32 2475754826, %v3426
  %v3430 = vor.u32 %v3428, %v3429
  %v3431 = vshll.u32 2475754826, %v3425
  %v3432 = vshrl.u32 2131351028, %v3426
  %v3433 = vor.u32 %v3431, %v3432
  %v3434 = vshll.u32 2131351028, %v3425
  %v3435 = vshrl.u32 2102212464, %v3426
  %v3436 = vor.u32 %v3434, %v3435
  %v3437 = vshll.u32 2102212464, %v3425
  %v3438 = vshrl.u32 920167782, %v3426
  %v3439 = vor.u32 %v3437, %v3438
  %v3440 = vshll.u32 920167782, %v3425
  %v3441 = vshrl.u32 1326507024, %v3426
  %v3442 = vor.u32 %v3440, %v3441
  %vm3443 = vcmp.lt.s32.totalorder %v3424, 1
  %vm3444 = vcmp.lt.s32.totalorder %v3424, 2
  %vm3445 = vcmp.lt.s32.totalorder %v3424, 3
  %vm3446 = vcmp.lt.s32.totalorder %v3424, 4
  %v3447 = vsel %vm3443, %v3427, %v3430
  %v3448 = vsel %vm3446, %v3436, 2102212464
  %v3449 = vsel %vm3445, %v3433, %v3448
  %v3450 = vsel %vm3444, %v3447, %v3449
  %v3451 = vsel %vm3443, %v3430, %v3433
  %v3452 = vsel %vm3446, %v3439, 920167782
  %v3453 = vsel %vm3445, %v3436, %v3452
  %v3454 = vsel %vm3444, %v3451, %v3453
  %v3455 = vsel %vm3443, %v3433, %v3436
  %v3456 = vsel %vm3446, %v3442, 1326507024
  %v3457 = vsel %vm3445, %v3439, %v3456
  %v3458 = vsel %vm3444, %v3455, %v3457
  %v3459 = vshll.u32 %v3419, 8
  %v3460 = vmul.u32.u64.compose %v3459, %v3458
  %v3461 = vextract.low.u32 %v3460
  %v3462 = vextract.high.u32 %v3460
  %v3463 = vmul.u32.u64.compose %v3459, %v3454
  %v3464 = vextract.low.u32 %v3463
  %v3465 = vextract.high.u32 %v3463
  %v3466 = vmul.u32 %v3459, %v3450
  %v3467 = vadd.s32 %v3462, %v3464
  %vm3468 = vc.u32 %v3462, %v3464
  %v3469 = vadd.s32 %v3465, 1
  %v3470 = vsel %vm3468, %v3469, %v3465
  %v3471 = vadd.s32 %v3466, %v3470
  %v3472 = vadd.s32 %v3471, 536870912
  %v3473 = vshrl.u32 %v3472, 30
  %v3474 = vshll.u32 %v3473, 30
  %v3475 = vsub.s32 %v3471, %v3474
  %vm3476 = vcmp.lt.s32.totalorder %v3475, 0
  %v3477 = vsub.s32 0, %v3475
  %v3478 = vsel %vm3476, %v3477, %v3475
  %v3479 = vclz %v3478
  %v3480 = vsub.s32 %v3479, 2
  %vm3481 = vcmp.gt.s32.totalorder 0, %v3480
  %v3482 = vsel %vm3481, 0, %v3480
  %v3483 = vsub.s32 32, %v3482
  %v3484 = vshll.u32 %v3475, %v3482
  %v3485 = vshrl.u32 %v3467, %v3483
  %v3486 = vor.u32 %v3484, %v3485
  %v3487 = vsub.s32 4294967266, %v3482
  %v3488 = vadd.s32 %v3487, 127
  %v3489 = vshll.u32 %v3488, 23
  %v3490 = vor.u32 4788187, %v3489
  %v3491 = vand.u32 2147483647, %v3490
  %v3493 = vcvt.s32.f32 %v3486
  %v3494 = vmul.f32 %v3493, %v3491
  %v3495 = vxor.u32 %v3494, 2147483648
  %v3496 = vsel %vm3413, %v3495, %v3494
  %v3497 = vsub.s32 4, %v3473
  %v3498 = vsel %vm3413, %v3497, %v3473
  %v3499 = vsel %vm3412, %v2159, %v3496
  %v3500 = vsel %vm3412, 0, %v3498
  %v3501 = vcosq.f32.pop %v3499
  %v3502 = vsinq.f32.pop %v3499
  %vm3503 = vweird.f32 %v2159
  %v3504 = vadd.s32 %v3500, 3
  %v3505 = vand.u32 %v3504, 3
  %vm3506 = vcmp.lt.s32.totalorder %v3505, 2
  %vm3507 = vcmp.eq.s32.totalorder %v3505, 0
  %v3508 = vxor.u32 %v3502, 2147483648
  %v3509 = vsel %vm3507, %v3501, %v3508
  %vm3510 = vcmp.eq.s32.totalorder %v3505, 2
  %v3511 = vxor.u32 %v3501, 2147483648
  %v3512 = vsel %vm3510, %v3511, %v3502
  %v3513 = vsel %vm3506, %v3509, %v3512
  %v3514 = vsel %vm3503, nan, %v3513
  %v3515 = vand.u32 2147483647, %v2160
  %vm3516 = vcmp.le.f32.partialorder %v3515, 0.7853982
  %vm3517 = vcmp.lt.s32.totalorder %v2160, 0
  %v3518 = vand.u32 %v2160, 2139095040
  %v3519 = vshrl.u32 %v3518, 23
  %v3520 = vsub.s32 %v3519, 127
  %v3521 = vand.u32 2147483647, %v2160
  %v3522 = vand.u32 %v3521, 8388607
  %v3523 = vor.u32 %v3522, 8388608
  %v3524 = vsub.s32 0, %v3523
  %v3525 = vadd.s32 %v3520, 1
  %vm3526 = vcmp.gt.s32.totalorder %v3525, 0
  %v3527 = vsel %vm3526, %v3525, 0
  %v3528 = vshrl.u32 %v3527, 5
  %v3529 = vand.u32 %v3527, 31
  %v3530 = vsub.s32 32, %v3529
  %v3531 = vshrl.u32 683565275, %v3530
  %v3532 = vshll.u32 683565275, %v3529
  %v3533 = vshrl.u32 2475754826, %v3530
  %v3534 = vor.u32 %v3532, %v3533
  %v3535 = vshll.u32 2475754826, %v3529
  %v3536 = vshrl.u32 2131351028, %v3530
  %v3537 = vor.u32 %v3535, %v3536
  %v3538 = vshll.u32 2131351028, %v3529
  %v3539 = vshrl.u32 2102212464, %v3530
  %v3540 = vor.u32 %v3538, %v3539
  %v3541 = vshll.u32 2102212464, %v3529
  %v3542 = vshrl.u32 920167782, %v3530
  %v3543 = vor.u32 %v3541, %v3542
  %v3544 = vshll.u32 920167782, %v3529
  %v3545 = vshrl.u32 1326507024, %v3530
  %v3546 = vor.u32 %v3544, %v3545
  %vm3547 = vcmp.lt.s32.totalorder %v3528, 1
  %vm3548 = vcmp.lt.s32.totalorder %v3528, 2
  %vm3549 = vcmp.lt.s32.totalorder %v3528, 3
  %vm3550 = vcmp.lt.s32.totalorder %v3528, 4
  %v3551 = vsel %vm3547, %v3531, %v3534
  %v3552 = vsel %vm3550, %v3540, 2102212464
  %v3553 = vsel %vm3549, %v3537, %v3552
  %v3554 = vsel %vm3548, %v3551, %v3553
  %v3555 = vsel %vm3547, %v3534, %v3537
  %v3556 = vsel %vm3550, %v3543, 920167782
  %v3557 = vsel %vm3549, %v3540, %v3556
  %v3558 = vsel %vm3548, %v3555, %v3557
  %v3559 = vsel %vm3547, %v3537, %v3540
  %v3560 = vsel %vm3550, %v3546, 1326507024
  %v3561 = vsel %vm3549, %v3543, %v3560
  %v3562 = vsel %vm3548, %v3559, %v3561
  %v3563 = vshll.u32 %v3523, 8
  %v3564 = vmul.u32.u64.compose %v3563, %v3562
  %v3565 = vextract.low.u32 %v3564
  %v3566 = vextract.high.u32 %v3564
  %v3567 = vmul.u32.u64.compose %v3563, %v3558
  %v3568 = vextract.low.u32 %v3567
  %v3569 = vextract.high.u32 %v3567
  %v3570 = vmul.u32 %v3563, %v3554
  %v3571 = vadd.s32 %v3566, %v3568
  %vm3572 = vc.u32 %v3566, %v3568
  %v3573 = vadd.s32 %v3569, 1
  %v3574 = vsel %vm3572, %v3573, %v3569
  %v3575 = vadd.s32 %v3570, %v3574
  %v3576 = vadd.s32 %v3575, 536870912
  %v3577 = vshrl.u32 %v3576, 30
  %v3578 = vshll.u32 %v3577, 30
  %v3579 = vsub.s32 %v3575, %v3578
  %vm3580 = vcmp.lt.s32.totalorder %v3579, 0
  %v3581 = vsub.s32 0, %v3579
  %v3582 = vsel %vm3580, %v3581, %v3579
  %v3583 = vclz %v3582
  %v3584 = vsub.s32 %v3583, 2
  %vm3585 = vcmp.gt.s32.totalorder 0, %v3584
  %v3586 = vsel %vm3585, 0, %v3584
  %v3587 = vsub.s32 32, %v3586
  %v3588 = vshll.u32 %v3579, %v3586
  %v3589 = vshrl.u32 %v3571, %v3587
  %v3590 = vor.u32 %v3588, %v3589
  %v3591 = vsub.s32 4294967266, %v3586
  %v3592 = vadd.s32 %v3591, 127
  %v3593 = vshll.u32 %v3592, 23
  %v3594 = vor.u32 4788187, %v3593
  %v3595 = vand.u32 2147483647, %v3594
  %v3597 = vcvt.s32.f32 %v3590
  %v3598 = vmul.f32 %v3597, %v3595
  %v3599 = vxor.u32 %v3598, 2147483648
  %v3600 = vsel %vm3517, %v3599, %v3598
  %v3601 = vsub.s32 4, %v3577
  %v3602 = vsel %vm3517, %v3601, %v3577
  %v3603 = vsel %vm3516, %v2160, %v3600
  %v3604 = vsel %vm3516, 0, %v3602
  %v3605 = vcosq.f32.pop %v3603
  %v3606 = vsinq.f32.pop %v3603
  %vm3607 = vweird.f32 %v2160
  %v3608 = vadd.s32 %v3604, 3
  %v3609 = vand.u32 %v3608, 3
  %vm3610 = vcmp.lt.s32.totalorder %v3609, 2
  %vm3611 = vcmp.eq.s32.totalorder %v3609, 0
  %v3612 = vxor.u32 %v3606, 2147483648
  %v3613 = vsel %vm3611, %v3605, %v3612
  %vm3614 = vcmp.eq.s32.totalorder %v3609, 2
  %v3615 = vxor.u32 %v3605, 2147483648
  %v3616 = vsel %vm3614, %v3615, %v3606
  %v3617 = vsel %vm3610, %v3613, %v3616
  %v3618 = vsel %vm3607, nan, %v3617
  %v3619 = vand.u32 2147483647, %v2161
  %vm3620 = vcmp.le.f32.partialorder %v3619, 0.7853982
  %vm3621 = vcmp.lt.s32.totalorder %v2161, 0
  %v3622 = vand.u32 %v2161, 2139095040
  %v3623 = vshrl.u32 %v3622, 23
  %v3624 = vsub.s32 %v3623, 127
  %v3625 = vand.u32 2147483647, %v2161
  %v3626 = vand.u32 %v3625, 8388607
  %v3627 = vor.u32 %v3626, 8388608
  %v3628 = vsub.s32 0, %v3627
  %v3629 = vadd.s32 %v3624, 1
  %vm3630 = vcmp.gt.s32.totalorder %v3629, 0
  %v3631 = vsel %vm3630, %v3629, 0
  %v3632 = vshrl.u32 %v3631, 5
  %v3633 = vand.u32 %v3631, 31
  %v3634 = vsub.s32 32, %v3633
  %v3635 = vshrl.u32 683565275, %v3634
  %v3636 = vshll.u32 683565275, %v3633
  %v3637 = vshrl.u32 2475754826, %v3634
  %v3638 = vor.u32 %v3636, %v3637
  %v3639 = vshll.u32 2475754826, %v3633
  %v3640 = vshrl.u32 2131351028, %v3634
  %v3641 = vor.u32 %v3639, %v3640
  %v3642 = vshll.u32 2131351028, %v3633
  %v3643 = vshrl.u32 2102212464, %v3634
  %v3644 = vor.u32 %v3642, %v3643
  %v3645 = vshll.u32 2102212464, %v3633
  %v3646 = vshrl.u32 920167782, %v3634
  %v3647 = vor.u32 %v3645, %v3646
  %v3648 = vshll.u32 920167782, %v3633
  %v3649 = vshrl.u32 1326507024, %v3634
  %v3650 = vor.u32 %v3648, %v3649
  %vm3651 = vcmp.lt.s32.totalorder %v3632, 1
  %vm3652 = vcmp.lt.s32.totalorder %v3632, 2
  %vm3653 = vcmp.lt.s32.totalorder %v3632, 3
  %vm3654 = vcmp.lt.s32.totalorder %v3632, 4
  %v3655 = vsel %vm3651, %v3635, %v3638
  %v3656 = vsel %vm3654, %v3644, 2102212464
  %v3657 = vsel %vm3653, %v3641, %v3656
  %v3658 = vsel %vm3652, %v3655, %v3657
  %v3659 = vsel %vm3651, %v3638, %v3641
  %v3660 = vsel %vm3654, %v3647, 920167782
  %v3661 = vsel %vm3653, %v3644, %v3660
  %v3662 = vsel %vm3652, %v3659, %v3661
  %v3663 = vsel %vm3651, %v3641, %v3644
  %v3664 = vsel %vm3654, %v3650, 1326507024
  %v3665 = vsel %vm3653, %v3647, %v3664
  %v3666 = vsel %vm3652, %v3663, %v3665
  %v3667 = vshll.u32 %v3627, 8
  %v3668 = vmul.u32.u64.compose %v3667, %v3666
  %v3669 = vextract.low.u32 %v3668
  %v3670 = vextract.high.u32 %v3668
  %v3671 = vmul.u32.u64.compose %v3667, %v3662
  %v3672 = vextract.low.u32 %v3671
  %v3673 = vextract.high.u32 %v3671
  %v3674 = vmul.u32 %v3667, %v3658
  %v3675 = vadd.s32 %v3670, %v3672
  %vm3676 = vc.u32 %v3670, %v3672
  %v3677 = vadd.s32 %v3673, 1
  %v3678 = vsel %vm3676, %v3677, %v3673
  %v3679 = vadd.s32 %v3674, %v3678
  %v3680 = vadd.s32 %v3679, 536870912
  %v3681 = vshrl.u32 %v3680, 30
  %v3682 = vshll.u32 %v3681, 30
  %v3683 = vsub.s32 %v3679, %v3682
  %vm3684 = vcmp.lt.s32.totalorder %v3683, 0
  %v3685 = vsub.s32 0, %v3683
  %v3686 = vsel %vm3684, %v3685, %v3683
  %v3687 = vclz %v3686
  %v3688 = vsub.s32 %v3687, 2
  %vm3689 = vcmp.gt.s32.totalorder 0, %v3688
  %v3690 = vsel %vm3689, 0, %v3688
  %v3691 = vsub.s32 32, %v3690
  %v3692 = vshll.u32 %v3683, %v3690
  %v3693 = vshrl.u32 %v3675, %v3691
  %v3694 = vor.u32 %v3692, %v3693
  %v3695 = vsub.s32 4294967266, %v3690
  %v3696 = vadd.s32 %v3695, 127
  %v3697 = vshll.u32 %v3696, 23
  %v3698 = vor.u32 4788187, %v3697
  %v3699 = vand.u32 2147483647, %v3698
  %v3701 = vcvt.s32.f32 %v3694
  %v3702 = vmul.f32 %v3701, %v3699
  %v3703 = vxor.u32 %v3702, 2147483648
  %v3704 = vsel %vm3621, %v3703, %v3702
  %v3705 = vsub.s32 4, %v3681
  %v3706 = vsel %vm3621, %v3705, %v3681
  %v3707 = vsel %vm3620, %v2161, %v3704
  %v3708 = vsel %vm3620, 0, %v3706
  %v3709 = vcosq.f32.pop %v3707
  %v3710 = vsinq.f32.pop %v3707
  %vm3711 = vweird.f32 %v2161
  %v3712 = vadd.s32 %v3708, 3
  %v3713 = vand.u32 %v3712, 3
  %vm3714 = vcmp.lt.s32.totalorder %v3713, 2
  %vm3715 = vcmp.eq.s32.totalorder %v3713, 0
  %v3716 = vxor.u32 %v3710, 2147483648
  %v3717 = vsel %vm3715, %v3709, %v3716
  %vm3718 = vcmp.eq.s32.totalorder %v3713, 2
  %v3719 = vxor.u32 %v3709, 2147483648
  %v3720 = vsel %vm3718, %v3719, %v3710
  %v3721 = vsel %vm3714, %v3717, %v3720
  %v3722 = vsel %vm3711, nan, %v3721
  %v3723 = vand.u32 2147483647, %v2162
  %vm3724 = vcmp.le.f32.partialorder %v3723, 0.7853982
  %vm3725 = vcmp.lt.s32.totalorder %v2162, 0
  %v3726 = vand.u32 %v2162, 2139095040
  %v3727 = vshrl.u32 %v3726, 23
  %v3728 = vsub.s32 %v3727, 127
  %v3729 = vand.u32 2147483647, %v2162
  %v3730 = vand.u32 %v3729, 8388607
  %v3731 = vor.u32 %v3730, 8388608
  %v3732 = vsub.s32 0, %v3731
  %v3733 = vadd.s32 %v3728, 1
  %vm3734 = vcmp.gt.s32.totalorder %v3733, 0
  %v3735 = vsel %vm3734, %v3733, 0
  %v3736 = vshrl.u32 %v3735, 5
  %v3737 = vand.u32 %v3735, 31
  %v3738 = vsub.s32 32, %v3737
  %v3739 = vshrl.u32 683565275, %v3738
  %v3740 = vshll.u32 683565275, %v3737
  %v3741 = vshrl.u32 2475754826, %v3738
  %v3742 = vor.u32 %v3740, %v3741
  %v3743 = vshll.u32 2475754826, %v3737
  %v3744 = vshrl.u32 2131351028, %v3738
  %v3745 = vor.u32 %v3743, %v3744
  %v3746 = vshll.u32 2131351028, %v3737
  %v3747 = vshrl.u32 2102212464, %v3738
  %v3748 = vor.u32 %v3746, %v3747
  %v3749 = vshll.u32 2102212464, %v3737
  %v3750 = vshrl.u32 920167782, %v3738
  %v3751 = vor.u32 %v3749, %v3750
  %v3752 = vshll.u32 920167782, %v3737
  %v3753 = vshrl.u32 1326507024, %v3738
  %v3754 = vor.u32 %v3752, %v3753
  %vm3755 = vcmp.lt.s32.totalorder %v3736, 1
  %vm3756 = vcmp.lt.s32.totalorder %v3736, 2
  %vm3757 = vcmp.lt.s32.totalorder %v3736, 3
  %vm3758 = vcmp.lt.s32.totalorder %v3736, 4
  %v3759 = vsel %vm3755, %v3739, %v3742
  %v3760 = vsel %vm3758, %v3748, 2102212464
  %v3761 = vsel %vm3757, %v3745, %v3760
  %v3762 = vsel %vm3756, %v3759, %v3761
  %v3763 = vsel %vm3755, %v3742, %v3745
  %v3764 = vsel %vm3758, %v3751, 920167782
  %v3765 = vsel %vm3757, %v3748, %v3764
  %v3766 = vsel %vm3756, %v3763, %v3765
  %v3767 = vsel %vm3755, %v3745, %v3748
  %v3768 = vsel %vm3758, %v3754, 1326507024
  %v3769 = vsel %vm3757, %v3751, %v3768
  %v3770 = vsel %vm3756, %v3767, %v3769
  %v3771 = vshll.u32 %v3731, 8
  %v3772 = vmul.u32.u64.compose %v3771, %v3770
  %v3773 = vextract.low.u32 %v3772
  %v3774 = vextract.high.u32 %v3772
  %v3775 = vmul.u32.u64.compose %v3771, %v3766
  %v3776 = vextract.low.u32 %v3775
  %v3777 = vextract.high.u32 %v3775
  %v3778 = vmul.u32 %v3771, %v3762
  %v3779 = vadd.s32 %v3774, %v3776
  %vm3780 = vc.u32 %v3774, %v3776
  %v3781 = vadd.s32 %v3777, 1
  %v3782 = vsel %vm3780, %v3781, %v3777
  %v3783 = vadd.s32 %v3778, %v3782
  %v3784 = vadd.s32 %v3783, 536870912
  %v3785 = vshrl.u32 %v3784, 30
  %v3786 = vshll.u32 %v3785, 30
  %v3787 = vsub.s32 %v3783, %v3786
  %vm3788 = vcmp.lt.s32.totalorder %v3787, 0
  %v3789 = vsub.s32 0, %v3787
  %v3790 = vsel %vm3788, %v3789, %v3787
  %v3791 = vclz %v3790
  %v3792 = vsub.s32 %v3791, 2
  %vm3793 = vcmp.gt.s32.totalorder 0, %v3792
  %v3794 = vsel %vm3793, 0, %v3792
  %v3795 = vsub.s32 32, %v3794
  %v3796 = vshll.u32 %v3787, %v3794
  %v3797 = vshrl.u32 %v3779, %v3795
  %v3798 = vor.u32 %v3796, %v3797
  %v3799 = vsub.s32 4294967266, %v3794
  %v3800 = vadd.s32 %v3799, 127
  %v3801 = vshll.u32 %v3800, 23
  %v3802 = vor.u32 4788187, %v3801
  %v3803 = vand.u32 2147483647, %v3802
  %v3805 = vcvt.s32.f32 %v3798
  %v3806 = vmul.f32 %v3805, %v3803
  %v3807 = vxor.u32 %v3806, 2147483648
  %v3808 = vsel %vm3725, %v3807, %v3806
  %v3809 = vsub.s32 4, %v3785
  %v3810 = vsel %vm3725, %v3809, %v3785
  %v3811 = vsel %vm3724, %v2162, %v3808
  %v3812 = vsel %vm3724, 0, %v3810
  %v3813 = vcosq.f32.pop %v3811
  %v3814 = vsinq.f32.pop %v3811
  %vm3815 = vweird.f32 %v2162
  %v3816 = vadd.s32 %v3812, 3
  %v3817 = vand.u32 %v3816, 3
  %vm3818 = vcmp.lt.s32.totalorder %v3817, 2
  %vm3819 = vcmp.eq.s32.totalorder %v3817, 0
  %v3820 = vxor.u32 %v3814, 2147483648
  %v3821 = vsel %vm3819, %v3813, %v3820
  %vm3822 = vcmp.eq.s32.totalorder %v3817, 2
  %v3823 = vxor.u32 %v3813, 2147483648
  %v3824 = vsel %vm3822, %v3823, %v3814
  %v3825 = vsel %vm3818, %v3821, %v3824
  %v3826 = vsel %vm3815, nan, %v3825
  %v3827 = vld [vmem:[%s6] sm:$0xff]
  %v3828 = vld [vmem:[%s6 + $0x8] sm:$0xff]
  %v3829 = vld [vmem:[%s7] sm:$0x1]
  %v3831 = vlaneseq
  %v3832 = vshrl.u32 %v3831, 7
  %v3833 = vsub.s32 0, %v3832
  %v3834 = vrot.slane %v3829, %v3833
  %v3837 = vsel %vm1953, %v2266, 0
  %v3840 = vsel %vm1953, %v2370, 0
  %v3843 = vsel %vm1953, %v2474, 0
  %v3846 = vsel %vm1953, %v2578, 0
  %v3849 = vsel %vm1953, %v2682, 0
  %v3852 = vsel %vm1953, %v2786, 0
  %v3855 = vsel %vm1953, %v2890, 0
  %v3858 = vsel %vm1953, %v2994, 0
  %v3861 = vsel %vm1953, %v3098, 0
  %v3864 = vsel %vm1953, %v3202, 0
  %v3867 = vsel %vm1953, %v3306, 0
  %v3870 = vsel %vm1953, %v3410, 0
  %v3873 = vsel %vm1953, %v3514, 0
  %v3876 = vsel %vm1953, %v3618, 0
  %v3879 = vsel %vm1953, %v3722, 0
  %v3882 = vsel %vm1953, %v3826, 0
  %3884 = vmatprep.subr.mxu0 0.0
  %3885 = vmatpush1.msra.mxu0 0.0
  %3886 = vmatprep.subr.mxu0 0.0
  %3887 = vmatpush1.msra.mxu0 0.0
  %3888 = vmatprep.subr.mxu0 0.0
  %3889 = vmatpush1.msra.mxu0 0.0
  %3890 = vmatprep.subr.mxu0 0.0
  %3891 = vmatpush1.msra.mxu0 0.0
  %3892 = vmatprep.subr.mxu0 0.0
  %3893 = vmatpush1.msra.mxu0 0.0
  %3894 = vmatprep.subr.mxu0 0.0
  %3895 = vmatpush1.msra.mxu0 0.0
  %3896 = vmatprep.subr.mxu0 0.0
  %3897 = vmatpush1.msra.mxu0 0.0
  %3898 = vmatprep.subr.mxu0 0.0
  %3899 = vmatpush1.msra.mxu0 0.0
  %3900 = vmatprep.subr.mxu0 0.0
  %3901 = vmatpush1.msra.mxu0 0.0
  %3902 = vmatprep.subr.mxu0 0.0
  %3903 = vmatpush1.msra.mxu0 0.0
  %3904 = vmatprep.subr.mxu0 0.0
  %3905 = vmatpush1.msra.mxu0 0.0
  %3906 = vmatprep.subr.mxu0 0.0
  %3907 = vmatpush1.msra.mxu0 0.0
  %3908 = vmatprep.subr.mxu0 0.0
  %3909 = vmatpush1.msra.mxu0 0.0
  %3910 = vmatprep.subr.mxu0 0.0
  %3911 = vmatpush1.msra.mxu0 0.0
  %3912 = vmatprep.subr.mxu0 0.0
  %3913 = vmatpush1.msra.mxu0 %v3828
  %3914 = vmatprep.subr.mxu0 0.0
  %3915 = vmatpush1.msra.mxu0 %v3827
  %3916 = vmatprep.subr.mxu0 0.0
  %3917 = vmatpush2.msra.mxu0 0.0
  %3918 = vmatprep.subr.mxu0 0.0
  %3919 = vmatpush2.msra.mxu0 0.0
  %3920 = vmatprep.subr.mxu0 0.0
  %3921 = vmatpush2.msra.mxu0 0.0
  %3922 = vmatprep.subr.mxu0 0.0
  %3923 = vmatpush2.msra.mxu0 0.0
  %3924 = vmatprep.subr.mxu0 0.0
  %3925 = vmatpush2.msra.mxu0 0.0
  %3926 = vmatprep.subr.mxu0 0.0
  %3927 = vmatpush2.msra.mxu0 0.0
  %3928 = vmatprep.subr.mxu0 0.0
  %3929 = vmatpush2.msra.mxu0 0.0
  %3930 = vmatprep.subr.mxu0 0.0
  %3931 = vmatpush2.msra.mxu0 0.0
  %3932 = vmatprep.subr.mxu0 0.0
  %3933 = vmatpush2.msra.mxu0 0.0
  %3934 = vmatprep.subr.mxu0 0.0
  %3935 = vmatpush2.msra.mxu0 0.0
  %3936 = vmatprep.subr.mxu0 0.0
  %3937 = vmatpush2.msra.mxu0 0.0
  %3938 = vmatprep.subr.mxu0 0.0
  %3939 = vmatpush2.msra.mxu0 0.0
  %3940 = vmatprep.subr.mxu0 0.0
  %3941 = vmatpush2.msra.mxu0 0.0
  %3942 = vmatprep.subr.mxu0 0.0
  %3943 = vmatpush2.msra.mxu0 0.0
  %3944 = vmatprep.subr.mxu0 0.0
  %3945 = vmatpush2.msra.mxu0 0.0
  %3946 = vmatprep.subr.mxu0 0.0
  %3947 = vmatpush2.msra.mxu0 0.0
  %3948 = vmatprep.mubr.f32.mxu0 0.0
  %3949 = vmatmul.mubr.f32.gmra.mxu0 %v3837
  %v3950 = vpop.f32.mrf.mxu0
  %v3951 = vadd.f32 %v3834, %v3950
  %v3952 = vpop.f32.mrf.mxu0
  %3953 = vmatprep.mubr.f32.mxu0 0.0
  %3954 = vmatmul.mubr.f32.gmra.mxu0 %v3840
  %v3955 = vpop.f32.mrf.mxu0
  %v3956 = vadd.f32 %v3834, %v3955
  %v3957 = vpop.f32.mrf.mxu0
  %3958 = vmatprep.mubr.f32.mxu0 0.0
  %3959 = vmatmul.mubr.f32.gmra.mxu0 %v3843
  %v3960 = vpop.f32.mrf.mxu0
  %v3961 = vadd.f32 %v3834, %v3960
  %v3962 = vpop.f32.mrf.mxu0
  %3963 = vmatprep.mubr.f32.mxu0 0.0
  %3964 = vmatmul.mubr.f32.gmra.mxu0 %v3846
  %v3965 = vpop.f32.mrf.mxu0
  %v3966 = vadd.f32 %v3834, %v3965
  %v3967 = vpop.f32.mrf.mxu0
  %3968 = vmatprep.mubr.f32.mxu0 0.0
  %3969 = vmatmul.mubr.f32.gmra.mxu0 %v3849
  %v3970 = vpop.f32.mrf.mxu0
  %v3971 = vadd.f32 %v3834, %v3970
  %v3972 = vpop.f32.mrf.mxu0
  %3973 = vmatprep.mubr.f32.mxu0 0.0
  %3974 = vmatmul.mubr.f32.gmra.mxu0 %v3852
  %v3975 = vpop.f32.mrf.mxu0
  %v3976 = vadd.f32 %v3834, %v3975
  %v3977 = vpop.f32.mrf.mxu0
  %3978 = vmatprep.mubr.f32.mxu0 0.0
  %3979 = vmatmul.mubr.f32.gmra.mxu0 %v3855
  %v3980 = vpop.f32.mrf.mxu0
  %v3981 = vadd.f32 %v3834, %v3980
  %v3982 = vpop.f32.mrf.mxu0
  %3983 = vmatprep.mubr.f32.mxu0 0.0
  %3984 = vmatmul.mubr.f32.gmra.mxu0 %v3858
  %v3985 = vpop.f32.mrf.mxu0
  %v3986 = vadd.f32 %v3834, %v3985
  %v3987 = vpop.f32.mrf.mxu0
  %3988 = vmatprep.mubr.f32.mxu0 0.0
  %3989 = vmatmul.mubr.f32.gmra.mxu0 %v3861
  %v3990 = vpop.f32.mrf.mxu0
  %v3991 = vadd.f32 %v3834, %v3990
  %v3992 = vpop.f32.mrf.mxu0
  %3993 = vmatprep.mubr.f32.mxu0 0.0
  %3994 = vmatmul.mubr.f32.gmra.mxu0 %v3864
  %v3995 = vpop.f32.mrf.mxu0
  %v3996 = vadd.f32 %v3834, %v3995
  %v3997 = vpop.f32.mrf.mxu0
  %3998 = vmatprep.mubr.f32.mxu0 0.0
  %3999 = vmatmul.mubr.f32.gmra.mxu0 %v3867
  %v4000 = vpop.f32.mrf.mxu0
  %v4001 = vadd.f32 %v3834, %v4000
  %v4002 = vpop.f32.mrf.mxu0
  %4003 = vmatprep.mubr.f32.mxu0 0.0
  %4004 = vmatmul.mubr.f32.gmra.mxu0 %v3870
  %v4005 = vpop.f32.mrf.mxu0
  %v4006 = vadd.f32 %v3834, %v4005
  %v4007 = vpop.f32.mrf.mxu0
  %4008 = vmatprep.mubr.f32.mxu0 0.0
  %4009 = vmatmul.mubr.f32.gmra.mxu0 %v3873
  %v4010 = vpop.f32.mrf.mxu0
  %v4011 = vadd.f32 %v3834, %v4010
  %v4012 = vpop.f32.mrf.mxu0
  %4013 = vmatprep.mubr.f32.mxu0 0.0
  %4014 = vmatmul.mubr.f32.gmra.mxu0 %v3876
  %v4015 = vpop.f32.mrf.mxu0
  %v4016 = vadd.f32 %v3834, %v4015
  %v4017 = vpop.f32.mrf.mxu0
  %4018 = vmatprep.mubr.f32.mxu0 0.0
  %4019 = vmatmul.mubr.f32.gmra.mxu0 %v3879
  %v4020 = vpop.f32.mrf.mxu0
  %v4021 = vadd.f32 %v3834, %v4020
  %v4022 = vpop.f32.mrf.mxu0
  %4023 = vmatprep.mubr.f32.mxu0 0.0
  %4024 = vmatmul.mubr.f32.gmra.mxu0 %v3882
  %v4025 = vpop.f32.mrf.mxu0
  %v4026 = vadd.f32 %v3834, %v4025
  %v4027 = vpop.f32.mrf.mxu0
  %4028 = vdwg.mxu0
  %v4029 = vmul.f32 %v262, %v3951
  %v4030 = vmul.f32 %v262, %v3956
  %v4031 = vmul.f32 %v262, %v3961
  %v4032 = vmul.f32 %v262, %v3966
  %v4033 = vmul.f32 %v262, %v3971
  %v4034 = vmul.f32 %v262, %v3976
  %v4035 = vmul.f32 %v262, %v3981
  %v4036 = vmul.f32 %v262, %v3986
  %v4037 = vmul.f32 %v262, %v3991
  %v4038 = vmul.f32 %v262, %v3996
  %v4039 = vmul.f32 %v262, %v4001
  %v4040 = vmul.f32 %v262, %v4006
  %v4041 = vmul.f32 %v262, %v4011
  %v4042 = vmul.f32 %v262, %v4016
  %v4043 = vmul.f32 %v262, %v4021
  %v4044 = vmul.f32 %v262, %v4026
  %v4045 = vand.u32 2147483647, %v4029
  %vm4046 = vcmp.le.f32.partialorder %v4045, 0.7853982
  %vm4047 = vcmp.lt.s32.totalorder %v4029, 0
  %v4048 = vand.u32 %v4029, 2139095040
  %v4049 = vshrl.u32 %v4048, 23
  %v4050 = vsub.s32 %v4049, 127
  %v4051 = vand.u32 2147483647, %v4029
  %v4052 = vand.u32 %v4051, 8388607
  %v4053 = vor.u32 %v4052, 8388608
  %v4054 = vsub.s32 0, %v4053
  %v4055 = vadd.s32 %v4050, 1
  %vm4056 = vcmp.gt.s32.totalorder %v4055, 0
  %v4057 = vsel %vm4056, %v4055, 0
  %v4058 = vshrl.u32 %v4057, 5
  %v4059 = vand.u32 %v4057, 31
  %v4060 = vsub.s32 32, %v4059
  %v4061 = vshrl.u32 683565275, %v4060
  %v4062 = vshll.u32 683565275, %v4059
  %v4063 = vshrl.u32 2475754826, %v4060
  %v4064 = vor.u32 %v4062, %v4063
  %v4065 = vshll.u32 2475754826, %v4059
  %v4066 = vshrl.u32 2131351028, %v4060
  %v4067 = vor.u32 %v4065, %v4066
  %v4068 = vshll.u32 2131351028, %v4059
  %v4069 = vshrl.u32 2102212464, %v4060
  %v4070 = vor.u32 %v4068, %v4069
  %v4071 = vshll.u32 2102212464, %v4059
  %v4072 = vshrl.u32 920167782, %v4060
  %v4073 = vor.u32 %v4071, %v4072
  %v4074 = vshll.u32 920167782, %v4059
  %v4075 = vshrl.u32 1326507024, %v4060
  %v4076 = vor.u32 %v4074, %v4075
  %vm4077 = vcmp.lt.s32.totalorder %v4058, 1
  %vm4078 = vcmp.lt.s32.totalorder %v4058, 2
  %vm4079 = vcmp.lt.s32.totalorder %v4058, 3
  %vm4080 = vcmp.lt.s32.totalorder %v4058, 4
  %v4081 = vsel %vm4077, %v4061, %v4064
  %v4082 = vsel %vm4080, %v4070, 2102212464
  %v4083 = vsel %vm4079, %v4067, %v4082
  %v4084 = vsel %vm4078, %v4081, %v4083
  %v4085 = vsel %vm4077, %v4064, %v4067
  %v4086 = vsel %vm4080, %v4073, 920167782
  %v4087 = vsel %vm4079, %v4070, %v4086
  %v4088 = vsel %vm4078, %v4085, %v4087
  %v4089 = vsel %vm4077, %v4067, %v4070
  %v4090 = vsel %vm4080, %v4076, 1326507024
  %v4091 = vsel %vm4079, %v4073, %v4090
  %v4092 = vsel %vm4078, %v4089, %v4091
  %v4093 = vshll.u32 %v4053, 8
  %v4094 = vmul.u32.u64.compose %v4093, %v4092
  %v4095 = vextract.low.u32 %v4094
  %v4096 = vextract.high.u32 %v4094
  %v4097 = vmul.u32.u64.compose %v4093, %v4088
  %v4098 = vextract.low.u32 %v4097
  %v4099 = vextract.high.u32 %v4097
  %v4100 = vmul.u32 %v4093, %v4084
  %v4101 = vadd.s32 %v4096, %v4098
  %vm4102 = vc.u32 %v4096, %v4098
  %v4103 = vadd.s32 %v4099, 1
  %v4104 = vsel %vm4102, %v4103, %v4099
  %v4105 = vadd.s32 %v4100, %v4104
  %v4106 = vadd.s32 %v4105, 536870912
  %v4107 = vshrl.u32 %v4106, 30
  %v4108 = vshll.u32 %v4107, 30
  %v4109 = vsub.s32 %v4105, %v4108
  %vm4110 = vcmp.lt.s32.totalorder %v4109, 0
  %v4111 = vsub.s32 0, %v4109
  %v4112 = vsel %vm4110, %v4111, %v4109
  %v4113 = vclz %v4112
  %v4114 = vsub.s32 %v4113, 2
  %vm4115 = vcmp.gt.s32.totalorder 0, %v4114
  %v4116 = vsel %vm4115, 0, %v4114
  %v4117 = vsub.s32 32, %v4116
  %v4118 = vshll.u32 %v4109, %v4116
  %v4119 = vshrl.u32 %v4101, %v4117
  %v4120 = vor.u32 %v4118, %v4119
  %v4121 = vsub.s32 4294967266, %v4116
  %v4122 = vadd.s32 %v4121, 127
  %v4123 = vshll.u32 %v4122, 23
  %v4124 = vor.u32 4788187, %v4123
  %v4125 = vand.u32 2147483647, %v4124
  %v4127 = vcvt.s32.f32 %v4120
  %v4128 = vmul.f32 %v4127, %v4125
  %v4129 = vxor.u32 %v4128, 2147483648
  %v4130 = vsel %vm4047, %v4129, %v4128
  %v4131 = vsub.s32 4, %v4107
  %v4132 = vsel %vm4047, %v4131, %v4107
  %v4133 = vsel %vm4046, %v4029, %v4130
  %v4134 = vsel %vm4046, 0, %v4132
  %v4135 = vcosq.f32.pop %v4133
  %v4136 = vsinq.f32.pop %v4133
  %vm4137 = vweird.f32 %v4029
  %v4138 = vadd.s32 %v4134, 3
  %v4139 = vand.u32 %v4138, 3
  %vm4140 = vcmp.lt.s32.totalorder %v4139, 2
  %vm4141 = vcmp.eq.s32.totalorder %v4139, 0
  %v4142 = vxor.u32 %v4136, 2147483648
  %v4143 = vsel %vm4141, %v4135, %v4142
  %vm4144 = vcmp.eq.s32.totalorder %v4139, 2
  %v4145 = vxor.u32 %v4135, 2147483648
  %v4146 = vsel %vm4144, %v4145, %v4136
  %v4147 = vsel %vm4140, %v4143, %v4146
  %v4148 = vsel %vm4137, nan, %v4147
  %v4149 = vand.u32 2147483647, %v4030
  %vm4150 = vcmp.le.f32.partialorder %v4149, 0.7853982
  %vm4151 = vcmp.lt.s32.totalorder %v4030, 0
  %v4152 = vand.u32 %v4030, 2139095040
  %v4153 = vshrl.u32 %v4152, 23
  %v4154 = vsub.s32 %v4153, 127
  %v4155 = vand.u32 2147483647, %v4030
  %v4156 = vand.u32 %v4155, 8388607
  %v4157 = vor.u32 %v4156, 8388608
  %v4158 = vsub.s32 0, %v4157
  %v4159 = vadd.s32 %v4154, 1
  %vm4160 = vcmp.gt.s32.totalorder %v4159, 0
  %v4161 = vsel %vm4160, %v4159, 0
  %v4162 = vshrl.u32 %v4161, 5
  %v4163 = vand.u32 %v4161, 31
  %v4164 = vsub.s32 32, %v4163
  %v4165 = vshrl.u32 683565275, %v4164
  %v4166 = vshll.u32 683565275, %v4163
  %v4167 = vshrl.u32 2475754826, %v4164
  %v4168 = vor.u32 %v4166, %v4167
  %v4169 = vshll.u32 2475754826, %v4163
  %v4170 = vshrl.u32 2131351028, %v4164
  %v4171 = vor.u32 %v4169, %v4170
  %v4172 = vshll.u32 2131351028, %v4163
  %v4173 = vshrl.u32 2102212464, %v4164
  %v4174 = vor.u32 %v4172, %v4173
  %v4175 = vshll.u32 2102212464, %v4163
  %v4176 = vshrl.u32 920167782, %v4164
  %v4177 = vor.u32 %v4175, %v4176
  %v4178 = vshll.u32 920167782, %v4163
  %v4179 = vshrl.u32 1326507024, %v4164
  %v4180 = vor.u32 %v4178, %v4179
  %vm4181 = vcmp.lt.s32.totalorder %v4162, 1
  %vm4182 = vcmp.lt.s32.totalorder %v4162, 2
  %vm4183 = vcmp.lt.s32.totalorder %v4162, 3
  %vm4184 = vcmp.lt.s32.totalorder %v4162, 4
  %v4185 = vsel %vm4181, %v4165, %v4168
  %v4186 = vsel %vm4184, %v4174, 2102212464
  %v4187 = vsel %vm4183, %v4171, %v4186
  %v4188 = vsel %vm4182, %v4185, %v4187
  %v4189 = vsel %vm4181, %v4168, %v4171
  %v4190 = vsel %vm4184, %v4177, 920167782
  %v4191 = vsel %vm4183, %v4174, %v4190
  %v4192 = vsel %vm4182, %v4189, %v4191
  %v4193 = vsel %vm4181, %v4171, %v4174
  %v4194 = vsel %vm4184, %v4180, 1326507024
  %v4195 = vsel %vm4183, %v4177, %v4194
  %v4196 = vsel %vm4182, %v4193, %v4195
  %v4197 = vshll.u32 %v4157, 8
  %v4198 = vmul.u32.u64.compose %v4197, %v4196
  %v4199 = vextract.low.u32 %v4198
  %v4200 = vextract.high.u32 %v4198
  %v4201 = vmul.u32.u64.compose %v4197, %v4192
  %v4202 = vextract.low.u32 %v4201
  %v4203 = vextract.high.u32 %v4201
  %v4204 = vmul.u32 %v4197, %v4188
  %v4205 = vadd.s32 %v4200, %v4202
  %vm4206 = vc.u32 %v4200, %v4202
  %v4207 = vadd.s32 %v4203, 1
  %v4208 = vsel %vm4206, %v4207, %v4203
  %v4209 = vadd.s32 %v4204, %v4208
  %v4210 = vadd.s32 %v4209, 536870912
  %v4211 = vshrl.u32 %v4210, 30
  %v4212 = vshll.u32 %v4211, 30
  %v4213 = vsub.s32 %v4209, %v4212
  %vm4214 = vcmp.lt.s32.totalorder %v4213, 0
  %v4215 = vsub.s32 0, %v4213
  %v4216 = vsel %vm4214, %v4215, %v4213
  %v4217 = vclz %v4216
  %v4218 = vsub.s32 %v4217, 2
  %vm4219 = vcmp.gt.s32.totalorder 0, %v4218
  %v4220 = vsel %vm4219, 0, %v4218
  %v4221 = vsub.s32 32, %v4220
  %v4222 = vshll.u32 %v4213, %v4220
  %v4223 = vshrl.u32 %v4205, %v4221
  %v4224 = vor.u32 %v4222, %v4223
  %v4225 = vsub.s32 4294967266, %v4220
  %v4226 = vadd.s32 %v4225, 127
  %v4227 = vshll.u32 %v4226, 23
  %v4228 = vor.u32 4788187, %v4227
  %v4229 = vand.u32 2147483647, %v4228
  %v4231 = vcvt.s32.f32 %v4224
  %v4232 = vmul.f32 %v4231, %v4229
  %v4233 = vxor.u32 %v4232, 2147483648
  %v4234 = vsel %vm4151, %v4233, %v4232
  %v4235 = vsub.s32 4, %v4211
  %v4236 = vsel %vm4151, %v4235, %v4211
  %v4237 = vsel %vm4150, %v4030, %v4234
  %v4238 = vsel %vm4150, 0, %v4236
  %v4239 = vcosq.f32.pop %v4237
  %v4240 = vsinq.f32.pop %v4237
  %vm4241 = vweird.f32 %v4030
  %v4242 = vadd.s32 %v4238, 3
  %v4243 = vand.u32 %v4242, 3
  %vm4244 = vcmp.lt.s32.totalorder %v4243, 2
  %vm4245 = vcmp.eq.s32.totalorder %v4243, 0
  %v4246 = vxor.u32 %v4240, 2147483648
  %v4247 = vsel %vm4245, %v4239, %v4246
  %vm4248 = vcmp.eq.s32.totalorder %v4243, 2
  %v4249 = vxor.u32 %v4239, 2147483648
  %v4250 = vsel %vm4248, %v4249, %v4240
  %v4251 = vsel %vm4244, %v4247, %v4250
  %v4252 = vsel %vm4241, nan, %v4251
  %v4253 = vand.u32 2147483647, %v4031
  %vm4254 = vcmp.le.f32.partialorder %v4253, 0.7853982
  %vm4255 = vcmp.lt.s32.totalorder %v4031, 0
  %v4256 = vand.u32 %v4031, 2139095040
  %v4257 = vshrl.u32 %v4256, 23
  %v4258 = vsub.s32 %v4257, 127
  %v4259 = vand.u32 2147483647, %v4031
  %v4260 = vand.u32 %v4259, 8388607
  %v4261 = vor.u32 %v4260, 8388608
  %v4262 = vsub.s32 0, %v4261
  %v4263 = vadd.s32 %v4258, 1
  %vm4264 = vcmp.gt.s32.totalorder %v4263, 0
  %v4265 = vsel %vm4264, %v4263, 0
  %v4266 = vshrl.u32 %v4265, 5
  %v4267 = vand.u32 %v4265, 31
  %v4268 = vsub.s32 32, %v4267
  %v4269 = vshrl.u32 683565275, %v4268
  %v4270 = vshll.u32 683565275, %v4267
  %v4271 = vshrl.u32 2475754826, %v4268
  %v4272 = vor.u32 %v4270, %v4271
  %v4273 = vshll.u32 2475754826, %v4267
  %v4274 = vshrl.u32 2131351028, %v4268
  %v4275 = vor.u32 %v4273, %v4274
  %v4276 = vshll.u32 2131351028, %v4267
  %v4277 = vshrl.u32 2102212464, %v4268
  %v4278 = vor.u32 %v4276, %v4277
  %v4279 = vshll.u32 2102212464, %v4267
  %v4280 = vshrl.u32 920167782, %v4268
  %v4281 = vor.u32 %v4279, %v4280
  %v4282 = vshll.u32 920167782, %v4267
  %v4283 = vshrl.u32 1326507024, %v4268
  %v4284 = vor.u32 %v4282, %v4283
  %vm4285 = vcmp.lt.s32.totalorder %v4266, 1
  %vm4286 = vcmp.lt.s32.totalorder %v4266, 2
  %vm4287 = vcmp.lt.s32.totalorder %v4266, 3
  %vm4288 = vcmp.lt.s32.totalorder %v4266, 4
  %v4289 = vsel %vm4285, %v4269, %v4272
  %v4290 = vsel %vm4288, %v4278, 2102212464
  %v4291 = vsel %vm4287, %v4275, %v4290
  %v4292 = vsel %vm4286, %v4289, %v4291
  %v4293 = vsel %vm4285, %v4272, %v4275
  %v4294 = vsel %vm4288, %v4281, 920167782
  %v4295 = vsel %vm4287, %v4278, %v4294
  %v4296 = vsel %vm4286, %v4293, %v4295
  %v4297 = vsel %vm4285, %v4275, %v4278
  %v4298 = vsel %vm4288, %v4284, 1326507024
  %v4299 = vsel %vm4287, %v4281, %v4298
  %v4300 = vsel %vm4286, %v4297, %v4299
  %v4301 = vshll.u32 %v4261, 8
  %v4302 = vmul.u32.u64.compose %v4301, %v4300
  %v4303 = vextract.low.u32 %v4302
  %v4304 = vextract.high.u32 %v4302
  %v4305 = vmul.u32.u64.compose %v4301, %v4296
  %v4306 = vextract.low.u32 %v4305
  %v4307 = vextract.high.u32 %v4305
  %v4308 = vmul.u32 %v4301, %v4292
  %v4309 = vadd.s32 %v4304, %v4306
  %vm4310 = vc.u32 %v4304, %v4306
  %v4311 = vadd.s32 %v4307, 1
  %v4312 = vsel %vm4310, %v4311, %v4307
  %v4313 = vadd.s32 %v4308, %v4312
  %v4314 = vadd.s32 %v4313, 536870912
  %v4315 = vshrl.u32 %v4314, 30
  %v4316 = vshll.u32 %v4315, 30
  %v4317 = vsub.s32 %v4313, %v4316
  %vm4318 = vcmp.lt.s32.totalorder %v4317, 0
  %v4319 = vsub.s32 0, %v4317
  %v4320 = vsel %vm4318, %v4319, %v4317
  %v4321 = vclz %v4320
  %v4322 = vsub.s32 %v4321, 2
  %vm4323 = vcmp.gt.s32.totalorder 0, %v4322
  %v4324 = vsel %vm4323, 0, %v4322
  %v4325 = vsub.s32 32, %v4324
  %v4326 = vshll.u32 %v4317, %v4324
  %v4327 = vshrl.u32 %v4309, %v4325
  %v4328 = vor.u32 %v4326, %v4327
  %v4329 = vsub.s32 4294967266, %v4324
  %v4330 = vadd.s32 %v4329, 127
  %v4331 = vshll.u32 %v4330, 23
  %v4332 = vor.u32 4788187, %v4331
  %v4333 = vand.u32 2147483647, %v4332
  %v4335 = vcvt.s32.f32 %v4328
  %v4336 = vmul.f32 %v4335, %v4333
  %v4337 = vxor.u32 %v4336, 2147483648
  %v4338 = vsel %vm4255, %v4337, %v4336
  %v4339 = vsub.s32 4, %v4315
  %v4340 = vsel %vm4255, %v4339, %v4315
  %v4341 = vsel %vm4254, %v4031, %v4338
  %v4342 = vsel %vm4254, 0, %v4340
  %v4343 = vcosq.f32.pop %v4341
  %v4344 = vsinq.f32.pop %v4341
  %vm4345 = vweird.f32 %v4031
  %v4346 = vadd.s32 %v4342, 3
  %v4347 = vand.u32 %v4346, 3
  %vm4348 = vcmp.lt.s32.totalorder %v4347, 2
  %vm4349 = vcmp.eq.s32.totalorder %v4347, 0
  %v4350 = vxor.u32 %v4344, 2147483648
  %v4351 = vsel %vm4349, %v4343, %v4350
  %vm4352 = vcmp.eq.s32.totalorder %v4347, 2
  %v4353 = vxor.u32 %v4343, 2147483648
  %v4354 = vsel %vm4352, %v4353, %v4344
  %v4355 = vsel %vm4348, %v4351, %v4354
  %v4356 = vsel %vm4345, nan, %v4355
  %v4357 = vand.u32 2147483647, %v4032
  %vm4358 = vcmp.le.f32.partialorder %v4357, 0.7853982
  %vm4359 = vcmp.lt.s32.totalorder %v4032, 0
  %v4360 = vand.u32 %v4032, 2139095040
  %v4361 = vshrl.u32 %v4360, 23
  %v4362 = vsub.s32 %v4361, 127
  %v4363 = vand.u32 2147483647, %v4032
  %v4364 = vand.u32 %v4363, 8388607
  %v4365 = vor.u32 %v4364, 8388608
  %v4366 = vsub.s32 0, %v4365
  %v4367 = vadd.s32 %v4362, 1
  %vm4368 = vcmp.gt.s32.totalorder %v4367, 0
  %v4369 = vsel %vm4368, %v4367, 0
  %v4370 = vshrl.u32 %v4369, 5
  %v4371 = vand.u32 %v4369, 31
  %v4372 = vsub.s32 32, %v4371
  %v4373 = vshrl.u32 683565275, %v4372
  %v4374 = vshll.u32 683565275, %v4371
  %v4375 = vshrl.u32 2475754826, %v4372
  %v4376 = vor.u32 %v4374, %v4375
  %v4377 = vshll.u32 2475754826, %v4371
  %v4378 = vshrl.u32 2131351028, %v4372
  %v4379 = vor.u32 %v4377, %v4378
  %v4380 = vshll.u32 2131351028, %v4371
  %v4381 = vshrl.u32 2102212464, %v4372
  %v4382 = vor.u32 %v4380, %v4381
  %v4383 = vshll.u32 2102212464, %v4371
  %v4384 = vshrl.u32 920167782, %v4372
  %v4385 = vor.u32 %v4383, %v4384
  %v4386 = vshll.u32 920167782, %v4371
  %v4387 = vshrl.u32 1326507024, %v4372
  %v4388 = vor.u32 %v4386, %v4387
  %vm4389 = vcmp.lt.s32.totalorder %v4370, 1
  %vm4390 = vcmp.lt.s32.totalorder %v4370, 2
  %vm4391 = vcmp.lt.s32.totalorder %v4370, 3
  %vm4392 = vcmp.lt.s32.totalorder %v4370, 4
  %v4393 = vsel %vm4389, %v4373, %v4376
  %v4394 = vsel %vm4392, %v4382, 2102212464
  %v4395 = vsel %vm4391, %v4379, %v4394
  %v4396 = vsel %vm4390, %v4393, %v4395
  %v4397 = vsel %vm4389, %v4376, %v4379
  %v4398 = vsel %vm4392, %v4385, 920167782
  %v4399 = vsel %vm4391, %v4382, %v4398
  %v4400 = vsel %vm4390, %v4397, %v4399
  %v4401 = vsel %vm4389, %v4379, %v4382
  %v4402 = vsel %vm4392, %v4388, 1326507024
  %v4403 = vsel %vm4391, %v4385, %v4402
  %v4404 = vsel %vm4390, %v4401, %v4403
  %v4405 = vshll.u32 %v4365, 8
  %v4406 = vmul.u32.u64.compose %v4405, %v4404
  %v4407 = vextract.low.u32 %v4406
  %v4408 = vextract.high.u32 %v4406
  %v4409 = vmul.u32.u64.compose %v4405, %v4400
  %v4410 = vextract.low.u32 %v4409
  %v4411 = vextract.high.u32 %v4409
  %v4412 = vmul.u32 %v4405, %v4396
  %v4413 = vadd.s32 %v4408, %v4410
  %vm4414 = vc.u32 %v4408, %v4410
  %v4415 = vadd.s32 %v4411, 1
  %v4416 = vsel %vm4414, %v4415, %v4411
  %v4417 = vadd.s32 %v4412, %v4416
  %v4418 = vadd.s32 %v4417, 536870912
  %v4419 = vshrl.u32 %v4418, 30
  %v4420 = vshll.u32 %v4419, 30
  %v4421 = vsub.s32 %v4417, %v4420
  %vm4422 = vcmp.lt.s32.totalorder %v4421, 0
  %v4423 = vsub.s32 0, %v4421
  %v4424 = vsel %vm4422, %v4423, %v4421
  %v4425 = vclz %v4424
  %v4426 = vsub.s32 %v4425, 2
  %vm4427 = vcmp.gt.s32.totalorder 0, %v4426
  %v4428 = vsel %vm4427, 0, %v4426
  %v4429 = vsub.s32 32, %v4428
  %v4430 = vshll.u32 %v4421, %v4428
  %v4431 = vshrl.u32 %v4413, %v4429
  %v4432 = vor.u32 %v4430, %v4431
  %v4433 = vsub.s32 4294967266, %v4428
  %v4434 = vadd.s32 %v4433, 127
  %v4435 = vshll.u32 %v4434, 23
  %v4436 = vor.u32 4788187, %v4435
  %v4437 = vand.u32 2147483647, %v4436
  %v4439 = vcvt.s32.f32 %v4432
  %v4440 = vmul.f32 %v4439, %v4437
  %v4441 = vxor.u32 %v4440, 2147483648
  %v4442 = vsel %vm4359, %v4441, %v4440
  %v4443 = vsub.s32 4, %v4419
  %v4444 = vsel %vm4359, %v4443, %v4419
  %v4445 = vsel %vm4358, %v4032, %v4442
  %v4446 = vsel %vm4358, 0, %v4444
  %v4447 = vcosq.f32.pop %v4445
  %v4448 = vsinq.f32.pop %v4445
  %vm4449 = vweird.f32 %v4032
  %v4450 = vadd.s32 %v4446, 3
  %v4451 = vand.u32 %v4450, 3
  %vm4452 = vcmp.lt.s32.totalorder %v4451, 2
  %vm4453 = vcmp.eq.s32.totalorder %v4451, 0
  %v4454 = vxor.u32 %v4448, 2147483648
  %v4455 = vsel %vm4453, %v4447, %v4454
  %vm4456 = vcmp.eq.s32.totalorder %v4451, 2
  %v4457 = vxor.u32 %v4447, 2147483648
  %v4458 = vsel %vm4456, %v4457, %v4448
  %v4459 = vsel %vm4452, %v4455, %v4458
  %v4460 = vsel %vm4449, nan, %v4459
  %v4461 = vand.u32 2147483647, %v4033
  %vm4462 = vcmp.le.f32.partialorder %v4461, 0.7853982
  %vm4463 = vcmp.lt.s32.totalorder %v4033, 0
  %v4464 = vand.u32 %v4033, 2139095040
  %v4465 = vshrl.u32 %v4464, 23
  %v4466 = vsub.s32 %v4465, 127
  %v4467 = vand.u32 2147483647, %v4033
  %v4468 = vand.u32 %v4467, 8388607
  %v4469 = vor.u32 %v4468, 8388608
  %v4470 = vsub.s32 0, %v4469
  %v4471 = vadd.s32 %v4466, 1
  %vm4472 = vcmp.gt.s32.totalorder %v4471, 0
  %v4473 = vsel %vm4472, %v4471, 0
  %v4474 = vshrl.u32 %v4473, 5
  %v4475 = vand.u32 %v4473, 31
  %v4476 = vsub.s32 32, %v4475
  %v4477 = vshrl.u32 683565275, %v4476
  %v4478 = vshll.u32 683565275, %v4475
  %v4479 = vshrl.u32 2475754826, %v4476
  %v4480 = vor.u32 %v4478, %v4479
  %v4481 = vshll.u32 2475754826, %v4475
  %v4482 = vshrl.u32 2131351028, %v4476
  %v4483 = vor.u32 %v4481, %v4482
  %v4484 = vshll.u32 2131351028, %v4475
  %v4485 = vshrl.u32 2102212464, %v4476
  %v4486 = vor.u32 %v4484, %v4485
  %v4487 = vshll.u32 2102212464, %v4475
  %v4488 = vshrl.u32 920167782, %v4476
  %v4489 = vor.u32 %v4487, %v4488
  %v4490 = vshll.u32 920167782, %v4475
  %v4491 = vshrl.u32 1326507024, %v4476
  %v4492 = vor.u32 %v4490, %v4491
  %vm4493 = vcmp.lt.s32.totalorder %v4474, 1
  %vm4494 = vcmp.lt.s32.totalorder %v4474, 2
  %vm4495 = vcmp.lt.s32.totalorder %v4474, 3
  %vm4496 = vcmp.lt.s32.totalorder %v4474, 4
  %v4497 = vsel %vm4493, %v4477, %v4480
  %v4498 = vsel %vm4496, %v4486, 2102212464
  %v4499 = vsel %vm4495, %v4483, %v4498
  %v4500 = vsel %vm4494, %v4497, %v4499
  %v4501 = vsel %vm4493, %v4480, %v4483
  %v4502 = vsel %vm4496, %v4489, 920167782
  %v4503 = vsel %vm4495, %v4486, %v4502
  %v4504 = vsel %vm4494, %v4501, %v4503
  %v4505 = vsel %vm4493, %v4483, %v4486
  %v4506 = vsel %vm4496, %v4492, 1326507024
  %v4507 = vsel %vm4495, %v4489, %v4506
  %v4508 = vsel %vm4494, %v4505, %v4507
  %v4509 = vshll.u32 %v4469, 8
  %v4510 = vmul.u32.u64.compose %v4509, %v4508
  %v4511 = vextract.low.u32 %v4510
  %v4512 = vextract.high.u32 %v4510
  %v4513 = vmul.u32.u64.compose %v4509, %v4504
  %v4514 = vextract.low.u32 %v4513
  %v4515 = vextract.high.u32 %v4513
  %v4516 = vmul.u32 %v4509, %v4500
  %v4517 = vadd.s32 %v4512, %v4514
  %vm4518 = vc.u32 %v4512, %v4514
  %v4519 = vadd.s32 %v4515, 1
  %v4520 = vsel %vm4518, %v4519, %v4515
  %v4521 = vadd.s32 %v4516, %v4520
  %v4522 = vadd.s32 %v4521, 536870912
  %v4523 = vshrl.u32 %v4522, 30
  %v4524 = vshll.u32 %v4523, 30
  %v4525 = vsub.s32 %v4521, %v4524
  %vm4526 = vcmp.lt.s32.totalorder %v4525, 0
  %v4527 = vsub.s32 0, %v4525
  %v4528 = vsel %vm4526, %v4527, %v4525
  %v4529 = vclz %v4528
  %v4530 = vsub.s32 %v4529, 2
  %vm4531 = vcmp.gt.s32.totalorder 0, %v4530
  %v4532 = vsel %vm4531, 0, %v4530
  %v4533 = vsub.s32 32, %v4532
  %v4534 = vshll.u32 %v4525, %v4532
  %v4535 = vshrl.u32 %v4517, %v4533
  %v4536 = vor.u32 %v4534, %v4535
  %v4537 = vsub.s32 4294967266, %v4532
  %v4538 = vadd.s32 %v4537, 127
  %v4539 = vshll.u32 %v4538, 23
  %v4540 = vor.u32 4788187, %v4539
  %v4541 = vand.u32 2147483647, %v4540
  %v4543 = vcvt.s32.f32 %v4536
  %v4544 = vmul.f32 %v4543, %v4541
  %v4545 = vxor.u32 %v4544, 2147483648
  %v4546 = vsel %vm4463, %v4545, %v4544
  %v4547 = vsub.s32 4, %v4523
  %v4548 = vsel %vm4463, %v4547, %v4523
  %v4549 = vsel %vm4462, %v4033, %v4546
  %v4550 = vsel %vm4462, 0, %v4548
  %v4551 = vcosq.f32.pop %v4549
  %v4552 = vsinq.f32.pop %v4549
  %vm4553 = vweird.f32 %v4033
  %v4554 = vadd.s32 %v4550, 3
  %v4555 = vand.u32 %v4554, 3
  %vm4556 = vcmp.lt.s32.totalorder %v4555, 2
  %vm4557 = vcmp.eq.s32.totalorder %v4555, 0
  %v4558 = vxor.u32 %v4552, 2147483648
  %v4559 = vsel %vm4557, %v4551, %v4558
  %vm4560 = vcmp.eq.s32.totalorder %v4555, 2
  %v4561 = vxor.u32 %v4551, 2147483648
  %v4562 = vsel %vm4560, %v4561, %v4552
  %v4563 = vsel %vm4556, %v4559, %v4562
  %v4564 = vsel %vm4553, nan, %v4563
  %v4565 = vand.u32 2147483647, %v4034
  %vm4566 = vcmp.le.f32.partialorder %v4565, 0.7853982
  %vm4567 = vcmp.lt.s32.totalorder %v4034, 0
  %v4568 = vand.u32 %v4034, 2139095040
  %v4569 = vshrl.u32 %v4568, 23
  %v4570 = vsub.s32 %v4569, 127
  %v4571 = vand.u32 2147483647, %v4034
  %v4572 = vand.u32 %v4571, 8388607
  %v4573 = vor.u32 %v4572, 8388608
  %v4574 = vsub.s32 0, %v4573
  %v4575 = vadd.s32 %v4570, 1
  %vm4576 = vcmp.gt.s32.totalorder %v4575, 0
  %v4577 = vsel %vm4576, %v4575, 0
  %v4578 = vshrl.u32 %v4577, 5
  %v4579 = vand.u32 %v4577, 31
  %v4580 = vsub.s32 32, %v4579
  %v4581 = vshrl.u32 683565275, %v4580
  %v4582 = vshll.u32 683565275, %v4579
  %v4583 = vshrl.u32 2475754826, %v4580
  %v4584 = vor.u32 %v4582, %v4583
  %v4585 = vshll.u32 2475754826, %v4579
  %v4586 = vshrl.u32 2131351028, %v4580
  %v4587 = vor.u32 %v4585, %v4586
  %v4588 = vshll.u32 2131351028, %v4579
  %v4589 = vshrl.u32 2102212464, %v4580
  %v4590 = vor.u32 %v4588, %v4589
  %v4591 = vshll.u32 2102212464, %v4579
  %v4592 = vshrl.u32 920167782, %v4580
  %v4593 = vor.u32 %v4591, %v4592
  %v4594 = vshll.u32 920167782, %v4579
  %v4595 = vshrl.u32 1326507024, %v4580
  %v4596 = vor.u32 %v4594, %v4595
  %vm4597 = vcmp.lt.s32.totalorder %v4578, 1
  %vm4598 = vcmp.lt.s32.totalorder %v4578, 2
  %vm4599 = vcmp.lt.s32.totalorder %v4578, 3
  %vm4600 = vcmp.lt.s32.totalorder %v4578, 4
  %v4601 = vsel %vm4597, %v4581, %v4584
  %v4602 = vsel %vm4600, %v4590, 2102212464
  %v4603 = vsel %vm4599, %v4587, %v4602
  %v4604 = vsel %vm4598, %v4601, %v4603
  %v4605 = vsel %vm4597, %v4584, %v4587
  %v4606 = vsel %vm4600, %v4593, 920167782
  %v4607 = vsel %vm4599, %v4590, %v4606
  %v4608 = vsel %vm4598, %v4605, %v4607
  %v4609 = vsel %vm4597, %v4587, %v4590
  %v4610 = vsel %vm4600, %v4596, 1326507024
  %v4611 = vsel %vm4599, %v4593, %v4610
  %v4612 = vsel %vm4598, %v4609, %v4611
  %v4613 = vshll.u32 %v4573, 8
  %v4614 = vmul.u32.u64.compose %v4613, %v4612
  %v4615 = vextract.low.u32 %v4614
  %v4616 = vextract.high.u32 %v4614
  %v4617 = vmul.u32.u64.compose %v4613, %v4608
  %v4618 = vextract.low.u32 %v4617
  %v4619 = vextract.high.u32 %v4617
  %v4620 = vmul.u32 %v4613, %v4604
  %v4621 = vadd.s32 %v4616, %v4618
  %vm4622 = vc.u32 %v4616, %v4618
  %v4623 = vadd.s32 %v4619, 1
  %v4624 = vsel %vm4622, %v4623, %v4619
  %v4625 = vadd.s32 %v4620, %v4624
  %v4626 = vadd.s32 %v4625, 536870912
  %v4627 = vshrl.u32 %v4626, 30
  %v4628 = vshll.u32 %v4627, 30
  %v4629 = vsub.s32 %v4625, %v4628
  %vm4630 = vcmp.lt.s32.totalorder %v4629, 0
  %v4631 = vsub.s32 0, %v4629
  %v4632 = vsel %vm4630, %v4631, %v4629
  %v4633 = vclz %v4632
  %v4634 = vsub.s32 %v4633, 2
  %vm4635 = vcmp.gt.s32.totalorder 0, %v4634
  %v4636 = vsel %vm4635, 0, %v4634
  %v4637 = vsub.s32 32, %v4636
  %v4638 = vshll.u32 %v4629, %v4636
  %v4639 = vshrl.u32 %v4621, %v4637
  %v4640 = vor.u32 %v4638, %v4639
  %v4641 = vsub.s32 4294967266, %v4636
  %v4642 = vadd.s32 %v4641, 127
  %v4643 = vshll.u32 %v4642, 23
  %v4644 = vor.u32 4788187, %v4643
  %v4645 = vand.u32 2147483647, %v4644
  %v4647 = vcvt.s32.f32 %v4640
  %v4648 = vmul.f32 %v4647, %v4645
  %v4649 = vxor.u32 %v4648, 2147483648
  %v4650 = vsel %vm4567, %v4649, %v4648
  %v4651 = vsub.s32 4, %v4627
  %v4652 = vsel %vm4567, %v4651, %v4627
  %v4653 = vsel %vm4566, %v4034, %v4650
  %v4654 = vsel %vm4566, 0, %v4652
  %v4655 = vcosq.f32.pop %v4653
  %v4656 = vsinq.f32.pop %v4653
  %vm4657 = vweird.f32 %v4034
  %v4658 = vadd.s32 %v4654, 3
  %v4659 = vand.u32 %v4658, 3
  %vm4660 = vcmp.lt.s32.totalorder %v4659, 2
  %vm4661 = vcmp.eq.s32.totalorder %v4659, 0
  %v4662 = vxor.u32 %v4656, 2147483648
  %v4663 = vsel %vm4661, %v4655, %v4662
  %vm4664 = vcmp.eq.s32.totalorder %v4659, 2
  %v4665 = vxor.u32 %v4655, 2147483648
  %v4666 = vsel %vm4664, %v4665, %v4656
  %v4667 = vsel %vm4660, %v4663, %v4666
  %v4668 = vsel %vm4657, nan, %v4667
  %v4669 = vand.u32 2147483647, %v4035
  %vm4670 = vcmp.le.f32.partialorder %v4669, 0.7853982
  %vm4671 = vcmp.lt.s32.totalorder %v4035, 0
  %v4672 = vand.u32 %v4035, 2139095040
  %v4673 = vshrl.u32 %v4672, 23
  %v4674 = vsub.s32 %v4673, 127
  %v4675 = vand.u32 2147483647, %v4035
  %v4676 = vand.u32 %v4675, 8388607
  %v4677 = vor.u32 %v4676, 8388608
  %v4678 = vsub.s32 0, %v4677
  %v4679 = vadd.s32 %v4674, 1
  %vm4680 = vcmp.gt.s32.totalorder %v4679, 0
  %v4681 = vsel %vm4680, %v4679, 0
  %v4682 = vshrl.u32 %v4681, 5
  %v4683 = vand.u32 %v4681, 31
  %v4684 = vsub.s32 32, %v4683
  %v4685 = vshrl.u32 683565275, %v4684
  %v4686 = vshll.u32 683565275, %v4683
  %v4687 = vshrl.u32 2475754826, %v4684
  %v4688 = vor.u32 %v4686, %v4687
  %v4689 = vshll.u32 2475754826, %v4683
  %v4690 = vshrl.u32 2131351028, %v4684
  %v4691 = vor.u32 %v4689, %v4690
  %v4692 = vshll.u32 2131351028, %v4683
  %v4693 = vshrl.u32 2102212464, %v4684
  %v4694 = vor.u32 %v4692, %v4693
  %v4695 = vshll.u32 2102212464, %v4683
  %v4696 = vshrl.u32 920167782, %v4684
  %v4697 = vor.u32 %v4695, %v4696
  %v4698 = vshll.u32 920167782, %v4683
  %v4699 = vshrl.u32 1326507024, %v4684
  %v4700 = vor.u32 %v4698, %v4699
  %vm4701 = vcmp.lt.s32.totalorder %v4682, 1
  %vm4702 = vcmp.lt.s32.totalorder %v4682, 2
  %vm4703 = vcmp.lt.s32.totalorder %v4682, 3
  %vm4704 = vcmp.lt.s32.totalorder %v4682, 4
  %v4705 = vsel %vm4701, %v4685, %v4688
  %v4706 = vsel %vm4704, %v4694, 2102212464
  %v4707 = vsel %vm4703, %v4691, %v4706
  %v4708 = vsel %vm4702, %v4705, %v4707
  %v4709 = vsel %vm4701, %v4688, %v4691
  %v4710 = vsel %vm4704, %v4697, 920167782
  %v4711 = vsel %vm4703, %v4694, %v4710
  %v4712 = vsel %vm4702, %v4709, %v4711
  %v4713 = vsel %vm4701, %v4691, %v4694
  %v4714 = vsel %vm4704, %v4700, 1326507024
  %v4715 = vsel %vm4703, %v4697, %v4714
  %v4716 = vsel %vm4702, %v4713, %v4715
  %v4717 = vshll.u32 %v4677, 8
  %v4718 = vmul.u32.u64.compose %v4717, %v4716
  %v4719 = vextract.low.u32 %v4718
  %v4720 = vextract.high.u32 %v4718
  %v4721 = vmul.u32.u64.compose %v4717, %v4712
  %v4722 = vextract.low.u32 %v4721
  %v4723 = vextract.high.u32 %v4721
  %v4724 = vmul.u32 %v4717, %v4708
  %v4725 = vadd.s32 %v4720, %v4722
  %vm4726 = vc.u32 %v4720, %v4722
  %v4727 = vadd.s32 %v4723, 1
  %v4728 = vsel %vm4726, %v4727, %v4723
  %v4729 = vadd.s32 %v4724, %v4728
  %v4730 = vadd.s32 %v4729, 536870912
  %v4731 = vshrl.u32 %v4730, 30
  %v4732 = vshll.u32 %v4731, 30
  %v4733 = vsub.s32 %v4729, %v4732
  %vm4734 = vcmp.lt.s32.totalorder %v4733, 0
  %v4735 = vsub.s32 0, %v4733
  %v4736 = vsel %vm4734, %v4735, %v4733
  %v4737 = vclz %v4736
  %v4738 = vsub.s32 %v4737, 2
  %vm4739 = vcmp.gt.s32.totalorder 0, %v4738
  %v4740 = vsel %vm4739, 0, %v4738
  %v4741 = vsub.s32 32, %v4740
  %v4742 = vshll.u32 %v4733, %v4740
  %v4743 = vshrl.u32 %v4725, %v4741
  %v4744 = vor.u32 %v4742, %v4743
  %v4745 = vsub.s32 4294967266, %v4740
  %v4746 = vadd.s32 %v4745, 127
  %v4747 = vshll.u32 %v4746, 23
  %v4748 = vor.u32 4788187, %v4747
  %v4749 = vand.u32 2147483647, %v4748
  %v4751 = vcvt.s32.f32 %v4744
  %v4752 = vmul.f32 %v4751, %v4749
  %v4753 = vxor.u32 %v4752, 2147483648
  %v4754 = vsel %vm4671, %v4753, %v4752
  %v4755 = vsub.s32 4, %v4731
  %v4756 = vsel %vm4671, %v4755, %v4731
  %v4757 = vsel %vm4670, %v4035, %v4754
  %v4758 = vsel %vm4670, 0, %v4756
  %v4759 = vcosq.f32.pop %v4757
  %v4760 = vsinq.f32.pop %v4757
  %vm4761 = vweird.f32 %v4035
  %v4762 = vadd.s32 %v4758, 3
  %v4763 = vand.u32 %v4762, 3
  %vm4764 = vcmp.lt.s32.totalorder %v4763, 2
  %vm4765 = vcmp.eq.s32.totalorder %v4763, 0
  %v4766 = vxor.u32 %v4760, 2147483648
  %v4767 = vsel %vm4765, %v4759, %v4766
  %vm4768 = vcmp.eq.s32.totalorder %v4763, 2
  %v4769 = vxor.u32 %v4759, 2147483648
  %v4770 = vsel %vm4768, %v4769, %v4760
  %v4771 = vsel %vm4764, %v4767, %v4770
  %v4772 = vsel %vm4761, nan, %v4771
  %v4773 = vand.u32 2147483647, %v4036
  %vm4774 = vcmp.le.f32.partialorder %v4773, 0.7853982
  %vm4775 = vcmp.lt.s32.totalorder %v4036, 0
  %v4776 = vand.u32 %v4036, 2139095040
  %v4777 = vshrl.u32 %v4776, 23
  %v4778 = vsub.s32 %v4777, 127
  %v4779 = vand.u32 2147483647, %v4036
  %v4780 = vand.u32 %v4779, 8388607
  %v4781 = vor.u32 %v4780, 8388608
  %v4782 = vsub.s32 0, %v4781
  %v4783 = vadd.s32 %v4778, 1
  %vm4784 = vcmp.gt.s32.totalorder %v4783, 0
  %v4785 = vsel %vm4784, %v4783, 0
  %v4786 = vshrl.u32 %v4785, 5
  %v4787 = vand.u32 %v4785, 31
  %v4788 = vsub.s32 32, %v4787
  %v4789 = vshrl.u32 683565275, %v4788
  %v4790 = vshll.u32 683565275, %v4787
  %v4791 = vshrl.u32 2475754826, %v4788
  %v4792 = vor.u32 %v4790, %v4791
  %v4793 = vshll.u32 2475754826, %v4787
  %v4794 = vshrl.u32 2131351028, %v4788
  %v4795 = vor.u32 %v4793, %v4794
  %v4796 = vshll.u32 2131351028, %v4787
  %v4797 = vshrl.u32 2102212464, %v4788
  %v4798 = vor.u32 %v4796, %v4797
  %v4799 = vshll.u32 2102212464, %v4787
  %v4800 = vshrl.u32 920167782, %v4788
  %v4801 = vor.u32 %v4799, %v4800
  %v4802 = vshll.u32 920167782, %v4787
  %v4803 = vshrl.u32 1326507024, %v4788
  %v4804 = vor.u32 %v4802, %v4803
  %vm4805 = vcmp.lt.s32.totalorder %v4786, 1
  %vm4806 = vcmp.lt.s32.totalorder %v4786, 2
  %vm4807 = vcmp.lt.s32.totalorder %v4786, 3
  %vm4808 = vcmp.lt.s32.totalorder %v4786, 4
  %v4809 = vsel %vm4805, %v4789, %v4792
  %v4810 = vsel %vm4808, %v4798, 2102212464
  %v4811 = vsel %vm4807, %v4795, %v4810
  %v4812 = vsel %vm4806, %v4809, %v4811
  %v4813 = vsel %vm4805, %v4792, %v4795
  %v4814 = vsel %vm4808, %v4801, 920167782
  %v4815 = vsel %vm4807, %v4798, %v4814
  %v4816 = vsel %vm4806, %v4813, %v4815
  %v4817 = vsel %vm4805, %v4795, %v4798
  %v4818 = vsel %vm4808, %v4804, 1326507024
  %v4819 = vsel %vm4807, %v4801, %v4818
  %v4820 = vsel %vm4806, %v4817, %v4819
  %v4821 = vshll.u32 %v4781, 8
  %v4822 = vmul.u32.u64.compose %v4821, %v4820
  %v4823 = vextract.low.u32 %v4822
  %v4824 = vextract.high.u32 %v4822
  %v4825 = vmul.u32.u64.compose %v4821, %v4816
  %v4826 = vextract.low.u32 %v4825
  %v4827 = vextract.high.u32 %v4825
  %v4828 = vmul.u32 %v4821, %v4812
  %v4829 = vadd.s32 %v4824, %v4826
  %vm4830 = vc.u32 %v4824, %v4826
  %v4831 = vadd.s32 %v4827, 1
  %v4832 = vsel %vm4830, %v4831, %v4827
  %v4833 = vadd.s32 %v4828, %v4832
  %v4834 = vadd.s32 %v4833, 536870912
  %v4835 = vshrl.u32 %v4834, 30
  %v4836 = vshll.u32 %v4835, 30
  %v4837 = vsub.s32 %v4833, %v4836
  %vm4838 = vcmp.lt.s32.totalorder %v4837, 0
  %v4839 = vsub.s32 0, %v4837
  %v4840 = vsel %vm4838, %v4839, %v4837
  %v4841 = vclz %v4840
  %v4842 = vsub.s32 %v4841, 2
  %vm4843 = vcmp.gt.s32.totalorder 0, %v4842
  %v4844 = vsel %vm4843, 0, %v4842
  %v4845 = vsub.s32 32, %v4844
  %v4846 = vshll.u32 %v4837, %v4844
  %v4847 = vshrl.u32 %v4829, %v4845
  %v4848 = vor.u32 %v4846, %v4847
  %v4849 = vsub.s32 4294967266, %v4844
  %v4850 = vadd.s32 %v4849, 127
  %v4851 = vshll.u32 %v4850, 23
  %v4852 = vor.u32 4788187, %v4851
  %v4853 = vand.u32 2147483647, %v4852
  %v4855 = vcvt.s32.f32 %v4848
  %v4856 = vmul.f32 %v4855, %v4853
  %v4857 = vxor.u32 %v4856, 2147483648
  %v4858 = vsel %vm4775, %v4857, %v4856
  %v4859 = vsub.s32 4, %v4835
  %v4860 = vsel %vm4775, %v4859, %v4835
  %v4861 = vsel %vm4774, %v4036, %v4858
  %v4862 = vsel %vm4774, 0, %v4860
  %v4863 = vcosq.f32.pop %v4861
  %v4864 = vsinq.f32.pop %v4861
  %vm4865 = vweird.f32 %v4036
  %v4866 = vadd.s32 %v4862, 3
  %v4867 = vand.u32 %v4866, 3
  %vm4868 = vcmp.lt.s32.totalorder %v4867, 2
  %vm4869 = vcmp.eq.s32.totalorder %v4867, 0
  %v4870 = vxor.u32 %v4864, 2147483648
  %v4871 = vsel %vm4869, %v4863, %v4870
  %vm4872 = vcmp.eq.s32.totalorder %v4867, 2
  %v4873 = vxor.u32 %v4863, 2147483648
  %v4874 = vsel %vm4872, %v4873, %v4864
  %v4875 = vsel %vm4868, %v4871, %v4874
  %v4876 = vsel %vm4865, nan, %v4875
  %v4877 = vand.u32 2147483647, %v4037
  %vm4878 = vcmp.le.f32.partialorder %v4877, 0.7853982
  %vm4879 = vcmp.lt.s32.totalorder %v4037, 0
  %v4880 = vand.u32 %v4037, 2139095040
  %v4881 = vshrl.u32 %v4880, 23
  %v4882 = vsub.s32 %v4881, 127
  %v4883 = vand.u32 2147483647, %v4037
  %v4884 = vand.u32 %v4883, 8388607
  %v4885 = vor.u32 %v4884, 8388608
  %v4886 = vsub.s32 0, %v4885
  %v4887 = vadd.s32 %v4882, 1
  %vm4888 = vcmp.gt.s32.totalorder %v4887, 0
  %v4889 = vsel %vm4888, %v4887, 0
  %v4890 = vshrl.u32 %v4889, 5
  %v4891 = vand.u32 %v4889, 31
  %v4892 = vsub.s32 32, %v4891
  %v4893 = vshrl.u32 683565275, %v4892
  %v4894 = vshll.u32 683565275, %v4891
  %v4895 = vshrl.u32 2475754826, %v4892
  %v4896 = vor.u32 %v4894, %v4895
  %v4897 = vshll.u32 2475754826, %v4891
  %v4898 = vshrl.u32 2131351028, %v4892
  %v4899 = vor.u32 %v4897, %v4898
  %v4900 = vshll.u32 2131351028, %v4891
  %v4901 = vshrl.u32 2102212464, %v4892
  %v4902 = vor.u32 %v4900, %v4901
  %v4903 = vshll.u32 2102212464, %v4891
  %v4904 = vshrl.u32 920167782, %v4892
  %v4905 = vor.u32 %v4903, %v4904
  %v4906 = vshll.u32 920167782, %v4891
  %v4907 = vshrl.u32 1326507024, %v4892
  %v4908 = vor.u32 %v4906, %v4907
  %vm4909 = vcmp.lt.s32.totalorder %v4890, 1
  %vm4910 = vcmp.lt.s32.totalorder %v4890, 2
  %vm4911 = vcmp.lt.s32.totalorder %v4890, 3
  %vm4912 = vcmp.lt.s32.totalorder %v4890, 4
  %v4913 = vsel %vm4909, %v4893, %v4896
  %v4914 = vsel %vm4912, %v4902, 2102212464
  %v4915 = vsel %vm4911, %v4899, %v4914
  %v4916 = vsel %vm4910, %v4913, %v4915
  %v4917 = vsel %vm4909, %v4896, %v4899
  %v4918 = vsel %vm4912, %v4905, 920167782
  %v4919 = vsel %vm4911, %v4902, %v4918
  %v4920 = vsel %vm4910, %v4917, %v4919
  %v4921 = vsel %vm4909, %v4899, %v4902
  %v4922 = vsel %vm4912, %v4908, 1326507024
  %v4923 = vsel %vm4911, %v4905, %v4922
  %v4924 = vsel %vm4910, %v4921, %v4923
  %v4925 = vshll.u32 %v4885, 8
  %v4926 = vmul.u32.u64.compose %v4925, %v4924
  %v4927 = vextract.low.u32 %v4926
  %v4928 = vextract.high.u32 %v4926
  %v4929 = vmul.u32.u64.compose %v4925, %v4920
  %v4930 = vextract.low.u32 %v4929
  %v4931 = vextract.high.u32 %v4929
  %v4932 = vmul.u32 %v4925, %v4916
  %v4933 = vadd.s32 %v4928, %v4930
  %vm4934 = vc.u32 %v4928, %v4930
  %v4935 = vadd.s32 %v4931, 1
  %v4936 = vsel %vm4934, %v4935, %v4931
  %v4937 = vadd.s32 %v4932, %v4936
  %v4938 = vadd.s32 %v4937, 536870912
  %v4939 = vshrl.u32 %v4938, 30
  %v4940 = vshll.u32 %v4939, 30
  %v4941 = vsub.s32 %v4937, %v4940
  %vm4942 = vcmp.lt.s32.totalorder %v4941, 0
  %v4943 = vsub.s32 0, %v4941
  %v4944 = vsel %vm4942, %v4943, %v4941
  %v4945 = vclz %v4944
  %v4946 = vsub.s32 %v4945, 2
  %vm4947 = vcmp.gt.s32.totalorder 0, %v4946
  %v4948 = vsel %vm4947, 0, %v4946
  %v4949 = vsub.s32 32, %v4948
  %v4950 = vshll.u32 %v4941, %v4948
  %v4951 = vshrl.u32 %v4933, %v4949
  %v4952 = vor.u32 %v4950, %v4951
  %v4953 = vsub.s32 4294967266, %v4948
  %v4954 = vadd.s32 %v4953, 127
  %v4955 = vshll.u32 %v4954, 23
  %v4956 = vor.u32 4788187, %v4955
  %v4957 = vand.u32 2147483647, %v4956
  %v4959 = vcvt.s32.f32 %v4952
  %v4960 = vmul.f32 %v4959, %v4957
  %v4961 = vxor.u32 %v4960, 2147483648
  %v4962 = vsel %vm4879, %v4961, %v4960
  %v4963 = vsub.s32 4, %v4939
  %v4964 = vsel %vm4879, %v4963, %v4939
  %v4965 = vsel %vm4878, %v4037, %v4962
  %v4966 = vsel %vm4878, 0, %v4964
  %v4967 = vcosq.f32.pop %v4965
  %v4968 = vsinq.f32.pop %v4965
  %vm4969 = vweird.f32 %v4037
  %v4970 = vadd.s32 %v4966, 3
  %v4971 = vand.u32 %v4970, 3
  %vm4972 = vcmp.lt.s32.totalorder %v4971, 2
  %vm4973 = vcmp.eq.s32.totalorder %v4971, 0
  %v4974 = vxor.u32 %v4968, 2147483648
  %v4975 = vsel %vm4973, %v4967, %v4974
  %vm4976 = vcmp.eq.s32.totalorder %v4971, 2
  %v4977 = vxor.u32 %v4967, 2147483648
  %v4978 = vsel %vm4976, %v4977, %v4968
  %v4979 = vsel %vm4972, %v4975, %v4978
  %v4980 = vsel %vm4969, nan, %v4979
  %v4981 = vand.u32 2147483647, %v4038
  %vm4982 = vcmp.le.f32.partialorder %v4981, 0.7853982
  %vm4983 = vcmp.lt.s32.totalorder %v4038, 0
  %v4984 = vand.u32 %v4038, 2139095040
  %v4985 = vshrl.u32 %v4984, 23
  %v4986 = vsub.s32 %v4985, 127
  %v4987 = vand.u32 2147483647, %v4038
  %v4988 = vand.u32 %v4987, 8388607
  %v4989 = vor.u32 %v4988, 8388608
  %v4990 = vsub.s32 0, %v4989
  %v4991 = vadd.s32 %v4986, 1
  %vm4992 = vcmp.gt.s32.totalorder %v4991, 0
  %v4993 = vsel %vm4992, %v4991, 0
  %v4994 = vshrl.u32 %v4993, 5
  %v4995 = vand.u32 %v4993, 31
  %v4996 = vsub.s32 32, %v4995
  %v4997 = vshrl.u32 683565275, %v4996
  %v4998 = vshll.u32 683565275, %v4995
  %v4999 = vshrl.u32 2475754826, %v4996
  %v5000 = vor.u32 %v4998, %v4999
  %v5001 = vshll.u32 2475754826, %v4995
  %v5002 = vshrl.u32 2131351028, %v4996
  %v5003 = vor.u32 %v5001, %v5002
  %v5004 = vshll.u32 2131351028, %v4995
  %v5005 = vshrl.u32 2102212464, %v4996
  %v5006 = vor.u32 %v5004, %v5005
  %v5007 = vshll.u32 2102212464, %v4995
  %v5008 = vshrl.u32 920167782, %v4996
  %v5009 = vor.u32 %v5007, %v5008
  %v5010 = vshll.u32 920167782, %v4995
  %v5011 = vshrl.u32 1326507024, %v4996
  %v5012 = vor.u32 %v5010, %v5011
  %vm5013 = vcmp.lt.s32.totalorder %v4994, 1
  %vm5014 = vcmp.lt.s32.totalorder %v4994, 2
  %vm5015 = vcmp.lt.s32.totalorder %v4994, 3
  %vm5016 = vcmp.lt.s32.totalorder %v4994, 4
  %v5017 = vsel %vm5013, %v4997, %v5000
  %v5018 = vsel %vm5016, %v5006, 2102212464
  %v5019 = vsel %vm5015, %v5003, %v5018
  %v5020 = vsel %vm5014, %v5017, %v5019
  %v5021 = vsel %vm5013, %v5000, %v5003
  %v5022 = vsel %vm5016, %v5009, 920167782
  %v5023 = vsel %vm5015, %v5006, %v5022
  %v5024 = vsel %vm5014, %v5021, %v5023
  %v5025 = vsel %vm5013, %v5003, %v5006
  %v5026 = vsel %vm5016, %v5012, 1326507024
  %v5027 = vsel %vm5015, %v5009, %v5026
  %v5028 = vsel %vm5014, %v5025, %v5027
  %v5029 = vshll.u32 %v4989, 8
  %v5030 = vmul.u32.u64.compose %v5029, %v5028
  %v5031 = vextract.low.u32 %v5030
  %v5032 = vextract.high.u32 %v5030
  %v5033 = vmul.u32.u64.compose %v5029, %v5024
  %v5034 = vextract.low.u32 %v5033
  %v5035 = vextract.high.u32 %v5033
  %v5036 = vmul.u32 %v5029, %v5020
  %v5037 = vadd.s32 %v5032, %v5034
  %vm5038 = vc.u32 %v5032, %v5034
  %v5039 = vadd.s32 %v5035, 1
  %v5040 = vsel %vm5038, %v5039, %v5035
  %v5041 = vadd.s32 %v5036, %v5040
  %v5042 = vadd.s32 %v5041, 536870912
  %v5043 = vshrl.u32 %v5042, 30
  %v5044 = vshll.u32 %v5043, 30
  %v5045 = vsub.s32 %v5041, %v5044
  %vm5046 = vcmp.lt.s32.totalorder %v5045, 0
  %v5047 = vsub.s32 0, %v5045
  %v5048 = vsel %vm5046, %v5047, %v5045
  %v5049 = vclz %v5048
  %v5050 = vsub.s32 %v5049, 2
  %vm5051 = vcmp.gt.s32.totalorder 0, %v5050
  %v5052 = vsel %vm5051, 0, %v5050
  %v5053 = vsub.s32 32, %v5052
  %v5054 = vshll.u32 %v5045, %v5052
  %v5055 = vshrl.u32 %v5037, %v5053
  %v5056 = vor.u32 %v5054, %v5055
  %v5057 = vsub.s32 4294967266, %v5052
  %v5058 = vadd.s32 %v5057, 127
  %v5059 = vshll.u32 %v5058, 23
  %v5060 = vor.u32 4788187, %v5059
  %v5061 = vand.u32 2147483647, %v5060
  %v5063 = vcvt.s32.f32 %v5056
  %v5064 = vmul.f32 %v5063, %v5061
  %v5065 = vxor.u32 %v5064, 2147483648
  %v5066 = vsel %vm4983, %v5065, %v5064
  %v5067 = vsub.s32 4, %v5043
  %v5068 = vsel %vm4983, %v5067, %v5043
  %v5069 = vsel %vm4982, %v4038, %v5066
  %v5070 = vsel %vm4982, 0, %v5068
  %v5071 = vcosq.f32.pop %v5069
  %v5072 = vsinq.f32.pop %v5069
  %vm5073 = vweird.f32 %v4038
  %v5074 = vadd.s32 %v5070, 3
  %v5075 = vand.u32 %v5074, 3
  %vm5076 = vcmp.lt.s32.totalorder %v5075, 2
  %vm5077 = vcmp.eq.s32.totalorder %v5075, 0
  %v5078 = vxor.u32 %v5072, 2147483648
  %v5079 = vsel %vm5077, %v5071, %v5078
  %vm5080 = vcmp.eq.s32.totalorder %v5075, 2
  %v5081 = vxor.u32 %v5071, 2147483648
  %v5082 = vsel %vm5080, %v5081, %v5072
  %v5083 = vsel %vm5076, %v5079, %v5082
  %v5084 = vsel %vm5073, nan, %v5083
  %v5085 = vand.u32 2147483647, %v4039
  %vm5086 = vcmp.le.f32.partialorder %v5085, 0.7853982
  %vm5087 = vcmp.lt.s32.totalorder %v4039, 0
  %v5088 = vand.u32 %v4039, 2139095040
  %v5089 = vshrl.u32 %v5088, 23
  %v5090 = vsub.s32 %v5089, 127
  %v5091 = vand.u32 2147483647, %v4039
  %v5092 = vand.u32 %v5091, 8388607
  %v5093 = vor.u32 %v5092, 8388608
  %v5094 = vsub.s32 0, %v5093
  %v5095 = vadd.s32 %v5090, 1
  %vm5096 = vcmp.gt.s32.totalorder %v5095, 0
  %v5097 = vsel %vm5096, %v5095, 0
  %v5098 = vshrl.u32 %v5097, 5
  %v5099 = vand.u32 %v5097, 31
  %v5100 = vsub.s32 32, %v5099
  %v5101 = vshrl.u32 683565275, %v5100
  %v5102 = vshll.u32 683565275, %v5099
  %v5103 = vshrl.u32 2475754826, %v5100
  %v5104 = vor.u32 %v5102, %v5103
  %v5105 = vshll.u32 2475754826, %v5099
  %v5106 = vshrl.u32 2131351028, %v5100
  %v5107 = vor.u32 %v5105, %v5106
  %v5108 = vshll.u32 2131351028, %v5099
  %v5109 = vshrl.u32 2102212464, %v5100
  %v5110 = vor.u32 %v5108, %v5109
  %v5111 = vshll.u32 2102212464, %v5099
  %v5112 = vshrl.u32 920167782, %v5100
  %v5113 = vor.u32 %v5111, %v5112
  %v5114 = vshll.u32 920167782, %v5099
  %v5115 = vshrl.u32 1326507024, %v5100
  %v5116 = vor.u32 %v5114, %v5115
  %vm5117 = vcmp.lt.s32.totalorder %v5098, 1
  %vm5118 = vcmp.lt.s32.totalorder %v5098, 2
  %vm5119 = vcmp.lt.s32.totalorder %v5098, 3
  %vm5120 = vcmp.lt.s32.totalorder %v5098, 4
  %v5121 = vsel %vm5117, %v5101, %v5104
  %v5122 = vsel %vm5120, %v5110, 2102212464
  %v5123 = vsel %vm5119, %v5107, %v5122
  %v5124 = vsel %vm5118, %v5121, %v5123
  %v5125 = vsel %vm5117, %v5104, %v5107
  %v5126 = vsel %vm5120, %v5113, 920167782
  %v5127 = vsel %vm5119, %v5110, %v5126
  %v5128 = vsel %vm5118, %v5125, %v5127
  %v5129 = vsel %vm5117, %v5107, %v5110
  %v5130 = vsel %vm5120, %v5116, 1326507024
  %v5131 = vsel %vm5119, %v5113, %v5130
  %v5132 = vsel %vm5118, %v5129, %v5131
  %v5133 = vshll.u32 %v5093, 8
  %v5134 = vmul.u32.u64.compose %v5133, %v5132
  %v5135 = vextract.low.u32 %v5134
  %v5136 = vextract.high.u32 %v5134
  %v5137 = vmul.u32.u64.compose %v5133, %v5128
  %v5138 = vextract.low.u32 %v5137
  %v5139 = vextract.high.u32 %v5137
  %v5140 = vmul.u32 %v5133, %v5124
  %v5141 = vadd.s32 %v5136, %v5138
  %vm5142 = vc.u32 %v5136, %v5138
  %v5143 = vadd.s32 %v5139, 1
  %v5144 = vsel %vm5142, %v5143, %v5139
  %v5145 = vadd.s32 %v5140, %v5144
  %v5146 = vadd.s32 %v5145, 536870912
  %v5147 = vshrl.u32 %v5146, 30
  %v5148 = vshll.u32 %v5147, 30
  %v5149 = vsub.s32 %v5145, %v5148
  %vm5150 = vcmp.lt.s32.totalorder %v5149, 0
  %v5151 = vsub.s32 0, %v5149
  %v5152 = vsel %vm5150, %v5151, %v5149
  %v5153 = vclz %v5152
  %v5154 = vsub.s32 %v5153, 2
  %vm5155 = vcmp.gt.s32.totalorder 0, %v5154
  %v5156 = vsel %vm5155, 0, %v5154
  %v5157 = vsub.s32 32, %v5156
  %v5158 = vshll.u32 %v5149, %v5156
  %v5159 = vshrl.u32 %v5141, %v5157
  %v5160 = vor.u32 %v5158, %v5159
  %v5161 = vsub.s32 4294967266, %v5156
  %v5162 = vadd.s32 %v5161, 127
  %v5163 = vshll.u32 %v5162, 23
  %v5164 = vor.u32 4788187, %v5163
  %v5165 = vand.u32 2147483647, %v5164
  %v5167 = vcvt.s32.f32 %v5160
  %v5168 = vmul.f32 %v5167, %v5165
  %v5169 = vxor.u32 %v5168, 2147483648
  %v5170 = vsel %vm5087, %v5169, %v5168
  %v5171 = vsub.s32 4, %v5147
  %v5172 = vsel %vm5087, %v5171, %v5147
  %v5173 = vsel %vm5086, %v4039, %v5170
  %v5174 = vsel %vm5086, 0, %v5172
  %v5175 = vcosq.f32.pop %v5173
  %v5176 = vsinq.f32.pop %v5173
  %vm5177 = vweird.f32 %v4039
  %v5178 = vadd.s32 %v5174, 3
  %v5179 = vand.u32 %v5178, 3
  %vm5180 = vcmp.lt.s32.totalorder %v5179, 2
  %vm5181 = vcmp.eq.s32.totalorder %v5179, 0
  %v5182 = vxor.u32 %v5176, 2147483648
  %v5183 = vsel %vm5181, %v5175, %v5182
  %vm5184 = vcmp.eq.s32.totalorder %v5179, 2
  %v5185 = vxor.u32 %v5175, 2147483648
  %v5186 = vsel %vm5184, %v5185, %v5176
  %v5187 = vsel %vm5180, %v5183, %v5186
  %v5188 = vsel %vm5177, nan, %v5187
  %v5189 = vand.u32 2147483647, %v4040
  %vm5190 = vcmp.le.f32.partialorder %v5189, 0.7853982
  %vm5191 = vcmp.lt.s32.totalorder %v4040, 0
  %v5192 = vand.u32 %v4040, 2139095040
  %v5193 = vshrl.u32 %v5192, 23
  %v5194 = vsub.s32 %v5193, 127
  %v5195 = vand.u32 2147483647, %v4040
  %v5196 = vand.u32 %v5195, 8388607
  %v5197 = vor.u32 %v5196, 8388608
  %v5198 = vsub.s32 0, %v5197
  %v5199 = vadd.s32 %v5194, 1
  %vm5200 = vcmp.gt.s32.totalorder %v5199, 0
  %v5201 = vsel %vm5200, %v5199, 0
  %v5202 = vshrl.u32 %v5201, 5
  %v5203 = vand.u32 %v5201, 31
  %v5204 = vsub.s32 32, %v5203
  %v5205 = vshrl.u32 683565275, %v5204
  %v5206 = vshll.u32 683565275, %v5203
  %v5207 = vshrl.u32 2475754826, %v5204
  %v5208 = vor.u32 %v5206, %v5207
  %v5209 = vshll.u32 2475754826, %v5203
  %v5210 = vshrl.u32 2131351028, %v5204
  %v5211 = vor.u32 %v5209, %v5210
  %v5212 = vshll.u32 2131351028, %v5203
  %v5213 = vshrl.u32 2102212464, %v5204
  %v5214 = vor.u32 %v5212, %v5213
  %v5215 = vshll.u32 2102212464, %v5203
  %v5216 = vshrl.u32 920167782, %v5204
  %v5217 = vor.u32 %v5215, %v5216
  %v5218 = vshll.u32 920167782, %v5203
  %v5219 = vshrl.u32 1326507024, %v5204
  %v5220 = vor.u32 %v5218, %v5219
  %vm5221 = vcmp.lt.s32.totalorder %v5202, 1
  %vm5222 = vcmp.lt.s32.totalorder %v5202, 2
  %vm5223 = vcmp.lt.s32.totalorder %v5202, 3
  %vm5224 = vcmp.lt.s32.totalorder %v5202, 4
  %v5225 = vsel %vm5221, %v5205, %v5208
  %v5226 = vsel %vm5224, %v5214, 2102212464
  %v5227 = vsel %vm5223, %v5211, %v5226
  %v5228 = vsel %vm5222, %v5225, %v5227
  %v5229 = vsel %vm5221, %v5208, %v5211
  %v5230 = vsel %vm5224, %v5217, 920167782
  %v5231 = vsel %vm5223, %v5214, %v5230
  %v5232 = vsel %vm5222, %v5229, %v5231
  %v5233 = vsel %vm5221, %v5211, %v5214
  %v5234 = vsel %vm5224, %v5220, 1326507024
  %v5235 = vsel %vm5223, %v5217, %v5234
  %v5236 = vsel %vm5222, %v5233, %v5235
  %v5237 = vshll.u32 %v5197, 8
  %v5238 = vmul.u32.u64.compose %v5237, %v5236
  %v5239 = vextract.low.u32 %v5238
  %v5240 = vextract.high.u32 %v5238
  %v5241 = vmul.u32.u64.compose %v5237, %v5232
  %v5242 = vextract.low.u32 %v5241
  %v5243 = vextract.high.u32 %v5241
  %v5244 = vmul.u32 %v5237, %v5228
  %v5245 = vadd.s32 %v5240, %v5242
  %vm5246 = vc.u32 %v5240, %v5242
  %v5247 = vadd.s32 %v5243, 1
  %v5248 = vsel %vm5246, %v5247, %v5243
  %v5249 = vadd.s32 %v5244, %v5248
  %v5250 = vadd.s32 %v5249, 536870912
  %v5251 = vshrl.u32 %v5250, 30
  %v5252 = vshll.u32 %v5251, 30
  %v5253 = vsub.s32 %v5249, %v5252
  %vm5254 = vcmp.lt.s32.totalorder %v5253, 0
  %v5255 = vsub.s32 0, %v5253
  %v5256 = vsel %vm5254, %v5255, %v5253
  %v5257 = vclz %v5256
  %v5258 = vsub.s32 %v5257, 2
  %vm5259 = vcmp.gt.s32.totalorder 0, %v5258
  %v5260 = vsel %vm5259, 0, %v5258
  %v5261 = vsub.s32 32, %v5260
  %v5262 = vshll.u32 %v5253, %v5260
  %v5263 = vshrl.u32 %v5245, %v5261
  %v5264 = vor.u32 %v5262, %v5263
  %v5265 = vsub.s32 4294967266, %v5260
  %v5266 = vadd.s32 %v5265, 127
  %v5267 = vshll.u32 %v5266, 23
  %v5268 = vor.u32 4788187, %v5267
  %v5269 = vand.u32 2147483647, %v5268
  %v5271 = vcvt.s32.f32 %v5264
  %v5272 = vmul.f32 %v5271, %v5269
  %v5273 = vxor.u32 %v5272, 2147483648
  %v5274 = vsel %vm5191, %v5273, %v5272
  %v5275 = vsub.s32 4, %v5251
  %v5276 = vsel %vm5191, %v5275, %v5251
  %v5277 = vsel %vm5190, %v4040, %v5274
  %v5278 = vsel %vm5190, 0, %v5276
  %v5279 = vcosq.f32.pop %v5277
  %v5280 = vsinq.f32.pop %v5277
  %vm5281 = vweird.f32 %v4040
  %v5282 = vadd.s32 %v5278, 3
  %v5283 = vand.u32 %v5282, 3
  %vm5284 = vcmp.lt.s32.totalorder %v5283, 2
  %vm5285 = vcmp.eq.s32.totalorder %v5283, 0
  %v5286 = vxor.u32 %v5280, 2147483648
  %v5287 = vsel %vm5285, %v5279, %v5286
  %vm5288 = vcmp.eq.s32.totalorder %v5283, 2
  %v5289 = vxor.u32 %v5279, 2147483648
  %v5290 = vsel %vm5288, %v5289, %v5280
  %v5291 = vsel %vm5284, %v5287, %v5290
  %v5292 = vsel %vm5281, nan, %v5291
  %v5293 = vand.u32 2147483647, %v4041
  %vm5294 = vcmp.le.f32.partialorder %v5293, 0.7853982
  %vm5295 = vcmp.lt.s32.totalorder %v4041, 0
  %v5296 = vand.u32 %v4041, 2139095040
  %v5297 = vshrl.u32 %v5296, 23
  %v5298 = vsub.s32 %v5297, 127
  %v5299 = vand.u32 2147483647, %v4041
  %v5300 = vand.u32 %v5299, 8388607
  %v5301 = vor.u32 %v5300, 8388608
  %v5302 = vsub.s32 0, %v5301
  %v5303 = vadd.s32 %v5298, 1
  %vm5304 = vcmp.gt.s32.totalorder %v5303, 0
  %v5305 = vsel %vm5304, %v5303, 0
  %v5306 = vshrl.u32 %v5305, 5
  %v5307 = vand.u32 %v5305, 31
  %v5308 = vsub.s32 32, %v5307
  %v5309 = vshrl.u32 683565275, %v5308
  %v5310 = vshll.u32 683565275, %v5307
  %v5311 = vshrl.u32 2475754826, %v5308
  %v5312 = vor.u32 %v5310, %v5311
  %v5313 = vshll.u32 2475754826, %v5307
  %v5314 = vshrl.u32 2131351028, %v5308
  %v5315 = vor.u32 %v5313, %v5314
  %v5316 = vshll.u32 2131351028, %v5307
  %v5317 = vshrl.u32 2102212464, %v5308
  %v5318 = vor.u32 %v5316, %v5317
  %v5319 = vshll.u32 2102212464, %v5307
  %v5320 = vshrl.u32 920167782, %v5308
  %v5321 = vor.u32 %v5319, %v5320
  %v5322 = vshll.u32 920167782, %v5307
  %v5323 = vshrl.u32 1326507024, %v5308
  %v5324 = vor.u32 %v5322, %v5323
  %vm5325 = vcmp.lt.s32.totalorder %v5306, 1
  %vm5326 = vcmp.lt.s32.totalorder %v5306, 2
  %vm5327 = vcmp.lt.s32.totalorder %v5306, 3
  %vm5328 = vcmp.lt.s32.totalorder %v5306, 4
  %v5329 = vsel %vm5325, %v5309, %v5312
  %v5330 = vsel %vm5328, %v5318, 2102212464
  %v5331 = vsel %vm5327, %v5315, %v5330
  %v5332 = vsel %vm5326, %v5329, %v5331
  %v5333 = vsel %vm5325, %v5312, %v5315
  %v5334 = vsel %vm5328, %v5321, 920167782
  %v5335 = vsel %vm5327, %v5318, %v5334
  %v5336 = vsel %vm5326, %v5333, %v5335
  %v5337 = vsel %vm5325, %v5315, %v5318
  %v5338 = vsel %vm5328, %v5324, 1326507024
  %v5339 = vsel %vm5327, %v5321, %v5338
  %v5340 = vsel %vm5326, %v5337, %v5339
  %v5341 = vshll.u32 %v5301, 8
  %v5342 = vmul.u32.u64.compose %v5341, %v5340
  %v5343 = vextract.low.u32 %v5342
  %v5344 = vextract.high.u32 %v5342
  %v5345 = vmul.u32.u64.compose %v5341, %v5336
  %v5346 = vextract.low.u32 %v5345
  %v5347 = vextract.high.u32 %v5345
  %v5348 = vmul.u32 %v5341, %v5332
  %v5349 = vadd.s32 %v5344, %v5346
  %vm5350 = vc.u32 %v5344, %v5346
  %v5351 = vadd.s32 %v5347, 1
  %v5352 = vsel %vm5350, %v5351, %v5347
  %v5353 = vadd.s32 %v5348, %v5352
  %v5354 = vadd.s32 %v5353, 536870912
  %v5355 = vshrl.u32 %v5354, 30
  %v5356 = vshll.u32 %v5355, 30
  %v5357 = vsub.s32 %v5353, %v5356
  %vm5358 = vcmp.lt.s32.totalorder %v5357, 0
  %v5359 = vsub.s32 0, %v5357
  %v5360 = vsel %vm5358, %v5359, %v5357
  %v5361 = vclz %v5360
  %v5362 = vsub.s32 %v5361, 2
  %vm5363 = vcmp.gt.s32.totalorder 0, %v5362
  %v5364 = vsel %vm5363, 0, %v5362
  %v5365 = vsub.s32 32, %v5364
  %v5366 = vshll.u32 %v5357, %v5364
  %v5367 = vshrl.u32 %v5349, %v5365
  %v5368 = vor.u32 %v5366, %v5367
  %v5369 = vsub.s32 4294967266, %v5364
  %v5370 = vadd.s32 %v5369, 127
  %v5371 = vshll.u32 %v5370, 23
  %v5372 = vor.u32 4788187, %v5371
  %v5373 = vand.u32 2147483647, %v5372
  %v5375 = vcvt.s32.f32 %v5368
  %v5376 = vmul.f32 %v5375, %v5373
  %v5377 = vxor.u32 %v5376, 2147483648
  %v5378 = vsel %vm5295, %v5377, %v5376
  %v5379 = vsub.s32 4, %v5355
  %v5380 = vsel %vm5295, %v5379, %v5355
  %v5381 = vsel %vm5294, %v4041, %v5378
  %v5382 = vsel %vm5294, 0, %v5380
  %v5383 = vcosq.f32.pop %v5381
  %v5384 = vsinq.f32.pop %v5381
  %vm5385 = vweird.f32 %v4041
  %v5386 = vadd.s32 %v5382, 3
  %v5387 = vand.u32 %v5386, 3
  %vm5388 = vcmp.lt.s32.totalorder %v5387, 2
  %vm5389 = vcmp.eq.s32.totalorder %v5387, 0
  %v5390 = vxor.u32 %v5384, 2147483648
  %v5391 = vsel %vm5389, %v5383, %v5390
  %vm5392 = vcmp.eq.s32.totalorder %v5387, 2
  %v5393 = vxor.u32 %v5383, 2147483648
  %v5394 = vsel %vm5392, %v5393, %v5384
  %v5395 = vsel %vm5388, %v5391, %v5394
  %v5396 = vsel %vm5385, nan, %v5395
  %v5397 = vand.u32 2147483647, %v4042
  %vm5398 = vcmp.le.f32.partialorder %v5397, 0.7853982
  %vm5399 = vcmp.lt.s32.totalorder %v4042, 0
  %v5400 = vand.u32 %v4042, 2139095040
  %v5401 = vshrl.u32 %v5400, 23
  %v5402 = vsub.s32 %v5401, 127
  %v5403 = vand.u32 2147483647, %v4042
  %v5404 = vand.u32 %v5403, 8388607
  %v5405 = vor.u32 %v5404, 8388608
  %v5406 = vsub.s32 0, %v5405
  %v5407 = vadd.s32 %v5402, 1
  %vm5408 = vcmp.gt.s32.totalorder %v5407, 0
  %v5409 = vsel %vm5408, %v5407, 0
  %v5410 = vshrl.u32 %v5409, 5
  %v5411 = vand.u32 %v5409, 31
  %v5412 = vsub.s32 32, %v5411
  %v5413 = vshrl.u32 683565275, %v5412
  %v5414 = vshll.u32 683565275, %v5411
  %v5415 = vshrl.u32 2475754826, %v5412
  %v5416 = vor.u32 %v5414, %v5415
  %v5417 = vshll.u32 2475754826, %v5411
  %v5418 = vshrl.u32 2131351028, %v5412
  %v5419 = vor.u32 %v5417, %v5418
  %v5420 = vshll.u32 2131351028, %v5411
  %v5421 = vshrl.u32 2102212464, %v5412
  %v5422 = vor.u32 %v5420, %v5421
  %v5423 = vshll.u32 2102212464, %v5411
  %v5424 = vshrl.u32 920167782, %v5412
  %v5425 = vor.u32 %v5423, %v5424
  %v5426 = vshll.u32 920167782, %v5411
  %v5427 = vshrl.u32 1326507024, %v5412
  %v5428 = vor.u32 %v5426, %v5427
  %vm5429 = vcmp.lt.s32.totalorder %v5410, 1
  %vm5430 = vcmp.lt.s32.totalorder %v5410, 2
  %vm5431 = vcmp.lt.s32.totalorder %v5410, 3
  %vm5432 = vcmp.lt.s32.totalorder %v5410, 4
  %v5433 = vsel %vm5429, %v5413, %v5416
  %v5434 = vsel %vm5432, %v5422, 2102212464
  %v5435 = vsel %vm5431, %v5419, %v5434
  %v5436 = vsel %vm5430, %v5433, %v5435
  %v5437 = vsel %vm5429, %v5416, %v5419
  %v5438 = vsel %vm5432, %v5425, 920167782
  %v5439 = vsel %vm5431, %v5422, %v5438
  %v5440 = vsel %vm5430, %v5437, %v5439
  %v5441 = vsel %vm5429, %v5419, %v5422
  %v5442 = vsel %vm5432, %v5428, 1326507024
  %v5443 = vsel %vm5431, %v5425, %v5442
  %v5444 = vsel %vm5430, %v5441, %v5443
  %v5445 = vshll.u32 %v5405, 8
  %v5446 = vmul.u32.u64.compose %v5445, %v5444
  %v5447 = vextract.low.u32 %v5446
  %v5448 = vextract.high.u32 %v5446
  %v5449 = vmul.u32.u64.compose %v5445, %v5440
  %v5450 = vextract.low.u32 %v5449
  %v5451 = vextract.high.u32 %v5449
  %v5452 = vmul.u32 %v5445, %v5436
  %v5453 = vadd.s32 %v5448, %v5450
  %vm5454 = vc.u32 %v5448, %v5450
  %v5455 = vadd.s32 %v5451, 1
  %v5456 = vsel %vm5454, %v5455, %v5451
  %v5457 = vadd.s32 %v5452, %v5456
  %v5458 = vadd.s32 %v5457, 536870912
  %v5459 = vshrl.u32 %v5458, 30
  %v5460 = vshll.u32 %v5459, 30
  %v5461 = vsub.s32 %v5457, %v5460
  %vm5462 = vcmp.lt.s32.totalorder %v5461, 0
  %v5463 = vsub.s32 0, %v5461
  %v5464 = vsel %vm5462, %v5463, %v5461
  %v5465 = vclz %v5464
  %v5466 = vsub.s32 %v5465, 2
  %vm5467 = vcmp.gt.s32.totalorder 0, %v5466
  %v5468 = vsel %vm5467, 0, %v5466
  %v5469 = vsub.s32 32, %v5468
  %v5470 = vshll.u32 %v5461, %v5468
  %v5471 = vshrl.u32 %v5453, %v5469
  %v5472 = vor.u32 %v5470, %v5471
  %v5473 = vsub.s32 4294967266, %v5468
  %v5474 = vadd.s32 %v5473, 127
  %v5475 = vshll.u32 %v5474, 23
  %v5476 = vor.u32 4788187, %v5475
  %v5477 = vand.u32 2147483647, %v5476
  %v5479 = vcvt.s32.f32 %v5472
  %v5480 = vmul.f32 %v5479, %v5477
  %v5481 = vxor.u32 %v5480, 2147483648
  %v5482 = vsel %vm5399, %v5481, %v5480
  %v5483 = vsub.s32 4, %v5459
  %v5484 = vsel %vm5399, %v5483, %v5459
  %v5485 = vsel %vm5398, %v4042, %v5482
  %v5486 = vsel %vm5398, 0, %v5484
  %v5487 = vcosq.f32.pop %v5485
  %v5488 = vsinq.f32.pop %v5485
  %vm5489 = vweird.f32 %v4042
  %v5490 = vadd.s32 %v5486, 3
  %v5491 = vand.u32 %v5490, 3
  %vm5492 = vcmp.lt.s32.totalorder %v5491, 2
  %vm5493 = vcmp.eq.s32.totalorder %v5491, 0
  %v5494 = vxor.u32 %v5488, 2147483648
  %v5495 = vsel %vm5493, %v5487, %v5494
  %vm5496 = vcmp.eq.s32.totalorder %v5491, 2
  %v5497 = vxor.u32 %v5487, 2147483648
  %v5498 = vsel %vm5496, %v5497, %v5488
  %v5499 = vsel %vm5492, %v5495, %v5498
  %v5500 = vsel %vm5489, nan, %v5499
  %v5501 = vand.u32 2147483647, %v4043
  %vm5502 = vcmp.le.f32.partialorder %v5501, 0.7853982
  %vm5503 = vcmp.lt.s32.totalorder %v4043, 0
  %v5504 = vand.u32 %v4043, 2139095040
  %v5505 = vshrl.u32 %v5504, 23
  %v5506 = vsub.s32 %v5505, 127
  %v5507 = vand.u32 2147483647, %v4043
  %v5508 = vand.u32 %v5507, 8388607
  %v5509 = vor.u32 %v5508, 8388608
  %v5510 = vsub.s32 0, %v5509
  %v5511 = vadd.s32 %v5506, 1
  %vm5512 = vcmp.gt.s32.totalorder %v5511, 0
  %v5513 = vsel %vm5512, %v5511, 0
  %v5514 = vshrl.u32 %v5513, 5
  %v5515 = vand.u32 %v5513, 31
  %v5516 = vsub.s32 32, %v5515
  %v5517 = vshrl.u32 683565275, %v5516
  %v5518 = vshll.u32 683565275, %v5515
  %v5519 = vshrl.u32 2475754826, %v5516
  %v5520 = vor.u32 %v5518, %v5519
  %v5521 = vshll.u32 2475754826, %v5515
  %v5522 = vshrl.u32 2131351028, %v5516
  %v5523 = vor.u32 %v5521, %v5522
  %v5524 = vshll.u32 2131351028, %v5515
  %v5525 = vshrl.u32 2102212464, %v5516
  %v5526 = vor.u32 %v5524, %v5525
  %v5527 = vshll.u32 2102212464, %v5515
  %v5528 = vshrl.u32 920167782, %v5516
  %v5529 = vor.u32 %v5527, %v5528
  %v5530 = vshll.u32 920167782, %v5515
  %v5531 = vshrl.u32 1326507024, %v5516
  %v5532 = vor.u32 %v5530, %v5531
  %vm5533 = vcmp.lt.s32.totalorder %v5514, 1
  %vm5534 = vcmp.lt.s32.totalorder %v5514, 2
  %vm5535 = vcmp.lt.s32.totalorder %v5514, 3
  %vm5536 = vcmp.lt.s32.totalorder %v5514, 4
  %v5537 = vsel %vm5533, %v5517, %v5520
  %v5538 = vsel %vm5536, %v5526, 2102212464
  %v5539 = vsel %vm5535, %v5523, %v5538
  %v5540 = vsel %vm5534, %v5537, %v5539
  %v5541 = vsel %vm5533, %v5520, %v5523
  %v5542 = vsel %vm5536, %v5529, 920167782
  %v5543 = vsel %vm5535, %v5526, %v5542
  %v5544 = vsel %vm5534, %v5541, %v5543
  %v5545 = vsel %vm5533, %v5523, %v5526
  %v5546 = vsel %vm5536, %v5532, 1326507024
  %v5547 = vsel %vm5535, %v5529, %v5546
  %v5548 = vsel %vm5534, %v5545, %v5547
  %v5549 = vshll.u32 %v5509, 8
  %v5550 = vmul.u32.u64.compose %v5549, %v5548
  %v5551 = vextract.low.u32 %v5550
  %v5552 = vextract.high.u32 %v5550
  %v5553 = vmul.u32.u64.compose %v5549, %v5544
  %v5554 = vextract.low.u32 %v5553
  %v5555 = vextract.high.u32 %v5553
  %v5556 = vmul.u32 %v5549, %v5540
  %v5557 = vadd.s32 %v5552, %v5554
  %vm5558 = vc.u32 %v5552, %v5554
  %v5559 = vadd.s32 %v5555, 1
  %v5560 = vsel %vm5558, %v5559, %v5555
  %v5561 = vadd.s32 %v5556, %v5560
  %v5562 = vadd.s32 %v5561, 536870912
  %v5563 = vshrl.u32 %v5562, 30
  %v5564 = vshll.u32 %v5563, 30
  %v5565 = vsub.s32 %v5561, %v5564
  %vm5566 = vcmp.lt.s32.totalorder %v5565, 0
  %v5567 = vsub.s32 0, %v5565
  %v5568 = vsel %vm5566, %v5567, %v5565
  %v5569 = vclz %v5568
  %v5570 = vsub.s32 %v5569, 2
  %vm5571 = vcmp.gt.s32.totalorder 0, %v5570
  %v5572 = vsel %vm5571, 0, %v5570
  %v5573 = vsub.s32 32, %v5572
  %v5574 = vshll.u32 %v5565, %v5572
  %v5575 = vshrl.u32 %v5557, %v5573
  %v5576 = vor.u32 %v5574, %v5575
  %v5577 = vsub.s32 4294967266, %v5572
  %v5578 = vadd.s32 %v5577, 127
  %v5579 = vshll.u32 %v5578, 23
  %v5580 = vor.u32 4788187, %v5579
  %v5581 = vand.u32 2147483647, %v5580
  %v5583 = vcvt.s32.f32 %v5576
  %v5584 = vmul.f32 %v5583, %v5581
  %v5585 = vxor.u32 %v5584, 2147483648
  %v5586 = vsel %vm5503, %v5585, %v5584
  %v5587 = vsub.s32 4, %v5563
  %v5588 = vsel %vm5503, %v5587, %v5563
  %v5589 = vsel %vm5502, %v4043, %v5586
  %v5590 = vsel %vm5502, 0, %v5588
  %v5591 = vcosq.f32.pop %v5589
  %v5592 = vsinq.f32.pop %v5589
  %vm5593 = vweird.f32 %v4043
  %v5594 = vadd.s32 %v5590, 3
  %v5595 = vand.u32 %v5594, 3
  %vm5596 = vcmp.lt.s32.totalorder %v5595, 2
  %vm5597 = vcmp.eq.s32.totalorder %v5595, 0
  %v5598 = vxor.u32 %v5592, 2147483648
  %v5599 = vsel %vm5597, %v5591, %v5598
  %vm5600 = vcmp.eq.s32.totalorder %v5595, 2
  %v5601 = vxor.u32 %v5591, 2147483648
  %v5602 = vsel %vm5600, %v5601, %v5592
  %v5603 = vsel %vm5596, %v5599, %v5602
  %v5604 = vsel %vm5593, nan, %v5603
  %v5605 = vand.u32 2147483647, %v4044
  %vm5606 = vcmp.le.f32.partialorder %v5605, 0.7853982
  %vm5607 = vcmp.lt.s32.totalorder %v4044, 0
  %v5608 = vand.u32 %v4044, 2139095040
  %v5609 = vshrl.u32 %v5608, 23
  %v5610 = vsub.s32 %v5609, 127
  %v5611 = vand.u32 2147483647, %v4044
  %v5612 = vand.u32 %v5611, 8388607
  %v5613 = vor.u32 %v5612, 8388608
  %v5614 = vsub.s32 0, %v5613
  %v5615 = vadd.s32 %v5610, 1
  %vm5616 = vcmp.gt.s32.totalorder %v5615, 0
  %v5617 = vsel %vm5616, %v5615, 0
  %v5618 = vshrl.u32 %v5617, 5
  %v5619 = vand.u32 %v5617, 31
  %v5620 = vsub.s32 32, %v5619
  %v5621 = vshrl.u32 683565275, %v5620
  %v5622 = vshll.u32 683565275, %v5619
  %v5623 = vshrl.u32 2475754826, %v5620
  %v5624 = vor.u32 %v5622, %v5623
  %v5625 = vshll.u32 2475754826, %v5619
  %v5626 = vshrl.u32 2131351028, %v5620
  %v5627 = vor.u32 %v5625, %v5626
  %v5628 = vshll.u32 2131351028, %v5619
  %v5629 = vshrl.u32 2102212464, %v5620
  %v5630 = vor.u32 %v5628, %v5629
  %v5631 = vshll.u32 2102212464, %v5619
  %v5632 = vshrl.u32 920167782, %v5620
  %v5633 = vor.u32 %v5631, %v5632
  %v5634 = vshll.u32 920167782, %v5619
  %v5635 = vshrl.u32 1326507024, %v5620
  %v5636 = vor.u32 %v5634, %v5635
  %vm5637 = vcmp.lt.s32.totalorder %v5618, 1
  %vm5638 = vcmp.lt.s32.totalorder %v5618, 2
  %vm5639 = vcmp.lt.s32.totalorder %v5618, 3
  %vm5640 = vcmp.lt.s32.totalorder %v5618, 4
  %v5641 = vsel %vm5637, %v5621, %v5624
  %v5642 = vsel %vm5640, %v5630, 2102212464
  %v5643 = vsel %vm5639, %v5627, %v5642
  %v5644 = vsel %vm5638, %v5641, %v5643
  %v5645 = vsel %vm5637, %v5624, %v5627
  %v5646 = vsel %vm5640, %v5633, 920167782
  %v5647 = vsel %vm5639, %v5630, %v5646
  %v5648 = vsel %vm5638, %v5645, %v5647
  %v5649 = vsel %vm5637, %v5627, %v5630
  %v5650 = vsel %vm5640, %v5636, 1326507024
  %v5651 = vsel %vm5639, %v5633, %v5650
  %v5652 = vsel %vm5638, %v5649, %v5651
  %v5653 = vshll.u32 %v5613, 8
  %v5654 = vmul.u32.u64.compose %v5653, %v5652
  %v5655 = vextract.low.u32 %v5654
  %v5656 = vextract.high.u32 %v5654
  %v5657 = vmul.u32.u64.compose %v5653, %v5648
  %v5658 = vextract.low.u32 %v5657
  %v5659 = vextract.high.u32 %v5657
  %v5660 = vmul.u32 %v5653, %v5644
  %v5661 = vadd.s32 %v5656, %v5658
  %vm5662 = vc.u32 %v5656, %v5658
  %v5663 = vadd.s32 %v5659, 1
  %v5664 = vsel %vm5662, %v5663, %v5659
  %v5665 = vadd.s32 %v5660, %v5664
  %v5666 = vadd.s32 %v5665, 536870912
  %v5667 = vshrl.u32 %v5666, 30
  %v5668 = vshll.u32 %v5667, 30
  %v5669 = vsub.s32 %v5665, %v5668
  %vm5670 = vcmp.lt.s32.totalorder %v5669, 0
  %v5671 = vsub.s32 0, %v5669
  %v5672 = vsel %vm5670, %v5671, %v5669
  %v5673 = vclz %v5672
  %v5674 = vsub.s32 %v5673, 2
  %vm5675 = vcmp.gt.s32.totalorder 0, %v5674
  %v5676 = vsel %vm5675, 0, %v5674
  %v5677 = vsub.s32 32, %v5676
  %v5678 = vshll.u32 %v5669, %v5676
  %v5679 = vshrl.u32 %v5661, %v5677
  %v5680 = vor.u32 %v5678, %v5679
  %v5681 = vsub.s32 4294967266, %v5676
  %v5682 = vadd.s32 %v5681, 127
  %v5683 = vshll.u32 %v5682, 23
  %v5684 = vor.u32 4788187, %v5683
  %v5685 = vand.u32 2147483647, %v5684
  %v5687 = vcvt.s32.f32 %v5680
  %v5688 = vmul.f32 %v5687, %v5685
  %v5689 = vxor.u32 %v5688, 2147483648
  %v5690 = vsel %vm5607, %v5689, %v5688
  %v5691 = vsub.s32 4, %v5667
  %v5692 = vsel %vm5607, %v5691, %v5667
  %v5693 = vsel %vm5606, %v4044, %v5690
  %v5694 = vsel %vm5606, 0, %v5692
  %v5695 = vcosq.f32.pop %v5693
  %v5696 = vsinq.f32.pop %v5693
  %vm5697 = vweird.f32 %v4044
  %v5698 = vadd.s32 %v5694, 3
  %v5699 = vand.u32 %v5698, 3
  %vm5700 = vcmp.lt.s32.totalorder %v5699, 2
  %vm5701 = vcmp.eq.s32.totalorder %v5699, 0
  %v5702 = vxor.u32 %v5696, 2147483648
  %v5703 = vsel %vm5701, %v5695, %v5702
  %vm5704 = vcmp.eq.s32.totalorder %v5699, 2
  %v5705 = vxor.u32 %v5695, 2147483648
  %v5706 = vsel %vm5704, %v5705, %v5696
  %v5707 = vsel %vm5700, %v5703, %v5706
  %v5708 = vsel %vm5697, nan, %v5707
  %v5709 = vld [vmem:[%s8] sm:$0xff]
  %v5710 = vld [vmem:[%s8 + $0x8] sm:$0xff]
  %v5712 = vsel %vm1953, %v4148, 0
  %v5715 = vsel %vm1953, %v4252, 0
  %v5718 = vsel %vm1953, %v4356, 0
  %v5721 = vsel %vm1953, %v4460, 0
  %v5724 = vsel %vm1953, %v4564, 0
  %v5727 = vsel %vm1953, %v4668, 0
  %v5730 = vsel %vm1953, %v4772, 0
  %v5733 = vsel %vm1953, %v4876, 0
  %v5736 = vsel %vm1953, %v4980, 0
  %v5739 = vsel %vm1953, %v5084, 0
  %v5742 = vsel %vm1953, %v5188, 0
  %v5745 = vsel %vm1953, %v5292, 0
  %v5748 = vsel %vm1953, %v5396, 0
  %v5751 = vsel %vm1953, %v5500, 0
  %v5754 = vsel %vm1953, %v5604, 0
  %v5757 = vsel %vm1953, %v5708, 0
  %5759 = vmatprep.subr.mxu0 0.0
  %5760 = vmatpush1.msra.mxu0 0.0
  %5761 = vmatprep.subr.mxu0 0.0
  %5762 = vmatpush1.msra.mxu0 0.0
  %5763 = vmatprep.subr.mxu0 0.0
  %5764 = vmatpush1.msra.mxu0 0.0
  %5765 = vmatprep.subr.mxu0 0.0
  %5766 = vmatpush1.msra.mxu0 0.0
  %5767 = vmatprep.subr.mxu0 0.0
  %5768 = vmatpush1.msra.mxu0 0.0
  %5769 = vmatprep.subr.mxu0 0.0
  %5770 = vmatpush1.msra.mxu0 0.0
  %5771 = vmatprep.subr.mxu0 0.0
  %5772 = vmatpush1.msra.mxu0 0.0
  %5773 = vmatprep.subr.mxu0 0.0
  %5774 = vmatpush1.msra.mxu0 0.0
  %5775 = vmatprep.subr.mxu0 0.0
  %5776 = vmatpush1.msra.mxu0 0.0
  %5777 = vmatprep.subr.mxu0 0.0
  %5778 = vmatpush1.msra.mxu0 0.0
  %5779 = vmatprep.subr.mxu0 0.0
  %5780 = vmatpush1.msra.mxu0 0.0
  %5781 = vmatprep.subr.mxu0 0.0
  %5782 = vmatpush1.msra.mxu0 0.0
  %5783 = vmatprep.subr.mxu0 0.0
  %5784 = vmatpush1.msra.mxu0 0.0
  %5785 = vmatprep.subr.mxu0 0.0
  %5786 = vmatpush1.msra.mxu0 0.0
  %5787 = vmatprep.subr.mxu0 0.0
  %5788 = vmatpush1.msra.mxu0 %v5710
  %5789 = vmatprep.subr.mxu0 0.0
  %5790 = vmatpush1.msra.mxu0 %v5709
  %5791 = vmatprep.subr.mxu0 0.0
  %5792 = vmatpush2.msra.mxu0 0.0
  %5793 = vmatprep.subr.mxu0 0.0
  %5794 = vmatpush2.msra.mxu0 0.0
  %5795 = vmatprep.subr.mxu0 0.0
  %5796 = vmatpush2.msra.mxu0 0.0
  %5797 = vmatprep.subr.mxu0 0.0
  %5798 = vmatpush2.msra.mxu0 0.0
  %5799 = vmatprep.subr.mxu0 0.0
  %5800 = vmatpush2.msra.mxu0 0.0
  %5801 = vmatprep.subr.mxu0 0.0
  %5802 = vmatpush2.msra.mxu0 0.0
  %5803 = vmatprep.subr.mxu0 0.0
  %5804 = vmatpush2.msra.mxu0 0.0
  %5805 = vmatprep.subr.mxu0 0.0
  %5806 = vmatpush2.msra.mxu0 0.0
  %5807 = vmatprep.subr.mxu0 0.0
  %5808 = vmatpush2.msra.mxu0 0.0
  %5809 = vmatprep.subr.mxu0 0.0
  %5810 = vmatpush2.msra.mxu0 0.0
  %5811 = vmatprep.subr.mxu0 0.0
  %5812 = vmatpush2.msra.mxu0 0.0
  %5813 = vmatprep.subr.mxu0 0.0
  %5814 = vmatpush2.msra.mxu0 0.0
  %5815 = vmatprep.subr.mxu0 0.0
  %5816 = vmatpush2.msra.mxu0 0.0
  %5817 = vmatprep.subr.mxu0 0.0
  %5818 = vmatpush2.msra.mxu0 0.0
  %5819 = vmatprep.subr.mxu0 0.0
  %5820 = vmatpush2.msra.mxu0 0.0
  %5821 = vmatprep.subr.mxu0 0.0
  %5822 = vmatpush2.msra.mxu0 0.0
  %5823 = vmatprep.mubr.f32.mxu0 0.0
  %5824 = vmatmul.mubr.f32.gmra.mxu0 %v5712
  %v5825 = vpop.f32.mrf.mxu0
  %v5826 = vadd.f32 0.0, %v5825
  %v5827 = vpop.f32.mrf.mxu0
  %5828 = vmatprep.mubr.f32.mxu0 0.0
  %5829 = vmatmul.mubr.f32.gmra.mxu0 %v5715
  %v5830 = vpop.f32.mrf.mxu0
  %v5831 = vadd.f32 0.0, %v5830
  %v5832 = vpop.f32.mrf.mxu0
  %5833 = vmatprep.mubr.f32.mxu0 0.0
  %5834 = vmatmul.mubr.f32.gmra.mxu0 %v5718
  %v5835 = vpop.f32.mrf.mxu0
  %v5836 = vadd.f32 0.0, %v5835
  %v5837 = vpop.f32.mrf.mxu0
  %5838 = vmatprep.mubr.f32.mxu0 0.0
  %5839 = vmatmul.mubr.f32.gmra.mxu0 %v5721
  %v5840 = vpop.f32.mrf.mxu0
  %v5841 = vadd.f32 0.0, %v5840
  %v5842 = vpop.f32.mrf.mxu0
  %5843 = vmatprep.mubr.f32.mxu0 0.0
  %5844 = vmatmul.mubr.f32.gmra.mxu0 %v5724
  %v5845 = vpop.f32.mrf.mxu0
  %v5846 = vadd.f32 0.0, %v5845
  %v5847 = vpop.f32.mrf.mxu0
  %5848 = vmatprep.mubr.f32.mxu0 0.0
  %5849 = vmatmul.mubr.f32.gmra.mxu0 %v5727
  %v5850 = vpop.f32.mrf.mxu0
  %v5851 = vadd.f32 0.0, %v5850
  %v5852 = vpop.f32.mrf.mxu0
  %5853 = vmatprep.mubr.f32.mxu0 0.0
  %5854 = vmatmul.mubr.f32.gmra.mxu0 %v5730
  %v5855 = vpop.f32.mrf.mxu0
  %v5856 = vadd.f32 0.0, %v5855
  %v5857 = vpop.f32.mrf.mxu0
  %5858 = vmatprep.mubr.f32.mxu0 0.0
  %5859 = vmatmul.mubr.f32.gmra.mxu0 %v5733
  %v5860 = vpop.f32.mrf.mxu0
  %v5861 = vadd.f32 0.0, %v5860
  %v5862 = vpop.f32.mrf.mxu0
  %5863 = vmatprep.mubr.f32.mxu0 0.0
  %5864 = vmatmul.mubr.f32.gmra.mxu0 %v5736
  %v5865 = vpop.f32.mrf.mxu0
  %v5866 = vadd.f32 0.0, %v5865
  %v5867 = vpop.f32.mrf.mxu0
  %5868 = vmatprep.mubr.f32.mxu0 0.0
  %5869 = vmatmul.mubr.f32.gmra.mxu0 %v5739
  %v5870 = vpop.f32.mrf.mxu0
  %v5871 = vadd.f32 0.0, %v5870
  %v5872 = vpop.f32.mrf.mxu0
  %5873 = vmatprep.mubr.f32.mxu0 0.0
  %5874 = vmatmul.mubr.f32.gmra.mxu0 %v5742
  %v5875 = vpop.f32.mrf.mxu0
  %v5876 = vadd.f32 0.0, %v5875
  %v5877 = vpop.f32.mrf.mxu0
  %5878 = vmatprep.mubr.f32.mxu0 0.0
  %5879 = vmatmul.mubr.f32.gmra.mxu0 %v5745
  %v5880 = vpop.f32.mrf.mxu0
  %v5881 = vadd.f32 0.0, %v5880
  %v5882 = vpop.f32.mrf.mxu0
  %5883 = vmatprep.mubr.f32.mxu0 0.0
  %5884 = vmatmul.mubr.f32.gmra.mxu0 %v5748
  %v5885 = vpop.f32.mrf.mxu0
  %v5886 = vadd.f32 0.0, %v5885
  %v5887 = vpop.f32.mrf.mxu0
  %5888 = vmatprep.mubr.f32.mxu0 0.0
  %5889 = vmatmul.mubr.f32.gmra.mxu0 %v5751
  %v5890 = vpop.f32.mrf.mxu0
  %v5891 = vadd.f32 0.0, %v5890
  %v5892 = vpop.f32.mrf.mxu0
  %5893 = vmatprep.mubr.f32.mxu0 0.0
  %5894 = vmatmul.mubr.f32.gmra.mxu0 %v5754
  %v5895 = vpop.f32.mrf.mxu0
  %v5896 = vadd.f32 0.0, %v5895
  %v5897 = vpop.f32.mrf.mxu0
  %5898 = vmatprep.mubr.f32.mxu0 0.0
  %5899 = vmatmul.mubr.f32.gmra.mxu0 %v5757
  %v5900 = vpop.f32.mrf.mxu0
  %v5901 = vadd.f32 0.0, %v5900
  %v5902 = vpop.f32.mrf.mxu0
  %5903 = vdwg.mxu0
  %v5904 = vld [vmem:[%s1] sm:$0xff]
  %v5905 = vld [vmem:[%s1 + $0x8] sm:$0xff]
  %v5906 = vld [vmem:[%s1 + $0x10] sm:$0xff]
  %v5907 = vld [vmem:[%s1 + $0x18] sm:$0xff]
  %v5908 = vld [vmem:[%s1 + $0x20] sm:$0xff]
  %v5909 = vld [vmem:[%s1 + $0x28] sm:$0xff]
  %v5910 = vld [vmem:[%s1 + $0x30] sm:$0xff]
  %v5911 = vld [vmem:[%s1 + $0x38] sm:$0xff]
  %v5912 = vld [vmem:[%s1 + $0x40] sm:$0xff]
  %v5913 = vld [vmem:[%s1 + $0x48] sm:$0xff]
  %v5914 = vld [vmem:[%s1 + $0x50] sm:$0xff]
  %v5915 = vld [vmem:[%s1 + $0x58] sm:$0xff]
  %v5916 = vld [vmem:[%s1 + $0x60] sm:$0xff]
  %v5917 = vld [vmem:[%s1 + $0x68] sm:$0xff]
  %v5918 = vld [vmem:[%s1 + $0x70] sm:$0xff]
  %v5919 = vld [vmem:[%s1 + $0x78] sm:$0xff]
  %v5920 = vmul.f32 %v5826, %v5904
  %v5921 = vmul.f32 %v5831, %v5905
  %v5922 = vmul.f32 %v5836, %v5906
  %v5923 = vmul.f32 %v5841, %v5907
  %v5924 = vmul.f32 %v5846, %v5908
  %v5925 = vmul.f32 %v5851, %v5909
  %v5926 = vmul.f32 %v5856, %v5910
  %v5927 = vmul.f32 %v5861, %v5911
  %v5928 = vmul.f32 %v5866, %v5912
  %v5929 = vmul.f32 %v5871, %v5913
  %v5930 = vmul.f32 %v5876, %v5914
  %v5931 = vmul.f32 %v5881, %v5915
  %v5932 = vmul.f32 %v5886, %v5916
  %v5933 = vmul.f32 %v5891, %v5917
  %v5934 = vmul.f32 %v5896, %v5918
  %v5935 = vmul.f32 %v5901, %v5919
  %5936 = vst [vmem:[%s10] sm:$0xff] %v5920
  %5937 = vst [vmem:[%s10 + $0x8] sm:$0xff] %v5921
  %5938 = vst [vmem:[%s10 + $0x10] sm:$0xff] %v5922
  %5939 = vst [vmem:[%s10 + $0x18] sm:$0xff] %v5923
  %5940 = vst [vmem:[%s10 + $0x20] sm:$0xff] %v5924
  %5941 = vst [vmem:[%s10 + $0x28] sm:$0xff] %v5925
  %5942 = vst [vmem:[%s10 + $0x30] sm:$0xff] %v5926
  %5943 = vst [vmem:[%s10 + $0x38] sm:$0xff] %v5927
  %5944 = vst [vmem:[%s10 + $0x40] sm:$0xff] %v5928
  %5945 = vst [vmem:[%s10 + $0x48] sm:$0xff] %v5929
  %5946 = vst [vmem:[%s10 + $0x50] sm:$0xff] %v5930
  %5947 = vst [vmem:[%s10 + $0x58] sm:$0xff] %v5931
  %5948 = vst [vmem:[%s10 + $0x60] sm:$0xff] %v5932
  %5949 = vst [vmem:[%s10 + $0x68] sm:$0xff] %v5933
  %5950 = vst [vmem:[%s10 + $0x70] sm:$0xff] %v5934
  %5951 = vst [vmem:[%s10 + $0x78] sm:$0xff] %v5935
  // Predicated region
  $region42: #{hyena_filter_forward.2} parent=0 // pred_check
    _
  $region43: #{hyena_filter_forward.2} parent=0 // pred_check_branch
    %5953 = sbr.rel (0) target = $region45
  $region44: #{hyena_filter_forward.2} parent=0 // pred_region
    _
  $region45: #{hyena_filter_forward.2} parent=0 // pred_fallthru
    _
  // Predicated region
  $region46: #{hyena_filter_forward.2} parent=0 // pred_check
    _
  $region47: #{hyena_filter_forward.2} parent=0 // pred_check_branch
    %5955 = sbr.rel (0) target = $region49
  $region48: #{hyena_filter_forward.2} parent=0 // pred_region
    _
  $region49: #{hyena_filter_forward.2} parent=0 // pred_fallthru
    _

</llo_original>
